<compile_context>
chip_gen: v5e
topology: v5e:2x2
jax: 0.10.0
libtpu: 0.0.40
codegen_flags: <defaults>
</compile_context>

<pallas_src>
import functools

import jax
import jax.numpy as jnp
from jax import lax
from jax.experimental import pallas as pl
from jax.experimental.pallas import tpu as pltpu

F32 = jnp.float32
BF16 = jnp.bfloat16

_H = 24                 # spatial size forced by Linear(64*3*3, 128) after 3 pools
_RS = 32                # padded row stride: 24 valid pixels + 8 zero filler
_IMG = 25 * _RS         # 800 rows / image: 1 ghost image-row + 24 image rows
_OFF = _RS              # position (h, w) lives at row _OFF + h*_RS + w
_HALO = 40              # zero halo rows at both ends of the conv3x3 scratch
_CH0 = 160              # row chunk for layers 0..3 (divides _IMG, multiple of 8)
_CH1 = 144              # row chunk for layers 4..7


# ---------------------------------------------------------------------------
# Fused kernel
# ---------------------------------------------------------------------------
def _danet_kernel(x_ref,
                  w0_ref, b0_ref, w1_ref, b1_ref, w2_ref, b2_ref,
                  w3_ref, b3_ref, w4_ref, b4_ref, w5_ref, b5_ref,
                  w6_ref, b6_ref, w7_ref, b7_ref, wfc_ref, bfc_ref,
                  o_ref,
                  vmask_ref, pad_ref, p1_ref, vbuf1_ref, q1_ref,
                  p2_ref, vbuf2_ref, q2_ref, p3_ref, vbuf3_ref, q3_ref,
                  *, tb):
    rows = tb * _IMG

    def relu(v):
        return jnp.maximum(v, 0.0)

    def conv1x1(v, w_ref_, b_ref_):
        y = jnp.dot(v.astype(BF16), w_ref_[...], preferred_element_type=F32)
        return relu(y + b_ref_[...])

    # --- per-image validity column (1.0 on real pixels, 0.0 on ghost/filler) --
    # Built from iota with only compares / bitwise-and (no div/mod).  Recomputed
    # every grid step so it is valid on every megacore core.
    def mask_body(c, _):
        s = pl.multiple_of(c * _CH0, 8)
        p = lax.broadcasted_iota(jnp.int32, (_CH0, 1), 0) + s
        ok = (p >= _OFF) & ((p & (_RS - 1)) < _H)
        vmask_ref[pl.ds(s, _CH0), :] = ok.astype(F32)
        return 0
    lax.fori_loop(0, _IMG // _CH0, mask_body, 0)

    # --- zero the halo rows around the conv3x3 input scratch ------------------
    pad_ref[pl.ds(0, _HALO), :] = jnp.zeros((_HALO, 48), F32)
    pad_ref[pl.ds(_HALO + rows, _HALO), :] = jnp.zeros((_HALO, 48), F32)

    # --- layers 0..2: Conv1x1(1->48)+ReLU, 2x Conv1x1(48->48)+ReLU ------------
    # x_ref is (IMG, tb): padded positions in sublanes, images in lanes.  The
    # image loop is static because it selects a lane; chunks are a fori_loop.
    for bb in range(tb):
        def l012_body(c, _, bb=bb):
            s = pl.multiple_of(c * _CH0, 8)
            xcol = x_ref[pl.ds(s, _CH0), pl.ds(bb, 1)]            # (CH0, 1)
            h = relu(xcol * w0_ref[...] + b0_ref[...])            # VPU, Cin = 1
            h = conv1x1(h, w1_ref, b1_ref)
            h = conv1x1(h, w2_ref, b2_ref)
            h = h * vmask_ref[pl.ds(s, _CH0), :]                  # zero ghost rows
            pad_ref[pl.ds(_HALO + bb * _IMG + s, _CH0), :] = h
            return 0
        lax.fori_loop(0, _IMG // _CH0, l012_body, 0)

    # --- layer 3: Conv3x3(48->72, pad=1)+ReLU ---------------------------------
    # 9 shifted matmuls over the zero-padded layout -- no boundary masks needed.
    def conv3_body(t, _):
        s = pl.multiple_of(t * _CH0, 8)
        acc = jnp.zeros((_CH0, 72), F32)
        for k in range(9):
            off = (k // 3 - 1) * _RS + (k % 3 - 1)
            lhs = pad_ref[pl.ds(_HALO + s + off, _CH0), :]
            acc = acc + jnp.dot(lhs.astype(BF16),
                                w3_ref[pl.ds(k * 48, 48), :],
                                preferred_element_type=F32)
        p1_ref[pl.ds(s, _CH0), :] = relu(acc + b3_ref[...])
        return 0
    lax.fori_loop(0, rows // _CH0, conv3_body, 0)

    # --- MaxPool 24x24 -> 12x12 ------------------------------------------------
    # Vertical max with contiguous reads into vbuf1, then one stride-2 pass per
    # image for the horizontal max.
    def pool1_body(bb, _):
        img = pl.multiple_of(bb * _IMG, 8)
        def vert(i, __):
            base = pl.multiple_of(img + (2 * i + 1) * _RS, 8)
            vm = jnp.maximum(p1_ref[pl.ds(base, _H), :],
                             p1_ref[pl.ds(base + _RS, _H), :])
            vbuf1_ref[pl.ds(pl.multiple_of(i * _H, 8), _H), :] = vm
            return 0
        lax.fori_loop(0, 12, vert, 0)
        q1_ref[pl.ds(pl.multiple_of(bb * 144, 8), 144), :] = jnp.maximum(
            vbuf1_ref[pl.ds(0, 144, stride=2), :],
            vbuf1_ref[pl.ds(1, 144, stride=2), :])
        return 0
    lax.fori_loop(0, tb, pool1_body, 0)

    # --- layers 4..6: Conv1x1 72->72->72->96 (+ReLU each) ----------------------
    def l456_body(t, _):
        s = pl.multiple_of(t * _CH1, 8)
        h = q1_ref[pl.ds(s, _CH1), :]
        h = conv1x1(h, w4_ref, b4_ref)
        h = conv1x1(h, w5_ref, b5_ref)
        h = conv1x1(h, w6_ref, b6_ref)
        p2_ref[pl.ds(s, _CH1), :] = h
        return 0
    lax.fori_loop(0, (tb * 144) // _CH1, l456_body, 0)

    # --- MaxPool 12x12 -> 6x6 ---------------------------------------------------
    def pool2_body(bb, _):
        img = pl.multiple_of(bb * 144, 8)
        def vert(i, __):
            base = pl.multiple_of(img + i * 24, 8)
            vm = jnp.maximum(p2_ref[pl.ds(base, 12), :],
                             p2_ref[pl.ds(base + 12, 12), :])
            vbuf2_ref[pl.ds(i * 12, 12), :] = vm
            return 0
        lax.fori_loop(0, 6, vert, 0)
        q2_ref[pl.ds(bb * 36, 36), :] = jnp.maximum(
            vbuf2_ref[pl.ds(0, 36, stride=2), :],
            vbuf2_ref[pl.ds(1, 36, stride=2), :])
        return 0
    lax.fori_loop(0, tb, pool2_body, 0)

    # --- layer 7: Conv1x1(96->64)+ReLU ------------------------------------------
    def l7_body(t, _):
        s = pl.multiple_of(t * _CH1, 8)
        p3_ref[pl.ds(s, _CH1), :] = conv1x1(q2_ref[pl.ds(s, _CH1), :],
                                            w7_ref, b7_ref)
        return 0
    lax.fori_loop(0, (tb * 36) // _CH1, l7_body, 0)

    # --- MaxPool 6x6 -> 3x3 -------------------------------------------------------
    def pool3_body(bb, _):
        img = bb * 36
        def vert(i, __):
            vm = jnp.maximum(p3_ref[pl.ds(img + i * 12, 6), :],
                             p3_ref[pl.ds(img + i * 12 + 6, 6), :])
            vbuf3_ref[pl.ds(i * 6, 6), :] = vm
            return 0
        lax.fori_loop(0, 3, vert, 0)
        q3_ref[pl.ds(bb * 9, 9), :] = jnp.maximum(
            vbuf3_ref[pl.ds(0, 9, stride=2), :],
            vbuf3_ref[pl.ds(1, 9, stride=2), :])
        return 0
    lax.fori_loop(0, tb, pool3_body, 0)

    # --- Flatten + Linear(576->128) + LogSoftmax ----------------------------------
    # wfc rows are laid out in NHWC-flatten order (r*64 + c, r = h*3 + w), so the
    # FC is 9 accumulated (tb, 64) x (64, 128) matmuls -- no transpose needed.
    logits = jnp.zeros((tb, 128), F32)
    for r in range(9):
        xr = q3_ref[pl.ds(r, tb, stride=9), :]                    # (tb, 64)
        logits = logits + jnp.dot(xr.astype(BF16),
                                  wfc_ref[pl.ds(r * 64, 64), :],
                                  preferred_element_type=F32)
    logits = logits + bfc_ref[...]
    mx = jnp.max(logits, axis=-1, keepdims=True)
    shifted = logits - mx
    lse = jnp.log(jnp.sum(jnp.exp(shifted), axis=-1, keepdims=True))
    o_ref[...] = (shifted - lse).astype(o_ref.dtype)


# ---------------------------------------------------------------------------
# Host-side wrapper
# ---------------------------------------------------------------------------
def _pick_tb(n):
    """Batch tile.  Never tb=n for ragged batches (VMEM scales with tb);
    grid has >=2 steps whenever n allows it (v7x dual TensorCore)."""
    if n >= 32:
        return 16
    return 8


def danet_forward(x_nchw, params):
    n = x_nchw.shape[0]
    assert x_nchw.shape[1:] == (1, _H, _H), x_nchw.shape
    tb = _pick_tb(n)
    n_pad = ((n + tb - 1) // tb) * tb

    x = x_nchw.astype(F32).reshape(n, _H, _H)
    if n_pad != n:
        x = jnp.concatenate([x, jnp.zeros((n_pad - n, _H, _H), F32)], axis=0)

    # Zero-padded per-image layout: position (h, w) -> row _OFF + h*_RS + w of
    # an _IMG-row block (row stride 32, one ghost image-row, zero filler).
    canvas = jnp.zeros((n_pad, 25, _RS), F32).at[:, 1:25, :_H].set(x)
    xpad = canvas.reshape(n_pad, _IMG)
    # Lane-dense feed: sublanes = padded positions, lanes = images of the tile.
    x2 = xpad.reshape(n_pad // tb, tb, _IMG).transpose(0, 2, 1).reshape(-1, tb)

    const = lambda i: (0, 0)
    full = lambda shape: pl.BlockSpec(shape, const)

    in_specs = [
        pl.BlockSpec((_IMG, tb), lambda i: (i, 0)),   # x (padded, lanes = images)
        full((1, 48)), full((1, 48)),                 # w0, b0  (f32, VPU layer)
        full((48, 48)), full((1, 48)),                # w1, b1
        full((48, 48)), full((1, 48)),                # w2, b2
        full((432, 72)), full((1, 72)),               # w3, b3  (rows kh, kw, cin)
        full((72, 72)), full((1, 72)),                # w4, b4
        full((72, 72)), full((1, 72)),                # w5, b5
        full((72, 96)), full((1, 96)),                # w6, b6
        full((96, 64)), full((1, 64)),                # w7, b7
        full((576, 128)), full((1, 128)),             # wfc, bfc
    ]

    rows = tb * _IMG
    scratch = [
        pltpu.VMEM((_IMG, 1), F32),                   # per-image validity column
        pltpu.VMEM((2 * _HALO + rows, 48), F32),      # conv3x3 input (padded)
        pltpu.VMEM((rows, 72), F32),                  # conv3x3 output (padded)
        pltpu.VMEM((288, 72), F32),                   # pool1 vertical-max buffer
        pltpu.VMEM((tb * 144, 72), F32),              # pool1 out
        pltpu.VMEM((tb * 144, 96), F32),              # layer-6 out
        pltpu.VMEM((72, 96), F32),                    # pool2 vertical-max buffer
        pltpu.VMEM((tb * 36, 96), F32),               # pool2 out
        pltpu.VMEM((tb * 36, 64), F32),               # layer-7 out
        pltpu.VMEM((18, 64), F32),                    # pool3 vertical-max buffer
        pltpu.VMEM((tb * 9, 64), F32),                # pool3 out
    ]

    kernel = functools.partial(_danet_kernel, tb=tb)
    out = pl.pallas_call(
        kernel,
        out_shape=jax.ShapeDtypeStruct((n_pad, 128), F32),
        grid_spec=pltpu.PrefetchScalarGridSpec(
            num_scalar_prefetch=0,
            grid=(n_pad // tb,),
            in_specs=in_specs,
            out_specs=pl.BlockSpec((tb, 128), lambda i: (i, 0)),
            scratch_shapes=scratch,
        ),
        compiler_params=pltpu.CompilerParams(
            dimension_semantics=("parallel",),
            vmem_limit_bytes=40 * 1024 * 1024),
    )(x2,
      params['w0'], params['b0'], params['w1'], params['b1'],
      params['w2'], params['b2'], params['w3'], params['b3'],
      params['w4'], params['b4'], params['w5'], params['b5'],
      params['w6'], params['b6'], params['w7'], params['b7'],
      params['wfc'], params['bfc'])
    return out[:n]


# ---------------------------------------------------------------------------
# Parameters (deterministic synthetic, PyTorch-like fan-in scaling)
# ---------------------------------------------------------------------------
def init_params(key):
    ks = jax.random.split(key, 20)

    def w(k, fan_in, shape, dtype):
        return (jax.random.normal(k, shape, F32) /
                jnp.sqrt(jnp.float32(fan_in))).astype(dtype)

    p = {}
    p['w0'], p['b0'] = w(ks[0], 1, (1, 48), F32), w(ks[1], 1, (1, 48), F32)
    p['w1'], p['b1'] = w(ks[2], 48, (48, 48), BF16), w(ks[3], 48, (1, 48), F32)
    p['w2'], p['b2'] = w(ks[4], 48, (48, 48), BF16), w(ks[5], 48, (1, 48), F32)
    # 3x3 conv weight rows ordered (kh, kw, cin) -> matches the 9 shifted taps.
    p['w3'], p['b3'] = w(ks[6], 48 * 9, (432, 72), BF16), w(ks[7], 48 * 9, (1, 72), F32)
    p['w4'], p['b4'] = w(ks[8], 72, (72, 72), BF16), w(ks[9], 72, (1, 72), F32)
    p['w5'], p['b5'] = w(ks[10], 72, (72, 72), BF16), w(ks[11], 72, (1, 72), F32)
    p['w6'], p['b6'] = w(ks[12], 72, (72, 96), BF16), w(ks[13], 72, (1, 96), F32)
    p['w7'], p['b7'] = w(ks[14], 96, (96, 64), BF16), w(ks[15], 96, (1, 64), F32)
    # FC weight rows in NHWC-flatten order ((h*3 + w)*64 + c); equivalent to the
    # PyTorch layout up to a fixed row permutation folded into the weights.
    p['wfc'] = w(ks[16], 576, (576, 128), BF16)
    p['bfc'] = w(ks[17], 576, (1, 128), F32)
    return p


# ---------------------------------------------------------------------------
# Pure-XLA reference (independent math path) with matching dtype choices
# ---------------------------------------------------------------------------
def danet_reference(x_nchw, params):
    x = jnp.transpose(x_nchw.astype(F32), (0, 2, 3, 1))        # NHWC

    def conv(x, wq, b, ksize, cin):
        w_hwio = wq.reshape(ksize, ksize, cin, -1)
        y = lax.conv_general_dilated(
            x.astype(wq.dtype), w_hwio,
            window_strides=(1, 1),
            padding=[(ksize // 2, ksize // 2)] * 2,
            dimension_numbers=('NHWC', 'HWIO', 'NHWC'),
            preferred_element_type=F32)
        return jnp.maximum(y + b.reshape(1, 1, 1, -1), 0.0)

    def pool(x):
        return lax.reduce_window(x, -jnp.inf, lax.max,
                                 (1, 2, 2, 1), (1, 2, 2, 1), 'VALID')

    x = conv(x, params['w0'], params['b0'], 1, 1)
    x = conv(x, params['w1'], params['b1'], 1, 48)
    x = conv(x, params['w2'], params['b2'], 1, 48)
    x = conv(x, params['w3'], params['b3'], 3, 48)
    x = pool(x)
    x = conv(x, params['w4'], params['b4'], 1, 72)
    x = conv(x, params['w5'], params['b5'], 1, 72)
    x = conv(x, params['w6'], params['b6'], 1, 72)
    x = pool(x)
    x = conv(x, params['w7'], params['b7'], 1, 96)
    x = pool(x)                                                 # (N, 3, 3, 64)
    flat = x.reshape(x.shape[0], -1)                            # NHWC flatten
    logits = jnp.dot(flat.astype(BF16), params['wfc'],
                     preferred_element_type=F32) + params['bfc']
    return jax.nn.log_softmax(logits, axis=-1)


# ---------------------------------------------------------------------------
if __name__ == "__main__":
    key = jax.random.PRNGKey(0)
    k_params, k_x = jax.random.split(key)

    params = init_params(k_params)
    # 24x24 input so that three 2x2 pools give the 3x3 map feeding Linear(64*3*3, 128).
    # Batch 12 exercises the ragged-batch padding path (pads to 16, tb=8, grid=2).
    x = jax.random.normal(k_x, (12, 1, 24, 24), F32)

    fwd = jax.jit(danet_forward)
    out = jax.block_until_ready(fwd(x, params))
    assert out.shape == (12, 128), out.shape

    # log-softmax rows must exponentiate-sum to 1
    row_sums = jnp.exp(out).sum(axis=1)
    assert bool(jnp.all(jnp.abs(row_sums - 1.0) < 1e-4)), row_sums

    # cross-check against a pure-XLA reference using the same dtype strategy
    ref = jax.block_until_ready(jax.jit(danet_reference)(x, params))
    err = float(jnp.max(jnp.abs(out - ref)))
    assert err < 5e-2, err

    print("KERNEL_OK")
</pallas_src>

<mosaic_0001>
module attributes {stable_mosaic.version = 11 : i64} {
  func.func @_danet_kernel(%arg0: i32, %arg1: memref<800x8xf32, #tpu.memory_space<vmem>>, %arg2: memref<1x48xf32, #tpu.memory_space<vmem>>, %arg3: memref<1x48xf32, #tpu.memory_space<vmem>>, %arg4: memref<48x48xbf16, #tpu.memory_space<vmem>>, %arg5: memref<1x48xf32, #tpu.memory_space<vmem>>, %arg6: memref<48x48xbf16, #tpu.memory_space<vmem>>, %arg7: memref<1x48xf32, #tpu.memory_space<vmem>>, %arg8: memref<432x72xbf16, #tpu.memory_space<vmem>>, %arg9: memref<1x72xf32, #tpu.memory_space<vmem>>, %arg10: memref<72x72xbf16, #tpu.memory_space<vmem>>, %arg11: memref<1x72xf32, #tpu.memory_space<vmem>>, %arg12: memref<72x72xbf16, #tpu.memory_space<vmem>>, %arg13: memref<1x72xf32, #tpu.memory_space<vmem>>, %arg14: memref<72x96xbf16, #tpu.memory_space<vmem>>, %arg15: memref<1x96xf32, #tpu.memory_space<vmem>>, %arg16: memref<96x64xbf16, #tpu.memory_space<vmem>>, %arg17: memref<1x64xf32, #tpu.memory_space<vmem>>, %arg18: memref<576x128xbf16, #tpu.memory_space<vmem>>, %arg19: memref<1x128xf32, #tpu.memory_space<vmem>>, %arg20: memref<8x128xf32, #tpu.memory_space<vmem>>, %arg21: memref<800x1xf32, #tpu.memory_space<vmem>>, %arg22: memref<6480x48xf32, #tpu.memory_space<vmem>>, %arg23: memref<6400x72xf32, #tpu.memory_space<vmem>>, %arg24: memref<288x72xf32, #tpu.memory_space<vmem>>, %arg25: memref<1152x72xf32, #tpu.memory_space<vmem>>, %arg26: memref<1152x96xf32, #tpu.memory_space<vmem>>, %arg27: memref<72x96xf32, #tpu.memory_space<vmem>>, %arg28: memref<288x96xf32, #tpu.memory_space<vmem>>, %arg29: memref<288x64xf32, #tpu.memory_space<vmem>>, %arg30: memref<18x64xf32, #tpu.memory_space<vmem>>, %arg31: memref<72x64xf32, #tpu.memory_space<vmem>>) attributes {dimension_semantics = [#tpu.dimension_semantics<parallel>], iteration_bounds = array<i64: 2>, scalar_prefetch = 0 : i64, scratch_operands = 11 : i64, tpu.core_type = #tpu.core_type<tc>, window_params = [{transform_indices = @transform_0, window_bounds = array<i64: 800, 8>}, {pipeline_mode = #tpu.pipeline_mode<synchronous>, transform_indices = @transform_1, window_bounds = array<i64: 1, 48>}, {pipeline_mode = #tpu.pipeline_mode<synchronous>, transform_indices = @transform_2, window_bounds = array<i64: 1, 48>}, {pipeline_mode = #tpu.pipeline_mode<synchronous>, transform_indices = @transform_3, window_bounds = array<i64: 48, 48>}, {pipeline_mode = #tpu.pipeline_mode<synchronous>, transform_indices = @transform_4, window_bounds = array<i64: 1, 48>}, {pipeline_mode = #tpu.pipeline_mode<synchronous>, transform_indices = @transform_5, window_bounds = array<i64: 48, 48>}, {pipeline_mode = #tpu.pipeline_mode<synchronous>, transform_indices = @transform_6, window_bounds = array<i64: 1, 48>}, {pipeline_mode = #tpu.pipeline_mode<synchronous>, transform_indices = @transform_7, window_bounds = array<i64: 432, 72>}, {pipeline_mode = #tpu.pipeline_mode<synchronous>, transform_indices = @transform_8, window_bounds = array<i64: 1, 72>}, {pipeline_mode = #tpu.pipeline_mode<synchronous>, transform_indices = @transform_9, window_bounds = array<i64: 72, 72>}, {pipeline_mode = #tpu.pipeline_mode<synchronous>, transform_indices = @transform_10, window_bounds = array<i64: 1, 72>}, {pipeline_mode = #tpu.pipeline_mode<synchronous>, transform_indices = @transform_11, window_bounds = array<i64: 72, 72>}, {pipeline_mode = #tpu.pipeline_mode<synchronous>, transform_indices = @transform_12, window_bounds = array<i64: 1, 72>}, {pipeline_mode = #tpu.pipeline_mode<synchronous>, transform_indices = @transform_13, window_bounds = array<i64: 72, 96>}, {pipeline_mode = #tpu.pipeline_mode<synchronous>, transform_indices = @transform_14, window_bounds = array<i64: 1, 96>}, {pipeline_mode = #tpu.pipeline_mode<synchronous>, transform_indices = @transform_15, window_bounds = array<i64: 96, 64>}, {pipeline_mode = #tpu.pipeline_mode<synchronous>, transform_indices = @transform_16, window_bounds = array<i64: 1, 64>}, {pipeline_mode = #tpu.pipeline_mode<synchronous>, transform_indices = @transform_17, window_bounds = array<i64: 576, 128>}, {pipeline_mode = #tpu.pipeline_mode<synchronous>, transform_indices = @transform_18, window_bounds = array<i64: 1, 128>}, {transform_indices = @transform_19, window_bounds = array<i64: 8, 128>}]} {
    %c0_i32 = arith.constant 0 : i32
    %c5_i32 = arith.constant 5 : i32
    %0 = arith.addi %c0_i32, %c5_i32 : i32
    %c1_i32 = arith.constant 1 : i32
    scf.for %arg32 = %c0_i32 to %0 step %c1_i32  : i32 {
      %c160_i32 = arith.constant 160 : i32
      %79 = arith.muli %arg32, %c160_i32 : i32
      %80 = tpu.assume_multiple %79, 8 : i32
      %81 = tpu.iota {dimensions = array<i32: 0>} : vector<160x1xi32>
      %82 = vector.broadcast %80 : i32 to vector<160x1xi32>
      %83 = arith.addi %81, %82 : vector<160x1xi32>
      %c32_i32 = arith.constant 32 : i32
      %84 = vector.broadcast %c32_i32 : i32 to vector<160x1xi32>
      %85 = arith.cmpi sge, %83, %84 : vector<160x1xi32>
      %c31_i32 = arith.constant 31 : i32
      %86 = vector.broadcast %c31_i32 : i32 to vector<160x1xi32>
      %87 = arith.andi %83, %86 : vector<160x1xi32>
      %c24_i32 = arith.constant 24 : i32
      %88 = vector.broadcast %c24_i32 : i32 to vector<160x1xi32>
      %89 = arith.cmpi slt, %87, %88 : vector<160x1xi32>
      %90 = arith.andi %85, %89 : vector<160x1xi1>
      %91 = arith.extui %90 : vector<160x1xi1> to vector<160x1xi32>
      %92 = arith.sitofp %91 : vector<160x1xi32> to vector<160x1xf32>
      %93 = arith.index_cast %80 : i32 to index
      %c0_93 = arith.constant 0 : index
      %94 = vector.load %arg21[%93, %c0_93] : memref<800x1xf32, #tpu.memory_space<vmem>>, vector<160x1xf32>
      tpu.vector_store %arg21[%93, %c0_93], %92 {strides = array<i32>} : memref<800x1xf32, #tpu.memory_space<vmem>>, vector<160x1xf32>,
    }
    %c5_i32_0 = arith.constant 5 : i32
    %cst = arith.constant 0.000000e+00 : f32
    %1 = vector.broadcast %cst : f32 to vector<40x48xf32>
    %c0 = arith.constant 0 : index
    %c0_1 = arith.constant 0 : index
    %2 = vector.load %arg22[%c0, %c0_1] : memref<6480x48xf32, #tpu.memory_space<vmem>>, vector<40x48xf32>
    tpu.vector_store %arg22[%c0, %c0_1], %1 {strides = array<i32>} : memref<6480x48xf32, #tpu.memory_space<vmem>>, vector<40x48xf32>,
    %cst_2 = arith.constant 0.000000e+00 : f32
    %3 = vector.broadcast %cst_2 : f32 to vector<40x48xf32>
    %c6440 = arith.constant 6440 : index
    %c0_3 = arith.constant 0 : index
    %4 = vector.load %arg22[%c6440, %c0_3] : memref<6480x48xf32, #tpu.memory_space<vmem>>, vector<40x48xf32>
    tpu.vector_store %arg22[%c6440, %c0_3], %3 {strides = array<i32>} : memref<6480x48xf32, #tpu.memory_space<vmem>>, vector<40x48xf32>,
    %c0_i32_4 = arith.constant 0 : i32
    %c5_i32_5 = arith.constant 5 : i32
    %5 = arith.addi %c0_i32_4, %c5_i32_5 : i32
    %c1_i32_6 = arith.constant 1 : i32
    scf.for %arg32 = %c0_i32_4 to %5 step %c1_i32_6  : i32 {
      %c160_i32 = arith.constant 160 : i32
      %79 = arith.muli %arg32, %c160_i32 : i32
      %80 = tpu.assume_multiple %79, 8 : i32
      %81 = arith.index_cast %80 : i32 to index
      %c0_93 = arith.constant 0 : index
      %82 = vector.load %arg1[%81, %c0_93] : memref<800x8xf32, #tpu.memory_space<vmem>>, vector<160x1xf32>
      %c0_94 = arith.constant 0 : index
      %c0_95 = arith.constant 0 : index
      %83 = vector.load %arg2[%c0_94, %c0_95] : memref<1x48xf32, #tpu.memory_space<vmem>>, vector<1x48xf32>
      %84 = vector.broadcast %82 : vector<160x1xf32> to vector<160x48xf32>
      %85 = vector.broadcast %83 : vector<1x48xf32> to vector<160x48xf32>
      %86 = arith.mulf %84, %85 : vector<160x48xf32>
      %c0_96 = arith.constant 0 : index
      %c0_97 = arith.constant 0 : index
      %87 = vector.load %arg3[%c0_96, %c0_97] : memref<1x48xf32, #tpu.memory_space<vmem>>, vector<1x48xf32>
      %88 = vector.broadcast %87 : vector<1x48xf32> to vector<160x48xf32>
      %89 = arith.addf %86, %88 : vector<160x48xf32>
      %cst_98 = arith.constant 0.000000e+00 : f32
      %90 = vector.broadcast %cst_98 : f32 to vector<160x48xf32>
      %91 = arith.maximumf %89, %90 : vector<160x48xf32>
      %92 = arith.truncf %91 : vector<160x48xf32> to vector<160x48xbf16>
      %c0_99 = arith.constant 0 : index
      %c0_100 = arith.constant 0 : index
      %93 = vector.load %arg4[%c0_99, %c0_100] : memref<48x48xbf16, #tpu.memory_space<vmem>>, vector<48x48xbf16>
      %cst_101 = arith.constant dense<0.000000e+00> : vector<160x48xf32>
      %94 = tpu.matmul %92, %93, %cst_101 {dimension_numbers = #tpu.dot_dimension_numbers<[1], [0], [0], [1], [0, 0, 1, 1], [], []>} : vector<160x48xbf16>, vector<48x48xbf16>, vector<160x48xf32> -> vector<160x48xf32>
      %c0_102 = arith.constant 0 : index
      %c0_103 = arith.constant 0 : index
      %95 = vector.load %arg5[%c0_102, %c0_103] : memref<1x48xf32, #tpu.memory_space<vmem>>, vector<1x48xf32>
      %96 = vector.broadcast %95 : vector<1x48xf32> to vector<160x48xf32>
      %97 = arith.addf %94, %96 : vector<160x48xf32>
      %cst_104 = arith.constant 0.000000e+00 : f32
      %98 = vector.broadcast %cst_104 : f32 to vector<160x48xf32>
      %99 = arith.maximumf %97, %98 : vector<160x48xf32>
      %100 = arith.truncf %99 : vector<160x48xf32> to vector<160x48xbf16>
      %c0_105 = arith.constant 0 : index
      %c0_106 = arith.constant 0 : index
      %101 = vector.load %arg6[%c0_105, %c0_106] : memref<48x48xbf16, #tpu.memory_space<vmem>>, vector<48x48xbf16>
      %cst_107 = arith.constant dense<0.000000e+00> : vector<160x48xf32>
      %102 = tpu.matmul %100, %101, %cst_107 {dimension_numbers = #tpu.dot_dimension_numbers<[1], [0], [0], [1], [0, 0, 1, 1], [], []>} : vector<160x48xbf16>, vector<48x48xbf16>, vector<160x48xf32> -> vector<160x48xf32>
      %c0_108 = arith.constant 0 : index
      %c0_109 = arith.constant 0 : index
      %103 = vector.load %arg7[%c0_108, %c0_109] : memref<1x48xf32, #tpu.memory_space<vmem>>, vector<1x48xf32>
      %104 = vector.broadcast %103 : vector<1x48xf32> to vector<160x48xf32>
      %105 = arith.addf %102, %104 : vector<160x48xf32>
      %cst_110 = arith.constant 0.000000e+00 : f32
      %106 = vector.broadcast %cst_110 : f32 to vector<160x48xf32>
      %107 = arith.maximumf %105, %106 : vector<160x48xf32>
      %108 = arith.index_cast %80 : i32 to index
      %c0_111 = arith.constant 0 : index
      %109 = vector.load %arg21[%108, %c0_111] : memref<800x1xf32, #tpu.memory_space<vmem>>, vector<160x1xf32>
      %110 = vector.broadcast %109 : vector<160x1xf32> to vector<160x48xf32>
      %111 = arith.mulf %107, %110 : vector<160x48xf32>
      %c40_i32_112 = arith.constant 40 : i32
      %112 = arith.addi %c40_i32_112, %80 : i32
      %113 = arith.index_cast %112 : i32 to index
      %c0_113 = arith.constant 0 : index
      %114 = vector.load %arg22[%113, %c0_113] : memref<6480x48xf32, #tpu.memory_space<vmem>>, vector<160x48xf32>
      tpu.vector_store %arg22[%113, %c0_113], %111 {strides = array<i32>} : memref<6480x48xf32, #tpu.memory_space<vmem>>, vector<160x48xf32>,
    }
    %c5_i32_7 = arith.constant 5 : i32
    %c0_i32_8 = arith.constant 0 : i32
    %c5_i32_9 = arith.constant 5 : i32
    %6 = arith.addi %c0_i32_8, %c5_i32_9 : i32
    %c1_i32_10 = arith.constant 1 : i32
    scf.for %arg32 = %c0_i32_8 to %6 step %c1_i32_10  : i32 {
      %c160_i32 = arith.constant 160 : i32
      %79 = arith.muli %arg32, %c160_i32 : i32
      %80 = tpu.assume_multiple %79, 8 : i32
      %81 = arith.index_cast %80 : i32 to index
      %c1_93 = arith.constant 1 : index
      %82 = vector.load %arg1[%81, %c1_93] : memref<800x8xf32, #tpu.memory_space<vmem>>, vector<160x1xf32>
      %c0_94 = arith.constant 0 : index
      %c0_95 = arith.constant 0 : index
      %83 = vector.load %arg2[%c0_94, %c0_95] : memref<1x48xf32, #tpu.memory_space<vmem>>, vector<1x48xf32>
      %84 = vector.broadcast %82 : vector<160x1xf32> to vector<160x48xf32>
      %85 = vector.broadcast %83 : vector<1x48xf32> to vector<160x48xf32>
      %86 = arith.mulf %84, %85 : vector<160x48xf32>
      %c0_96 = arith.constant 0 : index
      %c0_97 = arith.constant 0 : index
      %87 = vector.load %arg3[%c0_96, %c0_97] : memref<1x48xf32, #tpu.memory_space<vmem>>, vector<1x48xf32>
      %88 = vector.broadcast %87 : vector<1x48xf32> to vector<160x48xf32>
      %89 = arith.addf %86, %88 : vector<160x48xf32>
      %cst_98 = arith.constant 0.000000e+00 : f32
      %90 = vector.broadcast %cst_98 : f32 to vector<160x48xf32>
      %91 = arith.maximumf %89, %90 : vector<160x48xf32>
      %92 = arith.truncf %91 : vector<160x48xf32> to vector<160x48xbf16>
      %c0_99 = arith.constant 0 : index
      %c0_100 = arith.constant 0 : index
      %93 = vector.load %arg4[%c0_99, %c0_100] : memref<48x48xbf16, #tpu.memory_space<vmem>>, vector<48x48xbf16>
      %cst_101 = arith.constant dense<0.000000e+00> : vector<160x48xf32>
      %94 = tpu.matmul %92, %93, %cst_101 {dimension_numbers = #tpu.dot_dimension_numbers<[1], [0], [0], [1], [0, 0, 1, 1], [], []>} : vector<160x48xbf16>, vector<48x48xbf16>, vector<160x48xf32> -> vector<160x48xf32>
      %c0_102 = arith.constant 0 : index
      %c0_103 = arith.constant 0 : index
      %95 = vector.load %arg5[%c0_102, %c0_103] : memref<1x48xf32, #tpu.memory_space<vmem>>, vector<1x48xf32>
      %96 = vector.broadcast %95 : vector<1x48xf32> to vector<160x48xf32>
      %97 = arith.addf %94, %96 : vector<160x48xf32>
      %cst_104 = arith.constant 0.000000e+00 : f32
      %98 = vector.broadcast %cst_104 : f32 to vector<160x48xf32>
      %99 = arith.maximumf %97, %98 : vector<160x48xf32>
      %100 = arith.truncf %99 : vector<160x48xf32> to vector<160x48xbf16>
      %c0_105 = arith.constant 0 : index
      %c0_106 = arith.constant 0 : index
      %101 = vector.load %arg6[%c0_105, %c0_106] : memref<48x48xbf16, #tpu.memory_space<vmem>>, vector<48x48xbf16>
      %cst_107 = arith.constant dense<0.000000e+00> : vector<160x48xf32>
      %102 = tpu.matmul %100, %101, %cst_107 {dimension_numbers = #tpu.dot_dimension_numbers<[1], [0], [0], [1], [0, 0, 1, 1], [], []>} : vector<160x48xbf16>, vector<48x48xbf16>, vector<160x48xf32> -> vector<160x48xf32>
      %c0_108 = arith.constant 0 : index
      %c0_109 = arith.constant 0 : index
      %103 = vector.load %arg7[%c0_108, %c0_109] : memref<1x48xf32, #tpu.memory_space<vmem>>, vector<1x48xf32>
      %104 = vector.broadcast %103 : vector<1x48xf32> to vector<160x48xf32>
      %105 = arith.addf %102, %104 : vector<160x48xf32>
      %cst_110 = arith.constant 0.000000e+00 : f32
      %106 = vector.broadcast %cst_110 : f32 to vector<160x48xf32>
      %107 = arith.maximumf %105, %106 : vector<160x48xf32>
      %108 = arith.index_cast %80 : i32 to index
      %c0_111 = arith.constant 0 : index
      %109 = vector.load %arg21[%108, %c0_111] : memref<800x1xf32, #tpu.memory_space<vmem>>, vector<160x1xf32>
      %110 = vector.broadcast %109 : vector<160x1xf32> to vector<160x48xf32>
      %111 = arith.mulf %107, %110 : vector<160x48xf32>
      %c840_i32 = arith.constant 840 : i32
      %112 = arith.addi %c840_i32, %80 : i32
      %113 = arith.index_cast %112 : i32 to index
      %c0_112 = arith.constant 0 : index
      %114 = vector.load %arg22[%113, %c0_112] : memref<6480x48xf32, #tpu.memory_space<vmem>>, vector<160x48xf32>
      tpu.vector_store %arg22[%113, %c0_112], %111 {strides = array<i32>} : memref<6480x48xf32, #tpu.memory_space<vmem>>, vector<160x48xf32>,
    }
    %c5_i32_11 = arith.constant 5 : i32
    %c0_i32_12 = arith.constant 0 : i32
    %c5_i32_13 = arith.constant 5 : i32
    %7 = arith.addi %c0_i32_12, %c5_i32_13 : i32
    %c1_i32_14 = arith.constant 1 : i32
    scf.for %arg32 = %c0_i32_12 to %7 step %c1_i32_14  : i32 {
      %c160_i32 = arith.constant 160 : i32
      %79 = arith.muli %arg32, %c160_i32 : i32
      %80 = tpu.assume_multiple %79, 8 : i32
      %81 = arith.index_cast %80 : i32 to index
      %c2_93 = arith.constant 2 : index
      %82 = vector.load %arg1[%81, %c2_93] : memref<800x8xf32, #tpu.memory_space<vmem>>, vector<160x1xf32>
      %c0_94 = arith.constant 0 : index
      %c0_95 = arith.constant 0 : index
      %83 = vector.load %arg2[%c0_94, %c0_95] : memref<1x48xf32, #tpu.memory_space<vmem>>, vector<1x48xf32>
      %84 = vector.broadcast %82 : vector<160x1xf32> to vector<160x48xf32>
      %85 = vector.broadcast %83 : vector<1x48xf32> to vector<160x48xf32>
      %86 = arith.mulf %84, %85 : vector<160x48xf32>
      %c0_96 = arith.constant 0 : index
      %c0_97 = arith.constant 0 : index
      %87 = vector.load %arg3[%c0_96, %c0_97] : memref<1x48xf32, #tpu.memory_space<vmem>>, vector<1x48xf32>
      %88 = vector.broadcast %87 : vector<1x48xf32> to vector<160x48xf32>
      %89 = arith.addf %86, %88 : vector<160x48xf32>
      %cst_98 = arith.constant 0.000000e+00 : f32
      %90 = vector.broadcast %cst_98 : f32 to vector<160x48xf32>
      %91 = arith.maximumf %89, %90 : vector<160x48xf32>
      %92 = arith.truncf %91 : vector<160x48xf32> to vector<160x48xbf16>
      %c0_99 = arith.constant 0 : index
      %c0_100 = arith.constant 0 : index
      %93 = vector.load %arg4[%c0_99, %c0_100] : memref<48x48xbf16, #tpu.memory_space<vmem>>, vector<48x48xbf16>
      %cst_101 = arith.constant dense<0.000000e+00> : vector<160x48xf32>
      %94 = tpu.matmul %92, %93, %cst_101 {dimension_numbers = #tpu.dot_dimension_numbers<[1], [0], [0], [1], [0, 0, 1, 1], [], []>} : vector<160x48xbf16>, vector<48x48xbf16>, vector<160x48xf32> -> vector<160x48xf32>
      %c0_102 = arith.constant 0 : index
      %c0_103 = arith.constant 0 : index
      %95 = vector.load %arg5[%c0_102, %c0_103] : memref<1x48xf32, #tpu.memory_space<vmem>>, vector<1x48xf32>
      %96 = vector.broadcast %95 : vector<1x48xf32> to vector<160x48xf32>
      %97 = arith.addf %94, %96 : vector<160x48xf32>
      %cst_104 = arith.constant 0.000000e+00 : f32
      %98 = vector.broadcast %cst_104 : f32 to vector<160x48xf32>
      %99 = arith.maximumf %97, %98 : vector<160x48xf32>
      %100 = arith.truncf %99 : vector<160x48xf32> to vector<160x48xbf16>
      %c0_105 = arith.constant 0 : index
      %c0_106 = arith.constant 0 : index
      %101 = vector.load %arg6[%c0_105, %c0_106] : memref<48x48xbf16, #tpu.memory_space<vmem>>, vector<48x48xbf16>
      %cst_107 = arith.constant dense<0.000000e+00> : vector<160x48xf32>
      %102 = tpu.matmul %100, %101, %cst_107 {dimension_numbers = #tpu.dot_dimension_numbers<[1], [0], [0], [1], [0, 0, 1, 1], [], []>} : vector<160x48xbf16>, vector<48x48xbf16>, vector<160x48xf32> -> vector<160x48xf32>
      %c0_108 = arith.constant 0 : index
      %c0_109 = arith.constant 0 : index
      %103 = vector.load %arg7[%c0_108, %c0_109] : memref<1x48xf32, #tpu.memory_space<vmem>>, vector<1x48xf32>
      %104 = vector.broadcast %103 : vector<1x48xf32> to vector<160x48xf32>
      %105 = arith.addf %102, %104 : vector<160x48xf32>
      %cst_110 = arith.constant 0.000000e+00 : f32
      %106 = vector.broadcast %cst_110 : f32 to vector<160x48xf32>
      %107 = arith.maximumf %105, %106 : vector<160x48xf32>
      %108 = arith.index_cast %80 : i32 to index
      %c0_111 = arith.constant 0 : index
      %109 = vector.load %arg21[%108, %c0_111] : memref<800x1xf32, #tpu.memory_space<vmem>>, vector<160x1xf32>
      %110 = vector.broadcast %109 : vector<160x1xf32> to vector<160x48xf32>
      %111 = arith.mulf %107, %110 : vector<160x48xf32>
      %c1640_i32 = arith.constant 1640 : i32
      %112 = arith.addi %c1640_i32, %80 : i32
      %113 = arith.index_cast %112 : i32 to index
      %c0_112 = arith.constant 0 : index
      %114 = vector.load %arg22[%113, %c0_112] : memref<6480x48xf32, #tpu.memory_space<vmem>>, vector<160x48xf32>
      tpu.vector_store %arg22[%113, %c0_112], %111 {strides = array<i32>} : memref<6480x48xf32, #tpu.memory_space<vmem>>, vector<160x48xf32>,
    }
    %c5_i32_15 = arith.constant 5 : i32
    %c0_i32_16 = arith.constant 0 : i32
    %c5_i32_17 = arith.constant 5 : i32
    %8 = arith.addi %c0_i32_16, %c5_i32_17 : i32
    %c1_i32_18 = arith.constant 1 : i32
    scf.for %arg32 = %c0_i32_16 to %8 step %c1_i32_18  : i32 {
      %c160_i32 = arith.constant 160 : i32
      %79 = arith.muli %arg32, %c160_i32 : i32
      %80 = tpu.assume_multiple %79, 8 : i32
      %81 = arith.index_cast %80 : i32 to index
      %c3_93 = arith.constant 3 : index
      %82 = vector.load %arg1[%81, %c3_93] : memref<800x8xf32, #tpu.memory_space<vmem>>, vector<160x1xf32>
      %c0_94 = arith.constant 0 : index
      %c0_95 = arith.constant 0 : index
      %83 = vector.load %arg2[%c0_94, %c0_95] : memref<1x48xf32, #tpu.memory_space<vmem>>, vector<1x48xf32>
      %84 = vector.broadcast %82 : vector<160x1xf32> to vector<160x48xf32>
      %85 = vector.broadcast %83 : vector<1x48xf32> to vector<160x48xf32>
      %86 = arith.mulf %84, %85 : vector<160x48xf32>
      %c0_96 = arith.constant 0 : index
      %c0_97 = arith.constant 0 : index
      %87 = vector.load %arg3[%c0_96, %c0_97] : memref<1x48xf32, #tpu.memory_space<vmem>>, vector<1x48xf32>
      %88 = vector.broadcast %87 : vector<1x48xf32> to vector<160x48xf32>
      %89 = arith.addf %86, %88 : vector<160x48xf32>
      %cst_98 = arith.constant 0.000000e+00 : f32
      %90 = vector.broadcast %cst_98 : f32 to vector<160x48xf32>
      %91 = arith.maximumf %89, %90 : vector<160x48xf32>
      %92 = arith.truncf %91 : vector<160x48xf32> to vector<160x48xbf16>
      %c0_99 = arith.constant 0 : index
      %c0_100 = arith.constant 0 : index
      %93 = vector.load %arg4[%c0_99, %c0_100] : memref<48x48xbf16, #tpu.memory_space<vmem>>, vector<48x48xbf16>
      %cst_101 = arith.constant dense<0.000000e+00> : vector<160x48xf32>
      %94 = tpu.matmul %92, %93, %cst_101 {dimension_numbers = #tpu.dot_dimension_numbers<[1], [0], [0], [1], [0, 0, 1, 1], [], []>} : vector<160x48xbf16>, vector<48x48xbf16>, vector<160x48xf32> -> vector<160x48xf32>
      %c0_102 = arith.constant 0 : index
      %c0_103 = arith.constant 0 : index
      %95 = vector.load %arg5[%c0_102, %c0_103] : memref<1x48xf32, #tpu.memory_space<vmem>>, vector<1x48xf32>
      %96 = vector.broadcast %95 : vector<1x48xf32> to vector<160x48xf32>
      %97 = arith.addf %94, %96 : vector<160x48xf32>
      %cst_104 = arith.constant 0.000000e+00 : f32
      %98 = vector.broadcast %cst_104 : f32 to vector<160x48xf32>
      %99 = arith.maximumf %97, %98 : vector<160x48xf32>
      %100 = arith.truncf %99 : vector<160x48xf32> to vector<160x48xbf16>
      %c0_105 = arith.constant 0 : index
      %c0_106 = arith.constant 0 : index
      %101 = vector.load %arg6[%c0_105, %c0_106] : memref<48x48xbf16, #tpu.memory_space<vmem>>, vector<48x48xbf16>
      %cst_107 = arith.constant dense<0.000000e+00> : vector<160x48xf32>
      %102 = tpu.matmul %100, %101, %cst_107 {dimension_numbers = #tpu.dot_dimension_numbers<[1], [0], [0], [1], [0, 0, 1, 1], [], []>} : vector<160x48xbf16>, vector<48x48xbf16>, vector<160x48xf32> -> vector<160x48xf32>
      %c0_108 = arith.constant 0 : index
      %c0_109 = arith.constant 0 : index
      %103 = vector.load %arg7[%c0_108, %c0_109] : memref<1x48xf32, #tpu.memory_space<vmem>>, vector<1x48xf32>
      %104 = vector.broadcast %103 : vector<1x48xf32> to vector<160x48xf32>
      %105 = arith.addf %102, %104 : vector<160x48xf32>
      %cst_110 = arith.constant 0.000000e+00 : f32
      %106 = vector.broadcast %cst_110 : f32 to vector<160x48xf32>
      %107 = arith.maximumf %105, %106 : vector<160x48xf32>
      %108 = arith.index_cast %80 : i32 to index
      %c0_111 = arith.constant 0 : index
      %109 = vector.load %arg21[%108, %c0_111] : memref<800x1xf32, #tpu.memory_space<vmem>>, vector<160x1xf32>
      %110 = vector.broadcast %109 : vector<160x1xf32> to vector<160x48xf32>
      %111 = arith.mulf %107, %110 : vector<160x48xf32>
      %c2440_i32 = arith.constant 2440 : i32
      %112 = arith.addi %c2440_i32, %80 : i32
      %113 = arith.index_cast %112 : i32 to index
      %c0_112 = arith.constant 0 : index
      %114 = vector.load %arg22[%113, %c0_112] : memref<6480x48xf32, #tpu.memory_space<vmem>>, vector<160x48xf32>
      tpu.vector_store %arg22[%113, %c0_112], %111 {strides = array<i32>} : memref<6480x48xf32, #tpu.memory_space<vmem>>, vector<160x48xf32>,
    }
    %c5_i32_19 = arith.constant 5 : i32
    %c0_i32_20 = arith.constant 0 : i32
    %c5_i32_21 = arith.constant 5 : i32
    %9 = arith.addi %c0_i32_20, %c5_i32_21 : i32
    %c1_i32_22 = arith.constant 1 : i32
    scf.for %arg32 = %c0_i32_20 to %9 step %c1_i32_22  : i32 {
      %c160_i32 = arith.constant 160 : i32
      %79 = arith.muli %arg32, %c160_i32 : i32
      %80 = tpu.assume_multiple %79, 8 : i32
      %81 = arith.index_cast %80 : i32 to index
      %c4_93 = arith.constant 4 : index
      %82 = vector.load %arg1[%81, %c4_93] : memref<800x8xf32, #tpu.memory_space<vmem>>, vector<160x1xf32>
      %c0_94 = arith.constant 0 : index
      %c0_95 = arith.constant 0 : index
      %83 = vector.load %arg2[%c0_94, %c0_95] : memref<1x48xf32, #tpu.memory_space<vmem>>, vector<1x48xf32>
      %84 = vector.broadcast %82 : vector<160x1xf32> to vector<160x48xf32>
      %85 = vector.broadcast %83 : vector<1x48xf32> to vector<160x48xf32>
      %86 = arith.mulf %84, %85 : vector<160x48xf32>
      %c0_96 = arith.constant 0 : index
      %c0_97 = arith.constant 0 : index
      %87 = vector.load %arg3[%c0_96, %c0_97] : memref<1x48xf32, #tpu.memory_space<vmem>>, vector<1x48xf32>
      %88 = vector.broadcast %87 : vector<1x48xf32> to vector<160x48xf32>
      %89 = arith.addf %86, %88 : vector<160x48xf32>
      %cst_98 = arith.constant 0.000000e+00 : f32
      %90 = vector.broadcast %cst_98 : f32 to vector<160x48xf32>
      %91 = arith.maximumf %89, %90 : vector<160x48xf32>
      %92 = arith.truncf %91 : vector<160x48xf32> to vector<160x48xbf16>
      %c0_99 = arith.constant 0 : index
      %c0_100 = arith.constant 0 : index
      %93 = vector.load %arg4[%c0_99, %c0_100] : memref<48x48xbf16, #tpu.memory_space<vmem>>, vector<48x48xbf16>
      %cst_101 = arith.constant dense<0.000000e+00> : vector<160x48xf32>
      %94 = tpu.matmul %92, %93, %cst_101 {dimension_numbers = #tpu.dot_dimension_numbers<[1], [0], [0], [1], [0, 0, 1, 1], [], []>} : vector<160x48xbf16>, vector<48x48xbf16>, vector<160x48xf32> -> vector<160x48xf32>
      %c0_102 = arith.constant 0 : index
      %c0_103 = arith.constant 0 : index
      %95 = vector.load %arg5[%c0_102, %c0_103] : memref<1x48xf32, #tpu.memory_space<vmem>>, vector<1x48xf32>
      %96 = vector.broadcast %95 : vector<1x48xf32> to vector<160x48xf32>
      %97 = arith.addf %94, %96 : vector<160x48xf32>
      %cst_104 = arith.constant 0.000000e+00 : f32
      %98 = vector.broadcast %cst_104 : f32 to vector<160x48xf32>
      %99 = arith.maximumf %97, %98 : vector<160x48xf32>
      %100 = arith.truncf %99 : vector<160x48xf32> to vector<160x48xbf16>
      %c0_105 = arith.constant 0 : index
      %c0_106 = arith.constant 0 : index
      %101 = vector.load %arg6[%c0_105, %c0_106] : memref<48x48xbf16, #tpu.memory_space<vmem>>, vector<48x48xbf16>
      %cst_107 = arith.constant dense<0.000000e+00> : vector<160x48xf32>
      %102 = tpu.matmul %100, %101, %cst_107 {dimension_numbers = #tpu.dot_dimension_numbers<[1], [0], [0], [1], [0, 0, 1, 1], [], []>} : vector<160x48xbf16>, vector<48x48xbf16>, vector<160x48xf32> -> vector<160x48xf32>
      %c0_108 = arith.constant 0 : index
      %c0_109 = arith.constant 0 : index
      %103 = vector.load %arg7[%c0_108, %c0_109] : memref<1x48xf32, #tpu.memory_space<vmem>>, vector<1x48xf32>
      %104 = vector.broadcast %103 : vector<1x48xf32> to vector<160x48xf32>
      %105 = arith.addf %102, %104 : vector<160x48xf32>
      %cst_110 = arith.constant 0.000000e+00 : f32
      %106 = vector.broadcast %cst_110 : f32 to vector<160x48xf32>
      %107 = arith.maximumf %105, %106 : vector<160x48xf32>
      %108 = arith.index_cast %80 : i32 to index
      %c0_111 = arith.constant 0 : index
      %109 = vector.load %arg21[%108, %c0_111] : memref<800x1xf32, #tpu.memory_space<vmem>>, vector<160x1xf32>
      %110 = vector.broadcast %109 : vector<160x1xf32> to vector<160x48xf32>
      %111 = arith.mulf %107, %110 : vector<160x48xf32>
      %c3240_i32 = arith.constant 3240 : i32
      %112 = arith.addi %c3240_i32, %80 : i32
      %113 = arith.index_cast %112 : i32 to index
      %c0_112 = arith.constant 0 : index
      %114 = vector.load %arg22[%113, %c0_112] : memref<6480x48xf32, #tpu.memory_space<vmem>>, vector<160x48xf32>
      tpu.vector_store %arg22[%113, %c0_112], %111 {strides = array<i32>} : memref<6480x48xf32, #tpu.memory_space<vmem>>, vector<160x48xf32>,
    }
    %c5_i32_23 = arith.constant 5 : i32
    %c0_i32_24 = arith.constant 0 : i32
    %c5_i32_25 = arith.constant 5 : i32
    %10 = arith.addi %c0_i32_24, %c5_i32_25 : i32
    %c1_i32_26 = arith.constant 1 : i32
    scf.for %arg32 = %c0_i32_24 to %10 step %c1_i32_26  : i32 {
      %c160_i32 = arith.constant 160 : i32
      %79 = arith.muli %arg32, %c160_i32 : i32
      %80 = tpu.assume_multiple %79, 8 : i32
      %81 = arith.index_cast %80 : i32 to index
      %c5_93 = arith.constant 5 : index
      %82 = vector.load %arg1[%81, %c5_93] : memref<800x8xf32, #tpu.memory_space<vmem>>, vector<160x1xf32>
      %c0_94 = arith.constant 0 : index
      %c0_95 = arith.constant 0 : index
      %83 = vector.load %arg2[%c0_94, %c0_95] : memref<1x48xf32, #tpu.memory_space<vmem>>, vector<1x48xf32>
      %84 = vector.broadcast %82 : vector<160x1xf32> to vector<160x48xf32>
      %85 = vector.broadcast %83 : vector<1x48xf32> to vector<160x48xf32>
      %86 = arith.mulf %84, %85 : vector<160x48xf32>
      %c0_96 = arith.constant 0 : index
      %c0_97 = arith.constant 0 : index
      %87 = vector.load %arg3[%c0_96, %c0_97] : memref<1x48xf32, #tpu.memory_space<vmem>>, vector<1x48xf32>
      %88 = vector.broadcast %87 : vector<1x48xf32> to vector<160x48xf32>
      %89 = arith.addf %86, %88 : vector<160x48xf32>
      %cst_98 = arith.constant 0.000000e+00 : f32
      %90 = vector.broadcast %cst_98 : f32 to vector<160x48xf32>
      %91 = arith.maximumf %89, %90 : vector<160x48xf32>
      %92 = arith.truncf %91 : vector<160x48xf32> to vector<160x48xbf16>
      %c0_99 = arith.constant 0 : index
      %c0_100 = arith.constant 0 : index
      %93 = vector.load %arg4[%c0_99, %c0_100] : memref<48x48xbf16, #tpu.memory_space<vmem>>, vector<48x48xbf16>
      %cst_101 = arith.constant dense<0.000000e+00> : vector<160x48xf32>
      %94 = tpu.matmul %92, %93, %cst_101 {dimension_numbers = #tpu.dot_dimension_numbers<[1], [0], [0], [1], [0, 0, 1, 1], [], []>} : vector<160x48xbf16>, vector<48x48xbf16>, vector<160x48xf32> -> vector<160x48xf32>
      %c0_102 = arith.constant 0 : index
      %c0_103 = arith.constant 0 : index
      %95 = vector.load %arg5[%c0_102, %c0_103] : memref<1x48xf32, #tpu.memory_space<vmem>>, vector<1x48xf32>
      %96 = vector.broadcast %95 : vector<1x48xf32> to vector<160x48xf32>
      %97 = arith.addf %94, %96 : vector<160x48xf32>
      %cst_104 = arith.constant 0.000000e+00 : f32
      %98 = vector.broadcast %cst_104 : f32 to vector<160x48xf32>
      %99 = arith.maximumf %97, %98 : vector<160x48xf32>
      %100 = arith.truncf %99 : vector<160x48xf32> to vector<160x48xbf16>
      %c0_105 = arith.constant 0 : index
      %c0_106 = arith.constant 0 : index
      %101 = vector.load %arg6[%c0_105, %c0_106] : memref<48x48xbf16, #tpu.memory_space<vmem>>, vector<48x48xbf16>
      %cst_107 = arith.constant dense<0.000000e+00> : vector<160x48xf32>
      %102 = tpu.matmul %100, %101, %cst_107 {dimension_numbers = #tpu.dot_dimension_numbers<[1], [0], [0], [1], [0, 0, 1, 1], [], []>} : vector<160x48xbf16>, vector<48x48xbf16>, vector<160x48xf32> -> vector<160x48xf32>
      %c0_108 = arith.constant 0 : index
      %c0_109 = arith.constant 0 : index
      %103 = vector.load %arg7[%c0_108, %c0_109] : memref<1x48xf32, #tpu.memory_space<vmem>>, vector<1x48xf32>
      %104 = vector.broadcast %103 : vector<1x48xf32> to vector<160x48xf32>
      %105 = arith.addf %102, %104 : vector<160x48xf32>
      %cst_110 = arith.constant 0.000000e+00 : f32
      %106 = vector.broadcast %cst_110 : f32 to vector<160x48xf32>
      %107 = arith.maximumf %105, %106 : vector<160x48xf32>
      %108 = arith.index_cast %80 : i32 to index
      %c0_111 = arith.constant 0 : index
      %109 = vector.load %arg21[%108, %c0_111] : memref<800x1xf32, #tpu.memory_space<vmem>>, vector<160x1xf32>
      %110 = vector.broadcast %109 : vector<160x1xf32> to vector<160x48xf32>
      %111 = arith.mulf %107, %110 : vector<160x48xf32>
      %c4040_i32 = arith.constant 4040 : i32
      %112 = arith.addi %c4040_i32, %80 : i32
      %113 = arith.index_cast %112 : i32 to index
      %c0_112 = arith.constant 0 : index
      %114 = vector.load %arg22[%113, %c0_112] : memref<6480x48xf32, #tpu.memory_space<vmem>>, vector<160x48xf32>
      tpu.vector_store %arg22[%113, %c0_112], %111 {strides = array<i32>} : memref<6480x48xf32, #tpu.memory_space<vmem>>, vector<160x48xf32>,
    }
    %c5_i32_27 = arith.constant 5 : i32
    %c0_i32_28 = arith.constant 0 : i32
    %c5_i32_29 = arith.constant 5 : i32
    %11 = arith.addi %c0_i32_28, %c5_i32_29 : i32
    %c1_i32_30 = arith.constant 1 : i32
    scf.for %arg32 = %c0_i32_28 to %11 step %c1_i32_30  : i32 {
      %c160_i32 = arith.constant 160 : i32
      %79 = arith.muli %arg32, %c160_i32 : i32
      %80 = tpu.assume_multiple %79, 8 : i32
      %81 = arith.index_cast %80 : i32 to index
      %c6_93 = arith.constant 6 : index
      %82 = vector.load %arg1[%81, %c6_93] : memref<800x8xf32, #tpu.memory_space<vmem>>, vector<160x1xf32>
      %c0_94 = arith.constant 0 : index
      %c0_95 = arith.constant 0 : index
      %83 = vector.load %arg2[%c0_94, %c0_95] : memref<1x48xf32, #tpu.memory_space<vmem>>, vector<1x48xf32>
      %84 = vector.broadcast %82 : vector<160x1xf32> to vector<160x48xf32>
      %85 = vector.broadcast %83 : vector<1x48xf32> to vector<160x48xf32>
      %86 = arith.mulf %84, %85 : vector<160x48xf32>
      %c0_96 = arith.constant 0 : index
      %c0_97 = arith.constant 0 : index
      %87 = vector.load %arg3[%c0_96, %c0_97] : memref<1x48xf32, #tpu.memory_space<vmem>>, vector<1x48xf32>
      %88 = vector.broadcast %87 : vector<1x48xf32> to vector<160x48xf32>
      %89 = arith.addf %86, %88 : vector<160x48xf32>
      %cst_98 = arith.constant 0.000000e+00 : f32
      %90 = vector.broadcast %cst_98 : f32 to vector<160x48xf32>
      %91 = arith.maximumf %89, %90 : vector<160x48xf32>
      %92 = arith.truncf %91 : vector<160x48xf32> to vector<160x48xbf16>
      %c0_99 = arith.constant 0 : index
      %c0_100 = arith.constant 0 : index
      %93 = vector.load %arg4[%c0_99, %c0_100] : memref<48x48xbf16, #tpu.memory_space<vmem>>, vector<48x48xbf16>
      %cst_101 = arith.constant dense<0.000000e+00> : vector<160x48xf32>
      %94 = tpu.matmul %92, %93, %cst_101 {dimension_numbers = #tpu.dot_dimension_numbers<[1], [0], [0], [1], [0, 0, 1, 1], [], []>} : vector<160x48xbf16>, vector<48x48xbf16>, vector<160x48xf32> -> vector<160x48xf32>
      %c0_102 = arith.constant 0 : index
      %c0_103 = arith.constant 0 : index
      %95 = vector.load %arg5[%c0_102, %c0_103] : memref<1x48xf32, #tpu.memory_space<vmem>>, vector<1x48xf32>
      %96 = vector.broadcast %95 : vector<1x48xf32> to vector<160x48xf32>
      %97 = arith.addf %94, %96 : vector<160x48xf32>
      %cst_104 = arith.constant 0.000000e+00 : f32
      %98 = vector.broadcast %cst_104 : f32 to vector<160x48xf32>
      %99 = arith.maximumf %97, %98 : vector<160x48xf32>
      %100 = arith.truncf %99 : vector<160x48xf32> to vector<160x48xbf16>
      %c0_105 = arith.constant 0 : index
      %c0_106 = arith.constant 0 : index
      %101 = vector.load %arg6[%c0_105, %c0_106] : memref<48x48xbf16, #tpu.memory_space<vmem>>, vector<48x48xbf16>
      %cst_107 = arith.constant dense<0.000000e+00> : vector<160x48xf32>
      %102 = tpu.matmul %100, %101, %cst_107 {dimension_numbers = #tpu.dot_dimension_numbers<[1], [0], [0], [1], [0, 0, 1, 1], [], []>} : vector<160x48xbf16>, vector<48x48xbf16>, vector<160x48xf32> -> vector<160x48xf32>
      %c0_108 = arith.constant 0 : index
      %c0_109 = arith.constant 0 : index
      %103 = vector.load %arg7[%c0_108, %c0_109] : memref<1x48xf32, #tpu.memory_space<vmem>>, vector<1x48xf32>
      %104 = vector.broadcast %103 : vector<1x48xf32> to vector<160x48xf32>
      %105 = arith.addf %102, %104 : vector<160x48xf32>
      %cst_110 = arith.constant 0.000000e+00 : f32
      %106 = vector.broadcast %cst_110 : f32 to vector<160x48xf32>
      %107 = arith.maximumf %105, %106 : vector<160x48xf32>
      %108 = arith.index_cast %80 : i32 to index
      %c0_111 = arith.constant 0 : index
      %109 = vector.load %arg21[%108, %c0_111] : memref<800x1xf32, #tpu.memory_space<vmem>>, vector<160x1xf32>
      %110 = vector.broadcast %109 : vector<160x1xf32> to vector<160x48xf32>
      %111 = arith.mulf %107, %110 : vector<160x48xf32>
      %c4840_i32 = arith.constant 4840 : i32
      %112 = arith.addi %c4840_i32, %80 : i32
      %113 = arith.index_cast %112 : i32 to index
      %c0_112 = arith.constant 0 : index
      %114 = vector.load %arg22[%113, %c0_112] : memref<6480x48xf32, #tpu.memory_space<vmem>>, vector<160x48xf32>
      tpu.vector_store %arg22[%113, %c0_112], %111 {strides = array<i32>} : memref<6480x48xf32, #tpu.memory_space<vmem>>, vector<160x48xf32>,
    }
    %c5_i32_31 = arith.constant 5 : i32
    %c0_i32_32 = arith.constant 0 : i32
    %c5_i32_33 = arith.constant 5 : i32
    %12 = arith.addi %c0_i32_32, %c5_i32_33 : i32
    %c1_i32_34 = arith.constant 1 : i32
    scf.for %arg32 = %c0_i32_32 to %12 step %c1_i32_34  : i32 {
      %c160_i32 = arith.constant 160 : i32
      %79 = arith.muli %arg32, %c160_i32 : i32
      %80 = tpu.assume_multiple %79, 8 : i32
      %81 = arith.index_cast %80 : i32 to index
      %c7_93 = arith.constant 7 : index
      %82 = vector.load %arg1[%81, %c7_93] : memref<800x8xf32, #tpu.memory_space<vmem>>, vector<160x1xf32>
      %c0_94 = arith.constant 0 : index
      %c0_95 = arith.constant 0 : index
      %83 = vector.load %arg2[%c0_94, %c0_95] : memref<1x48xf32, #tpu.memory_space<vmem>>, vector<1x48xf32>
      %84 = vector.broadcast %82 : vector<160x1xf32> to vector<160x48xf32>
      %85 = vector.broadcast %83 : vector<1x48xf32> to vector<160x48xf32>
      %86 = arith.mulf %84, %85 : vector<160x48xf32>
      %c0_96 = arith.constant 0 : index
      %c0_97 = arith.constant 0 : index
      %87 = vector.load %arg3[%c0_96, %c0_97] : memref<1x48xf32, #tpu.memory_space<vmem>>, vector<1x48xf32>
      %88 = vector.broadcast %87 : vector<1x48xf32> to vector<160x48xf32>
      %89 = arith.addf %86, %88 : vector<160x48xf32>
      %cst_98 = arith.constant 0.000000e+00 : f32
      %90 = vector.broadcast %cst_98 : f32 to vector<160x48xf32>
      %91 = arith.maximumf %89, %90 : vector<160x48xf32>
      %92 = arith.truncf %91 : vector<160x48xf32> to vector<160x48xbf16>
      %c0_99 = arith.constant 0 : index
      %c0_100 = arith.constant 0 : index
      %93 = vector.load %arg4[%c0_99, %c0_100] : memref<48x48xbf16, #tpu.memory_space<vmem>>, vector<48x48xbf16>
      %cst_101 = arith.constant dense<0.000000e+00> : vector<160x48xf32>
      %94 = tpu.matmul %92, %93, %cst_101 {dimension_numbers = #tpu.dot_dimension_numbers<[1], [0], [0], [1], [0, 0, 1, 1], [], []>} : vector<160x48xbf16>, vector<48x48xbf16>, vector<160x48xf32> -> vector<160x48xf32>
      %c0_102 = arith.constant 0 : index
      %c0_103 = arith.constant 0 : index
      %95 = vector.load %arg5[%c0_102, %c0_103] : memref<1x48xf32, #tpu.memory_space<vmem>>, vector<1x48xf32>
      %96 = vector.broadcast %95 : vector<1x48xf32> to vector<160x48xf32>
      %97 = arith.addf %94, %96 : vector<160x48xf32>
      %cst_104 = arith.constant 0.000000e+00 : f32
      %98 = vector.broadcast %cst_104 : f32 to vector<160x48xf32>
      %99 = arith.maximumf %97, %98 : vector<160x48xf32>
      %100 = arith.truncf %99 : vector<160x48xf32> to vector<160x48xbf16>
      %c0_105 = arith.constant 0 : index
      %c0_106 = arith.constant 0 : index
      %101 = vector.load %arg6[%c0_105, %c0_106] : memref<48x48xbf16, #tpu.memory_space<vmem>>, vector<48x48xbf16>
      %cst_107 = arith.constant dense<0.000000e+00> : vector<160x48xf32>
      %102 = tpu.matmul %100, %101, %cst_107 {dimension_numbers = #tpu.dot_dimension_numbers<[1], [0], [0], [1], [0, 0, 1, 1], [], []>} : vector<160x48xbf16>, vector<48x48xbf16>, vector<160x48xf32> -> vector<160x48xf32>
      %c0_108 = arith.constant 0 : index
      %c0_109 = arith.constant 0 : index
      %103 = vector.load %arg7[%c0_108, %c0_109] : memref<1x48xf32, #tpu.memory_space<vmem>>, vector<1x48xf32>
      %104 = vector.broadcast %103 : vector<1x48xf32> to vector<160x48xf32>
      %105 = arith.addf %102, %104 : vector<160x48xf32>
      %cst_110 = arith.constant 0.000000e+00 : f32
      %106 = vector.broadcast %cst_110 : f32 to vector<160x48xf32>
      %107 = arith.maximumf %105, %106 : vector<160x48xf32>
      %108 = arith.index_cast %80 : i32 to index
      %c0_111 = arith.constant 0 : index
      %109 = vector.load %arg21[%108, %c0_111] : memref<800x1xf32, #tpu.memory_space<vmem>>, vector<160x1xf32>
      %110 = vector.broadcast %109 : vector<160x1xf32> to vector<160x48xf32>
      %111 = arith.mulf %107, %110 : vector<160x48xf32>
      %c5640_i32 = arith.constant 5640 : i32
      %112 = arith.addi %c5640_i32, %80 : i32
      %113 = arith.index_cast %112 : i32 to index
      %c0_112 = arith.constant 0 : index
      %114 = vector.load %arg22[%113, %c0_112] : memref<6480x48xf32, #tpu.memory_space<vmem>>, vector<160x48xf32>
      tpu.vector_store %arg22[%113, %c0_112], %111 {strides = array<i32>} : memref<6480x48xf32, #tpu.memory_space<vmem>>, vector<160x48xf32>,
    }
    %c5_i32_35 = arith.constant 5 : i32
    %c0_i32_36 = arith.constant 0 : i32
    %c40_i32 = arith.constant 40 : i32
    %13 = arith.addi %c0_i32_36, %c40_i32 : i32
    %c1_i32_37 = arith.constant 1 : i32
    scf.for %arg32 = %c0_i32_36 to %13 step %c1_i32_37  : i32 {
      %c160_i32 = arith.constant 160 : i32
      %79 = arith.muli %arg32, %c160_i32 : i32
      %80 = tpu.assume_multiple %79, 8 : i32
      %cst_93 = arith.constant 0.000000e+00 : f32
      %81 = vector.broadcast %cst_93 : f32 to vector<160x72xf32>
      %c40_i32_94 = arith.constant 40 : i32
      %82 = arith.addi %c40_i32_94, %80 : i32
      %c-33_i32 = arith.constant -33 : i32
      %83 = arith.addi %82, %c-33_i32 : i32
      %84 = arith.index_cast %83 : i32 to index
      %c0_95 = arith.constant 0 : index
      %85 = vector.load %arg22[%84, %c0_95] : memref<6480x48xf32, #tpu.memory_space<vmem>>, vector<160x48xf32>
      %86 = arith.truncf %85 : vector<160x48xf32> to vector<160x48xbf16>
      %c0_96 = arith.constant 0 : index
      %c0_97 = arith.constant 0 : index
      %87 = vector.load %arg8[%c0_96, %c0_97] : memref<432x72xbf16, #tpu.memory_space<vmem>>, vector<48x72xbf16>
      %cst_98 = arith.constant dense<0.000000e+00> : vector<160x72xf32>
      %88 = tpu.matmul %86, %87, %cst_98 {dimension_numbers = #tpu.dot_dimension_numbers<[1], [0], [0], [1], [0, 0, 1, 1], [], []>} : vector<160x48xbf16>, vector<48x72xbf16>, vector<160x72xf32> -> vector<160x72xf32>
      %89 = arith.addf %81, %88 : vector<160x72xf32>
      %c40_i32_99 = arith.constant 40 : i32
      %90 = arith.addi %c40_i32_99, %80 : i32
      %c-32_i32 = arith.constant -32 : i32
      %91 = arith.addi %90, %c-32_i32 : i32
      %92 = arith.index_cast %91 : i32 to index
      %c0_100 = arith.constant 0 : index
      %93 = vector.load %arg22[%92, %c0_100] : memref<6480x48xf32, #tpu.memory_space<vmem>>, vector<160x48xf32>
      %94 = arith.truncf %93 : vector<160x48xf32> to vector<160x48xbf16>
      %c48 = arith.constant 48 : index
      %c0_101 = arith.constant 0 : index
      %95 = vector.load %arg8[%c48, %c0_101] : memref<432x72xbf16, #tpu.memory_space<vmem>>, vector<48x72xbf16>
      %cst_102 = arith.constant dense<0.000000e+00> : vector<160x72xf32>
      %96 = tpu.matmul %94, %95, %cst_102 {dimension_numbers = #tpu.dot_dimension_numbers<[1], [0], [0], [1], [0, 0, 1, 1], [], []>} : vector<160x48xbf16>, vector<48x72xbf16>, vector<160x72xf32> -> vector<160x72xf32>
      %97 = arith.addf %89, %96 : vector<160x72xf32>
      %c40_i32_103 = arith.constant 40 : i32
      %98 = arith.addi %c40_i32_103, %80 : i32
      %c-31_i32 = arith.constant -31 : i32
      %99 = arith.addi %98, %c-31_i32 : i32
      %100 = arith.index_cast %99 : i32 to index
      %c0_104 = arith.constant 0 : index
      %101 = vector.load %arg22[%100, %c0_104] : memref<6480x48xf32, #tpu.memory_space<vmem>>, vector<160x48xf32>
      %102 = arith.truncf %101 : vector<160x48xf32> to vector<160x48xbf16>
      %c96 = arith.constant 96 : index
      %c0_105 = arith.constant 0 : index
      %103 = vector.load %arg8[%c96, %c0_105] : memref<432x72xbf16, #tpu.memory_space<vmem>>, vector<48x72xbf16>
      %cst_106 = arith.constant dense<0.000000e+00> : vector<160x72xf32>
      %104 = tpu.matmul %102, %103, %cst_106 {dimension_numbers = #tpu.dot_dimension_numbers<[1], [0], [0], [1], [0, 0, 1, 1], [], []>} : vector<160x48xbf16>, vector<48x72xbf16>, vector<160x72xf32> -> vector<160x72xf32>
      %105 = arith.addf %97, %104 : vector<160x72xf32>
      %c40_i32_107 = arith.constant 40 : i32
      %106 = arith.addi %c40_i32_107, %80 : i32
      %c-1_i32 = arith.constant -1 : i32
      %107 = arith.addi %106, %c-1_i32 : i32
      %108 = arith.index_cast %107 : i32 to index
      %c0_108 = arith.constant 0 : index
      %109 = vector.load %arg22[%108, %c0_108] : memref<6480x48xf32, #tpu.memory_space<vmem>>, vector<160x48xf32>
      %110 = arith.truncf %109 : vector<160x48xf32> to vector<160x48xbf16>
      %c144 = arith.constant 144 : index
      %c0_109 = arith.constant 0 : index
      %111 = vector.load %arg8[%c144, %c0_109] : memref<432x72xbf16, #tpu.memory_space<vmem>>, vector<48x72xbf16>
      %cst_110 = arith.constant dense<0.000000e+00> : vector<160x72xf32>
      %112 = tpu.matmul %110, %111, %cst_110 {dimension_numbers = #tpu.dot_dimension_numbers<[1], [0], [0], [1], [0, 0, 1, 1], [], []>} : vector<160x48xbf16>, vector<48x72xbf16>, vector<160x72xf32> -> vector<160x72xf32>
      %113 = arith.addf %105, %112 : vector<160x72xf32>
      %c40_i32_111 = arith.constant 40 : i32
      %114 = arith.addi %c40_i32_111, %80 : i32
      %c0_i32_112 = arith.constant 0 : i32
      %115 = arith.addi %114, %c0_i32_112 : i32
      %116 = arith.index_cast %115 : i32 to index
      %c0_113 = arith.constant 0 : index
      %117 = vector.load %arg22[%116, %c0_113] : memref<6480x48xf32, #tpu.memory_space<vmem>>, vector<160x48xf32>
      %118 = arith.truncf %117 : vector<160x48xf32> to vector<160x48xbf16>
      %c192_114 = arith.constant 192 : index
      %c0_115 = arith.constant 0 : index
      %119 = vector.load %arg8[%c192_114, %c0_115] : memref<432x72xbf16, #tpu.memory_space<vmem>>, vector<48x72xbf16>
      %cst_116 = arith.constant dense<0.000000e+00> : vector<160x72xf32>
      %120 = tpu.matmul %118, %119, %cst_116 {dimension_numbers = #tpu.dot_dimension_numbers<[1], [0], [0], [1], [0, 0, 1, 1], [], []>} : vector<160x48xbf16>, vector<48x72xbf16>, vector<160x72xf32> -> vector<160x72xf32>
      %121 = arith.addf %113, %120 : vector<160x72xf32>
      %c40_i32_117 = arith.constant 40 : i32
      %122 = arith.addi %c40_i32_117, %80 : i32
      %c1_i32_118 = arith.constant 1 : i32
      %123 = arith.addi %122, %c1_i32_118 : i32
      %124 = arith.index_cast %123 : i32 to index
      %c0_119 = arith.constant 0 : index
      %125 = vector.load %arg22[%124, %c0_119] : memref<6480x48xf32, #tpu.memory_space<vmem>>, vector<160x48xf32>
      %126 = arith.truncf %125 : vector<160x48xf32> to vector<160x48xbf16>
      %c240 = arith.constant 240 : index
      %c0_120 = arith.constant 0 : index
      %127 = vector.load %arg8[%c240, %c0_120] : memref<432x72xbf16, #tpu.memory_space<vmem>>, vector<48x72xbf16>
      %cst_121 = arith.constant dense<0.000000e+00> : vector<160x72xf32>
      %128 = tpu.matmul %126, %127, %cst_121 {dimension_numbers = #tpu.dot_dimension_numbers<[1], [0], [0], [1], [0, 0, 1, 1], [], []>} : vector<160x48xbf16>, vector<48x72xbf16>, vector<160x72xf32> -> vector<160x72xf32>
      %129 = arith.addf %121, %128 : vector<160x72xf32>
      %c40_i32_122 = arith.constant 40 : i32
      %130 = arith.addi %c40_i32_122, %80 : i32
      %c31_i32 = arith.constant 31 : i32
      %131 = arith.addi %130, %c31_i32 : i32
      %132 = arith.index_cast %131 : i32 to index
      %c0_123 = arith.constant 0 : index
      %133 = vector.load %arg22[%132, %c0_123] : memref<6480x48xf32, #tpu.memory_space<vmem>>, vector<160x48xf32>
      %134 = arith.truncf %133 : vector<160x48xf32> to vector<160x48xbf16>
      %c288 = arith.constant 288 : index
      %c0_124 = arith.constant 0 : index
      %135 = vector.load %arg8[%c288, %c0_124] : memref<432x72xbf16, #tpu.memory_space<vmem>>, vector<48x72xbf16>
      %cst_125 = arith.constant dense<0.000000e+00> : vector<160x72xf32>
      %136 = tpu.matmul %134, %135, %cst_125 {dimension_numbers = #tpu.dot_dimension_numbers<[1], [0], [0], [1], [0, 0, 1, 1], [], []>} : vector<160x48xbf16>, vector<48x72xbf16>, vector<160x72xf32> -> vector<160x72xf32>
      %137 = arith.addf %129, %136 : vector<160x72xf32>
      %c40_i32_126 = arith.constant 40 : i32
      %138 = arith.addi %c40_i32_126, %80 : i32
      %c32_i32 = arith.constant 32 : i32
      %139 = arith.addi %138, %c32_i32 : i32
      %140 = arith.index_cast %139 : i32 to index
      %c0_127 = arith.constant 0 : index
      %141 = vector.load %arg22[%140, %c0_127] : memref<6480x48xf32, #tpu.memory_space<vmem>>, vector<160x48xf32>
      %142 = arith.truncf %141 : vector<160x48xf32> to vector<160x48xbf16>
      %c336 = arith.constant 336 : index
      %c0_128 = arith.constant 0 : index
      %143 = vector.load %arg8[%c336, %c0_128] : memref<432x72xbf16, #tpu.memory_space<vmem>>, vector<48x72xbf16>
      %cst_129 = arith.constant dense<0.000000e+00> : vector<160x72xf32>
      %144 = tpu.matmul %142, %143, %cst_129 {dimension_numbers = #tpu.dot_dimension_numbers<[1], [0], [0], [1], [0, 0, 1, 1], [], []>} : vector<160x48xbf16>, vector<48x72xbf16>, vector<160x72xf32> -> vector<160x72xf32>
      %145 = arith.addf %137, %144 : vector<160x72xf32>
      %c40_i32_130 = arith.constant 40 : i32
      %146 = arith.addi %c40_i32_130, %80 : i32
      %c33_i32 = arith.constant 33 : i32
      %147 = arith.addi %146, %c33_i32 : i32
      %148 = arith.index_cast %147 : i32 to index
      %c0_131 = arith.constant 0 : index
      %149 = vector.load %arg22[%148, %c0_131] : memref<6480x48xf32, #tpu.memory_space<vmem>>, vector<160x48xf32>
      %150 = arith.truncf %149 : vector<160x48xf32> to vector<160x48xbf16>
      %c384_132 = arith.constant 384 : index
      %c0_133 = arith.constant 0 : index
      %151 = vector.load %arg8[%c384_132, %c0_133] : memref<432x72xbf16, #tpu.memory_space<vmem>>, vector<48x72xbf16>
      %cst_134 = arith.constant dense<0.000000e+00> : vector<160x72xf32>
      %152 = tpu.matmul %150, %151, %cst_134 {dimension_numbers = #tpu.dot_dimension_numbers<[1], [0], [0], [1], [0, 0, 1, 1], [], []>} : vector<160x48xbf16>, vector<48x72xbf16>, vector<160x72xf32> -> vector<160x72xf32>
      %153 = arith.addf %145, %152 : vector<160x72xf32>
      %c0_135 = arith.constant 0 : index
      %c0_136 = arith.constant 0 : index
      %154 = vector.load %arg9[%c0_135, %c0_136] : memref<1x72xf32, #tpu.memory_space<vmem>>, vector<1x72xf32>
      %155 = vector.broadcast %154 : vector<1x72xf32> to vector<160x72xf32>
      %156 = arith.addf %153, %155 : vector<160x72xf32>
      %cst_137 = arith.constant 0.000000e+00 : f32
      %157 = vector.broadcast %cst_137 : f32 to vector<160x72xf32>
      %158 = arith.maximumf %156, %157 : vector<160x72xf32>
      %159 = arith.index_cast %80 : i32 to index
      %c0_138 = arith.constant 0 : index
      %160 = vector.load %arg23[%159, %c0_138] : memref<6400x72xf32, #tpu.memory_space<vmem>>, vector<160x72xf32>
      tpu.vector_store %arg23[%159, %c0_138], %158 {strides = array<i32>} : memref<6400x72xf32, #tpu.memory_space<vmem>>, vector<160x72xf32>,
    }
    %c40_i32_38 = arith.constant 40 : i32
    %c0_i32_39 = arith.constant 0 : i32
    %c8_i32 = arith.constant 8 : i32
    %14 = arith.addi %c0_i32_39, %c8_i32 : i32
    %c1_i32_40 = arith.constant 1 : i32
    scf.for %arg32 = %c0_i32_39 to %14 step %c1_i32_40  : i32 {
      %c800_i32 = arith.constant 800 : i32
      %79 = arith.muli %arg32, %c800_i32 : i32
      %80 = tpu.assume_multiple %79, 8 : i32
      %c0_i32_93 = arith.constant 0 : i32
      %c12_i32 = arith.constant 12 : i32
      %81 = arith.addi %c0_i32_93, %c12_i32 : i32
      %c1_i32_94 = arith.constant 1 : i32
      scf.for %arg33 = %c0_i32_93 to %81 step %c1_i32_94  : i32 {
        %c2_i32_101 = arith.constant 2 : i32
        %89 = arith.muli %c2_i32_101, %arg33 : i32
        %c1_i32_102 = arith.constant 1 : i32
        %90 = arith.addi %89, %c1_i32_102 : i32
        %c32_i32 = arith.constant 32 : i32
        %91 = arith.muli %90, %c32_i32 : i32
        %92 = arith.addi %80, %91 : i32
        %93 = tpu.assume_multiple %92, 8 : i32
        %94 = arith.index_cast %93 : i32 to index
        %c0_103 = arith.constant 0 : index
        %95 = vector.load %arg23[%94, %c0_103] : memref<6400x72xf32, #tpu.memory_space<vmem>>, vector<24x72xf32>
        %c32_i32_104 = arith.constant 32 : i32
        %96 = arith.addi %93, %c32_i32_104 : i32
        %97 = arith.index_cast %96 : i32 to index
        %c0_105 = arith.constant 0 : index
        %98 = vector.load %arg23[%97, %c0_105] : memref<6400x72xf32, #tpu.memory_space<vmem>>, vector<24x72xf32>
        %99 = arith.maximumf %95, %98 : vector<24x72xf32>
        %c24_i32 = arith.constant 24 : i32
        %100 = arith.muli %arg33, %c24_i32 : i32
        %101 = tpu.assume_multiple %100, 8 : i32
        %102 = arith.index_cast %101 : i32 to index
        %c0_106 = arith.constant 0 : index
        %103 = vector.load %arg24[%102, %c0_106] : memref<288x72xf32, #tpu.memory_space<vmem>>, vector<24x72xf32>
        tpu.vector_store %arg24[%102, %c0_106], %99 {strides = array<i32>} : memref<288x72xf32, #tpu.memory_space<vmem>>, vector<24x72xf32>,
      }
      %c12_i32_95 = arith.constant 12 : i32
      %c0_96 = arith.constant 0 : index
      %c0_97 = arith.constant 0 : index
      %82 = tpu.strided_load %arg24[%c0_96, %c0_97] {strides = array<i32: 2, 1>} : memref<288x72xf32, #tpu.memory_space<vmem>>, vector<144x72xf32>
      %c1_98 = arith.constant 1 : index
      %c0_99 = arith.constant 0 : index
      %83 = tpu.strided_load %arg24[%c1_98, %c0_99] {strides = array<i32: 2, 1>} : memref<288x72xf32, #tpu.memory_space<vmem>>, vector<144x72xf32>
      %84 = arith.maximumf %82, %83 : vector<144x72xf32>
      %c144_i32 = arith.constant 144 : i32
      %85 = arith.muli %arg32, %c144_i32 : i32
      %86 = tpu.assume_multiple %85, 8 : i32
      %87 = arith.index_cast %86 : i32 to index
      %c0_100 = arith.constant 0 : index
      %88 = vector.load %arg25[%87, %c0_100] : memref<1152x72xf32, #tpu.memory_space<vmem>>, vector<144x72xf32>
      tpu.vector_store %arg25[%87, %c0_100], %84 {strides = array<i32>} : memref<1152x72xf32, #tpu.memory_space<vmem>>, vector<144x72xf32>,
    }
    %c8_i32_41 = arith.constant 8 : i32
    %c0_i32_42 = arith.constant 0 : i32
    %c8_i32_43 = arith.constant 8 : i32
    %15 = arith.addi %c0_i32_42, %c8_i32_43 : i32
    %c1_i32_44 = arith.constant 1 : i32
    scf.for %arg32 = %c0_i32_42 to %15 step %c1_i32_44  : i32 {
      %c144_i32 = arith.constant 144 : i32
      %79 = arith.muli %arg32, %c144_i32 : i32
      %80 = tpu.assume_multiple %79, 8 : i32
      %81 = arith.index_cast %80 : i32 to index
      %c0_93 = arith.constant 0 : index
      %82 = vector.load %arg25[%81, %c0_93] : memref<1152x72xf32, #tpu.memory_space<vmem>>, vector<144x72xf32>
      %83 = arith.truncf %82 : vector<144x72xf32> to vector<144x72xbf16>
      %c0_94 = arith.constant 0 : index
      %c0_95 = arith.constant 0 : index
      %84 = vector.load %arg10[%c0_94, %c0_95] : memref<72x72xbf16, #tpu.memory_space<vmem>>, vector<72x72xbf16>
      %cst_96 = arith.constant dense<0.000000e+00> : vector<144x72xf32>
      %85 = tpu.matmul %83, %84, %cst_96 {dimension_numbers = #tpu.dot_dimension_numbers<[1], [0], [0], [1], [0, 0, 1, 1], [], []>} : vector<144x72xbf16>, vector<72x72xbf16>, vector<144x72xf32> -> vector<144x72xf32>
      %c0_97 = arith.constant 0 : index
      %c0_98 = arith.constant 0 : index
      %86 = vector.load %arg11[%c0_97, %c0_98] : memref<1x72xf32, #tpu.memory_space<vmem>>, vector<1x72xf32>
      %87 = vector.broadcast %86 : vector<1x72xf32> to vector<144x72xf32>
      %88 = arith.addf %85, %87 : vector<144x72xf32>
      %cst_99 = arith.constant 0.000000e+00 : f32
      %89 = vector.broadcast %cst_99 : f32 to vector<144x72xf32>
      %90 = arith.maximumf %88, %89 : vector<144x72xf32>
      %91 = arith.truncf %90 : vector<144x72xf32> to vector<144x72xbf16>
      %c0_100 = arith.constant 0 : index
      %c0_101 = arith.constant 0 : index
      %92 = vector.load %arg12[%c0_100, %c0_101] : memref<72x72xbf16, #tpu.memory_space<vmem>>, vector<72x72xbf16>
      %cst_102 = arith.constant dense<0.000000e+00> : vector<144x72xf32>
      %93 = tpu.matmul %91, %92, %cst_102 {dimension_numbers = #tpu.dot_dimension_numbers<[1], [0], [0], [1], [0, 0, 1, 1], [], []>} : vector<144x72xbf16>, vector<72x72xbf16>, vector<144x72xf32> -> vector<144x72xf32>
      %c0_103 = arith.constant 0 : index
      %c0_104 = arith.constant 0 : index
      %94 = vector.load %arg13[%c0_103, %c0_104] : memref<1x72xf32, #tpu.memory_space<vmem>>, vector<1x72xf32>
      %95 = vector.broadcast %94 : vector<1x72xf32> to vector<144x72xf32>
      %96 = arith.addf %93, %95 : vector<144x72xf32>
      %cst_105 = arith.constant 0.000000e+00 : f32
      %97 = vector.broadcast %cst_105 : f32 to vector<144x72xf32>
      %98 = arith.maximumf %96, %97 : vector<144x72xf32>
      %99 = arith.truncf %98 : vector<144x72xf32> to vector<144x72xbf16>
      %c0_106 = arith.constant 0 : index
      %c0_107 = arith.constant 0 : index
      %100 = vector.load %arg14[%c0_106, %c0_107] : memref<72x96xbf16, #tpu.memory_space<vmem>>, vector<72x96xbf16>
      %cst_108 = arith.constant dense<0.000000e+00> : vector<144x96xf32>
      %101 = tpu.matmul %99, %100, %cst_108 {dimension_numbers = #tpu.dot_dimension_numbers<[1], [0], [0], [1], [0, 0, 1, 1], [], []>} : vector<144x72xbf16>, vector<72x96xbf16>, vector<144x96xf32> -> vector<144x96xf32>
      %c0_109 = arith.constant 0 : index
      %c0_110 = arith.constant 0 : index
      %102 = vector.load %arg15[%c0_109, %c0_110] : memref<1x96xf32, #tpu.memory_space<vmem>>, vector<1x96xf32>
      %103 = vector.broadcast %102 : vector<1x96xf32> to vector<144x96xf32>
      %104 = arith.addf %101, %103 : vector<144x96xf32>
      %cst_111 = arith.constant 0.000000e+00 : f32
      %105 = vector.broadcast %cst_111 : f32 to vector<144x96xf32>
      %106 = arith.maximumf %104, %105 : vector<144x96xf32>
      %107 = arith.index_cast %80 : i32 to index
      %c0_112 = arith.constant 0 : index
      %108 = vector.load %arg26[%107, %c0_112] : memref<1152x96xf32, #tpu.memory_space<vmem>>, vector<144x96xf32>
      tpu.vector_store %arg26[%107, %c0_112], %106 {strides = array<i32>} : memref<1152x96xf32, #tpu.memory_space<vmem>>, vector<144x96xf32>,
    }
    %c8_i32_45 = arith.constant 8 : i32
    %c0_i32_46 = arith.constant 0 : i32
    %c8_i32_47 = arith.constant 8 : i32
    %16 = arith.addi %c0_i32_46, %c8_i32_47 : i32
    %c1_i32_48 = arith.constant 1 : i32
    scf.for %arg32 = %c0_i32_46 to %16 step %c1_i32_48  : i32 {
      %c144_i32 = arith.constant 144 : i32
      %79 = arith.muli %arg32, %c144_i32 : i32
      %80 = tpu.assume_multiple %79, 8 : i32
      %c0_i32_93 = arith.constant 0 : i32
      %c6_i32 = arith.constant 6 : i32
      %81 = arith.addi %c0_i32_93, %c6_i32 : i32
      %c1_i32_94 = arith.constant 1 : i32
      scf.for %arg33 = %c0_i32_93 to %81 step %c1_i32_94  : i32 {
        %c24_i32 = arith.constant 24 : i32
        %88 = arith.muli %arg33, %c24_i32 : i32
        %89 = arith.addi %80, %88 : i32
        %90 = tpu.assume_multiple %89, 8 : i32
        %91 = arith.index_cast %90 : i32 to index
        %c0_101 = arith.constant 0 : index
        %92 = vector.load %arg26[%91, %c0_101] : memref<1152x96xf32, #tpu.memory_space<vmem>>, vector<12x96xf32>
        %c12_i32 = arith.constant 12 : i32
        %93 = arith.addi %90, %c12_i32 : i32
        %94 = arith.index_cast %93 : i32 to index
        %c0_102 = arith.constant 0 : index
        %95 = vector.load %arg26[%94, %c0_102] : memref<1152x96xf32, #tpu.memory_space<vmem>>, vector<12x96xf32>
        %96 = arith.maximumf %92, %95 : vector<12x96xf32>
        %c12_i32_103 = arith.constant 12 : i32
        %97 = arith.muli %arg33, %c12_i32_103 : i32
        %98 = arith.index_cast %97 : i32 to index
        %c0_104 = arith.constant 0 : index
        %99 = vector.load %arg27[%98, %c0_104] : memref<72x96xf32, #tpu.memory_space<vmem>>, vector<12x96xf32>
        tpu.vector_store %arg27[%98, %c0_104], %96 {strides = array<i32>} : memref<72x96xf32, #tpu.memory_space<vmem>>, vector<12x96xf32>,
      }
      %c6_i32_95 = arith.constant 6 : i32
      %c0_96 = arith.constant 0 : index
      %c0_97 = arith.constant 0 : index
      %82 = tpu.strided_load %arg27[%c0_96, %c0_97] {strides = array<i32: 2, 1>} : memref<72x96xf32, #tpu.memory_space<vmem>>, vector<36x96xf32>
      %c1_98 = arith.constant 1 : index
      %c0_99 = arith.constant 0 : index
      %83 = tpu.strided_load %arg27[%c1_98, %c0_99] {strides = array<i32: 2, 1>} : memref<72x96xf32, #tpu.memory_space<vmem>>, vector<36x96xf32>
      %84 = arith.maximumf %82, %83 : vector<36x96xf32>
      %c36_i32 = arith.constant 36 : i32
      %85 = arith.muli %arg32, %c36_i32 : i32
      %86 = arith.index_cast %85 : i32 to index
      %c0_100 = arith.constant 0 : index
      %87 = vector.load %arg28[%86, %c0_100] : memref<288x96xf32, #tpu.memory_space<vmem>>, vector<36x96xf32>
      tpu.vector_store %arg28[%86, %c0_100], %84 {strides = array<i32>} : memref<288x96xf32, #tpu.memory_space<vmem>>, vector<36x96xf32>,
    }
    %c8_i32_49 = arith.constant 8 : i32
    %c0_i32_50 = arith.constant 0 : i32
    %c2_i32 = arith.constant 2 : i32
    %17 = arith.addi %c0_i32_50, %c2_i32 : i32
    %c1_i32_51 = arith.constant 1 : i32
    scf.for %arg32 = %c0_i32_50 to %17 step %c1_i32_51  : i32 {
      %c144_i32 = arith.constant 144 : i32
      %79 = arith.muli %arg32, %c144_i32 : i32
      %80 = tpu.assume_multiple %79, 8 : i32
      %81 = arith.index_cast %80 : i32 to index
      %c0_93 = arith.constant 0 : index
      %82 = vector.load %arg28[%81, %c0_93] : memref<288x96xf32, #tpu.memory_space<vmem>>, vector<144x96xf32>
      %83 = arith.truncf %82 : vector<144x96xf32> to vector<144x96xbf16>
      %c0_94 = arith.constant 0 : index
      %c0_95 = arith.constant 0 : index
      %84 = vector.load %arg16[%c0_94, %c0_95] : memref<96x64xbf16, #tpu.memory_space<vmem>>, vector<96x64xbf16>
      %cst_96 = arith.constant dense<0.000000e+00> : vector<144x64xf32>
      %85 = tpu.matmul %83, %84, %cst_96 {dimension_numbers = #tpu.dot_dimension_numbers<[1], [0], [0], [1], [0, 0, 1, 1], [], []>} : vector<144x96xbf16>, vector<96x64xbf16>, vector<144x64xf32> -> vector<144x64xf32>
      %c0_97 = arith.constant 0 : index
      %c0_98 = arith.constant 0 : index
      %86 = vector.load %arg17[%c0_97, %c0_98] : memref<1x64xf32, #tpu.memory_space<vmem>>, vector<1x64xf32>
      %87 = vector.broadcast %86 : vector<1x64xf32> to vector<144x64xf32>
      %88 = arith.addf %85, %87 : vector<144x64xf32>
      %cst_99 = arith.constant 0.000000e+00 : f32
      %89 = vector.broadcast %cst_99 : f32 to vector<144x64xf32>
      %90 = arith.maximumf %88, %89 : vector<144x64xf32>
      %91 = arith.index_cast %80 : i32 to index
      %c0_100 = arith.constant 0 : index
      %92 = vector.load %arg29[%91, %c0_100] : memref<288x64xf32, #tpu.memory_space<vmem>>, vector<144x64xf32>
      tpu.vector_store %arg29[%91, %c0_100], %90 {strides = array<i32>} : memref<288x64xf32, #tpu.memory_space<vmem>>, vector<144x64xf32>,
    }
    %c2_i32_52 = arith.constant 2 : i32
    %c0_i32_53 = arith.constant 0 : i32
    %c8_i32_54 = arith.constant 8 : i32
    %18 = arith.addi %c0_i32_53, %c8_i32_54 : i32
    %c1_i32_55 = arith.constant 1 : i32
    scf.for %arg32 = %c0_i32_53 to %18 step %c1_i32_55  : i32 {
      %c36_i32 = arith.constant 36 : i32
      %79 = arith.muli %arg32, %c36_i32 : i32
      %c0_i32_93 = arith.constant 0 : i32
      %c3_i32 = arith.constant 3 : i32
      %80 = arith.addi %c0_i32_93, %c3_i32 : i32
      %c1_i32_94 = arith.constant 1 : i32
      scf.for %arg33 = %c0_i32_93 to %80 step %c1_i32_94  : i32 {
        %c12_i32 = arith.constant 12 : i32
        %87 = arith.muli %arg33, %c12_i32 : i32
        %88 = arith.addi %79, %87 : i32
        %89 = arith.index_cast %88 : i32 to index
        %c0_101 = arith.constant 0 : index
        %90 = vector.load %arg29[%89, %c0_101] : memref<288x64xf32, #tpu.memory_space<vmem>>, vector<6x64xf32>
        %c12_i32_102 = arith.constant 12 : i32
        %91 = arith.muli %arg33, %c12_i32_102 : i32
        %92 = arith.addi %79, %91 : i32
        %c6_i32 = arith.constant 6 : i32
        %93 = arith.addi %92, %c6_i32 : i32
        %94 = arith.index_cast %93 : i32 to index
        %c0_103 = arith.constant 0 : index
        %95 = vector.load %arg29[%94, %c0_103] : memref<288x64xf32, #tpu.memory_space<vmem>>, vector<6x64xf32>
        %96 = arith.maximumf %90, %95 : vector<6x64xf32>
        %c6_i32_104 = arith.constant 6 : i32
        %97 = arith.muli %arg33, %c6_i32_104 : i32
        %98 = arith.index_cast %97 : i32 to index
        %c0_105 = arith.constant 0 : index
        %99 = vector.load %arg30[%98, %c0_105] : memref<18x64xf32, #tpu.memory_space<vmem>>, vector<6x64xf32>
        tpu.vector_store %arg30[%98, %c0_105], %96 {strides = array<i32>} : memref<18x64xf32, #tpu.memory_space<vmem>>, vector<6x64xf32>,
      }
      %c3_i32_95 = arith.constant 3 : i32
      %c0_96 = arith.constant 0 : index
      %c0_97 = arith.constant 0 : index
      %81 = tpu.strided_load %arg30[%c0_96, %c0_97] {strides = array<i32: 2, 1>} : memref<18x64xf32, #tpu.memory_space<vmem>>, vector<9x64xf32>
      %c1_98 = arith.constant 1 : index
      %c0_99 = arith.constant 0 : index
      %82 = tpu.strided_load %arg30[%c1_98, %c0_99] {strides = array<i32: 2, 1>} : memref<18x64xf32, #tpu.memory_space<vmem>>, vector<9x64xf32>
      %83 = arith.maximumf %81, %82 : vector<9x64xf32>
      %c9_i32 = arith.constant 9 : i32
      %84 = arith.muli %arg32, %c9_i32 : i32
      %85 = arith.index_cast %84 : i32 to index
      %c0_100 = arith.constant 0 : index
      %86 = vector.load %arg31[%85, %c0_100] : memref<72x64xf32, #tpu.memory_space<vmem>>, vector<9x64xf32>
      tpu.vector_store %arg31[%85, %c0_100], %83 {strides = array<i32>} : memref<72x64xf32, #tpu.memory_space<vmem>>, vector<9x64xf32>,
    }
    %c8_i32_56 = arith.constant 8 : i32
    %cst_57 = arith.constant 0.000000e+00 : f32
    %19 = vector.broadcast %cst_57 : f32 to vector<8x128xf32>
    %c0_58 = arith.constant 0 : index
    %c0_59 = arith.constant 0 : index
    %20 = tpu.strided_load %arg31[%c0_58, %c0_59] {strides = array<i32: 9, 1>} : memref<72x64xf32, #tpu.memory_space<vmem>>, vector<8x64xf32>
    %21 = arith.truncf %20 : vector<8x64xf32> to vector<8x64xbf16>
    %c0_60 = arith.constant 0 : index
    %c0_61 = arith.constant 0 : index
    %22 = vector.load %arg18[%c0_60, %c0_61] : memref<576x128xbf16, #tpu.memory_space<vmem>>, vector<64x128xbf16>
    %cst_62 = arith.constant dense<0.000000e+00> : vector<8x128xf32>
    %23 = tpu.matmul %21, %22, %cst_62 {dimension_numbers = #tpu.dot_dimension_numbers<[1], [0], [0], [1], [0, 0, 1, 1], [], []>} : vector<8x64xbf16>, vector<64x128xbf16>, vector<8x128xf32> -> vector<8x128xf32>
    %24 = arith.addf %19, %23 : vector<8x128xf32>
    %c1 = arith.constant 1 : index
    %c0_63 = arith.constant 0 : index
    %25 = tpu.strided_load %arg31[%c1, %c0_63] {strides = array<i32: 9, 1>} : memref<72x64xf32, #tpu.memory_space<vmem>>, vector<8x64xf32>
    %26 = arith.truncf %25 : vector<8x64xf32> to vector<8x64xbf16>
    %c64 = arith.constant 64 : index
    %c0_64 = arith.constant 0 : index
    %27 = vector.load %arg18[%c64, %c0_64] : memref<576x128xbf16, #tpu.memory_space<vmem>>, vector<64x128xbf16>
    %cst_65 = arith.constant dense<0.000000e+00> : vector<8x128xf32>
    %28 = tpu.matmul %26, %27, %cst_65 {dimension_numbers = #tpu.dot_dimension_numbers<[1], [0], [0], [1], [0, 0, 1, 1], [], []>} : vector<8x64xbf16>, vector<64x128xbf16>, vector<8x128xf32> -> vector<8x128xf32>
    %29 = arith.addf %24, %28 : vector<8x128xf32>
    %c2 = arith.constant 2 : index
    %c0_66 = arith.constant 0 : index
    %30 = tpu.strided_load %arg31[%c2, %c0_66] {strides = array<i32: 9, 1>} : memref<72x64xf32, #tpu.memory_space<vmem>>, vector<8x64xf32>
    %31 = arith.truncf %30 : vector<8x64xf32> to vector<8x64xbf16>
    %c128 = arith.constant 128 : index
    %c0_67 = arith.constant 0 : index
    %32 = vector.load %arg18[%c128, %c0_67] : memref<576x128xbf16, #tpu.memory_space<vmem>>, vector<64x128xbf16>
    %cst_68 = arith.constant dense<0.000000e+00> : vector<8x128xf32>
    %33 = tpu.matmul %31, %32, %cst_68 {dimension_numbers = #tpu.dot_dimension_numbers<[1], [0], [0], [1], [0, 0, 1, 1], [], []>} : vector<8x64xbf16>, vector<64x128xbf16>, vector<8x128xf32> -> vector<8x128xf32>
    %34 = arith.addf %29, %33 : vector<8x128xf32>
    %c3 = arith.constant 3 : index
    %c0_69 = arith.constant 0 : index
    %35 = tpu.strided_load %arg31[%c3, %c0_69] {strides = array<i32: 9, 1>} : memref<72x64xf32, #tpu.memory_space<vmem>>, vector<8x64xf32>
    %36 = arith.truncf %35 : vector<8x64xf32> to vector<8x64xbf16>
    %c192 = arith.constant 192 : index
    %c0_70 = arith.constant 0 : index
    %37 = vector.load %arg18[%c192, %c0_70] : memref<576x128xbf16, #tpu.memory_space<vmem>>, vector<64x128xbf16>
    %cst_71 = arith.constant dense<0.000000e+00> : vector<8x128xf32>
    %38 = tpu.matmul %36, %37, %cst_71 {dimension_numbers = #tpu.dot_dimension_numbers<[1], [0], [0], [1], [0, 0, 1, 1], [], []>} : vector<8x64xbf16>, vector<64x128xbf16>, vector<8x128xf32> -> vector<8x128xf32>
    %39 = arith.addf %34, %38 : vector<8x128xf32>
    %c4 = arith.constant 4 : index
    %c0_72 = arith.constant 0 : index
    %40 = tpu.strided_load %arg31[%c4, %c0_72] {strides = array<i32: 9, 1>} : memref<72x64xf32, #tpu.memory_space<vmem>>, vector<8x64xf32>
    %41 = arith.truncf %40 : vector<8x64xf32> to vector<8x64xbf16>
    %c256 = arith.constant 256 : index
    %c0_73 = arith.constant 0 : index
    %42 = vector.load %arg18[%c256, %c0_73] : memref<576x128xbf16, #tpu.memory_space<vmem>>, vector<64x128xbf16>
    %cst_74 = arith.constant dense<0.000000e+00> : vector<8x128xf32>
    %43 = tpu.matmul %41, %42, %cst_74 {dimension_numbers = #tpu.dot_dimension_numbers<[1], [0], [0], [1], [0, 0, 1, 1], [], []>} : vector<8x64xbf16>, vector<64x128xbf16>, vector<8x128xf32> -> vector<8x128xf32>
    %44 = arith.addf %39, %43 : vector<8x128xf32>
    %c5 = arith.constant 5 : index
    %c0_75 = arith.constant 0 : index
    %45 = tpu.strided_load %arg31[%c5, %c0_75] {strides = array<i32: 9, 1>} : memref<72x64xf32, #tpu.memory_space<vmem>>, vector<8x64xf32>
    %46 = arith.truncf %45 : vector<8x64xf32> to vector<8x64xbf16>
    %c320 = arith.constant 320 : index
    %c0_76 = arith.constant 0 : index
    %47 = vector.load %arg18[%c320, %c0_76] : memref<576x128xbf16, #tpu.memory_space<vmem>>, vector<64x128xbf16>
    %cst_77 = arith.constant dense<0.000000e+00> : vector<8x128xf32>
    %48 = tpu.matmul %46, %47, %cst_77 {dimension_numbers = #tpu.dot_dimension_numbers<[1], [0], [0], [1], [0, 0, 1, 1], [], []>} : vector<8x64xbf16>, vector<64x128xbf16>, vector<8x128xf32> -> vector<8x128xf32>
    %49 = arith.addf %44, %48 : vector<8x128xf32>
    %c6 = arith.constant 6 : index
    %c0_78 = arith.constant 0 : index
    %50 = tpu.strided_load %arg31[%c6, %c0_78] {strides = array<i32: 9, 1>} : memref<72x64xf32, #tpu.memory_space<vmem>>, vector<8x64xf32>
    %51 = arith.truncf %50 : vector<8x64xf32> to vector<8x64xbf16>
    %c384 = arith.constant 384 : index
    %c0_79 = arith.constant 0 : index
    %52 = vector.load %arg18[%c384, %c0_79] : memref<576x128xbf16, #tpu.memory_space<vmem>>, vector<64x128xbf16>
    %cst_80 = arith.constant dense<0.000000e+00> : vector<8x128xf32>
    %53 = tpu.matmul %51, %52, %cst_80 {dimension_numbers = #tpu.dot_dimension_numbers<[1], [0], [0], [1], [0, 0, 1, 1], [], []>} : vector<8x64xbf16>, vector<64x128xbf16>, vector<8x128xf32> -> vector<8x128xf32>
    %54 = arith.addf %49, %53 : vector<8x128xf32>
    %c7 = arith.constant 7 : index
    %c0_81 = arith.constant 0 : index
    %55 = tpu.strided_load %arg31[%c7, %c0_81] {strides = array<i32: 9, 1>} : memref<72x64xf32, #tpu.memory_space<vmem>>, vector<8x64xf32>
    %56 = arith.truncf %55 : vector<8x64xf32> to vector<8x64xbf16>
    %c448 = arith.constant 448 : index
    %c0_82 = arith.constant 0 : index
    %57 = vector.load %arg18[%c448, %c0_82] : memref<576x128xbf16, #tpu.memory_space<vmem>>, vector<64x128xbf16>
    %cst_83 = arith.constant dense<0.000000e+00> : vector<8x128xf32>
    %58 = tpu.matmul %56, %57, %cst_83 {dimension_numbers = #tpu.dot_dimension_numbers<[1], [0], [0], [1], [0, 0, 1, 1], [], []>} : vector<8x64xbf16>, vector<64x128xbf16>, vector<8x128xf32> -> vector<8x128xf32>
    %59 = arith.addf %54, %58 : vector<8x128xf32>
    %c8 = arith.constant 8 : index
    %c0_84 = arith.constant 0 : index
    %60 = tpu.strided_load %arg31[%c8, %c0_84] {strides = array<i32: 9, 1>} : memref<72x64xf32, #tpu.memory_space<vmem>>, vector<8x64xf32>
    %61 = arith.truncf %60 : vector<8x64xf32> to vector<8x64xbf16>
    %c512 = arith.constant 512 : index
    %c0_85 = arith.constant 0 : index
    %62 = vector.load %arg18[%c512, %c0_85] : memref<576x128xbf16, #tpu.memory_space<vmem>>, vector<64x128xbf16>
    %cst_86 = arith.constant dense<0.000000e+00> : vector<8x128xf32>
    %63 = tpu.matmul %61, %62, %cst_86 {dimension_numbers = #tpu.dot_dimension_numbers<[1], [0], [0], [1], [0, 0, 1, 1], [], []>} : vector<8x64xbf16>, vector<64x128xbf16>, vector<8x128xf32> -> vector<8x128xf32>
    %64 = arith.addf %59, %63 : vector<8x128xf32>
    %c0_87 = arith.constant 0 : index
    %c0_88 = arith.constant 0 : index
    %65 = vector.load %arg19[%c0_87, %c0_88] : memref<1x128xf32, #tpu.memory_space<vmem>>, vector<1x128xf32>
    %66 = vector.broadcast %65 : vector<1x128xf32> to vector<8x128xf32>
    %67 = arith.addf %64, %66 : vector<8x128xf32>
    %cst_89 = arith.constant dense<0xFF800000> : vector<8xf32>
    %68 = vector.multi_reduction <maximumf>, %67, %cst_89 [1] : vector<8x128xf32> to vector<8xf32>
    %69 = vector.shape_cast %68 : vector<8xf32> to vector<8x1xf32>
    %70 = vector.broadcast %69 : vector<8x1xf32> to vector<8x128xf32>
    %71 = arith.subf %67, %70 : vector<8x128xf32>
    %72 = math.exp %71 : vector<8x128xf32>
    %cst_90 = arith.constant dense<0.000000e+00> : vector<8xf32>
    %73 = vector.multi_reduction <add>, %72, %cst_90 [1] : vector<8x128xf32> to vector<8xf32>
    %74 = vector.shape_cast %73 : vector<8xf32> to vector<8x1xf32>
    %75 = math.log %74 : vector<8x1xf32>
    %76 = vector.broadcast %75 : vector<8x1xf32> to vector<8x128xf32>
    %77 = arith.subf %71, %76 : vector<8x128xf32>
    %c0_91 = arith.constant 0 : index
    %c0_92 = arith.constant 0 : index
    %78 = vector.load %arg20[%c0_91, %c0_92] : memref<8x128xf32, #tpu.memory_space<vmem>>, vector<8x128xf32>
    tpu.vector_store %arg20[%c0_91, %c0_92], %77 {strides = array<i32>} : memref<8x128xf32, #tpu.memory_space<vmem>>, vector<8x128xf32>,
    return
  }
  func.func @transform_0(%arg0: i32) -> (i32, i32) {
    %c0_i32 = arith.constant 0 : i32
    %c0_i32_0 = arith.constant 0 : i32
    return %arg0, %c0_i32 : i32, i32
  }
  func.func @transform_1(%arg0: i32) -> (i32, i32) {
    %c0_i32 = arith.constant 0 : i32
    %c0_i32_0 = arith.constant 0 : i32
    %c0_i32_1 = arith.constant 0 : i32
    return %c0_i32, %c0_i32_0 : i32, i32
  }
  func.func @transform_2(%arg0: i32) -> (i32, i32) {
    %c0_i32 = arith.constant 0 : i32
    %c0_i32_0 = arith.constant 0 : i32
    %c0_i32_1 = arith.constant 0 : i32
    return %c0_i32, %c0_i32_0 : i32, i32
  }
  func.func @transform_3(%arg0: i32) -> (i32, i32) {
    %c0_i32 = arith.constant 0 : i32
    %c0_i32_0 = arith.constant 0 : i32
    %c0_i32_1 = arith.constant 0 : i32
    return %c0_i32, %c0_i32_0 : i32, i32
  }
  func.func @transform_4(%arg0: i32) -> (i32, i32) {
    %c0_i32 = arith.constant 0 : i32
    %c0_i32_0 = arith.constant 0 : i32
    %c0_i32_1 = arith.constant 0 : i32
    return %c0_i32, %c0_i32_0 : i32, i32
  }
  func.func @transform_5(%arg0: i32) -> (i32, i32) {
    %c0_i32 = arith.constant 0 : i32
    %c0_i32_0 = arith.constant 0 : i32
    %c0_i32_1 = arith.constant 0 : i32
    return %c0_i32, %c0_i32_0 : i32, i32
  }
  func.func @transform_6(%arg0: i32) -> (i32, i32) {
    %c0_i32 = arith.constant 0 : i32
    %c0_i32_0 = arith.constant 0 : i32
    %c0_i32_1 = arith.constant 0 : i32
    return %c0_i32, %c0_i32_0 : i32, i32
  }
  func.func @transform_7(%arg0: i32) -> (i32, i32) {
    %c0_i32 = arith.constant 0 : i32
    %c0_i32_0 = arith.constant 0 : i32
    %c0_i32_1 = arith.constant 0 : i32
    return %c0_i32, %c0_i32_0 : i32, i32
  }
  func.func @transform_8(%arg0: i32) -> (i32, i32) {
    %c0_i32 = arith.constant 0 : i32
    %c0_i32_0 = arith.constant 0 : i32
    %c0_i32_1 = arith.constant 0 : i32
    return %c0_i32, %c0_i32_0 : i32, i32
  }
  func.func @transform_9(%arg0: i32) -> (i32, i32) {
    %c0_i32 = arith.constant 0 : i32
    %c0_i32_0 = arith.constant 0 : i32
    %c0_i32_1 = arith.constant 0 : i32
    return %c0_i32, %c0_i32_0 : i32, i32
  }
  func.func @transform_10(%arg0: i32) -> (i32, i32) {
    %c0_i32 = arith.constant 0 : i32
    %c0_i32_0 = arith.constant 0 : i32
    %c0_i32_1 = arith.constant 0 : i32
    return %c0_i32, %c0_i32_0 : i32, i32
  }
  func.func @transform_11(%arg0: i32) -> (i32, i32) {
    %c0_i32 = arith.constant 0 : i32
    %c0_i32_0 = arith.constant 0 : i32
    %c0_i32_1 = arith.constant 0 : i32
    return %c0_i32, %c0_i32_0 : i32, i32
  }
  func.func @transform_12(%arg0: i32) -> (i32, i32) {
    %c0_i32 = arith.constant 0 : i32
    %c0_i32_0 = arith.constant 0 : i32
    %c0_i32_1 = arith.constant 0 : i32
    return %c0_i32, %c0_i32_0 : i32, i32
  }
  func.func @transform_13(%arg0: i32) -> (i32, i32) {
    %c0_i32 = arith.constant 0 : i32
    %c0_i32_0 = arith.constant 0 : i32
    %c0_i32_1 = arith.constant 0 : i32
    return %c0_i32, %c0_i32_0 : i32, i32
  }
  func.func @transform_14(%arg0: i32) -> (i32, i32) {
    %c0_i32 = arith.constant 0 : i32
    %c0_i32_0 = arith.constant 0 : i32
    %c0_i32_1 = arith.constant 0 : i32
    return %c0_i32, %c0_i32_0 : i32, i32
  }
  func.func @transform_15(%arg0: i32) -> (i32, i32) {
    %c0_i32 = arith.constant 0 : i32
    %c0_i32_0 = arith.constant 0 : i32
    %c0_i32_1 = arith.constant 0 : i32
    return %c0_i32, %c0_i32_0 : i32, i32
  }
  func.func @transform_16(%arg0: i32) -> (i32, i32) {
    %c0_i32 = arith.constant 0 : i32
    %c0_i32_0 = arith.constant 0 : i32
    %c0_i32_1 = arith.constant 0 : i32
    return %c0_i32, %c0_i32_0 : i32, i32
  }
  func.func @transform_17(%arg0: i32) -> (i32, i32) {
    %c0_i32 = arith.constant 0 : i32
    %c0_i32_0 = arith.constant 0 : i32
    %c0_i32_1 = arith.constant 0 : i32
    return %c0_i32, %c0_i32_0 : i32, i32
  }
  func.func @transform_18(%arg0: i32) -> (i32, i32) {
    %c0_i32 = arith.constant 0 : i32
    %c0_i32_0 = arith.constant 0 : i32
    %c0_i32_1 = arith.constant 0 : i32
    return %c0_i32, %c0_i32_0 : i32, i32
  }
  func.func @transform_19(%arg0: i32) -> (i32, i32) {
    %c0_i32 = arith.constant 0 : i32
    %c0_i32_0 = arith.constant 0 : i32
    return %arg0, %c0_i32 : i32, i32
  }
}

</mosaic_0001>

<llo_original>
// kernel: danet_forward.1
$region0: #{danet_forward.1}
  #allocation0 [shape = 'u32[]', space=smem, size = 0x4, offset = 0x4, fixed_abs, tag = 'smem constant byte address 0x4 - core index']
  #allocation1 [shape = 'u32[72,128]{1,0:T(1,128)}', space=vmem, size = 0x9000, scoped, tag = 'internal scratch']
  #allocation2 [shape = 'f32[800,1]{1,0:T(8,128)}', space=vmem, size = 0x64000, scoped, tag = 'scratch operand']
  #allocation3 [shape = 'f32[6480,48]{1,0:T(8,128)}', space=vmem, size = 0x32a000, scoped, tag = 'scratch operand']
  #allocation4 [shape = 'f32[6400,72]{1,0:T(8,128)}', space=vmem, size = 0x320000, scoped, tag = 'scratch operand']
  #allocation5 [shape = 'f32[288,72]{1,0:T(8,128)}', space=vmem, size = 0x24000, scoped, tag = 'scratch operand']
  #allocation6 [shape = 'f32[1152,72]{1,0:T(8,128)}', space=vmem, size = 0x90000, scoped, tag = 'scratch operand']
  #allocation7 [shape = 'f32[1152,96]{1,0:T(8,128)}', space=vmem, size = 0x90000, scoped, tag = 'scratch operand']
  #allocation8 [shape = 'f32[72,96]{1,0:T(8,128)}', space=vmem, size = 0x9000, scoped, tag = 'scratch operand']
  #allocation9 [shape = 'f32[288,96]{1,0:T(8,128)}', space=vmem, size = 0x24000, scoped, tag = 'scratch operand']
  #allocation10 [shape = 'f32[288,64]{1,0:T(8,128)}', space=vmem, size = 0x24000, scoped, tag = 'scratch operand']
  #allocation11 [shape = 'f32[18,64]{1,0:T(8,128)}', space=vmem, size = 0x3000, scoped, tag = 'scratch operand']
  #allocation12 [shape = 'f32[72,64]{1,0:T(8,128)}', space=vmem, size = 0x9000, scoped, tag = 'scratch operand']
  %s0 = inlined_call_operand.vmem [shape: f32[1600,8], index: 0, kind: input, shape index: {}]
  %s1 = inlined_call_operand.vmem [shape: f32[1,48], index: 1, kind: input, shape index: {}]
  %s2 = inlined_call_operand.vmem [shape: f32[1,48], index: 2, kind: input, shape index: {}]
  %s3 = inlined_call_operand.vmem [shape: bf16[48,48], index: 3, kind: input, shape index: {}]
  %s4 = inlined_call_operand.vmem [shape: f32[1,48], index: 4, kind: input, shape index: {}]
  %s5 = inlined_call_operand.vmem [shape: bf16[48,48], index: 5, kind: input, shape index: {}]
  %s6 = inlined_call_operand.vmem [shape: f32[1,48], index: 6, kind: input, shape index: {}]
  %s7 = inlined_call_operand.vmem [shape: bf16[432,72], index: 7, kind: input, shape index: {}]
  %s8 = inlined_call_operand.vmem [shape: f32[1,72], index: 8, kind: input, shape index: {}]
  %s9 = inlined_call_operand.vmem [shape: bf16[72,72], index: 9, kind: input, shape index: {}]
  %s10 = inlined_call_operand.vmem [shape: f32[1,72], index: 10, kind: input, shape index: {}]
  %s11 = inlined_call_operand.vmem [shape: bf16[72,72], index: 11, kind: input, shape index: {}]
  %s12 = inlined_call_operand.vmem [shape: f32[1,72], index: 12, kind: input, shape index: {}]
  %s13 = inlined_call_operand.vmem [shape: bf16[72,96], index: 13, kind: input, shape index: {}]
  %s14 = inlined_call_operand.vmem [shape: f32[1,96], index: 14, kind: input, shape index: {}]
  %s15 = inlined_call_operand.vmem [shape: bf16[96,64], index: 15, kind: input, shape index: {}]
  %s16 = inlined_call_operand.vmem [shape: f32[1,64], index: 16, kind: input, shape index: {}]
  %s17 = inlined_call_operand.vmem [shape: bf16[576,128], index: 17, kind: input, shape index: {}]
  %s18 = inlined_call_operand.vmem [shape: f32[1,128], index: 18, kind: input, shape index: {}]
  %s19 = inlined_call_operand.hbm [shape: f32[16,128], index: 19, kind: output, shape index: {}]
  %s20 = sld [smem:[#allocation0]]
  $region235: #{danet_forward.1} parent=0
    _
  %s22 = ssub.s32 1, %s20
  %s23 = scalar_select 0, %s22, %s20
  $region1: #{danet_forward.1} parent=0
    #allocation13 [shape = 'u8[8192]{0}', space=vmem, size = 0x2000, scoped, tag = 'output window, operand 0']
    #allocation14 [shape = 's32[2]{0}', space=sflag, size = 0x8, scoped, tag = 'scoped memory for danet_forward.1']
    %24 = vsyncpa [#allocation14], 0
    %s25 = scalar_lea.sflag [#allocation14], 1
    %26 = vsyncpa %s25, 0
    loop: start=0, step=1, limit=4
    $region2: #{danet_forward.1} parent=1 // loop_pre_header
      _
    $region3: #{danet_forward.1} parent=1 // loop_header
      %s28 = sphi 0, %s32
      %p29 = scmp.ge.s32.totalorder %s28, 4
      %s38 = sphi 0, %s40
      %s41 = sphi 0, %s38
      %s42 = sphi 0, %s41
      %s58 = sphi 0, %s42
      %s62 = sphi 0, %s62
      %s64 = sphi 0, %s62
      %s65 = sphi 0, %s64
      %s79 = sphi 0, %s65
      %s83 = sphi 0, %s83
      %s85 = sphi 0, %s83
      %s86 = sphi 0, %s85
      %s100 = sphi 0, %s86
      %s104 = sphi 0, %s104
      %s106 = sphi 0, %s104
      %s107 = sphi 0, %s106
      %s121 = sphi 0, %s107
      %s125 = sphi 0, %s125
      %s127 = sphi 0, %s125
      %s128 = sphi 0, %s127
      %s142 = sphi 0, %s128
      %s146 = sphi 0, %s146
      %s148 = sphi 0, %s146
      %s149 = sphi 0, %s148
      %s163 = sphi 0, %s149
      %s167 = sphi 0, %s167
      %s169 = sphi 0, %s167
      %s170 = sphi 0, %s169
      %s184 = sphi 0, %s170
      %s188 = sphi 0, %s188
      %s190 = sphi 0, %s188
      %s191 = sphi 0, %s190
      %s205 = sphi 0, %s191
      %s209 = sphi 0, %s209
      %s211 = sphi 0, %s209
      %s212 = sphi 0, %s211
      %s226 = sphi 0, %s212
      %s230 = sphi 0, %s230
      %s232 = sphi 0, %s230
      %s233 = sphi 0, %s232
      %s247 = sphi 0, %s233
      %s251 = sphi 0, %s251
      %s253 = sphi 0, %s251
      %s254 = sphi 0, %s253
      %s268 = sphi 0, %s254
      %s272 = sphi 0, %s272
      %s274 = sphi 0, %s272
      %s275 = sphi 0, %s274
      %s289 = sphi 0, %s275
      %s293 = sphi 0, %s293
      %s295 = sphi 0, %s293
      %s296 = sphi 0, %s295
      %s310 = sphi 0, %s296
      %s314 = sphi 0, %s314
      %s316 = sphi 0, %s314
      %s317 = sphi 0, %s316
      %s331 = sphi 0, %s317
      %s335 = sphi 0, %s335
      %s337 = sphi 0, %s335
      %s338 = sphi 0, %s337
      %s352 = sphi 0, %s338
      %s356 = sphi 0, %s356
      %s358 = sphi 0, %s356
      %s359 = sphi 0, %s358
      %s373 = sphi 0, %s359
      %s377 = sphi 0, %s377
      %s379 = sphi 0, %s377
      %s380 = sphi 0, %s379
      %s394 = sphi 0, %s380
      %s398 = sphi 0, %s398
      %s400 = sphi 0, %s398
      %s401 = sphi 0, %s400
      %s415 = sphi 0, %s401
      %s419 = sphi 0, %s419
      %s421 = sphi 0, %s419
      %s422 = sphi 0, %s421
      %s436 = sphi 0, %s422
      %s442 = sphi 0, %s444
      %s445 = sphi 0, %s442
      %s446 = sphi 0, %s445
      %s462 = sphi 0, %s446
    $region4: #{danet_forward.1} parent=1 // loop_header_branch
      %31 = sbr.rel (%p29) target = $region8
    $region5: #{danet_forward.1} parent=1 // loop_body
      %s33 = ssub.s32 %s28, 1
      %s34 = ssub.s32 %s28, 2
      %s35 = sadd.s32 %s28, 1
      %s36 = ssub.s32 %s28, %s35
      %p37 = scmp.eq.s32.totalorder %s36, 0
      %s39 = sadd.s32 %s38, 1
      %s40 = scalar_select %p37, %s38, %s39
      %p43 = pneg %p37
      %p44 = scmp.eq.s32.totalorder %s28, 1
      %p45 = por %p43, %p44
      %p46 = scmp.ne.s32.totalorder %s38, %s41
      %p47 = scmp.eq.s32.totalorder %s28, 0
      %p48 = por %p46, %p47
      %p49 = scmp.ne.s32.totalorder %s38, %s41
      %p50 = scmp.eq.s32.totalorder %s33, 1
      %p51 = por %p49, %p50
      %p52 = scmp.ne.s32.totalorder %s41, %s42
      %p53 = scmp.eq.s32.totalorder %s33, 0
      %p54 = por %p52, %p53
      %p55 = scmp.ne.s32.totalorder %s41, %s42
      %p56 = scmp.eq.s32.totalorder %s34, 1
      %p57 = por %p55, %p56
      %p59 = scmp.ne.s32.totalorder %s42, %s58
      %p60 = scmp.eq.s32.totalorder %s34, 0
      %p61 = por %p59, %p60
      %s63 = sadd.s32 %s62, 1
      %p66 = scmp.eq.s32.totalorder %s28, 1
      %p67 = scmp.ne.s32.totalorder %s62, %s64
      %p68 = scmp.eq.s32.totalorder %s28, 0
      %p69 = por %p67, %p68
      %p70 = scmp.ne.s32.totalorder %s62, %s64
      %p71 = scmp.eq.s32.totalorder %s33, 1
      %p72 = por %p70, %p71
      %p73 = scmp.ne.s32.totalorder %s64, %s65
      %p74 = scmp.eq.s32.totalorder %s33, 0
      %p75 = por %p73, %p74
      %p76 = scmp.ne.s32.totalorder %s64, %s65
      %p77 = scmp.eq.s32.totalorder %s34, 1
      %p78 = por %p76, %p77
      %p80 = scmp.ne.s32.totalorder %s65, %s79
      %p81 = scmp.eq.s32.totalorder %s34, 0
      %p82 = por %p80, %p81
      %s84 = sadd.s32 %s83, 1
      %p87 = scmp.eq.s32.totalorder %s28, 1
      %p88 = scmp.ne.s32.totalorder %s83, %s85
      %p89 = scmp.eq.s32.totalorder %s28, 0
      %p90 = por %p88, %p89
      %p91 = scmp.ne.s32.totalorder %s83, %s85
      %p92 = scmp.eq.s32.totalorder %s33, 1
      %p93 = por %p91, %p92
      %p94 = scmp.ne.s32.totalorder %s85, %s86
      %p95 = scmp.eq.s32.totalorder %s33, 0
      %p96 = por %p94, %p95
      %p97 = scmp.ne.s32.totalorder %s85, %s86
      %p98 = scmp.eq.s32.totalorder %s34, 1
      %p99 = por %p97, %p98
      %p101 = scmp.ne.s32.totalorder %s86, %s100
      %p102 = scmp.eq.s32.totalorder %s34, 0
      %p103 = por %p101, %p102
      %s105 = sadd.s32 %s104, 1
      %p108 = scmp.eq.s32.totalorder %s28, 1
      %p109 = scmp.ne.s32.totalorder %s104, %s106
      %p110 = scmp.eq.s32.totalorder %s28, 0
      %p111 = por %p109, %p110
      %p112 = scmp.ne.s32.totalorder %s104, %s106
      %p113 = scmp.eq.s32.totalorder %s33, 1
      %p114 = por %p112, %p113
      %p115 = scmp.ne.s32.totalorder %s106, %s107
      %p116 = scmp.eq.s32.totalorder %s33, 0
      %p117 = por %p115, %p116
      %p118 = scmp.ne.s32.totalorder %s106, %s107
      %p119 = scmp.eq.s32.totalorder %s34, 1
      %p120 = por %p118, %p119
      %p122 = scmp.ne.s32.totalorder %s107, %s121
      %p123 = scmp.eq.s32.totalorder %s34, 0
      %p124 = por %p122, %p123
      %s126 = sadd.s32 %s125, 1
      %p129 = scmp.eq.s32.totalorder %s28, 1
      %p130 = scmp.ne.s32.totalorder %s125, %s127
      %p131 = scmp.eq.s32.totalorder %s28, 0
      %p132 = por %p130, %p131
      %p133 = scmp.ne.s32.totalorder %s125, %s127
      %p134 = scmp.eq.s32.totalorder %s33, 1
      %p135 = por %p133, %p134
      %p136 = scmp.ne.s32.totalorder %s127, %s128
      %p137 = scmp.eq.s32.totalorder %s33, 0
      %p138 = por %p136, %p137
      %p139 = scmp.ne.s32.totalorder %s127, %s128
      %p140 = scmp.eq.s32.totalorder %s34, 1
      %p141 = por %p139, %p140
      %p143 = scmp.ne.s32.totalorder %s128, %s142
      %p144 = scmp.eq.s32.totalorder %s34, 0
      %p145 = por %p143, %p144
      %s147 = sadd.s32 %s146, 1
      %p150 = scmp.eq.s32.totalorder %s28, 1
      %p151 = scmp.ne.s32.totalorder %s146, %s148
      %p152 = scmp.eq.s32.totalorder %s28, 0
      %p153 = por %p151, %p152
      %p154 = scmp.ne.s32.totalorder %s146, %s148
      %p155 = scmp.eq.s32.totalorder %s33, 1
      %p156 = por %p154, %p155
      %p157 = scmp.ne.s32.totalorder %s148, %s149
      %p158 = scmp.eq.s32.totalorder %s33, 0
      %p159 = por %p157, %p158
      %p160 = scmp.ne.s32.totalorder %s148, %s149
      %p161 = scmp.eq.s32.totalorder %s34, 1
      %p162 = por %p160, %p161
      %p164 = scmp.ne.s32.totalorder %s149, %s163
      %p165 = scmp.eq.s32.totalorder %s34, 0
      %p166 = por %p164, %p165
      %s168 = sadd.s32 %s167, 1
      %p171 = scmp.eq.s32.totalorder %s28, 1
      %p172 = scmp.ne.s32.totalorder %s167, %s169
      %p173 = scmp.eq.s32.totalorder %s28, 0
      %p174 = por %p172, %p173
      %p175 = scmp.ne.s32.totalorder %s167, %s169
      %p176 = scmp.eq.s32.totalorder %s33, 1
      %p177 = por %p175, %p176
      %p178 = scmp.ne.s32.totalorder %s169, %s170
      %p179 = scmp.eq.s32.totalorder %s33, 0
      %p180 = por %p178, %p179
      %p181 = scmp.ne.s32.totalorder %s169, %s170
      %p182 = scmp.eq.s32.totalorder %s34, 1
      %p183 = por %p181, %p182
      %p185 = scmp.ne.s32.totalorder %s170, %s184
      %p186 = scmp.eq.s32.totalorder %s34, 0
      %p187 = por %p185, %p186
      %s189 = sadd.s32 %s188, 1
      %p192 = scmp.eq.s32.totalorder %s28, 1
      %p193 = scmp.ne.s32.totalorder %s188, %s190
      %p194 = scmp.eq.s32.totalorder %s28, 0
      %p195 = por %p193, %p194
      %p196 = scmp.ne.s32.totalorder %s188, %s190
      %p197 = scmp.eq.s32.totalorder %s33, 1
      %p198 = por %p196, %p197
      %p199 = scmp.ne.s32.totalorder %s190, %s191
      %p200 = scmp.eq.s32.totalorder %s33, 0
      %p201 = por %p199, %p200
      %p202 = scmp.ne.s32.totalorder %s190, %s191
      %p203 = scmp.eq.s32.totalorder %s34, 1
      %p204 = por %p202, %p203
      %p206 = scmp.ne.s32.totalorder %s191, %s205
      %p207 = scmp.eq.s32.totalorder %s34, 0
      %p208 = por %p206, %p207
      %s210 = sadd.s32 %s209, 1
      %p213 = scmp.eq.s32.totalorder %s28, 1
      %p214 = scmp.ne.s32.totalorder %s209, %s211
      %p215 = scmp.eq.s32.totalorder %s28, 0
      %p216 = por %p214, %p215
      %p217 = scmp.ne.s32.totalorder %s209, %s211
      %p218 = scmp.eq.s32.totalorder %s33, 1
      %p219 = por %p217, %p218
      %p220 = scmp.ne.s32.totalorder %s211, %s212
      %p221 = scmp.eq.s32.totalorder %s33, 0
      %p222 = por %p220, %p221
      %p223 = scmp.ne.s32.totalorder %s211, %s212
      %p224 = scmp.eq.s32.totalorder %s34, 1
      %p225 = por %p223, %p224
      %p227 = scmp.ne.s32.totalorder %s212, %s226
      %p228 = scmp.eq.s32.totalorder %s34, 0
      %p229 = por %p227, %p228
      %s231 = sadd.s32 %s230, 1
      %p234 = scmp.eq.s32.totalorder %s28, 1
      %p235 = scmp.ne.s32.totalorder %s230, %s232
      %p236 = scmp.eq.s32.totalorder %s28, 0
      %p237 = por %p235, %p236
      %p238 = scmp.ne.s32.totalorder %s230, %s232
      %p239 = scmp.eq.s32.totalorder %s33, 1
      %p240 = por %p238, %p239
      %p241 = scmp.ne.s32.totalorder %s232, %s233
      %p242 = scmp.eq.s32.totalorder %s33, 0
      %p243 = por %p241, %p242
      %p244 = scmp.ne.s32.totalorder %s232, %s233
      %p245 = scmp.eq.s32.totalorder %s34, 1
      %p246 = por %p244, %p245
      %p248 = scmp.ne.s32.totalorder %s233, %s247
      %p249 = scmp.eq.s32.totalorder %s34, 0
      %p250 = por %p248, %p249
      %s252 = sadd.s32 %s251, 1
      %p255 = scmp.eq.s32.totalorder %s28, 1
      %p256 = scmp.ne.s32.totalorder %s251, %s253
      %p257 = scmp.eq.s32.totalorder %s28, 0
      %p258 = por %p256, %p257
      %p259 = scmp.ne.s32.totalorder %s251, %s253
      %p260 = scmp.eq.s32.totalorder %s33, 1
      %p261 = por %p259, %p260
      %p262 = scmp.ne.s32.totalorder %s253, %s254
      %p263 = scmp.eq.s32.totalorder %s33, 0
      %p264 = por %p262, %p263
      %p265 = scmp.ne.s32.totalorder %s253, %s254
      %p266 = scmp.eq.s32.totalorder %s34, 1
      %p267 = por %p265, %p266
      %p269 = scmp.ne.s32.totalorder %s254, %s268
      %p270 = scmp.eq.s32.totalorder %s34, 0
      %p271 = por %p269, %p270
      %s273 = sadd.s32 %s272, 1
      %p276 = scmp.eq.s32.totalorder %s28, 1
      %p277 = scmp.ne.s32.totalorder %s272, %s274
      %p278 = scmp.eq.s32.totalorder %s28, 0
      %p279 = por %p277, %p278
      %p280 = scmp.ne.s32.totalorder %s272, %s274
      %p281 = scmp.eq.s32.totalorder %s33, 1
      %p282 = por %p280, %p281
      %p283 = scmp.ne.s32.totalorder %s274, %s275
      %p284 = scmp.eq.s32.totalorder %s33, 0
      %p285 = por %p283, %p284
      %p286 = scmp.ne.s32.totalorder %s274, %s275
      %p287 = scmp.eq.s32.totalorder %s34, 1
      %p288 = por %p286, %p287
      %p290 = scmp.ne.s32.totalorder %s275, %s289
      %p291 = scmp.eq.s32.totalorder %s34, 0
      %p292 = por %p290, %p291
      %s294 = sadd.s32 %s293, 1
      %p297 = scmp.eq.s32.totalorder %s28, 1
      %p298 = scmp.ne.s32.totalorder %s293, %s295
      %p299 = scmp.eq.s32.totalorder %s28, 0
      %p300 = por %p298, %p299
      %p301 = scmp.ne.s32.totalorder %s293, %s295
      %p302 = scmp.eq.s32.totalorder %s33, 1
      %p303 = por %p301, %p302
      %p304 = scmp.ne.s32.totalorder %s295, %s296
      %p305 = scmp.eq.s32.totalorder %s33, 0
      %p306 = por %p304, %p305
      %p307 = scmp.ne.s32.totalorder %s295, %s296
      %p308 = scmp.eq.s32.totalorder %s34, 1
      %p309 = por %p307, %p308
      %p311 = scmp.ne.s32.totalorder %s296, %s310
      %p312 = scmp.eq.s32.totalorder %s34, 0
      %p313 = por %p311, %p312
      %s315 = sadd.s32 %s314, 1
      %p318 = scmp.eq.s32.totalorder %s28, 1
      %p319 = scmp.ne.s32.totalorder %s314, %s316
      %p320 = scmp.eq.s32.totalorder %s28, 0
      %p321 = por %p319, %p320
      %p322 = scmp.ne.s32.totalorder %s314, %s316
      %p323 = scmp.eq.s32.totalorder %s33, 1
      %p324 = por %p322, %p323
      %p325 = scmp.ne.s32.totalorder %s316, %s317
      %p326 = scmp.eq.s32.totalorder %s33, 0
      %p327 = por %p325, %p326
      %p328 = scmp.ne.s32.totalorder %s316, %s317
      %p329 = scmp.eq.s32.totalorder %s34, 1
      %p330 = por %p328, %p329
      %p332 = scmp.ne.s32.totalorder %s317, %s331
      %p333 = scmp.eq.s32.totalorder %s34, 0
      %p334 = por %p332, %p333
      %s336 = sadd.s32 %s335, 1
      %p339 = scmp.eq.s32.totalorder %s28, 1
      %p340 = scmp.ne.s32.totalorder %s335, %s337
      %p341 = scmp.eq.s32.totalorder %s28, 0
      %p342 = por %p340, %p341
      %p343 = scmp.ne.s32.totalorder %s335, %s337
      %p344 = scmp.eq.s32.totalorder %s33, 1
      %p345 = por %p343, %p344
      %p346 = scmp.ne.s32.totalorder %s337, %s338
      %p347 = scmp.eq.s32.totalorder %s33, 0
      %p348 = por %p346, %p347
      %p349 = scmp.ne.s32.totalorder %s337, %s338
      %p350 = scmp.eq.s32.totalorder %s34, 1
      %p351 = por %p349, %p350
      %p353 = scmp.ne.s32.totalorder %s338, %s352
      %p354 = scmp.eq.s32.totalorder %s34, 0
      %p355 = por %p353, %p354
      %s357 = sadd.s32 %s356, 1
      %p360 = scmp.eq.s32.totalorder %s28, 1
      %p361 = scmp.ne.s32.totalorder %s356, %s358
      %p362 = scmp.eq.s32.totalorder %s28, 0
      %p363 = por %p361, %p362
      %p364 = scmp.ne.s32.totalorder %s356, %s358
      %p365 = scmp.eq.s32.totalorder %s33, 1
      %p366 = por %p364, %p365
      %p367 = scmp.ne.s32.totalorder %s358, %s359
      %p368 = scmp.eq.s32.totalorder %s33, 0
      %p369 = por %p367, %p368
      %p370 = scmp.ne.s32.totalorder %s358, %s359
      %p371 = scmp.eq.s32.totalorder %s34, 1
      %p372 = por %p370, %p371
      %p374 = scmp.ne.s32.totalorder %s359, %s373
      %p375 = scmp.eq.s32.totalorder %s34, 0
      %p376 = por %p374, %p375
      %s378 = sadd.s32 %s377, 1
      %p381 = scmp.eq.s32.totalorder %s28, 1
      %p382 = scmp.ne.s32.totalorder %s377, %s379
      %p383 = scmp.eq.s32.totalorder %s28, 0
      %p384 = por %p382, %p383
      %p385 = scmp.ne.s32.totalorder %s377, %s379
      %p386 = scmp.eq.s32.totalorder %s33, 1
      %p387 = por %p385, %p386
      %p388 = scmp.ne.s32.totalorder %s379, %s380
      %p389 = scmp.eq.s32.totalorder %s33, 0
      %p390 = por %p388, %p389
      %p391 = scmp.ne.s32.totalorder %s379, %s380
      %p392 = scmp.eq.s32.totalorder %s34, 1
      %p393 = por %p391, %p392
      %p395 = scmp.ne.s32.totalorder %s380, %s394
      %p396 = scmp.eq.s32.totalorder %s34, 0
      %p397 = por %p395, %p396
      %s399 = sadd.s32 %s398, 1
      %p402 = scmp.eq.s32.totalorder %s28, 1
      %p403 = scmp.ne.s32.totalorder %s398, %s400
      %p404 = scmp.eq.s32.totalorder %s28, 0
      %p405 = por %p403, %p404
      %p406 = scmp.ne.s32.totalorder %s398, %s400
      %p407 = scmp.eq.s32.totalorder %s33, 1
      %p408 = por %p406, %p407
      %p409 = scmp.ne.s32.totalorder %s400, %s401
      %p410 = scmp.eq.s32.totalorder %s33, 0
      %p411 = por %p409, %p410
      %p412 = scmp.ne.s32.totalorder %s400, %s401
      %p413 = scmp.eq.s32.totalorder %s34, 1
      %p414 = por %p412, %p413
      %p416 = scmp.ne.s32.totalorder %s401, %s415
      %p417 = scmp.eq.s32.totalorder %s34, 0
      %p418 = por %p416, %p417
      %s420 = sadd.s32 %s419, 1
      %p423 = scmp.eq.s32.totalorder %s28, 1
      %p424 = scmp.ne.s32.totalorder %s419, %s421
      %p425 = scmp.eq.s32.totalorder %s28, 0
      %p426 = por %p424, %p425
      %p427 = scmp.ne.s32.totalorder %s419, %s421
      %p428 = scmp.eq.s32.totalorder %s33, 1
      %p429 = por %p427, %p428
      %p430 = scmp.ne.s32.totalorder %s421, %s422
      %p431 = scmp.eq.s32.totalorder %s33, 0
      %p432 = por %p430, %p431
      %p433 = scmp.ne.s32.totalorder %s421, %s422
      %p434 = scmp.eq.s32.totalorder %s34, 1
      %p435 = por %p433, %p434
      %p437 = scmp.ne.s32.totalorder %s422, %s436
      %p438 = scmp.eq.s32.totalorder %s34, 0
      %p439 = por %p437, %p438
      %s440 = ssub.s32 %s28, %s35
      %p441 = scmp.eq.s32.totalorder %s440, 0
      %s443 = sadd.s32 %s442, 1
      %s444 = scalar_select %p441, %s442, %s443
      %p447 = pneg %p441
      %p448 = scmp.eq.s32.totalorder %s28, 1
      %p449 = por %p447, %p448
      %p450 = scmp.ne.s32.totalorder %s442, %s445
      %p451 = scmp.eq.s32.totalorder %s28, 0
      %p452 = por %p450, %p451
      %p453 = scmp.ne.s32.totalorder %s442, %s445
      %p454 = scmp.eq.s32.totalorder %s33, 1
      %p455 = por %p453, %p454
      %p456 = scmp.ne.s32.totalorder %s445, %s446
      %p457 = scmp.eq.s32.totalorder %s33, 0
      %p458 = por %p456, %p457
      %p459 = scmp.ne.s32.totalorder %s445, %s446
      %p460 = scmp.eq.s32.totalorder %s34, 1
      %p461 = por %p459, %p460
      %p463 = scmp.ne.s32.totalorder %s446, %s462
      %p464 = scmp.eq.s32.totalorder %s34, 0
      %p465 = por %p463, %p464
      %p466 = scmp.le.s32.totalorder 1, %s28
      %p467 = scmp.lt.s32.totalorder %s28, 3
      %p468 = pnand %p466, %p467
      %p469 = pneg %p468
      // Predicated region
      $region9: #{danet_forward.1} parent=5 // pred_check
        _
      $region10: #{danet_forward.1} parent=5 // pred_check_branch
        %471 = sbr.rel (%p468) target = $region12
      $region11: #{danet_forward.1} parent=5 // pred_region
        %s472 = ssub.s32 %s28, 1
        // Predicated region
        $region13: #{danet_forward.1} parent=11 // pred_check
          %p473 = pneg %p75
        $region14: #{danet_forward.1} parent=11 // pred_check_branch
          %475 = sbr.rel (%p473) target = $region16
        $region15: #{danet_forward.1} parent=11 // pred_region
          _
        $region16: #{danet_forward.1} parent=11 // pred_fallthru
          _
        // Predicated region
        $region17: #{danet_forward.1} parent=11 // pred_check
          %p476 = pneg %p96
        $region18: #{danet_forward.1} parent=11 // pred_check_branch
          %478 = sbr.rel (%p476) target = $region20
        $region19: #{danet_forward.1} parent=11 // pred_region
          _
        $region20: #{danet_forward.1} parent=11 // pred_fallthru
          _
        // Predicated region
        $region21: #{danet_forward.1} parent=11 // pred_check
          %p479 = pneg %p117
        $region22: #{danet_forward.1} parent=11 // pred_check_branch
          %481 = sbr.rel (%p479) target = $region24
        $region23: #{danet_forward.1} parent=11 // pred_region
          _
        $region24: #{danet_forward.1} parent=11 // pred_fallthru
          _
        // Predicated region
        $region25: #{danet_forward.1} parent=11 // pred_check
          %p482 = pneg %p138
        $region26: #{danet_forward.1} parent=11 // pred_check_branch
          %484 = sbr.rel (%p482) target = $region28
        $region27: #{danet_forward.1} parent=11 // pred_region
          _
        $region28: #{danet_forward.1} parent=11 // pred_fallthru
          _
        // Predicated region
        $region29: #{danet_forward.1} parent=11 // pred_check
          %p485 = pneg %p159
        $region30: #{danet_forward.1} parent=11 // pred_check_branch
          %487 = sbr.rel (%p485) target = $region32
        $region31: #{danet_forward.1} parent=11 // pred_region
          _
        $region32: #{danet_forward.1} parent=11 // pred_fallthru
          _
        // Predicated region
        $region33: #{danet_forward.1} parent=11 // pred_check
          %p488 = pneg %p180
        $region34: #{danet_forward.1} parent=11 // pred_check_branch
          %490 = sbr.rel (%p488) target = $region36
        $region35: #{danet_forward.1} parent=11 // pred_region
          _
        $region36: #{danet_forward.1} parent=11 // pred_fallthru
          _
        // Predicated region
        $region37: #{danet_forward.1} parent=11 // pred_check
          %p491 = pneg %p201
        $region38: #{danet_forward.1} parent=11 // pred_check_branch
          %493 = sbr.rel (%p491) target = $region40
        $region39: #{danet_forward.1} parent=11 // pred_region
          _
        $region40: #{danet_forward.1} parent=11 // pred_fallthru
          _
        // Predicated region
        $region41: #{danet_forward.1} parent=11 // pred_check
          %p494 = pneg %p222
        $region42: #{danet_forward.1} parent=11 // pred_check_branch
          %496 = sbr.rel (%p494) target = $region44
        $region43: #{danet_forward.1} parent=11 // pred_region
          _
        $region44: #{danet_forward.1} parent=11 // pred_fallthru
          _
        // Predicated region
        $region45: #{danet_forward.1} parent=11 // pred_check
          %p497 = pneg %p243
        $region46: #{danet_forward.1} parent=11 // pred_check_branch
          %499 = sbr.rel (%p497) target = $region48
        $region47: #{danet_forward.1} parent=11 // pred_region
          _
        $region48: #{danet_forward.1} parent=11 // pred_fallthru
          _
        // Predicated region
        $region49: #{danet_forward.1} parent=11 // pred_check
          %p500 = pneg %p264
        $region50: #{danet_forward.1} parent=11 // pred_check_branch
          %502 = sbr.rel (%p500) target = $region52
        $region51: #{danet_forward.1} parent=11 // pred_region
          _
        $region52: #{danet_forward.1} parent=11 // pred_fallthru
          _
        // Predicated region
        $region53: #{danet_forward.1} parent=11 // pred_check
          %p503 = pneg %p285
        $region54: #{danet_forward.1} parent=11 // pred_check_branch
          %505 = sbr.rel (%p503) target = $region56
        $region55: #{danet_forward.1} parent=11 // pred_region
          _
        $region56: #{danet_forward.1} parent=11 // pred_fallthru
          _
        // Predicated region
        $region57: #{danet_forward.1} parent=11 // pred_check
          %p506 = pneg %p306
        $region58: #{danet_forward.1} parent=11 // pred_check_branch
          %508 = sbr.rel (%p506) target = $region60
        $region59: #{danet_forward.1} parent=11 // pred_region
          _
        $region60: #{danet_forward.1} parent=11 // pred_fallthru
          _
        // Predicated region
        $region61: #{danet_forward.1} parent=11 // pred_check
          %p509 = pneg %p327
        $region62: #{danet_forward.1} parent=11 // pred_check_branch
          %511 = sbr.rel (%p509) target = $region64
        $region63: #{danet_forward.1} parent=11 // pred_region
          _
        $region64: #{danet_forward.1} parent=11 // pred_fallthru
          _
        // Predicated region
        $region65: #{danet_forward.1} parent=11 // pred_check
          %p512 = pneg %p348
        $region66: #{danet_forward.1} parent=11 // pred_check_branch
          %514 = sbr.rel (%p512) target = $region68
        $region67: #{danet_forward.1} parent=11 // pred_region
          _
        $region68: #{danet_forward.1} parent=11 // pred_fallthru
          _
        // Predicated region
        $region69: #{danet_forward.1} parent=11 // pred_check
          %p515 = pneg %p369
        $region70: #{danet_forward.1} parent=11 // pred_check_branch
          %517 = sbr.rel (%p515) target = $region72
        $region71: #{danet_forward.1} parent=11 // pred_region
          _
        $region72: #{danet_forward.1} parent=11 // pred_fallthru
          _
        // Predicated region
        $region73: #{danet_forward.1} parent=11 // pred_check
          %p518 = pneg %p390
        $region74: #{danet_forward.1} parent=11 // pred_check_branch
          %520 = sbr.rel (%p518) target = $region76
        $region75: #{danet_forward.1} parent=11 // pred_region
          _
        $region76: #{danet_forward.1} parent=11 // pred_fallthru
          _
        // Predicated region
        $region77: #{danet_forward.1} parent=11 // pred_check
          %p521 = pneg %p411
        $region78: #{danet_forward.1} parent=11 // pred_check_branch
          %523 = sbr.rel (%p521) target = $region80
        $region79: #{danet_forward.1} parent=11 // pred_region
          _
        $region80: #{danet_forward.1} parent=11 // pred_fallthru
          _
        // Predicated region
        $region81: #{danet_forward.1} parent=11 // pred_check
          %p524 = pneg %p432
        $region82: #{danet_forward.1} parent=11 // pred_check_branch
          %526 = sbr.rel (%p524) target = $region84
        $region83: #{danet_forward.1} parent=11 // pred_region
          _
        $region84: #{danet_forward.1} parent=11 // pred_fallthru
          _
      $region12: #{danet_forward.1} parent=5 // pred_fallthru
        _
      %p527 = scmp.lt.s32.totalorder %s28, 2
      // Predicated region
      $region85: #{danet_forward.1} parent=5 // pred_check
        %p528 = pneg %p527
      $region86: #{danet_forward.1} parent=5 // pred_check_branch
        %530 = sbr.rel (%p528) target = $region88
      $region87: #{danet_forward.1} parent=5 // pred_region
        // Predicated region
        $region89: #{danet_forward.1} parent=87 // pred_check
          %p531 = pneg %p48
        $region90: #{danet_forward.1} parent=87 // pred_check_branch
          %533 = sbr.rel (%p531) target = $region92
        $region91: #{danet_forward.1} parent=87 // pred_region
          %s534 = smul.u32 100, %s28
          %p535 = scmp.lt.s32.totalorder %s534, 199
          %s536 = scalar_select %p535, %s534, 199
          %s537 = smul.addr %s536, 8
          %s538 = scalar_lea.vmem %s0, %s537
          %s539 = smul.u32 100, %s28
        $region92: #{danet_forward.1} parent=87 // pred_fallthru
          _
      $region88: #{danet_forward.1} parent=5 // pred_fallthru
        _
      %p540 = scmp.le.s32.totalorder 1, %s28
      %p541 = scmp.lt.s32.totalorder %s28, 3
      %p542 = pnand %p540, %p541
      %p543 = pneg %p542
      // Predicated region
      $region93: #{danet_forward.1} parent=5 // pred_check
        _
      $region94: #{danet_forward.1} parent=5 // pred_check_branch
        %545 = sbr.rel (%p542) target = $region96
      $region95: #{danet_forward.1} parent=5 // pred_region
        %s546 = ssub.s32 %s28, 1
        %s547 = smul.u32 100, %s33
        %p548 = scmp.lt.s32.totalorder %s547, 199
        %s549 = scalar_select %p548, %s547, 199
        %s550 = smul.addr %s549, 8
        %s551 = scalar_lea.vmem %s0, %s550
        %p552 = pneg %p54
        %p553 = pneg %p51
        %p554 = pneg %p75
        %p555 = pneg %p72
        %p556 = pneg %p96
        %p557 = pneg %p93
        %p558 = pneg %p117
        %p559 = pneg %p114
        %p560 = pneg %p138
        %p561 = pneg %p135
        %p562 = pneg %p159
        %p563 = pneg %p156
        %p564 = pneg %p180
        %p565 = pneg %p177
        %p566 = pneg %p201
        %p567 = pneg %p198
        %p568 = pneg %p222
        %p569 = pneg %p219
        %p570 = pneg %p243
        %p571 = pneg %p240
        %p572 = pneg %p264
        %p573 = pneg %p261
        %p574 = pneg %p285
        %p575 = pneg %p282
        %p576 = pneg %p306
        %p577 = pneg %p303
        %p578 = pneg %p327
        %p579 = pneg %p324
        %p580 = pneg %p348
        %p581 = pneg %p345
        %p582 = pneg %p369
        %p583 = pneg %p366
        %p584 = pneg %p390
        %p585 = pneg %p387
        %p586 = pneg %p411
        %p587 = pneg %p408
        %p588 = pneg %p432
        %p589 = pneg %p429
        %p590 = pneg %p458
        %p591 = pneg %p455
        %s592 = sand.u32 %s445, 1
        %s593 = scalar_lea.sflag [#allocation14], %s592
        %s594 = sand.u32 %s445, 1
        %s595 = smul.addr %s594, 8
        %s596 = scalar_lea.vmem [#allocation13], %s595
        %s597 = smul.u32 100, %s33
        %p598 = scmp.lt.s32.totalorder %s597, 199
        %s599 = scalar_select %p598, %s597, 199
        %s600 = smul.addr %s599, 8
        %s601 = scalar_lea.vmem %s0, %s600
        %s602 = smul.u32 100, %s33
        loop: start=0, step=1, limit=5
        $region97: #{danet_forward.1} parent=95 // loop_pre_header
          _
        $region98: #{danet_forward.1} parent=95 // loop_header
          %s605 = sphi 0, %s609
          %p606 = scmp.ge.s32.totalorder %s605, 5
        $region99: #{danet_forward.1} parent=95 // loop_header_branch
          %608 = sbr.rel (%p606) target = $region103
        $region100: #{danet_forward.1} parent=95 // loop_body
          %s610 = smul.u32 %s605, 160
          %v611 = vlaneseq
          %v612 = vshrl.u32 %v611, 7
          %v613 = vadd.s32 %v612, 8
          %v614 = vadd.s32 %v612, 16
          %v615 = vadd.s32 %v612, 24
          %v616 = vadd.s32 %v612, 32
          %v617 = vadd.s32 %v612, 40
          %v618 = vadd.s32 %v612, 48
          %v619 = vadd.s32 %v612, 56
          %v620 = vadd.s32 %v612, 64
          %v621 = vadd.s32 %v612, 72
          %v622 = vadd.s32 %v612, 80
          %v623 = vadd.s32 %v612, 88
          %v624 = vadd.s32 %v612, 96
          %v625 = vadd.s32 %v612, 104
          %v626 = vadd.s32 %v612, 112
          %v627 = vadd.s32 %v612, 120
          %v628 = vadd.s32 %v612, 128
          %v629 = vadd.s32 %v612, 136
          %v630 = vadd.s32 %v612, 144
          %v631 = vadd.s32 %v612, 152
          %v632 = vstv %s610
          %v633 = vadd.s32 %v612, %v632
          %v634 = vadd.s32 %v613, %v632
          %v635 = vadd.s32 %v614, %v632
          %v636 = vadd.s32 %v615, %v632
          %v637 = vadd.s32 %v616, %v632
          %v638 = vadd.s32 %v617, %v632
          %v639 = vadd.s32 %v618, %v632
          %v640 = vadd.s32 %v619, %v632
          %v641 = vadd.s32 %v620, %v632
          %v642 = vadd.s32 %v621, %v632
          %v643 = vadd.s32 %v622, %v632
          %v644 = vadd.s32 %v623, %v632
          %v645 = vadd.s32 %v624, %v632
          %v646 = vadd.s32 %v625, %v632
          %v647 = vadd.s32 %v626, %v632
          %v648 = vadd.s32 %v627, %v632
          %v649 = vadd.s32 %v628, %v632
          %v650 = vadd.s32 %v629, %v632
          %v651 = vadd.s32 %v630, %v632
          %v652 = vadd.s32 %v631, %v632
          %vm653 = vcmp.ge.s32.totalorder %v633, 32
          %vm654 = vcmp.ge.s32.totalorder %v634, 32
          %vm655 = vcmp.ge.s32.totalorder %v635, 32
          %vm656 = vcmp.ge.s32.totalorder %v636, 32
          %vm657 = vcmp.ge.s32.totalorder %v637, 32
          %vm658 = vcmp.ge.s32.totalorder %v638, 32
          %vm659 = vcmp.ge.s32.totalorder %v639, 32
          %vm660 = vcmp.ge.s32.totalorder %v640, 32
          %vm661 = vcmp.ge.s32.totalorder %v641, 32
          %vm662 = vcmp.ge.s32.totalorder %v642, 32
          %vm663 = vcmp.ge.s32.totalorder %v643, 32
          %vm664 = vcmp.ge.s32.totalorder %v644, 32
          %vm665 = vcmp.ge.s32.totalorder %v645, 32
          %vm666 = vcmp.ge.s32.totalorder %v646, 32
          %vm667 = vcmp.ge.s32.totalorder %v647, 32
          %vm668 = vcmp.ge.s32.totalorder %v648, 32
          %vm669 = vcmp.ge.s32.totalorder %v649, 32
          %vm670 = vcmp.ge.s32.totalorder %v650, 32
          %vm671 = vcmp.ge.s32.totalorder %v651, 32
          %vm672 = vcmp.ge.s32.totalorder %v652, 32
          %v673 = vand.u32 %v633, 31
          %v674 = vand.u32 %v634, 31
          %v675 = vand.u32 %v635, 31
          %v676 = vand.u32 %v636, 31
          %v677 = vand.u32 %v637, 31
          %v678 = vand.u32 %v638, 31
          %v679 = vand.u32 %v639, 31
          %v680 = vand.u32 %v640, 31
          %v681 = vand.u32 %v641, 31
          %v682 = vand.u32 %v642, 31
          %v683 = vand.u32 %v643, 31
          %v684 = vand.u32 %v644, 31
          %v685 = vand.u32 %v645, 31
          %v686 = vand.u32 %v646, 31
          %v687 = vand.u32 %v647, 31
          %v688 = vand.u32 %v648, 31
          %v689 = vand.u32 %v649, 31
          %v690 = vand.u32 %v650, 31
          %v691 = vand.u32 %v651, 31
          %v692 = vand.u32 %v652, 31
          %vm693 = vcmp.lt.s32.totalorder %v673, 24
          %vm694 = vcmp.lt.s32.totalorder %v674, 24
          %vm695 = vcmp.lt.s32.totalorder %v675, 24
          %vm696 = vcmp.lt.s32.totalorder %v676, 24
          %vm697 = vcmp.lt.s32.totalorder %v677, 24
          %vm698 = vcmp.lt.s32.totalorder %v678, 24
          %vm699 = vcmp.lt.s32.totalorder %v679, 24
          %vm700 = vcmp.lt.s32.totalorder %v680, 24
          %vm701 = vcmp.lt.s32.totalorder %v681, 24
          %vm702 = vcmp.lt.s32.totalorder %v682, 24
          %vm703 = vcmp.lt.s32.totalorder %v683, 24
          %vm704 = vcmp.lt.s32.totalorder %v684, 24
          %vm705 = vcmp.lt.s32.totalorder %v685, 24
          %vm706 = vcmp.lt.s32.totalorder %v686, 24
          %vm707 = vcmp.lt.s32.totalorder %v687, 24
          %vm708 = vcmp.lt.s32.totalorder %v688, 24
          %vm709 = vcmp.lt.s32.totalorder %v689, 24
          %vm710 = vcmp.lt.s32.totalorder %v690, 24
          %vm711 = vcmp.lt.s32.totalorder %v691, 24
          %vm712 = vcmp.lt.s32.totalorder %v692, 24
          %vm713 = vmand %vm653, %vm693
          %vm714 = vmand %vm654, %vm694
          %vm715 = vmand %vm655, %vm695
          %vm716 = vmand %vm656, %vm696
          %vm717 = vmand %vm657, %vm697
          %vm718 = vmand %vm658, %vm698
          %vm719 = vmand %vm659, %vm699
          %vm720 = vmand %vm660, %vm700
          %vm721 = vmand %vm661, %vm701
          %vm722 = vmand %vm662, %vm702
          %vm723 = vmand %vm663, %vm703
          %vm724 = vmand %vm664, %vm704
          %vm725 = vmand %vm665, %vm705
          %vm726 = vmand %vm666, %vm706
          %vm727 = vmand %vm667, %vm707
          %vm728 = vmand %vm668, %vm708
          %vm729 = vmand %vm669, %vm709
          %vm730 = vmand %vm670, %vm710
          %vm731 = vmand %vm671, %vm711
          %vm732 = vmand %vm672, %vm712
          %v733 = vsel %vm713, 1, 0
          %v734 = vsel %vm714, 1, 0
          %v735 = vsel %vm715, 1, 0
          %v736 = vsel %vm716, 1, 0
          %v737 = vsel %vm717, 1, 0
          %v738 = vsel %vm718, 1, 0
          %v739 = vsel %vm719, 1, 0
          %v740 = vsel %vm720, 1, 0
          %v741 = vsel %vm721, 1, 0
          %v742 = vsel %vm722, 1, 0
          %v743 = vsel %vm723, 1, 0
          %v744 = vsel %vm724, 1, 0
          %v745 = vsel %vm725, 1, 0
          %v746 = vsel %vm726, 1, 0
          %v747 = vsel %vm727, 1, 0
          %v748 = vsel %vm728, 1, 0
          %v749 = vsel %vm729, 1, 0
          %v750 = vsel %vm730, 1, 0
          %v751 = vsel %vm731, 1, 0
          %v752 = vsel %vm732, 1, 0
          %v753 = vcvt.s32.f32 %v733
          %v754 = vcvt.s32.f32 %v734
          %v755 = vcvt.s32.f32 %v735
          %v756 = vcvt.s32.f32 %v736
          %v757 = vcvt.s32.f32 %v737
          %v758 = vcvt.s32.f32 %v738
          %v759 = vcvt.s32.f32 %v739
          %v760 = vcvt.s32.f32 %v740
          %v761 = vcvt.s32.f32 %v741
          %v762 = vcvt.s32.f32 %v742
          %v763 = vcvt.s32.f32 %v743
          %v764 = vcvt.s32.f32 %v744
          %v765 = vcvt.s32.f32 %v745
          %v766 = vcvt.s32.f32 %v746
          %v767 = vcvt.s32.f32 %v747
          %v768 = vcvt.s32.f32 %v748
          %v769 = vcvt.s32.f32 %v749
          %v770 = vcvt.s32.f32 %v750
          %v771 = vcvt.s32.f32 %v751
          %v772 = vcvt.s32.f32 %v752
          %s773 = scalar_lea.vmem [#allocation2], %s610
          %vm774 = vcmask 7168
          %775 = vst.msk [vmem:[%s773] sm:$0xff] %vm774, %v753
          %776 = vst.msk [vmem:[%s773 + $0x8] sm:$0xff] %vm774, %v754
          %777 = vst.msk [vmem:[%s773 + $0x10] sm:$0xff] %vm774, %v755
          %778 = vst.msk [vmem:[%s773 + $0x18] sm:$0xff] %vm774, %v756
          %779 = vst.msk [vmem:[%s773 + $0x20] sm:$0xff] %vm774, %v757
          %780 = vst.msk [vmem:[%s773 + $0x28] sm:$0xff] %vm774, %v758
          %781 = vst.msk [vmem:[%s773 + $0x30] sm:$0xff] %vm774, %v759
          %782 = vst.msk [vmem:[%s773 + $0x38] sm:$0xff] %vm774, %v760
          %783 = vst.msk [vmem:[%s773 + $0x40] sm:$0xff] %vm774, %v761
          %784 = vst.msk [vmem:[%s773 + $0x48] sm:$0xff] %vm774, %v762
          %785 = vst.msk [vmem:[%s773 + $0x50] sm:$0xff] %vm774, %v763
          %786 = vst.msk [vmem:[%s773 + $0x58] sm:$0xff] %vm774, %v764
          %787 = vst.msk [vmem:[%s773 + $0x60] sm:$0xff] %vm774, %v765
          %788 = vst.msk [vmem:[%s773 + $0x68] sm:$0xff] %vm774, %v766
          %789 = vst.msk [vmem:[%s773 + $0x70] sm:$0xff] %vm774, %v767
          %790 = vst.msk [vmem:[%s773 + $0x78] sm:$0xff] %vm774, %v768
          %791 = vst.msk [vmem:[%s773 + $0x80] sm:$0xff] %vm774, %v769
          %792 = vst.msk [vmem:[%s773 + $0x88] sm:$0xff] %vm774, %v770
          %793 = vst.msk [vmem:[%s773 + $0x90] sm:$0xff] %vm774, %v771
          %794 = vst.msk [vmem:[%s773 + $0x98] sm:$0xff] %vm774, %v772
        $region101: #{danet_forward.1} parent=95 // loop_footer
          %s609 = sadd.s32 1, %s605
        $region102: #{danet_forward.1} parent=95 // loop_footer_branch
          %604 = sbr.rel target = $region98
        $region103: #{danet_forward.1} parent=95 // loop_exit
          _
        %vm795 = vcmask 392192
        %796 = vst.msk [vmem:[#allocation3] sm:$0xff] %vm795, 0.0
        %797 = vst.msk [vmem:[#allocation3 + $0x8] sm:$0xff] %vm795, 0.0
        %798 = vst.msk [vmem:[#allocation3 + $0x10] sm:$0xff] %vm795, 0.0
        %799 = vst.msk [vmem:[#allocation3 + $0x18] sm:$0xff] %vm795, 0.0
        %800 = vst.msk [vmem:[#allocation3 + $0x20] sm:$0xff] %vm795, 0.0
        %801 = vst.msk [vmem:[#allocation3 + $0x1928] sm:$0xff] %vm795, 0.0
        %802 = vst.msk [vmem:[#allocation3 + $0x1930] sm:$0xff] %vm795, 0.0
        %803 = vst.msk [vmem:[#allocation3 + $0x1938] sm:$0xff] %vm795, 0.0
        %804 = vst.msk [vmem:[#allocation3 + $0x1940] sm:$0xff] %vm795, 0.0
        %805 = vst.msk [vmem:[#allocation3 + $0x1948] sm:$0xff] %vm795, 0.0
        loop: start=0, step=1, limit=5
        $region104: #{danet_forward.1} parent=95 // loop_pre_header
          _
        $region105: #{danet_forward.1} parent=95 // loop_header
          %s807 = sphi 0, %s811
          %p808 = scmp.ge.s32.totalorder %s807, 5
        $region106: #{danet_forward.1} parent=95 // loop_header_branch
          %810 = sbr.rel (%p808) target = $region110
        $region107: #{danet_forward.1} parent=95 // loop_body
          %s812 = smul.u32 %s807, 160
          %s813 = scalar_lea.vmem %s601, %s812
          %v814 = vld [vmem:[%s813] sm:$0xff]
          %v815 = vld [vmem:[%s813 + $0x8] sm:$0xff]
          %v816 = vld [vmem:[%s813 + $0x10] sm:$0xff]
          %v817 = vld [vmem:[%s813 + $0x18] sm:$0xff]
          %v818 = vld [vmem:[%s813 + $0x20] sm:$0xff]
          %v819 = vld [vmem:[%s813 + $0x28] sm:$0xff]
          %v820 = vld [vmem:[%s813 + $0x30] sm:$0xff]
          %v821 = vld [vmem:[%s813 + $0x38] sm:$0xff]
          %v822 = vld [vmem:[%s813 + $0x40] sm:$0xff]
          %v823 = vld [vmem:[%s813 + $0x48] sm:$0xff]
          %v824 = vld [vmem:[%s813 + $0x50] sm:$0xff]
          %v825 = vld [vmem:[%s813 + $0x58] sm:$0xff]
          %v826 = vld [vmem:[%s813 + $0x60] sm:$0xff]
          %v827 = vld [vmem:[%s813 + $0x68] sm:$0xff]
          %v828 = vld [vmem:[%s813 + $0x70] sm:$0xff]
          %v829 = vld [vmem:[%s813 + $0x78] sm:$0xff]
          %v830 = vld [vmem:[%s813 + $0x80] sm:$0xff]
          %v831 = vld [vmem:[%s813 + $0x88] sm:$0xff]
          %v832 = vld [vmem:[%s813 + $0x90] sm:$0xff]
          %v833 = vld [vmem:[%s813 + $0x98] sm:$0xff]
          %v834 = vld [vmem:[%s1] sm:$0x1]
          %836 = vset.pattern.permute.xlu0 0
          %837 = vperm.xlu0 %836, %v814
          %v838 = vpop.permute.xlu0 %837
          %841 = vset.pattern.permute.xlu0 0
          %842 = vperm.xlu0 %841, %v815
          %v843 = vpop.permute.xlu0 %842
          %846 = vset.pattern.permute.xlu0 0
          %847 = vperm.xlu0 %846, %v816
          %v848 = vpop.permute.xlu0 %847
          %851 = vset.pattern.permute.xlu0 0
          %852 = vperm.xlu0 %851, %v817
          %v853 = vpop.permute.xlu0 %852
          %856 = vset.pattern.permute.xlu0 0
          %857 = vperm.xlu0 %856, %v818
          %v858 = vpop.permute.xlu0 %857
          %861 = vset.pattern.permute.xlu0 0
          %862 = vperm.xlu0 %861, %v819
          %v863 = vpop.permute.xlu0 %862
          %866 = vset.pattern.permute.xlu0 0
          %867 = vperm.xlu0 %866, %v820
          %v868 = vpop.permute.xlu0 %867
          %871 = vset.pattern.permute.xlu0 0
          %872 = vperm.xlu0 %871, %v821
          %v873 = vpop.permute.xlu0 %872
          %876 = vset.pattern.permute.xlu0 0
          %877 = vperm.xlu0 %876, %v822
          %v878 = vpop.permute.xlu0 %877
          %881 = vset.pattern.permute.xlu0 0
          %882 = vperm.xlu0 %881, %v823
          %v883 = vpop.permute.xlu0 %882
          %886 = vset.pattern.permute.xlu0 0
          %887 = vperm.xlu0 %886, %v824
          %v888 = vpop.permute.xlu0 %887
          %891 = vset.pattern.permute.xlu0 0
          %892 = vperm.xlu0 %891, %v825
          %v893 = vpop.permute.xlu0 %892
          %896 = vset.pattern.permute.xlu0 0
          %897 = vperm.xlu0 %896, %v826
          %v898 = vpop.permute.xlu0 %897
          %901 = vset.pattern.permute.xlu0 0
          %902 = vperm.xlu0 %901, %v827
          %v903 = vpop.permute.xlu0 %902
          %906 = vset.pattern.permute.xlu0 0
          %907 = vperm.xlu0 %906, %v828
          %v908 = vpop.permute.xlu0 %907
          %911 = vset.pattern.permute.xlu0 0
          %912 = vperm.xlu0 %911, %v829
          %v913 = vpop.permute.xlu0 %912
          %916 = vset.pattern.permute.xlu0 0
          %917 = vperm.xlu0 %916, %v830
          %v918 = vpop.permute.xlu0 %917
          %921 = vset.pattern.permute.xlu0 0
          %922 = vperm.xlu0 %921, %v831
          %v923 = vpop.permute.xlu0 %922
          %926 = vset.pattern.permute.xlu0 0
          %927 = vperm.xlu0 %926, %v832
          %v928 = vpop.permute.xlu0 %927
          %931 = vset.pattern.permute.xlu0 0
          %932 = vperm.xlu0 %931, %v833
          %v933 = vpop.permute.xlu0 %932
          %v936 = vperm.slane %v834, 0
          %v938 = vmul.f32 %v838, %v936
          %v939 = vmul.f32 %v843, %v936
          %v940 = vmul.f32 %v848, %v936
          %v941 = vmul.f32 %v853, %v936
          %v942 = vmul.f32 %v858, %v936
          %v943 = vmul.f32 %v863, %v936
          %v944 = vmul.f32 %v868, %v936
          %v945 = vmul.f32 %v873, %v936
          %v946 = vmul.f32 %v878, %v936
          %v947 = vmul.f32 %v883, %v936
          %v948 = vmul.f32 %v888, %v936
          %v949 = vmul.f32 %v893, %v936
          %v950 = vmul.f32 %v898, %v936
          %v951 = vmul.f32 %v903, %v936
          %v952 = vmul.f32 %v908, %v936
          %v953 = vmul.f32 %v913, %v936
          %v954 = vmul.f32 %v918, %v936
          %v955 = vmul.f32 %v923, %v936
          %v956 = vmul.f32 %v928, %v936
          %v957 = vmul.f32 %v933, %v936
          %v958 = vld [vmem:[%s2] sm:$0x1]
          %v960 = vperm.slane %v958, 0
          %v962 = vadd.f32 %v938, %v960
          %v963 = vadd.f32 %v939, %v960
          %v964 = vadd.f32 %v940, %v960
          %v965 = vadd.f32 %v941, %v960
          %v966 = vadd.f32 %v942, %v960
          %v967 = vadd.f32 %v943, %v960
          %v968 = vadd.f32 %v944, %v960
          %v969 = vadd.f32 %v945, %v960
          %v970 = vadd.f32 %v946, %v960
          %v971 = vadd.f32 %v947, %v960
          %v972 = vadd.f32 %v948, %v960
          %v973 = vadd.f32 %v949, %v960
          %v974 = vadd.f32 %v950, %v960
          %v975 = vadd.f32 %v951, %v960
          %v976 = vadd.f32 %v952, %v960
          %v977 = vadd.f32 %v953, %v960
          %v978 = vadd.f32 %v954, %v960
          %v979 = vadd.f32 %v955, %v960
          %v980 = vadd.f32 %v956, %v960
          %v981 = vadd.f32 %v957, %v960
          %v982 = vmax.f32 %v962, 0.0
          %v983 = vmax.f32 %v963, 0.0
          %v984 = vmax.f32 %v964, 0.0
          %v985 = vmax.f32 %v965, 0.0
          %v986 = vmax.f32 %v966, 0.0
          %v987 = vmax.f32 %v967, 0.0
          %v988 = vmax.f32 %v968, 0.0
          %v989 = vmax.f32 %v969, 0.0
          %v990 = vmax.f32 %v970, 0.0
          %v991 = vmax.f32 %v971, 0.0
          %v992 = vmax.f32 %v972, 0.0
          %v993 = vmax.f32 %v973, 0.0
          %v994 = vmax.f32 %v974, 0.0
          %v995 = vmax.f32 %v975, 0.0
          %v996 = vmax.f32 %v976, 0.0
          %v997 = vmax.f32 %v977, 0.0
          %v998 = vmax.f32 %v978, 0.0
          %v999 = vmax.f32 %v979, 0.0
          %v1000 = vmax.f32 %v980, 0.0
          %v1001 = vmax.f32 %v981, 0.0
          %v1002 = vpack.c.bf16 %v983, %v982
          %v1003 = vpack.c.bf16 %v985, %v984
          %v1004 = vpack.c.bf16 %v987, %v986
          %v1005 = vpack.c.bf16 %v989, %v988
          %v1006 = vpack.c.bf16 %v991, %v990
          %v1007 = vpack.c.bf16 %v993, %v992
          %v1008 = vpack.c.bf16 %v995, %v994
          %v1009 = vpack.c.bf16 %v997, %v996
          %v1010 = vpack.c.bf16 %v999, %v998
          %v1011 = vpack.c.bf16 %v1001, %v1000
          %v1012 = vld [vmem:[%s3] sm:$0xf]
          %v1013 = vld [vmem:[%s3 + $0x4] sm:$0xf]
          %v1014 = vld [vmem:[%s3 + $0x8] sm:$0xf]
          %v1015 = vld [vmem:[%s3 + $0xc] sm:$0xf]
          %v1016 = vld [vmem:[%s3 + $0x10] sm:$0xf]
          %v1017 = vld [vmem:[%s3 + $0x14] sm:$0xf]
          %v1018 = vld [vmem:[%s4] sm:$0x1]
          %v1020 = vperm.slane %v1018, 0
          %v1028 = vunpack.c.l.b16 %v1012
          %v1029 = vunpack.c.l.b16 %v1013
          %v1030 = vunpack.c.l.b16 %v1014
          %v1031 = vunpack.c.l.b16 %v1015
          %v1032 = vunpack.c.l.b16 %v1016
          %v1033 = vunpack.c.l.b16 %v1017
          %v1034 = vpack.c.b16 %v1029, %v1028
          %v1035 = vpack.c.b16 %v1031, %v1030
          %v1036 = vpack.c.b16 %v1033, %v1032
          %v1041 = vsel %vm795, %v1002, 0
          %v1044 = vsel %vm795, %v1003, 0
          %v1047 = vsel %vm795, %v1004, 0
          %v1050 = vsel %vm795, %v1005, 0
          %v1053 = vsel %vm795, %v1006, 0
          %v1056 = vsel %vm795, %v1007, 0
          %v1059 = vsel %vm795, %v1008, 0
          %v1062 = vsel %vm795, %v1009, 0
          %v1065 = vsel %vm795, %v1010, 0
          %v1068 = vsel %vm795, %v1011, 0
          %1070 = vmatpush.bf16.msra.mxu0 0
          %1071 = vmatpush.bf16.msra.mxu0 0
          %1072 = vmatpush.bf16.msra.mxu0 0
          %1073 = vmatpush.bf16.msra.mxu0 0
          %1074 = vmatpush.bf16.msra.mxu0 0
          %1075 = vmatpush.bf16.msra.mxu0 %v1036
          %1076 = vmatpush.bf16.msra.mxu0 %v1035
          %1077 = vmatpush.bf16.msra.mxu0 %v1034
          %1078 = vmatmul.bf16.gmra.mxu0 %v1041
          %v1079 = vpop.f32.mrf.mxu0
          %v1080 = vadd.f32 %v1020, %v1079
          %v1081 = vpop.f32.mrf.mxu0
          %v1082 = vadd.f32 %v1020, %v1081
          %1083 = vmatmul.bf16.gmra.mxu0 %v1044
          %v1084 = vpop.f32.mrf.mxu0
          %v1085 = vadd.f32 %v1020, %v1084
          %v1086 = vpop.f32.mrf.mxu0
          %v1087 = vadd.f32 %v1020, %v1086
          %1088 = vmatmul.bf16.gmra.mxu0 %v1047
          %v1089 = vpop.f32.mrf.mxu0
          %v1090 = vadd.f32 %v1020, %v1089
          %v1091 = vpop.f32.mrf.mxu0
          %v1092 = vadd.f32 %v1020, %v1091
          %1093 = vmatmul.bf16.gmra.mxu0 %v1050
          %v1094 = vpop.f32.mrf.mxu0
          %v1095 = vadd.f32 %v1020, %v1094
          %v1096 = vpop.f32.mrf.mxu0
          %v1097 = vadd.f32 %v1020, %v1096
          %1098 = vmatmul.bf16.gmra.mxu0 %v1053
          %v1099 = vpop.f32.mrf.mxu0
          %v1100 = vadd.f32 %v1020, %v1099
          %v1101 = vpop.f32.mrf.mxu0
          %v1102 = vadd.f32 %v1020, %v1101
          %1103 = vmatmul.bf16.gmra.mxu0 %v1056
          %v1104 = vpop.f32.mrf.mxu0
          %v1105 = vadd.f32 %v1020, %v1104
          %v1106 = vpop.f32.mrf.mxu0
          %v1107 = vadd.f32 %v1020, %v1106
          %1108 = vmatmul.bf16.gmra.mxu0 %v1059
          %v1109 = vpop.f32.mrf.mxu0
          %v1110 = vadd.f32 %v1020, %v1109
          %v1111 = vpop.f32.mrf.mxu0
          %v1112 = vadd.f32 %v1020, %v1111
          %1113 = vmatmul.bf16.gmra.mxu0 %v1062
          %v1114 = vpop.f32.mrf.mxu0
          %v1115 = vadd.f32 %v1020, %v1114
          %v1116 = vpop.f32.mrf.mxu0
          %v1117 = vadd.f32 %v1020, %v1116
          %1118 = vmatmul.bf16.gmra.mxu0 %v1065
          %v1119 = vpop.f32.mrf.mxu0
          %v1120 = vadd.f32 %v1020, %v1119
          %v1121 = vpop.f32.mrf.mxu0
          %v1122 = vadd.f32 %v1020, %v1121
          %1123 = vmatmul.bf16.gmra.mxu0 %v1068
          %v1124 = vpop.f32.mrf.mxu0
          %v1125 = vadd.f32 %v1020, %v1124
          %v1126 = vpop.f32.mrf.mxu0
          %v1127 = vadd.f32 %v1020, %v1126
          %1128 = vdwg.mxu0
          %v1129 = vmax.f32 %v1080, 0.0
          %v1130 = vmax.f32 %v1082, 0.0
          %v1131 = vmax.f32 %v1085, 0.0
          %v1132 = vmax.f32 %v1087, 0.0
          %v1133 = vmax.f32 %v1090, 0.0
          %v1134 = vmax.f32 %v1092, 0.0
          %v1135 = vmax.f32 %v1095, 0.0
          %v1136 = vmax.f32 %v1097, 0.0
          %v1137 = vmax.f32 %v1100, 0.0
          %v1138 = vmax.f32 %v1102, 0.0
          %v1139 = vmax.f32 %v1105, 0.0
          %v1140 = vmax.f32 %v1107, 0.0
          %v1141 = vmax.f32 %v1110, 0.0
          %v1142 = vmax.f32 %v1112, 0.0
          %v1143 = vmax.f32 %v1115, 0.0
          %v1144 = vmax.f32 %v1117, 0.0
          %v1145 = vmax.f32 %v1120, 0.0
          %v1146 = vmax.f32 %v1122, 0.0
          %v1147 = vmax.f32 %v1125, 0.0
          %v1148 = vmax.f32 %v1127, 0.0
          %v1149 = vpack.c.bf16 %v1130, %v1129
          %v1150 = vpack.c.bf16 %v1132, %v1131
          %v1151 = vpack.c.bf16 %v1134, %v1133
          %v1152 = vpack.c.bf16 %v1136, %v1135
          %v1153 = vpack.c.bf16 %v1138, %v1137
          %v1154 = vpack.c.bf16 %v1140, %v1139
          %v1155 = vpack.c.bf16 %v1142, %v1141
          %v1156 = vpack.c.bf16 %v1144, %v1143
          %v1157 = vpack.c.bf16 %v1146, %v1145
          %v1158 = vpack.c.bf16 %v1148, %v1147
          %v1159 = vld [vmem:[%s5] sm:$0xf]
          %v1160 = vld [vmem:[%s5 + $0x4] sm:$0xf]
          %v1161 = vld [vmem:[%s5 + $0x8] sm:$0xf]
          %v1162 = vld [vmem:[%s5 + $0xc] sm:$0xf]
          %v1163 = vld [vmem:[%s5 + $0x10] sm:$0xf]
          %v1164 = vld [vmem:[%s5 + $0x14] sm:$0xf]
          %v1165 = vld [vmem:[%s6] sm:$0x1]
          %v1167 = vperm.slane %v1165, 0
          %v1175 = vunpack.c.l.b16 %v1159
          %v1176 = vunpack.c.l.b16 %v1160
          %v1177 = vunpack.c.l.b16 %v1161
          %v1178 = vunpack.c.l.b16 %v1162
          %v1179 = vunpack.c.l.b16 %v1163
          %v1180 = vunpack.c.l.b16 %v1164
          %v1181 = vpack.c.b16 %v1176, %v1175
          %v1182 = vpack.c.b16 %v1178, %v1177
          %v1183 = vpack.c.b16 %v1180, %v1179
          %v1188 = vsel %vm795, %v1149, 0
          %v1191 = vsel %vm795, %v1150, 0
          %v1194 = vsel %vm795, %v1151, 0
          %v1197 = vsel %vm795, %v1152, 0
          %v1200 = vsel %vm795, %v1153, 0
          %v1203 = vsel %vm795, %v1154, 0
          %v1206 = vsel %vm795, %v1155, 0
          %v1209 = vsel %vm795, %v1156, 0
          %v1212 = vsel %vm795, %v1157, 0
          %v1215 = vsel %vm795, %v1158, 0
          %1217 = vmatpush.bf16.msra.mxu0 0
          %1218 = vmatpush.bf16.msra.mxu0 0
          %1219 = vmatpush.bf16.msra.mxu0 0
          %1220 = vmatpush.bf16.msra.mxu0 0
          %1221 = vmatpush.bf16.msra.mxu0 0
          %1222 = vmatpush.bf16.msra.mxu0 %v1183
          %1223 = vmatpush.bf16.msra.mxu0 %v1182
          %1224 = vmatpush.bf16.msra.mxu0 %v1181
          %1225 = vmatmul.bf16.gmra.mxu0 %v1188
          %v1226 = vpop.f32.mrf.mxu0
          %v1227 = vadd.f32 %v1167, %v1226
          %v1228 = vpop.f32.mrf.mxu0
          %v1229 = vadd.f32 %v1167, %v1228
          %1230 = vmatmul.bf16.gmra.mxu0 %v1191
          %v1231 = vpop.f32.mrf.mxu0
          %v1232 = vadd.f32 %v1167, %v1231
          %v1233 = vpop.f32.mrf.mxu0
          %v1234 = vadd.f32 %v1167, %v1233
          %1235 = vmatmul.bf16.gmra.mxu0 %v1194
          %v1236 = vpop.f32.mrf.mxu0
          %v1237 = vadd.f32 %v1167, %v1236
          %v1238 = vpop.f32.mrf.mxu0
          %v1239 = vadd.f32 %v1167, %v1238
          %1240 = vmatmul.bf16.gmra.mxu0 %v1197
          %v1241 = vpop.f32.mrf.mxu0
          %v1242 = vadd.f32 %v1167, %v1241
          %v1243 = vpop.f32.mrf.mxu0
          %v1244 = vadd.f32 %v1167, %v1243
          %1245 = vmatmul.bf16.gmra.mxu0 %v1200
          %v1246 = vpop.f32.mrf.mxu0
          %v1247 = vadd.f32 %v1167, %v1246
          %v1248 = vpop.f32.mrf.mxu0
          %v1249 = vadd.f32 %v1167, %v1248
          %1250 = vmatmul.bf16.gmra.mxu0 %v1203
          %v1251 = vpop.f32.mrf.mxu0
          %v1252 = vadd.f32 %v1167, %v1251
          %v1253 = vpop.f32.mrf.mxu0
          %v1254 = vadd.f32 %v1167, %v1253
          %1255 = vmatmul.bf16.gmra.mxu0 %v1206
          %v1256 = vpop.f32.mrf.mxu0
          %v1257 = vadd.f32 %v1167, %v1256
          %v1258 = vpop.f32.mrf.mxu0
          %v1259 = vadd.f32 %v1167, %v1258
          %1260 = vmatmul.bf16.gmra.mxu0 %v1209
          %v1261 = vpop.f32.mrf.mxu0
          %v1262 = vadd.f32 %v1167, %v1261
          %v1263 = vpop.f32.mrf.mxu0
          %v1264 = vadd.f32 %v1167, %v1263
          %1265 = vmatmul.bf16.gmra.mxu0 %v1212
          %v1266 = vpop.f32.mrf.mxu0
          %v1267 = vadd.f32 %v1167, %v1266
          %v1268 = vpop.f32.mrf.mxu0
          %v1269 = vadd.f32 %v1167, %v1268
          %1270 = vmatmul.bf16.gmra.mxu0 %v1215
          %v1271 = vpop.f32.mrf.mxu0
          %v1272 = vadd.f32 %v1167, %v1271
          %v1273 = vpop.f32.mrf.mxu0
          %v1274 = vadd.f32 %v1167, %v1273
          %1275 = vdwg.mxu0
          %v1276 = vmax.f32 %v1227, 0.0
          %v1277 = vmax.f32 %v1229, 0.0
          %v1278 = vmax.f32 %v1232, 0.0
          %v1279 = vmax.f32 %v1234, 0.0
          %v1280 = vmax.f32 %v1237, 0.0
          %v1281 = vmax.f32 %v1239, 0.0
          %v1282 = vmax.f32 %v1242, 0.0
          %v1283 = vmax.f32 %v1244, 0.0
          %v1284 = vmax.f32 %v1247, 0.0
          %v1285 = vmax.f32 %v1249, 0.0
          %v1286 = vmax.f32 %v1252, 0.0
          %v1287 = vmax.f32 %v1254, 0.0
          %v1288 = vmax.f32 %v1257, 0.0
          %v1289 = vmax.f32 %v1259, 0.0
          %v1290 = vmax.f32 %v1262, 0.0
          %v1291 = vmax.f32 %v1264, 0.0
          %v1292 = vmax.f32 %v1267, 0.0
          %v1293 = vmax.f32 %v1269, 0.0
          %v1294 = vmax.f32 %v1272, 0.0
          %v1295 = vmax.f32 %v1274, 0.0
          %s1296 = scalar_lea.vmem [#allocation2], %s812
          %v1297 = vld [vmem:[%s1296] sm:$0xff]
          %v1298 = vld [vmem:[%s1296 + $0x8] sm:$0xff]
          %v1299 = vld [vmem:[%s1296 + $0x10] sm:$0xff]
          %v1300 = vld [vmem:[%s1296 + $0x18] sm:$0xff]
          %v1301 = vld [vmem:[%s1296 + $0x20] sm:$0xff]
          %v1302 = vld [vmem:[%s1296 + $0x28] sm:$0xff]
          %v1303 = vld [vmem:[%s1296 + $0x30] sm:$0xff]
          %v1304 = vld [vmem:[%s1296 + $0x38] sm:$0xff]
          %v1305 = vld [vmem:[%s1296 + $0x40] sm:$0xff]
          %v1306 = vld [vmem:[%s1296 + $0x48] sm:$0xff]
          %v1307 = vld [vmem:[%s1296 + $0x50] sm:$0xff]
          %v1308 = vld [vmem:[%s1296 + $0x58] sm:$0xff]
          %v1309 = vld [vmem:[%s1296 + $0x60] sm:$0xff]
          %v1310 = vld [vmem:[%s1296 + $0x68] sm:$0xff]
          %v1311 = vld [vmem:[%s1296 + $0x70] sm:$0xff]
          %v1312 = vld [vmem:[%s1296 + $0x78] sm:$0xff]
          %v1313 = vld [vmem:[%s1296 + $0x80] sm:$0xff]
          %v1314 = vld [vmem:[%s1296 + $0x88] sm:$0xff]
          %v1315 = vld [vmem:[%s1296 + $0x90] sm:$0xff]
          %v1316 = vld [vmem:[%s1296 + $0x98] sm:$0xff]
          %1318 = vset.pattern.permute.xlu0 0
          %1319 = vperm.xlu0 %1318, %v1297
          %v1320 = vpop.permute.xlu0 %1319
          %1323 = vset.pattern.permute.xlu0 0
          %1324 = vperm.xlu0 %1323, %v1298
          %v1325 = vpop.permute.xlu0 %1324
          %1328 = vset.pattern.permute.xlu0 0
          %1329 = vperm.xlu0 %1328, %v1299
          %v1330 = vpop.permute.xlu0 %1329
          %1333 = vset.pattern.permute.xlu0 0
          %1334 = vperm.xlu0 %1333, %v1300
          %v1335 = vpop.permute.xlu0 %1334
          %1338 = vset.pattern.permute.xlu0 0
          %1339 = vperm.xlu0 %1338, %v1301
          %v1340 = vpop.permute.xlu0 %1339
          %1343 = vset.pattern.permute.xlu0 0
          %1344 = vperm.xlu0 %1343, %v1302
          %v1345 = vpop.permute.xlu0 %1344
          %1348 = vset.pattern.permute.xlu0 0
          %1349 = vperm.xlu0 %1348, %v1303
          %v1350 = vpop.permute.xlu0 %1349
          %1353 = vset.pattern.permute.xlu0 0
          %1354 = vperm.xlu0 %1353, %v1304
          %v1355 = vpop.permute.xlu0 %1354
          %1358 = vset.pattern.permute.xlu0 0
          %1359 = vperm.xlu0 %1358, %v1305
          %v1360 = vpop.permute.xlu0 %1359
          %1363 = vset.pattern.permute.xlu0 0
          %1364 = vperm.xlu0 %1363, %v1306
          %v1365 = vpop.permute.xlu0 %1364
          %1368 = vset.pattern.permute.xlu0 0
          %1369 = vperm.xlu0 %1368, %v1307
          %v1370 = vpop.permute.xlu0 %1369
          %1373 = vset.pattern.permute.xlu0 0
          %1374 = vperm.xlu0 %1373, %v1308
          %v1375 = vpop.permute.xlu0 %1374
          %1378 = vset.pattern.permute.xlu0 0
          %1379 = vperm.xlu0 %1378, %v1309
          %v1380 = vpop.permute.xlu0 %1379
          %1383 = vset.pattern.permute.xlu0 0
          %1384 = vperm.xlu0 %1383, %v1310
          %v1385 = vpop.permute.xlu0 %1384
          %1388 = vset.pattern.permute.xlu0 0
          %1389 = vperm.xlu0 %1388, %v1311
          %v1390 = vpop.permute.xlu0 %1389
          %1393 = vset.pattern.permute.xlu0 0
          %1394 = vperm.xlu0 %1393, %v1312
          %v1395 = vpop.permute.xlu0 %1394
          %1398 = vset.pattern.permute.xlu0 0
          %1399 = vperm.xlu0 %1398, %v1313
          %v1400 = vpop.permute.xlu0 %1399
          %1403 = vset.pattern.permute.xlu0 0
          %1404 = vperm.xlu0 %1403, %v1314
          %v1405 = vpop.permute.xlu0 %1404
          %1408 = vset.pattern.permute.xlu0 0
          %1409 = vperm.xlu0 %1408, %v1315
          %v1410 = vpop.permute.xlu0 %1409
          %1413 = vset.pattern.permute.xlu0 0
          %1414 = vperm.xlu0 %1413, %v1316
          %v1415 = vpop.permute.xlu0 %1414
          %v1417 = vmul.f32 %v1276, %v1320
          %v1418 = vmul.f32 %v1277, %v1325
          %v1419 = vmul.f32 %v1278, %v1330
          %v1420 = vmul.f32 %v1279, %v1335
          %v1421 = vmul.f32 %v1280, %v1340
          %v1422 = vmul.f32 %v1281, %v1345
          %v1423 = vmul.f32 %v1282, %v1350
          %v1424 = vmul.f32 %v1283, %v1355
          %v1425 = vmul.f32 %v1284, %v1360
          %v1426 = vmul.f32 %v1285, %v1365
          %v1427 = vmul.f32 %v1286, %v1370
          %v1428 = vmul.f32 %v1287, %v1375
          %v1429 = vmul.f32 %v1288, %v1380
          %v1430 = vmul.f32 %v1289, %v1385
          %v1431 = vmul.f32 %v1290, %v1390
          %v1432 = vmul.f32 %v1291, %v1395
          %v1433 = vmul.f32 %v1292, %v1400
          %v1434 = vmul.f32 %v1293, %v1405
          %v1435 = vmul.f32 %v1294, %v1410
          %v1436 = vmul.f32 %v1295, %v1415
          %s1437 = sadd.s32 %s812, 40
          %s1438 = scalar_lea.vmem [#allocation3], %s1437
          %1439 = vst.msk [vmem:[%s1438] sm:$0xff] %vm795, %v1417
          %1440 = vst.msk [vmem:[%s1438 + $0x8] sm:$0xff] %vm795, %v1418
          %1441 = vst.msk [vmem:[%s1438 + $0x10] sm:$0xff] %vm795, %v1419
          %1442 = vst.msk [vmem:[%s1438 + $0x18] sm:$0xff] %vm795, %v1420
          %1443 = vst.msk [vmem:[%s1438 + $0x20] sm:$0xff] %vm795, %v1421
          %1444 = vst.msk [vmem:[%s1438 + $0x28] sm:$0xff] %vm795, %v1422
          %1445 = vst.msk [vmem:[%s1438 + $0x30] sm:$0xff] %vm795, %v1423
          %1446 = vst.msk [vmem:[%s1438 + $0x38] sm:$0xff] %vm795, %v1424
          %1447 = vst.msk [vmem:[%s1438 + $0x40] sm:$0xff] %vm795, %v1425
          %1448 = vst.msk [vmem:[%s1438 + $0x48] sm:$0xff] %vm795, %v1426
          %1449 = vst.msk [vmem:[%s1438 + $0x50] sm:$0xff] %vm795, %v1427
          %1450 = vst.msk [vmem:[%s1438 + $0x58] sm:$0xff] %vm795, %v1428
          %1451 = vst.msk [vmem:[%s1438 + $0x60] sm:$0xff] %vm795, %v1429
          %1452 = vst.msk [vmem:[%s1438 + $0x68] sm:$0xff] %vm795, %v1430
          %1453 = vst.msk [vmem:[%s1438 + $0x70] sm:$0xff] %vm795, %v1431
          %1454 = vst.msk [vmem:[%s1438 + $0x78] sm:$0xff] %vm795, %v1432
          %1455 = vst.msk [vmem:[%s1438 + $0x80] sm:$0xff] %vm795, %v1433
          %1456 = vst.msk [vmem:[%s1438 + $0x88] sm:$0xff] %vm795, %v1434
          %1457 = vst.msk [vmem:[%s1438 + $0x90] sm:$0xff] %vm795, %v1435
          %1458 = vst.msk [vmem:[%s1438 + $0x98] sm:$0xff] %vm795, %v1436
        $region108: #{danet_forward.1} parent=95 // loop_footer
          %s811 = sadd.s32 1, %s807
        $region109: #{danet_forward.1} parent=95 // loop_footer_branch
          %806 = sbr.rel target = $region105
        $region110: #{danet_forward.1} parent=95 // loop_exit
          _
        loop: start=0, step=1, limit=5
        $region111: #{danet_forward.1} parent=95 // loop_pre_header
          _
        $region112: #{danet_forward.1} parent=95 // loop_header
          %s1460 = sphi 0, %s1464
          %p1461 = scmp.ge.s32.totalorder %s1460, 5
        $region113: #{danet_forward.1} parent=95 // loop_header_branch
          %1463 = sbr.rel (%p1461) target = $region117
        $region114: #{danet_forward.1} parent=95 // loop_body
          %s1465 = smul.u32 %s1460, 160
          %s1466 = scalar_lea.vmem %s601, %s1465
          %v1467 = vld [vmem:[%s1466] sm:$0xff]
          %v1468 = vld [vmem:[%s1466 + $0x8] sm:$0xff]
          %v1469 = vld [vmem:[%s1466 + $0x10] sm:$0xff]
          %v1470 = vld [vmem:[%s1466 + $0x18] sm:$0xff]
          %v1471 = vld [vmem:[%s1466 + $0x20] sm:$0xff]
          %v1472 = vld [vmem:[%s1466 + $0x28] sm:$0xff]
          %v1473 = vld [vmem:[%s1466 + $0x30] sm:$0xff]
          %v1474 = vld [vmem:[%s1466 + $0x38] sm:$0xff]
          %v1475 = vld [vmem:[%s1466 + $0x40] sm:$0xff]
          %v1476 = vld [vmem:[%s1466 + $0x48] sm:$0xff]
          %v1477 = vld [vmem:[%s1466 + $0x50] sm:$0xff]
          %v1478 = vld [vmem:[%s1466 + $0x58] sm:$0xff]
          %v1479 = vld [vmem:[%s1466 + $0x60] sm:$0xff]
          %v1480 = vld [vmem:[%s1466 + $0x68] sm:$0xff]
          %v1481 = vld [vmem:[%s1466 + $0x70] sm:$0xff]
          %v1482 = vld [vmem:[%s1466 + $0x78] sm:$0xff]
          %v1483 = vld [vmem:[%s1466 + $0x80] sm:$0xff]
          %v1484 = vld [vmem:[%s1466 + $0x88] sm:$0xff]
          %v1485 = vld [vmem:[%s1466 + $0x90] sm:$0xff]
          %v1486 = vld [vmem:[%s1466 + $0x98] sm:$0xff]
          %v1487 = vld [vmem:[%s1] sm:$0x1]
          %1489 = vset.pattern.permute.xlu0 1
          %1490 = vperm.xlu0 %1489, %v1467
          %v1491 = vpop.permute.xlu0 %1490
          %1494 = vset.pattern.permute.xlu0 1
          %1495 = vperm.xlu0 %1494, %v1468
          %v1496 = vpop.permute.xlu0 %1495
          %1499 = vset.pattern.permute.xlu0 1
          %1500 = vperm.xlu0 %1499, %v1469
          %v1501 = vpop.permute.xlu0 %1500
          %1504 = vset.pattern.permute.xlu0 1
          %1505 = vperm.xlu0 %1504, %v1470
          %v1506 = vpop.permute.xlu0 %1505
          %1509 = vset.pattern.permute.xlu0 1
          %1510 = vperm.xlu0 %1509, %v1471
          %v1511 = vpop.permute.xlu0 %1510
          %1514 = vset.pattern.permute.xlu0 1
          %1515 = vperm.xlu0 %1514, %v1472
          %v1516 = vpop.permute.xlu0 %1515
          %1519 = vset.pattern.permute.xlu0 1
          %1520 = vperm.xlu0 %1519, %v1473
          %v1521 = vpop.permute.xlu0 %1520
          %1524 = vset.pattern.permute.xlu0 1
          %1525 = vperm.xlu0 %1524, %v1474
          %v1526 = vpop.permute.xlu0 %1525
          %1529 = vset.pattern.permute.xlu0 1
          %1530 = vperm.xlu0 %1529, %v1475
          %v1531 = vpop.permute.xlu0 %1530
          %1534 = vset.pattern.permute.xlu0 1
          %1535 = vperm.xlu0 %1534, %v1476
          %v1536 = vpop.permute.xlu0 %1535
          %1539 = vset.pattern.permute.xlu0 1
          %1540 = vperm.xlu0 %1539, %v1477
          %v1541 = vpop.permute.xlu0 %1540
          %1544 = vset.pattern.permute.xlu0 1
          %1545 = vperm.xlu0 %1544, %v1478
          %v1546 = vpop.permute.xlu0 %1545
          %1549 = vset.pattern.permute.xlu0 1
          %1550 = vperm.xlu0 %1549, %v1479
          %v1551 = vpop.permute.xlu0 %1550
          %1554 = vset.pattern.permute.xlu0 1
          %1555 = vperm.xlu0 %1554, %v1480
          %v1556 = vpop.permute.xlu0 %1555
          %1559 = vset.pattern.permute.xlu0 1
          %1560 = vperm.xlu0 %1559, %v1481
          %v1561 = vpop.permute.xlu0 %1560
          %1564 = vset.pattern.permute.xlu0 1
          %1565 = vperm.xlu0 %1564, %v1482
          %v1566 = vpop.permute.xlu0 %1565
          %1569 = vset.pattern.permute.xlu0 1
          %1570 = vperm.xlu0 %1569, %v1483
          %v1571 = vpop.permute.xlu0 %1570
          %1574 = vset.pattern.permute.xlu0 1
          %1575 = vperm.xlu0 %1574, %v1484
          %v1576 = vpop.permute.xlu0 %1575
          %1579 = vset.pattern.permute.xlu0 1
          %1580 = vperm.xlu0 %1579, %v1485
          %v1581 = vpop.permute.xlu0 %1580
          %1584 = vset.pattern.permute.xlu0 1
          %1585 = vperm.xlu0 %1584, %v1486
          %v1586 = vpop.permute.xlu0 %1585
          %v1589 = vperm.slane %v1487, 0
          %v1591 = vmul.f32 %v1491, %v1589
          %v1592 = vmul.f32 %v1496, %v1589
          %v1593 = vmul.f32 %v1501, %v1589
          %v1594 = vmul.f32 %v1506, %v1589
          %v1595 = vmul.f32 %v1511, %v1589
          %v1596 = vmul.f32 %v1516, %v1589
          %v1597 = vmul.f32 %v1521, %v1589
          %v1598 = vmul.f32 %v1526, %v1589
          %v1599 = vmul.f32 %v1531, %v1589
          %v1600 = vmul.f32 %v1536, %v1589
          %v1601 = vmul.f32 %v1541, %v1589
          %v1602 = vmul.f32 %v1546, %v1589
          %v1603 = vmul.f32 %v1551, %v1589
          %v1604 = vmul.f32 %v1556, %v1589
          %v1605 = vmul.f32 %v1561, %v1589
          %v1606 = vmul.f32 %v1566, %v1589
          %v1607 = vmul.f32 %v1571, %v1589
          %v1608 = vmul.f32 %v1576, %v1589
          %v1609 = vmul.f32 %v1581, %v1589
          %v1610 = vmul.f32 %v1586, %v1589
          %v1611 = vld [vmem:[%s2] sm:$0x1]
          %v1613 = vperm.slane %v1611, 0
          %v1615 = vadd.f32 %v1591, %v1613
          %v1616 = vadd.f32 %v1592, %v1613
          %v1617 = vadd.f32 %v1593, %v1613
          %v1618 = vadd.f32 %v1594, %v1613
          %v1619 = vadd.f32 %v1595, %v1613
          %v1620 = vadd.f32 %v1596, %v1613
          %v1621 = vadd.f32 %v1597, %v1613
          %v1622 = vadd.f32 %v1598, %v1613
          %v1623 = vadd.f32 %v1599, %v1613
          %v1624 = vadd.f32 %v1600, %v1613
          %v1625 = vadd.f32 %v1601, %v1613
          %v1626 = vadd.f32 %v1602, %v1613
          %v1627 = vadd.f32 %v1603, %v1613
          %v1628 = vadd.f32 %v1604, %v1613
          %v1629 = vadd.f32 %v1605, %v1613
          %v1630 = vadd.f32 %v1606, %v1613
          %v1631 = vadd.f32 %v1607, %v1613
          %v1632 = vadd.f32 %v1608, %v1613
          %v1633 = vadd.f32 %v1609, %v1613
          %v1634 = vadd.f32 %v1610, %v1613
          %v1635 = vmax.f32 %v1615, 0.0
          %v1636 = vmax.f32 %v1616, 0.0
          %v1637 = vmax.f32 %v1617, 0.0
          %v1638 = vmax.f32 %v1618, 0.0
          %v1639 = vmax.f32 %v1619, 0.0
          %v1640 = vmax.f32 %v1620, 0.0
          %v1641 = vmax.f32 %v1621, 0.0
          %v1642 = vmax.f32 %v1622, 0.0
          %v1643 = vmax.f32 %v1623, 0.0
          %v1644 = vmax.f32 %v1624, 0.0
          %v1645 = vmax.f32 %v1625, 0.0
          %v1646 = vmax.f32 %v1626, 0.0
          %v1647 = vmax.f32 %v1627, 0.0
          %v1648 = vmax.f32 %v1628, 0.0
          %v1649 = vmax.f32 %v1629, 0.0
          %v1650 = vmax.f32 %v1630, 0.0
          %v1651 = vmax.f32 %v1631, 0.0
          %v1652 = vmax.f32 %v1632, 0.0
          %v1653 = vmax.f32 %v1633, 0.0
          %v1654 = vmax.f32 %v1634, 0.0
          %v1655 = vpack.c.bf16 %v1636, %v1635
          %v1656 = vpack.c.bf16 %v1638, %v1637
          %v1657 = vpack.c.bf16 %v1640, %v1639
          %v1658 = vpack.c.bf16 %v1642, %v1641
          %v1659 = vpack.c.bf16 %v1644, %v1643
          %v1660 = vpack.c.bf16 %v1646, %v1645
          %v1661 = vpack.c.bf16 %v1648, %v1647
          %v1662 = vpack.c.bf16 %v1650, %v1649
          %v1663 = vpack.c.bf16 %v1652, %v1651
          %v1664 = vpack.c.bf16 %v1654, %v1653
          %v1665 = vld [vmem:[%s3] sm:$0xf]
          %v1666 = vld [vmem:[%s3 + $0x4] sm:$0xf]
          %v1667 = vld [vmem:[%s3 + $0x8] sm:$0xf]
          %v1668 = vld [vmem:[%s3 + $0xc] sm:$0xf]
          %v1669 = vld [vmem:[%s3 + $0x10] sm:$0xf]
          %v1670 = vld [vmem:[%s3 + $0x14] sm:$0xf]
          %v1671 = vld [vmem:[%s4] sm:$0x1]
          %v1673 = vperm.slane %v1671, 0
          %v1681 = vunpack.c.l.b16 %v1665
          %v1682 = vunpack.c.l.b16 %v1666
          %v1683 = vunpack.c.l.b16 %v1667
          %v1684 = vunpack.c.l.b16 %v1668
          %v1685 = vunpack.c.l.b16 %v1669
          %v1686 = vunpack.c.l.b16 %v1670
          %v1687 = vpack.c.b16 %v1682, %v1681
          %v1688 = vpack.c.b16 %v1684, %v1683
          %v1689 = vpack.c.b16 %v1686, %v1685
          %v1694 = vsel %vm795, %v1655, 0
          %v1697 = vsel %vm795, %v1656, 0
          %v1700 = vsel %vm795, %v1657, 0
          %v1703 = vsel %vm795, %v1658, 0
          %v1706 = vsel %vm795, %v1659, 0
          %v1709 = vsel %vm795, %v1660, 0
          %v1712 = vsel %vm795, %v1661, 0
          %v1715 = vsel %vm795, %v1662, 0
          %v1718 = vsel %vm795, %v1663, 0
          %v1721 = vsel %vm795, %v1664, 0
          %1723 = vmatpush.bf16.msra.mxu0 0
          %1724 = vmatpush.bf16.msra.mxu0 0
          %1725 = vmatpush.bf16.msra.mxu0 0
          %1726 = vmatpush.bf16.msra.mxu0 0
          %1727 = vmatpush.bf16.msra.mxu0 0
          %1728 = vmatpush.bf16.msra.mxu0 %v1689
          %1729 = vmatpush.bf16.msra.mxu0 %v1688
          %1730 = vmatpush.bf16.msra.mxu0 %v1687
          %1731 = vmatmul.bf16.gmra.mxu0 %v1694
          %v1732 = vpop.f32.mrf.mxu0
          %v1733 = vadd.f32 %v1673, %v1732
          %v1734 = vpop.f32.mrf.mxu0
          %v1735 = vadd.f32 %v1673, %v1734
          %1736 = vmatmul.bf16.gmra.mxu0 %v1697
          %v1737 = vpop.f32.mrf.mxu0
          %v1738 = vadd.f32 %v1673, %v1737
          %v1739 = vpop.f32.mrf.mxu0
          %v1740 = vadd.f32 %v1673, %v1739
          %1741 = vmatmul.bf16.gmra.mxu0 %v1700
          %v1742 = vpop.f32.mrf.mxu0
          %v1743 = vadd.f32 %v1673, %v1742
          %v1744 = vpop.f32.mrf.mxu0
          %v1745 = vadd.f32 %v1673, %v1744
          %1746 = vmatmul.bf16.gmra.mxu0 %v1703
          %v1747 = vpop.f32.mrf.mxu0
          %v1748 = vadd.f32 %v1673, %v1747
          %v1749 = vpop.f32.mrf.mxu0
          %v1750 = vadd.f32 %v1673, %v1749
          %1751 = vmatmul.bf16.gmra.mxu0 %v1706
          %v1752 = vpop.f32.mrf.mxu0
          %v1753 = vadd.f32 %v1673, %v1752
          %v1754 = vpop.f32.mrf.mxu0
          %v1755 = vadd.f32 %v1673, %v1754
          %1756 = vmatmul.bf16.gmra.mxu0 %v1709
          %v1757 = vpop.f32.mrf.mxu0
          %v1758 = vadd.f32 %v1673, %v1757
          %v1759 = vpop.f32.mrf.mxu0
          %v1760 = vadd.f32 %v1673, %v1759
          %1761 = vmatmul.bf16.gmra.mxu0 %v1712
          %v1762 = vpop.f32.mrf.mxu0
          %v1763 = vadd.f32 %v1673, %v1762
          %v1764 = vpop.f32.mrf.mxu0
          %v1765 = vadd.f32 %v1673, %v1764
          %1766 = vmatmul.bf16.gmra.mxu0 %v1715
          %v1767 = vpop.f32.mrf.mxu0
          %v1768 = vadd.f32 %v1673, %v1767
          %v1769 = vpop.f32.mrf.mxu0
          %v1770 = vadd.f32 %v1673, %v1769
          %1771 = vmatmul.bf16.gmra.mxu0 %v1718
          %v1772 = vpop.f32.mrf.mxu0
          %v1773 = vadd.f32 %v1673, %v1772
          %v1774 = vpop.f32.mrf.mxu0
          %v1775 = vadd.f32 %v1673, %v1774
          %1776 = vmatmul.bf16.gmra.mxu0 %v1721
          %v1777 = vpop.f32.mrf.mxu0
          %v1778 = vadd.f32 %v1673, %v1777
          %v1779 = vpop.f32.mrf.mxu0
          %v1780 = vadd.f32 %v1673, %v1779
          %1781 = vdwg.mxu0
          %v1782 = vmax.f32 %v1733, 0.0
          %v1783 = vmax.f32 %v1735, 0.0
          %v1784 = vmax.f32 %v1738, 0.0
          %v1785 = vmax.f32 %v1740, 0.0
          %v1786 = vmax.f32 %v1743, 0.0
          %v1787 = vmax.f32 %v1745, 0.0
          %v1788 = vmax.f32 %v1748, 0.0
          %v1789 = vmax.f32 %v1750, 0.0
          %v1790 = vmax.f32 %v1753, 0.0
          %v1791 = vmax.f32 %v1755, 0.0
          %v1792 = vmax.f32 %v1758, 0.0
          %v1793 = vmax.f32 %v1760, 0.0
          %v1794 = vmax.f32 %v1763, 0.0
          %v1795 = vmax.f32 %v1765, 0.0
          %v1796 = vmax.f32 %v1768, 0.0
          %v1797 = vmax.f32 %v1770, 0.0
          %v1798 = vmax.f32 %v1773, 0.0
          %v1799 = vmax.f32 %v1775, 0.0
          %v1800 = vmax.f32 %v1778, 0.0
          %v1801 = vmax.f32 %v1780, 0.0
          %v1802 = vpack.c.bf16 %v1783, %v1782
          %v1803 = vpack.c.bf16 %v1785, %v1784
          %v1804 = vpack.c.bf16 %v1787, %v1786
          %v1805 = vpack.c.bf16 %v1789, %v1788
          %v1806 = vpack.c.bf16 %v1791, %v1790
          %v1807 = vpack.c.bf16 %v1793, %v1792
          %v1808 = vpack.c.bf16 %v1795, %v1794
          %v1809 = vpack.c.bf16 %v1797, %v1796
          %v1810 = vpack.c.bf16 %v1799, %v1798
          %v1811 = vpack.c.bf16 %v1801, %v1800
          %v1812 = vld [vmem:[%s5] sm:$0xf]
          %v1813 = vld [vmem:[%s5 + $0x4] sm:$0xf]
          %v1814 = vld [vmem:[%s5 + $0x8] sm:$0xf]
          %v1815 = vld [vmem:[%s5 + $0xc] sm:$0xf]
          %v1816 = vld [vmem:[%s5 + $0x10] sm:$0xf]
          %v1817 = vld [vmem:[%s5 + $0x14] sm:$0xf]
          %v1818 = vld [vmem:[%s6] sm:$0x1]
          %v1820 = vperm.slane %v1818, 0
          %v1828 = vunpack.c.l.b16 %v1812
          %v1829 = vunpack.c.l.b16 %v1813
          %v1830 = vunpack.c.l.b16 %v1814
          %v1831 = vunpack.c.l.b16 %v1815
          %v1832 = vunpack.c.l.b16 %v1816
          %v1833 = vunpack.c.l.b16 %v1817
          %v1834 = vpack.c.b16 %v1829, %v1828
          %v1835 = vpack.c.b16 %v1831, %v1830
          %v1836 = vpack.c.b16 %v1833, %v1832
          %v1841 = vsel %vm795, %v1802, 0
          %v1844 = vsel %vm795, %v1803, 0
          %v1847 = vsel %vm795, %v1804, 0
          %v1850 = vsel %vm795, %v1805, 0
          %v1853 = vsel %vm795, %v1806, 0
          %v1856 = vsel %vm795, %v1807, 0
          %v1859 = vsel %vm795, %v1808, 0
          %v1862 = vsel %vm795, %v1809, 0
          %v1865 = vsel %vm795, %v1810, 0
          %v1868 = vsel %vm795, %v1811, 0
          %1870 = vmatpush.bf16.msra.mxu0 0
          %1871 = vmatpush.bf16.msra.mxu0 0
          %1872 = vmatpush.bf16.msra.mxu0 0
          %1873 = vmatpush.bf16.msra.mxu0 0
          %1874 = vmatpush.bf16.msra.mxu0 0
          %1875 = vmatpush.bf16.msra.mxu0 %v1836
          %1876 = vmatpush.bf16.msra.mxu0 %v1835
          %1877 = vmatpush.bf16.msra.mxu0 %v1834
          %1878 = vmatmul.bf16.gmra.mxu0 %v1841
          %v1879 = vpop.f32.mrf.mxu0
          %v1880 = vadd.f32 %v1820, %v1879
          %v1881 = vpop.f32.mrf.mxu0
          %v1882 = vadd.f32 %v1820, %v1881
          %1883 = vmatmul.bf16.gmra.mxu0 %v1844
          %v1884 = vpop.f32.mrf.mxu0
          %v1885 = vadd.f32 %v1820, %v1884
          %v1886 = vpop.f32.mrf.mxu0
          %v1887 = vadd.f32 %v1820, %v1886
          %1888 = vmatmul.bf16.gmra.mxu0 %v1847
          %v1889 = vpop.f32.mrf.mxu0
          %v1890 = vadd.f32 %v1820, %v1889
          %v1891 = vpop.f32.mrf.mxu0
          %v1892 = vadd.f32 %v1820, %v1891
          %1893 = vmatmul.bf16.gmra.mxu0 %v1850
          %v1894 = vpop.f32.mrf.mxu0
          %v1895 = vadd.f32 %v1820, %v1894
          %v1896 = vpop.f32.mrf.mxu0
          %v1897 = vadd.f32 %v1820, %v1896
          %1898 = vmatmul.bf16.gmra.mxu0 %v1853
          %v1899 = vpop.f32.mrf.mxu0
          %v1900 = vadd.f32 %v1820, %v1899
          %v1901 = vpop.f32.mrf.mxu0
          %v1902 = vadd.f32 %v1820, %v1901
          %1903 = vmatmul.bf16.gmra.mxu0 %v1856
          %v1904 = vpop.f32.mrf.mxu0
          %v1905 = vadd.f32 %v1820, %v1904
          %v1906 = vpop.f32.mrf.mxu0
          %v1907 = vadd.f32 %v1820, %v1906
          %1908 = vmatmul.bf16.gmra.mxu0 %v1859
          %v1909 = vpop.f32.mrf.mxu0
          %v1910 = vadd.f32 %v1820, %v1909
          %v1911 = vpop.f32.mrf.mxu0
          %v1912 = vadd.f32 %v1820, %v1911
          %1913 = vmatmul.bf16.gmra.mxu0 %v1862
          %v1914 = vpop.f32.mrf.mxu0
          %v1915 = vadd.f32 %v1820, %v1914
          %v1916 = vpop.f32.mrf.mxu0
          %v1917 = vadd.f32 %v1820, %v1916
          %1918 = vmatmul.bf16.gmra.mxu0 %v1865
          %v1919 = vpop.f32.mrf.mxu0
          %v1920 = vadd.f32 %v1820, %v1919
          %v1921 = vpop.f32.mrf.mxu0
          %v1922 = vadd.f32 %v1820, %v1921
          %1923 = vmatmul.bf16.gmra.mxu0 %v1868
          %v1924 = vpop.f32.mrf.mxu0
          %v1925 = vadd.f32 %v1820, %v1924
          %v1926 = vpop.f32.mrf.mxu0
          %v1927 = vadd.f32 %v1820, %v1926
          %1928 = vdwg.mxu0
          %v1929 = vmax.f32 %v1880, 0.0
          %v1930 = vmax.f32 %v1882, 0.0
          %v1931 = vmax.f32 %v1885, 0.0
          %v1932 = vmax.f32 %v1887, 0.0
          %v1933 = vmax.f32 %v1890, 0.0
          %v1934 = vmax.f32 %v1892, 0.0
          %v1935 = vmax.f32 %v1895, 0.0
          %v1936 = vmax.f32 %v1897, 0.0
          %v1937 = vmax.f32 %v1900, 0.0
          %v1938 = vmax.f32 %v1902, 0.0
          %v1939 = vmax.f32 %v1905, 0.0
          %v1940 = vmax.f32 %v1907, 0.0
          %v1941 = vmax.f32 %v1910, 0.0
          %v1942 = vmax.f32 %v1912, 0.0
          %v1943 = vmax.f32 %v1915, 0.0
          %v1944 = vmax.f32 %v1917, 0.0
          %v1945 = vmax.f32 %v1920, 0.0
          %v1946 = vmax.f32 %v1922, 0.0
          %v1947 = vmax.f32 %v1925, 0.0
          %v1948 = vmax.f32 %v1927, 0.0
          %s1949 = scalar_lea.vmem [#allocation2], %s1465
          %v1950 = vld [vmem:[%s1949] sm:$0xff]
          %v1951 = vld [vmem:[%s1949 + $0x8] sm:$0xff]
          %v1952 = vld [vmem:[%s1949 + $0x10] sm:$0xff]
          %v1953 = vld [vmem:[%s1949 + $0x18] sm:$0xff]
          %v1954 = vld [vmem:[%s1949 + $0x20] sm:$0xff]
          %v1955 = vld [vmem:[%s1949 + $0x28] sm:$0xff]
          %v1956 = vld [vmem:[%s1949 + $0x30] sm:$0xff]
          %v1957 = vld [vmem:[%s1949 + $0x38] sm:$0xff]
          %v1958 = vld [vmem:[%s1949 + $0x40] sm:$0xff]
          %v1959 = vld [vmem:[%s1949 + $0x48] sm:$0xff]
          %v1960 = vld [vmem:[%s1949 + $0x50] sm:$0xff]
          %v1961 = vld [vmem:[%s1949 + $0x58] sm:$0xff]
          %v1962 = vld [vmem:[%s1949 + $0x60] sm:$0xff]
          %v1963 = vld [vmem:[%s1949 + $0x68] sm:$0xff]
          %v1964 = vld [vmem:[%s1949 + $0x70] sm:$0xff]
          %v1965 = vld [vmem:[%s1949 + $0x78] sm:$0xff]
          %v1966 = vld [vmem:[%s1949 + $0x80] sm:$0xff]
          %v1967 = vld [vmem:[%s1949 + $0x88] sm:$0xff]
          %v1968 = vld [vmem:[%s1949 + $0x90] sm:$0xff]
          %v1969 = vld [vmem:[%s1949 + $0x98] sm:$0xff]
          %1971 = vset.pattern.permute.xlu0 0
          %1972 = vperm.xlu0 %1971, %v1950
          %v1973 = vpop.permute.xlu0 %1972
          %1976 = vset.pattern.permute.xlu0 0
          %1977 = vperm.xlu0 %1976, %v1951
          %v1978 = vpop.permute.xlu0 %1977
          %1981 = vset.pattern.permute.xlu0 0
          %1982 = vperm.xlu0 %1981, %v1952
          %v1983 = vpop.permute.xlu0 %1982
          %1986 = vset.pattern.permute.xlu0 0
          %1987 = vperm.xlu0 %1986, %v1953
          %v1988 = vpop.permute.xlu0 %1987
          %1991 = vset.pattern.permute.xlu0 0
          %1992 = vperm.xlu0 %1991, %v1954
          %v1993 = vpop.permute.xlu0 %1992
          %1996 = vset.pattern.permute.xlu0 0
          %1997 = vperm.xlu0 %1996, %v1955
          %v1998 = vpop.permute.xlu0 %1997
          %2001 = vset.pattern.permute.xlu0 0
          %2002 = vperm.xlu0 %2001, %v1956
          %v2003 = vpop.permute.xlu0 %2002
          %2006 = vset.pattern.permute.xlu0 0
          %2007 = vperm.xlu0 %2006, %v1957
          %v2008 = vpop.permute.xlu0 %2007
          %2011 = vset.pattern.permute.xlu0 0
          %2012 = vperm.xlu0 %2011, %v1958
          %v2013 = vpop.permute.xlu0 %2012
          %2016 = vset.pattern.permute.xlu0 0
          %2017 = vperm.xlu0 %2016, %v1959
          %v2018 = vpop.permute.xlu0 %2017
          %2021 = vset.pattern.permute.xlu0 0
          %2022 = vperm.xlu0 %2021, %v1960
          %v2023 = vpop.permute.xlu0 %2022
          %2026 = vset.pattern.permute.xlu0 0
          %2027 = vperm.xlu0 %2026, %v1961
          %v2028 = vpop.permute.xlu0 %2027
          %2031 = vset.pattern.permute.xlu0 0
          %2032 = vperm.xlu0 %2031, %v1962
          %v2033 = vpop.permute.xlu0 %2032
          %2036 = vset.pattern.permute.xlu0 0
          %2037 = vperm.xlu0 %2036, %v1963
          %v2038 = vpop.permute.xlu0 %2037
          %2041 = vset.pattern.permute.xlu0 0
          %2042 = vperm.xlu0 %2041, %v1964
          %v2043 = vpop.permute.xlu0 %2042
          %2046 = vset.pattern.permute.xlu0 0
          %2047 = vperm.xlu0 %2046, %v1965
          %v2048 = vpop.permute.xlu0 %2047
          %2051 = vset.pattern.permute.xlu0 0
          %2052 = vperm.xlu0 %2051, %v1966
          %v2053 = vpop.permute.xlu0 %2052
          %2056 = vset.pattern.permute.xlu0 0
          %2057 = vperm.xlu0 %2056, %v1967
          %v2058 = vpop.permute.xlu0 %2057
          %2061 = vset.pattern.permute.xlu0 0
          %2062 = vperm.xlu0 %2061, %v1968
          %v2063 = vpop.permute.xlu0 %2062
          %2066 = vset.pattern.permute.xlu0 0
          %2067 = vperm.xlu0 %2066, %v1969
          %v2068 = vpop.permute.xlu0 %2067
          %v2070 = vmul.f32 %v1929, %v1973
          %v2071 = vmul.f32 %v1930, %v1978
          %v2072 = vmul.f32 %v1931, %v1983
          %v2073 = vmul.f32 %v1932, %v1988
          %v2074 = vmul.f32 %v1933, %v1993
          %v2075 = vmul.f32 %v1934, %v1998
          %v2076 = vmul.f32 %v1935, %v2003
          %v2077 = vmul.f32 %v1936, %v2008
          %v2078 = vmul.f32 %v1937, %v2013
          %v2079 = vmul.f32 %v1938, %v2018
          %v2080 = vmul.f32 %v1939, %v2023
          %v2081 = vmul.f32 %v1940, %v2028
          %v2082 = vmul.f32 %v1941, %v2033
          %v2083 = vmul.f32 %v1942, %v2038
          %v2084 = vmul.f32 %v1943, %v2043
          %v2085 = vmul.f32 %v1944, %v2048
          %v2086 = vmul.f32 %v1945, %v2053
          %v2087 = vmul.f32 %v1946, %v2058
          %v2088 = vmul.f32 %v1947, %v2063
          %v2089 = vmul.f32 %v1948, %v2068
          %s2090 = sadd.s32 %s1465, 840
          %s2091 = scalar_lea.vmem [#allocation3], %s2090
          %2092 = vst.msk [vmem:[%s2091] sm:$0xff] %vm795, %v2070
          %2093 = vst.msk [vmem:[%s2091 + $0x8] sm:$0xff] %vm795, %v2071
          %2094 = vst.msk [vmem:[%s2091 + $0x10] sm:$0xff] %vm795, %v2072
          %2095 = vst.msk [vmem:[%s2091 + $0x18] sm:$0xff] %vm795, %v2073
          %2096 = vst.msk [vmem:[%s2091 + $0x20] sm:$0xff] %vm795, %v2074
          %2097 = vst.msk [vmem:[%s2091 + $0x28] sm:$0xff] %vm795, %v2075
          %2098 = vst.msk [vmem:[%s2091 + $0x30] sm:$0xff] %vm795, %v2076
          %2099 = vst.msk [vmem:[%s2091 + $0x38] sm:$0xff] %vm795, %v2077
          %2100 = vst.msk [vmem:[%s2091 + $0x40] sm:$0xff] %vm795, %v2078
          %2101 = vst.msk [vmem:[%s2091 + $0x48] sm:$0xff] %vm795, %v2079
          %2102 = vst.msk [vmem:[%s2091 + $0x50] sm:$0xff] %vm795, %v2080
          %2103 = vst.msk [vmem:[%s2091 + $0x58] sm:$0xff] %vm795, %v2081
          %2104 = vst.msk [vmem:[%s2091 + $0x60] sm:$0xff] %vm795, %v2082
          %2105 = vst.msk [vmem:[%s2091 + $0x68] sm:$0xff] %vm795, %v2083
          %2106 = vst.msk [vmem:[%s2091 + $0x70] sm:$0xff] %vm795, %v2084
          %2107 = vst.msk [vmem:[%s2091 + $0x78] sm:$0xff] %vm795, %v2085
          %2108 = vst.msk [vmem:[%s2091 + $0x80] sm:$0xff] %vm795, %v2086
          %2109 = vst.msk [vmem:[%s2091 + $0x88] sm:$0xff] %vm795, %v2087
          %2110 = vst.msk [vmem:[%s2091 + $0x90] sm:$0xff] %vm795, %v2088
          %2111 = vst.msk [vmem:[%s2091 + $0x98] sm:$0xff] %vm795, %v2089
        $region115: #{danet_forward.1} parent=95 // loop_footer
          %s1464 = sadd.s32 1, %s1460
        $region116: #{danet_forward.1} parent=95 // loop_footer_branch
          %1459 = sbr.rel target = $region112
        $region117: #{danet_forward.1} parent=95 // loop_exit
          _
        loop: start=0, step=1, limit=5
        $region118: #{danet_forward.1} parent=95 // loop_pre_header
          _
        $region119: #{danet_forward.1} parent=95 // loop_header
          %s2113 = sphi 0, %s2117
          %p2114 = scmp.ge.s32.totalorder %s2113, 5
        $region120: #{danet_forward.1} parent=95 // loop_header_branch
          %2116 = sbr.rel (%p2114) target = $region124
        $region121: #{danet_forward.1} parent=95 // loop_body
          %s2118 = smul.u32 %s2113, 160
          %s2119 = scalar_lea.vmem %s601, %s2118
          %v2120 = vld [vmem:[%s2119] sm:$0xff]
          %v2121 = vld [vmem:[%s2119 + $0x8] sm:$0xff]
          %v2122 = vld [vmem:[%s2119 + $0x10] sm:$0xff]
          %v2123 = vld [vmem:[%s2119 + $0x18] sm:$0xff]
          %v2124 = vld [vmem:[%s2119 + $0x20] sm:$0xff]
          %v2125 = vld [vmem:[%s2119 + $0x28] sm:$0xff]
          %v2126 = vld [vmem:[%s2119 + $0x30] sm:$0xff]
          %v2127 = vld [vmem:[%s2119 + $0x38] sm:$0xff]
          %v2128 = vld [vmem:[%s2119 + $0x40] sm:$0xff]
          %v2129 = vld [vmem:[%s2119 + $0x48] sm:$0xff]
          %v2130 = vld [vmem:[%s2119 + $0x50] sm:$0xff]
          %v2131 = vld [vmem:[%s2119 + $0x58] sm:$0xff]
          %v2132 = vld [vmem:[%s2119 + $0x60] sm:$0xff]
          %v2133 = vld [vmem:[%s2119 + $0x68] sm:$0xff]
          %v2134 = vld [vmem:[%s2119 + $0x70] sm:$0xff]
          %v2135 = vld [vmem:[%s2119 + $0x78] sm:$0xff]
          %v2136 = vld [vmem:[%s2119 + $0x80] sm:$0xff]
          %v2137 = vld [vmem:[%s2119 + $0x88] sm:$0xff]
          %v2138 = vld [vmem:[%s2119 + $0x90] sm:$0xff]
          %v2139 = vld [vmem:[%s2119 + $0x98] sm:$0xff]
          %v2140 = vld [vmem:[%s1] sm:$0x1]
          %2142 = vset.pattern.permute.xlu0 2
          %2143 = vperm.xlu0 %2142, %v2120
          %v2144 = vpop.permute.xlu0 %2143
          %2147 = vset.pattern.permute.xlu0 2
          %2148 = vperm.xlu0 %2147, %v2121
          %v2149 = vpop.permute.xlu0 %2148
          %2152 = vset.pattern.permute.xlu0 2
          %2153 = vperm.xlu0 %2152, %v2122
          %v2154 = vpop.permute.xlu0 %2153
          %2157 = vset.pattern.permute.xlu0 2
          %2158 = vperm.xlu0 %2157, %v2123
          %v2159 = vpop.permute.xlu0 %2158
          %2162 = vset.pattern.permute.xlu0 2
          %2163 = vperm.xlu0 %2162, %v2124
          %v2164 = vpop.permute.xlu0 %2163
          %2167 = vset.pattern.permute.xlu0 2
          %2168 = vperm.xlu0 %2167, %v2125
          %v2169 = vpop.permute.xlu0 %2168
          %2172 = vset.pattern.permute.xlu0 2
          %2173 = vperm.xlu0 %2172, %v2126
          %v2174 = vpop.permute.xlu0 %2173
          %2177 = vset.pattern.permute.xlu0 2
          %2178 = vperm.xlu0 %2177, %v2127
          %v2179 = vpop.permute.xlu0 %2178
          %2182 = vset.pattern.permute.xlu0 2
          %2183 = vperm.xlu0 %2182, %v2128
          %v2184 = vpop.permute.xlu0 %2183
          %2187 = vset.pattern.permute.xlu0 2
          %2188 = vperm.xlu0 %2187, %v2129
          %v2189 = vpop.permute.xlu0 %2188
          %2192 = vset.pattern.permute.xlu0 2
          %2193 = vperm.xlu0 %2192, %v2130
          %v2194 = vpop.permute.xlu0 %2193
          %2197 = vset.pattern.permute.xlu0 2
          %2198 = vperm.xlu0 %2197, %v2131
          %v2199 = vpop.permute.xlu0 %2198
          %2202 = vset.pattern.permute.xlu0 2
          %2203 = vperm.xlu0 %2202, %v2132
          %v2204 = vpop.permute.xlu0 %2203
          %2207 = vset.pattern.permute.xlu0 2
          %2208 = vperm.xlu0 %2207, %v2133
          %v2209 = vpop.permute.xlu0 %2208
          %2212 = vset.pattern.permute.xlu0 2
          %2213 = vperm.xlu0 %2212, %v2134
          %v2214 = vpop.permute.xlu0 %2213
          %2217 = vset.pattern.permute.xlu0 2
          %2218 = vperm.xlu0 %2217, %v2135
          %v2219 = vpop.permute.xlu0 %2218
          %2222 = vset.pattern.permute.xlu0 2
          %2223 = vperm.xlu0 %2222, %v2136
          %v2224 = vpop.permute.xlu0 %2223
          %2227 = vset.pattern.permute.xlu0 2
          %2228 = vperm.xlu0 %2227, %v2137
          %v2229 = vpop.permute.xlu0 %2228
          %2232 = vset.pattern.permute.xlu0 2
          %2233 = vperm.xlu0 %2232, %v2138
          %v2234 = vpop.permute.xlu0 %2233
          %2237 = vset.pattern.permute.xlu0 2
          %2238 = vperm.xlu0 %2237, %v2139
          %v2239 = vpop.permute.xlu0 %2238
          %v2242 = vperm.slane %v2140, 0
          %v2244 = vmul.f32 %v2144, %v2242
          %v2245 = vmul.f32 %v2149, %v2242
          %v2246 = vmul.f32 %v2154, %v2242
          %v2247 = vmul.f32 %v2159, %v2242
          %v2248 = vmul.f32 %v2164, %v2242
          %v2249 = vmul.f32 %v2169, %v2242
          %v2250 = vmul.f32 %v2174, %v2242
          %v2251 = vmul.f32 %v2179, %v2242
          %v2252 = vmul.f32 %v2184, %v2242
          %v2253 = vmul.f32 %v2189, %v2242
          %v2254 = vmul.f32 %v2194, %v2242
          %v2255 = vmul.f32 %v2199, %v2242
          %v2256 = vmul.f32 %v2204, %v2242
          %v2257 = vmul.f32 %v2209, %v2242
          %v2258 = vmul.f32 %v2214, %v2242
          %v2259 = vmul.f32 %v2219, %v2242
          %v2260 = vmul.f32 %v2224, %v2242
          %v2261 = vmul.f32 %v2229, %v2242
          %v2262 = vmul.f32 %v2234, %v2242
          %v2263 = vmul.f32 %v2239, %v2242
          %v2264 = vld [vmem:[%s2] sm:$0x1]
          %v2266 = vperm.slane %v2264, 0
          %v2268 = vadd.f32 %v2244, %v2266
          %v2269 = vadd.f32 %v2245, %v2266
          %v2270 = vadd.f32 %v2246, %v2266
          %v2271 = vadd.f32 %v2247, %v2266
          %v2272 = vadd.f32 %v2248, %v2266
          %v2273 = vadd.f32 %v2249, %v2266
          %v2274 = vadd.f32 %v2250, %v2266
          %v2275 = vadd.f32 %v2251, %v2266
          %v2276 = vadd.f32 %v2252, %v2266
          %v2277 = vadd.f32 %v2253, %v2266
          %v2278 = vadd.f32 %v2254, %v2266
          %v2279 = vadd.f32 %v2255, %v2266
          %v2280 = vadd.f32 %v2256, %v2266
          %v2281 = vadd.f32 %v2257, %v2266
          %v2282 = vadd.f32 %v2258, %v2266
          %v2283 = vadd.f32 %v2259, %v2266
          %v2284 = vadd.f32 %v2260, %v2266
          %v2285 = vadd.f32 %v2261, %v2266
          %v2286 = vadd.f32 %v2262, %v2266
          %v2287 = vadd.f32 %v2263, %v2266
          %v2288 = vmax.f32 %v2268, 0.0
          %v2289 = vmax.f32 %v2269, 0.0
          %v2290 = vmax.f32 %v2270, 0.0
          %v2291 = vmax.f32 %v2271, 0.0
          %v2292 = vmax.f32 %v2272, 0.0
          %v2293 = vmax.f32 %v2273, 0.0
          %v2294 = vmax.f32 %v2274, 0.0
          %v2295 = vmax.f32 %v2275, 0.0
          %v2296 = vmax.f32 %v2276, 0.0
          %v2297 = vmax.f32 %v2277, 0.0
          %v2298 = vmax.f32 %v2278, 0.0
          %v2299 = vmax.f32 %v2279, 0.0
          %v2300 = vmax.f32 %v2280, 0.0
          %v2301 = vmax.f32 %v2281, 0.0
          %v2302 = vmax.f32 %v2282, 0.0
          %v2303 = vmax.f32 %v2283, 0.0
          %v2304 = vmax.f32 %v2284, 0.0
          %v2305 = vmax.f32 %v2285, 0.0
          %v2306 = vmax.f32 %v2286, 0.0
          %v2307 = vmax.f32 %v2287, 0.0
          %v2308 = vpack.c.bf16 %v2289, %v2288
          %v2309 = vpack.c.bf16 %v2291, %v2290
          %v2310 = vpack.c.bf16 %v2293, %v2292
          %v2311 = vpack.c.bf16 %v2295, %v2294
          %v2312 = vpack.c.bf16 %v2297, %v2296
          %v2313 = vpack.c.bf16 %v2299, %v2298
          %v2314 = vpack.c.bf16 %v2301, %v2300
          %v2315 = vpack.c.bf16 %v2303, %v2302
          %v2316 = vpack.c.bf16 %v2305, %v2304
          %v2317 = vpack.c.bf16 %v2307, %v2306
          %v2318 = vld [vmem:[%s3] sm:$0xf]
          %v2319 = vld [vmem:[%s3 + $0x4] sm:$0xf]
          %v2320 = vld [vmem:[%s3 + $0x8] sm:$0xf]
          %v2321 = vld [vmem:[%s3 + $0xc] sm:$0xf]
          %v2322 = vld [vmem:[%s3 + $0x10] sm:$0xf]
          %v2323 = vld [vmem:[%s3 + $0x14] sm:$0xf]
          %v2324 = vld [vmem:[%s4] sm:$0x1]
          %v2326 = vperm.slane %v2324, 0
          %v2334 = vunpack.c.l.b16 %v2318
          %v2335 = vunpack.c.l.b16 %v2319
          %v2336 = vunpack.c.l.b16 %v2320
          %v2337 = vunpack.c.l.b16 %v2321
          %v2338 = vunpack.c.l.b16 %v2322
          %v2339 = vunpack.c.l.b16 %v2323
          %v2340 = vpack.c.b16 %v2335, %v2334
          %v2341 = vpack.c.b16 %v2337, %v2336
          %v2342 = vpack.c.b16 %v2339, %v2338
          %v2347 = vsel %vm795, %v2308, 0
          %v2350 = vsel %vm795, %v2309, 0
          %v2353 = vsel %vm795, %v2310, 0
          %v2356 = vsel %vm795, %v2311, 0
          %v2359 = vsel %vm795, %v2312, 0
          %v2362 = vsel %vm795, %v2313, 0
          %v2365 = vsel %vm795, %v2314, 0
          %v2368 = vsel %vm795, %v2315, 0
          %v2371 = vsel %vm795, %v2316, 0
          %v2374 = vsel %vm795, %v2317, 0
          %2376 = vmatpush.bf16.msra.mxu0 0
          %2377 = vmatpush.bf16.msra.mxu0 0
          %2378 = vmatpush.bf16.msra.mxu0 0
          %2379 = vmatpush.bf16.msra.mxu0 0
          %2380 = vmatpush.bf16.msra.mxu0 0
          %2381 = vmatpush.bf16.msra.mxu0 %v2342
          %2382 = vmatpush.bf16.msra.mxu0 %v2341
          %2383 = vmatpush.bf16.msra.mxu0 %v2340
          %2384 = vmatmul.bf16.gmra.mxu0 %v2347
          %v2385 = vpop.f32.mrf.mxu0
          %v2386 = vadd.f32 %v2326, %v2385
          %v2387 = vpop.f32.mrf.mxu0
          %v2388 = vadd.f32 %v2326, %v2387
          %2389 = vmatmul.bf16.gmra.mxu0 %v2350
          %v2390 = vpop.f32.mrf.mxu0
          %v2391 = vadd.f32 %v2326, %v2390
          %v2392 = vpop.f32.mrf.mxu0
          %v2393 = vadd.f32 %v2326, %v2392
          %2394 = vmatmul.bf16.gmra.mxu0 %v2353
          %v2395 = vpop.f32.mrf.mxu0
          %v2396 = vadd.f32 %v2326, %v2395
          %v2397 = vpop.f32.mrf.mxu0
          %v2398 = vadd.f32 %v2326, %v2397
          %2399 = vmatmul.bf16.gmra.mxu0 %v2356
          %v2400 = vpop.f32.mrf.mxu0
          %v2401 = vadd.f32 %v2326, %v2400
          %v2402 = vpop.f32.mrf.mxu0
          %v2403 = vadd.f32 %v2326, %v2402
          %2404 = vmatmul.bf16.gmra.mxu0 %v2359
          %v2405 = vpop.f32.mrf.mxu0
          %v2406 = vadd.f32 %v2326, %v2405
          %v2407 = vpop.f32.mrf.mxu0
          %v2408 = vadd.f32 %v2326, %v2407
          %2409 = vmatmul.bf16.gmra.mxu0 %v2362
          %v2410 = vpop.f32.mrf.mxu0
          %v2411 = vadd.f32 %v2326, %v2410
          %v2412 = vpop.f32.mrf.mxu0
          %v2413 = vadd.f32 %v2326, %v2412
          %2414 = vmatmul.bf16.gmra.mxu0 %v2365
          %v2415 = vpop.f32.mrf.mxu0
          %v2416 = vadd.f32 %v2326, %v2415
          %v2417 = vpop.f32.mrf.mxu0
          %v2418 = vadd.f32 %v2326, %v2417
          %2419 = vmatmul.bf16.gmra.mxu0 %v2368
          %v2420 = vpop.f32.mrf.mxu0
          %v2421 = vadd.f32 %v2326, %v2420
          %v2422 = vpop.f32.mrf.mxu0
          %v2423 = vadd.f32 %v2326, %v2422
          %2424 = vmatmul.bf16.gmra.mxu0 %v2371
          %v2425 = vpop.f32.mrf.mxu0
          %v2426 = vadd.f32 %v2326, %v2425
          %v2427 = vpop.f32.mrf.mxu0
          %v2428 = vadd.f32 %v2326, %v2427
          %2429 = vmatmul.bf16.gmra.mxu0 %v2374
          %v2430 = vpop.f32.mrf.mxu0
          %v2431 = vadd.f32 %v2326, %v2430
          %v2432 = vpop.f32.mrf.mxu0
          %v2433 = vadd.f32 %v2326, %v2432
          %2434 = vdwg.mxu0
          %v2435 = vmax.f32 %v2386, 0.0
          %v2436 = vmax.f32 %v2388, 0.0
          %v2437 = vmax.f32 %v2391, 0.0
          %v2438 = vmax.f32 %v2393, 0.0
          %v2439 = vmax.f32 %v2396, 0.0
          %v2440 = vmax.f32 %v2398, 0.0
          %v2441 = vmax.f32 %v2401, 0.0
          %v2442 = vmax.f32 %v2403, 0.0
          %v2443 = vmax.f32 %v2406, 0.0
          %v2444 = vmax.f32 %v2408, 0.0
          %v2445 = vmax.f32 %v2411, 0.0
          %v2446 = vmax.f32 %v2413, 0.0
          %v2447 = vmax.f32 %v2416, 0.0
          %v2448 = vmax.f32 %v2418, 0.0
          %v2449 = vmax.f32 %v2421, 0.0
          %v2450 = vmax.f32 %v2423, 0.0
          %v2451 = vmax.f32 %v2426, 0.0
          %v2452 = vmax.f32 %v2428, 0.0
          %v2453 = vmax.f32 %v2431, 0.0
          %v2454 = vmax.f32 %v2433, 0.0
          %v2455 = vpack.c.bf16 %v2436, %v2435
          %v2456 = vpack.c.bf16 %v2438, %v2437
          %v2457 = vpack.c.bf16 %v2440, %v2439
          %v2458 = vpack.c.bf16 %v2442, %v2441
          %v2459 = vpack.c.bf16 %v2444, %v2443
          %v2460 = vpack.c.bf16 %v2446, %v2445
          %v2461 = vpack.c.bf16 %v2448, %v2447
          %v2462 = vpack.c.bf16 %v2450, %v2449
          %v2463 = vpack.c.bf16 %v2452, %v2451
          %v2464 = vpack.c.bf16 %v2454, %v2453
          %v2465 = vld [vmem:[%s5] sm:$0xf]
          %v2466 = vld [vmem:[%s5 + $0x4] sm:$0xf]
          %v2467 = vld [vmem:[%s5 + $0x8] sm:$0xf]
          %v2468 = vld [vmem:[%s5 + $0xc] sm:$0xf]
          %v2469 = vld [vmem:[%s5 + $0x10] sm:$0xf]
          %v2470 = vld [vmem:[%s5 + $0x14] sm:$0xf]
          %v2471 = vld [vmem:[%s6] sm:$0x1]
          %v2473 = vperm.slane %v2471, 0
          %v2481 = vunpack.c.l.b16 %v2465
          %v2482 = vunpack.c.l.b16 %v2466
          %v2483 = vunpack.c.l.b16 %v2467
          %v2484 = vunpack.c.l.b16 %v2468
          %v2485 = vunpack.c.l.b16 %v2469
          %v2486 = vunpack.c.l.b16 %v2470
          %v2487 = vpack.c.b16 %v2482, %v2481
          %v2488 = vpack.c.b16 %v2484, %v2483
          %v2489 = vpack.c.b16 %v2486, %v2485
          %v2494 = vsel %vm795, %v2455, 0
          %v2497 = vsel %vm795, %v2456, 0
          %v2500 = vsel %vm795, %v2457, 0
          %v2503 = vsel %vm795, %v2458, 0
          %v2506 = vsel %vm795, %v2459, 0
          %v2509 = vsel %vm795, %v2460, 0
          %v2512 = vsel %vm795, %v2461, 0
          %v2515 = vsel %vm795, %v2462, 0
          %v2518 = vsel %vm795, %v2463, 0
          %v2521 = vsel %vm795, %v2464, 0
          %2523 = vmatpush.bf16.msra.mxu0 0
          %2524 = vmatpush.bf16.msra.mxu0 0
          %2525 = vmatpush.bf16.msra.mxu0 0
          %2526 = vmatpush.bf16.msra.mxu0 0
          %2527 = vmatpush.bf16.msra.mxu0 0
          %2528 = vmatpush.bf16.msra.mxu0 %v2489
          %2529 = vmatpush.bf16.msra.mxu0 %v2488
          %2530 = vmatpush.bf16.msra.mxu0 %v2487
          %2531 = vmatmul.bf16.gmra.mxu0 %v2494
          %v2532 = vpop.f32.mrf.mxu0
          %v2533 = vadd.f32 %v2473, %v2532
          %v2534 = vpop.f32.mrf.mxu0
          %v2535 = vadd.f32 %v2473, %v2534
          %2536 = vmatmul.bf16.gmra.mxu0 %v2497
          %v2537 = vpop.f32.mrf.mxu0
          %v2538 = vadd.f32 %v2473, %v2537
          %v2539 = vpop.f32.mrf.mxu0
          %v2540 = vadd.f32 %v2473, %v2539
          %2541 = vmatmul.bf16.gmra.mxu0 %v2500
          %v2542 = vpop.f32.mrf.mxu0
          %v2543 = vadd.f32 %v2473, %v2542
          %v2544 = vpop.f32.mrf.mxu0
          %v2545 = vadd.f32 %v2473, %v2544
          %2546 = vmatmul.bf16.gmra.mxu0 %v2503
          %v2547 = vpop.f32.mrf.mxu0
          %v2548 = vadd.f32 %v2473, %v2547
          %v2549 = vpop.f32.mrf.mxu0
          %v2550 = vadd.f32 %v2473, %v2549
          %2551 = vmatmul.bf16.gmra.mxu0 %v2506
          %v2552 = vpop.f32.mrf.mxu0
          %v2553 = vadd.f32 %v2473, %v2552
          %v2554 = vpop.f32.mrf.mxu0
          %v2555 = vadd.f32 %v2473, %v2554
          %2556 = vmatmul.bf16.gmra.mxu0 %v2509
          %v2557 = vpop.f32.mrf.mxu0
          %v2558 = vadd.f32 %v2473, %v2557
          %v2559 = vpop.f32.mrf.mxu0
          %v2560 = vadd.f32 %v2473, %v2559
          %2561 = vmatmul.bf16.gmra.mxu0 %v2512
          %v2562 = vpop.f32.mrf.mxu0
          %v2563 = vadd.f32 %v2473, %v2562
          %v2564 = vpop.f32.mrf.mxu0
          %v2565 = vadd.f32 %v2473, %v2564
          %2566 = vmatmul.bf16.gmra.mxu0 %v2515
          %v2567 = vpop.f32.mrf.mxu0
          %v2568 = vadd.f32 %v2473, %v2567
          %v2569 = vpop.f32.mrf.mxu0
          %v2570 = vadd.f32 %v2473, %v2569
          %2571 = vmatmul.bf16.gmra.mxu0 %v2518
          %v2572 = vpop.f32.mrf.mxu0
          %v2573 = vadd.f32 %v2473, %v2572
          %v2574 = vpop.f32.mrf.mxu0
          %v2575 = vadd.f32 %v2473, %v2574
          %2576 = vmatmul.bf16.gmra.mxu0 %v2521
          %v2577 = vpop.f32.mrf.mxu0
          %v2578 = vadd.f32 %v2473, %v2577
          %v2579 = vpop.f32.mrf.mxu0
          %v2580 = vadd.f32 %v2473, %v2579
          %2581 = vdwg.mxu0
          %v2582 = vmax.f32 %v2533, 0.0
          %v2583 = vmax.f32 %v2535, 0.0
          %v2584 = vmax.f32 %v2538, 0.0
          %v2585 = vmax.f32 %v2540, 0.0
          %v2586 = vmax.f32 %v2543, 0.0
          %v2587 = vmax.f32 %v2545, 0.0
          %v2588 = vmax.f32 %v2548, 0.0
          %v2589 = vmax.f32 %v2550, 0.0
          %v2590 = vmax.f32 %v2553, 0.0
          %v2591 = vmax.f32 %v2555, 0.0
          %v2592 = vmax.f32 %v2558, 0.0
          %v2593 = vmax.f32 %v2560, 0.0
          %v2594 = vmax.f32 %v2563, 0.0
          %v2595 = vmax.f32 %v2565, 0.0
          %v2596 = vmax.f32 %v2568, 0.0
          %v2597 = vmax.f32 %v2570, 0.0
          %v2598 = vmax.f32 %v2573, 0.0
          %v2599 = vmax.f32 %v2575, 0.0
          %v2600 = vmax.f32 %v2578, 0.0
          %v2601 = vmax.f32 %v2580, 0.0
          %s2602 = scalar_lea.vmem [#allocation2], %s2118
          %v2603 = vld [vmem:[%s2602] sm:$0xff]
          %v2604 = vld [vmem:[%s2602 + $0x8] sm:$0xff]
          %v2605 = vld [vmem:[%s2602 + $0x10] sm:$0xff]
          %v2606 = vld [vmem:[%s2602 + $0x18] sm:$0xff]
          %v2607 = vld [vmem:[%s2602 + $0x20] sm:$0xff]
          %v2608 = vld [vmem:[%s2602 + $0x28] sm:$0xff]
          %v2609 = vld [vmem:[%s2602 + $0x30] sm:$0xff]
          %v2610 = vld [vmem:[%s2602 + $0x38] sm:$0xff]
          %v2611 = vld [vmem:[%s2602 + $0x40] sm:$0xff]
          %v2612 = vld [vmem:[%s2602 + $0x48] sm:$0xff]
          %v2613 = vld [vmem:[%s2602 + $0x50] sm:$0xff]
          %v2614 = vld [vmem:[%s2602 + $0x58] sm:$0xff]
          %v2615 = vld [vmem:[%s2602 + $0x60] sm:$0xff]
          %v2616 = vld [vmem:[%s2602 + $0x68] sm:$0xff]
          %v2617 = vld [vmem:[%s2602 + $0x70] sm:$0xff]
          %v2618 = vld [vmem:[%s2602 + $0x78] sm:$0xff]
          %v2619 = vld [vmem:[%s2602 + $0x80] sm:$0xff]
          %v2620 = vld [vmem:[%s2602 + $0x88] sm:$0xff]
          %v2621 = vld [vmem:[%s2602 + $0x90] sm:$0xff]
          %v2622 = vld [vmem:[%s2602 + $0x98] sm:$0xff]
          %2624 = vset.pattern.permute.xlu0 0
          %2625 = vperm.xlu0 %2624, %v2603
          %v2626 = vpop.permute.xlu0 %2625
          %2629 = vset.pattern.permute.xlu0 0
          %2630 = vperm.xlu0 %2629, %v2604
          %v2631 = vpop.permute.xlu0 %2630
          %2634 = vset.pattern.permute.xlu0 0
          %2635 = vperm.xlu0 %2634, %v2605
          %v2636 = vpop.permute.xlu0 %2635
          %2639 = vset.pattern.permute.xlu0 0
          %2640 = vperm.xlu0 %2639, %v2606
          %v2641 = vpop.permute.xlu0 %2640
          %2644 = vset.pattern.permute.xlu0 0
          %2645 = vperm.xlu0 %2644, %v2607
          %v2646 = vpop.permute.xlu0 %2645
          %2649 = vset.pattern.permute.xlu0 0
          %2650 = vperm.xlu0 %2649, %v2608
          %v2651 = vpop.permute.xlu0 %2650
          %2654 = vset.pattern.permute.xlu0 0
          %2655 = vperm.xlu0 %2654, %v2609
          %v2656 = vpop.permute.xlu0 %2655
          %2659 = vset.pattern.permute.xlu0 0
          %2660 = vperm.xlu0 %2659, %v2610
          %v2661 = vpop.permute.xlu0 %2660
          %2664 = vset.pattern.permute.xlu0 0
          %2665 = vperm.xlu0 %2664, %v2611
          %v2666 = vpop.permute.xlu0 %2665
          %2669 = vset.pattern.permute.xlu0 0
          %2670 = vperm.xlu0 %2669, %v2612
          %v2671 = vpop.permute.xlu0 %2670
          %2674 = vset.pattern.permute.xlu0 0
          %2675 = vperm.xlu0 %2674, %v2613
          %v2676 = vpop.permute.xlu0 %2675
          %2679 = vset.pattern.permute.xlu0 0
          %2680 = vperm.xlu0 %2679, %v2614
          %v2681 = vpop.permute.xlu0 %2680
          %2684 = vset.pattern.permute.xlu0 0
          %2685 = vperm.xlu0 %2684, %v2615
          %v2686 = vpop.permute.xlu0 %2685
          %2689 = vset.pattern.permute.xlu0 0
          %2690 = vperm.xlu0 %2689, %v2616
          %v2691 = vpop.permute.xlu0 %2690
          %2694 = vset.pattern.permute.xlu0 0
          %2695 = vperm.xlu0 %2694, %v2617
          %v2696 = vpop.permute.xlu0 %2695
          %2699 = vset.pattern.permute.xlu0 0
          %2700 = vperm.xlu0 %2699, %v2618
          %v2701 = vpop.permute.xlu0 %2700
          %2704 = vset.pattern.permute.xlu0 0
          %2705 = vperm.xlu0 %2704, %v2619
          %v2706 = vpop.permute.xlu0 %2705
          %2709 = vset.pattern.permute.xlu0 0
          %2710 = vperm.xlu0 %2709, %v2620
          %v2711 = vpop.permute.xlu0 %2710
          %2714 = vset.pattern.permute.xlu0 0
          %2715 = vperm.xlu0 %2714, %v2621
          %v2716 = vpop.permute.xlu0 %2715
          %2719 = vset.pattern.permute.xlu0 0
          %2720 = vperm.xlu0 %2719, %v2622
          %v2721 = vpop.permute.xlu0 %2720
          %v2723 = vmul.f32 %v2582, %v2626
          %v2724 = vmul.f32 %v2583, %v2631
          %v2725 = vmul.f32 %v2584, %v2636
          %v2726 = vmul.f32 %v2585, %v2641
          %v2727 = vmul.f32 %v2586, %v2646
          %v2728 = vmul.f32 %v2587, %v2651
          %v2729 = vmul.f32 %v2588, %v2656
          %v2730 = vmul.f32 %v2589, %v2661
          %v2731 = vmul.f32 %v2590, %v2666
          %v2732 = vmul.f32 %v2591, %v2671
          %v2733 = vmul.f32 %v2592, %v2676
          %v2734 = vmul.f32 %v2593, %v2681
          %v2735 = vmul.f32 %v2594, %v2686
          %v2736 = vmul.f32 %v2595, %v2691
          %v2737 = vmul.f32 %v2596, %v2696
          %v2738 = vmul.f32 %v2597, %v2701
          %v2739 = vmul.f32 %v2598, %v2706
          %v2740 = vmul.f32 %v2599, %v2711
          %v2741 = vmul.f32 %v2600, %v2716
          %v2742 = vmul.f32 %v2601, %v2721
          %s2743 = sadd.s32 %s2118, 1640
          %s2744 = scalar_lea.vmem [#allocation3], %s2743
          %2745 = vst.msk [vmem:[%s2744] sm:$0xff] %vm795, %v2723
          %2746 = vst.msk [vmem:[%s2744 + $0x8] sm:$0xff] %vm795, %v2724
          %2747 = vst.msk [vmem:[%s2744 + $0x10] sm:$0xff] %vm795, %v2725
          %2748 = vst.msk [vmem:[%s2744 + $0x18] sm:$0xff] %vm795, %v2726
          %2749 = vst.msk [vmem:[%s2744 + $0x20] sm:$0xff] %vm795, %v2727
          %2750 = vst.msk [vmem:[%s2744 + $0x28] sm:$0xff] %vm795, %v2728
          %2751 = vst.msk [vmem:[%s2744 + $0x30] sm:$0xff] %vm795, %v2729
          %2752 = vst.msk [vmem:[%s2744 + $0x38] sm:$0xff] %vm795, %v2730
          %2753 = vst.msk [vmem:[%s2744 + $0x40] sm:$0xff] %vm795, %v2731
          %2754 = vst.msk [vmem:[%s2744 + $0x48] sm:$0xff] %vm795, %v2732
          %2755 = vst.msk [vmem:[%s2744 + $0x50] sm:$0xff] %vm795, %v2733
          %2756 = vst.msk [vmem:[%s2744 + $0x58] sm:$0xff] %vm795, %v2734
          %2757 = vst.msk [vmem:[%s2744 + $0x60] sm:$0xff] %vm795, %v2735
          %2758 = vst.msk [vmem:[%s2744 + $0x68] sm:$0xff] %vm795, %v2736
          %2759 = vst.msk [vmem:[%s2744 + $0x70] sm:$0xff] %vm795, %v2737
          %2760 = vst.msk [vmem:[%s2744 + $0x78] sm:$0xff] %vm795, %v2738
          %2761 = vst.msk [vmem:[%s2744 + $0x80] sm:$0xff] %vm795, %v2739
          %2762 = vst.msk [vmem:[%s2744 + $0x88] sm:$0xff] %vm795, %v2740
          %2763 = vst.msk [vmem:[%s2744 + $0x90] sm:$0xff] %vm795, %v2741
          %2764 = vst.msk [vmem:[%s2744 + $0x98] sm:$0xff] %vm795, %v2742
        $region122: #{danet_forward.1} parent=95 // loop_footer
          %s2117 = sadd.s32 1, %s2113
        $region123: #{danet_forward.1} parent=95 // loop_footer_branch
          %2112 = sbr.rel target = $region119
        $region124: #{danet_forward.1} parent=95 // loop_exit
          _
        loop: start=0, step=1, limit=5
        $region125: #{danet_forward.1} parent=95 // loop_pre_header
          _
        $region126: #{danet_forward.1} parent=95 // loop_header
          %s2766 = sphi 0, %s2770
          %p2767 = scmp.ge.s32.totalorder %s2766, 5
        $region127: #{danet_forward.1} parent=95 // loop_header_branch
          %2769 = sbr.rel (%p2767) target = $region131
        $region128: #{danet_forward.1} parent=95 // loop_body
          %s2771 = smul.u32 %s2766, 160
          %s2772 = scalar_lea.vmem %s601, %s2771
          %v2773 = vld [vmem:[%s2772] sm:$0xff]
          %v2774 = vld [vmem:[%s2772 + $0x8] sm:$0xff]
          %v2775 = vld [vmem:[%s2772 + $0x10] sm:$0xff]
          %v2776 = vld [vmem:[%s2772 + $0x18] sm:$0xff]
          %v2777 = vld [vmem:[%s2772 + $0x20] sm:$0xff]
          %v2778 = vld [vmem:[%s2772 + $0x28] sm:$0xff]
          %v2779 = vld [vmem:[%s2772 + $0x30] sm:$0xff]
          %v2780 = vld [vmem:[%s2772 + $0x38] sm:$0xff]
          %v2781 = vld [vmem:[%s2772 + $0x40] sm:$0xff]
          %v2782 = vld [vmem:[%s2772 + $0x48] sm:$0xff]
          %v2783 = vld [vmem:[%s2772 + $0x50] sm:$0xff]
          %v2784 = vld [vmem:[%s2772 + $0x58] sm:$0xff]
          %v2785 = vld [vmem:[%s2772 + $0x60] sm:$0xff]
          %v2786 = vld [vmem:[%s2772 + $0x68] sm:$0xff]
          %v2787 = vld [vmem:[%s2772 + $0x70] sm:$0xff]
          %v2788 = vld [vmem:[%s2772 + $0x78] sm:$0xff]
          %v2789 = vld [vmem:[%s2772 + $0x80] sm:$0xff]
          %v2790 = vld [vmem:[%s2772 + $0x88] sm:$0xff]
          %v2791 = vld [vmem:[%s2772 + $0x90] sm:$0xff]
          %v2792 = vld [vmem:[%s2772 + $0x98] sm:$0xff]
          %v2793 = vld [vmem:[%s1] sm:$0x1]
          %2795 = vset.pattern.permute.xlu0 3
          %2796 = vperm.xlu0 %2795, %v2773
          %v2797 = vpop.permute.xlu0 %2796
          %2800 = vset.pattern.permute.xlu0 3
          %2801 = vperm.xlu0 %2800, %v2774
          %v2802 = vpop.permute.xlu0 %2801
          %2805 = vset.pattern.permute.xlu0 3
          %2806 = vperm.xlu0 %2805, %v2775
          %v2807 = vpop.permute.xlu0 %2806
          %2810 = vset.pattern.permute.xlu0 3
          %2811 = vperm.xlu0 %2810, %v2776
          %v2812 = vpop.permute.xlu0 %2811
          %2815 = vset.pattern.permute.xlu0 3
          %2816 = vperm.xlu0 %2815, %v2777
          %v2817 = vpop.permute.xlu0 %2816
          %2820 = vset.pattern.permute.xlu0 3
          %2821 = vperm.xlu0 %2820, %v2778
          %v2822 = vpop.permute.xlu0 %2821
          %2825 = vset.pattern.permute.xlu0 3
          %2826 = vperm.xlu0 %2825, %v2779
          %v2827 = vpop.permute.xlu0 %2826
          %2830 = vset.pattern.permute.xlu0 3
          %2831 = vperm.xlu0 %2830, %v2780
          %v2832 = vpop.permute.xlu0 %2831
          %2835 = vset.pattern.permute.xlu0 3
          %2836 = vperm.xlu0 %2835, %v2781
          %v2837 = vpop.permute.xlu0 %2836
          %2840 = vset.pattern.permute.xlu0 3
          %2841 = vperm.xlu0 %2840, %v2782
          %v2842 = vpop.permute.xlu0 %2841
          %2845 = vset.pattern.permute.xlu0 3
          %2846 = vperm.xlu0 %2845, %v2783
          %v2847 = vpop.permute.xlu0 %2846
          %2850 = vset.pattern.permute.xlu0 3
          %2851 = vperm.xlu0 %2850, %v2784
          %v2852 = vpop.permute.xlu0 %2851
          %2855 = vset.pattern.permute.xlu0 3
          %2856 = vperm.xlu0 %2855, %v2785
          %v2857 = vpop.permute.xlu0 %2856
          %2860 = vset.pattern.permute.xlu0 3
          %2861 = vperm.xlu0 %2860, %v2786
          %v2862 = vpop.permute.xlu0 %2861
          %2865 = vset.pattern.permute.xlu0 3
          %2866 = vperm.xlu0 %2865, %v2787
          %v2867 = vpop.permute.xlu0 %2866
          %2870 = vset.pattern.permute.xlu0 3
          %2871 = vperm.xlu0 %2870, %v2788
          %v2872 = vpop.permute.xlu0 %2871
          %2875 = vset.pattern.permute.xlu0 3
          %2876 = vperm.xlu0 %2875, %v2789
          %v2877 = vpop.permute.xlu0 %2876
          %2880 = vset.pattern.permute.xlu0 3
          %2881 = vperm.xlu0 %2880, %v2790
          %v2882 = vpop.permute.xlu0 %2881
          %2885 = vset.pattern.permute.xlu0 3
          %2886 = vperm.xlu0 %2885, %v2791
          %v2887 = vpop.permute.xlu0 %2886
          %2890 = vset.pattern.permute.xlu0 3
          %2891 = vperm.xlu0 %2890, %v2792
          %v2892 = vpop.permute.xlu0 %2891
          %v2895 = vperm.slane %v2793, 0
          %v2897 = vmul.f32 %v2797, %v2895
          %v2898 = vmul.f32 %v2802, %v2895
          %v2899 = vmul.f32 %v2807, %v2895
          %v2900 = vmul.f32 %v2812, %v2895
          %v2901 = vmul.f32 %v2817, %v2895
          %v2902 = vmul.f32 %v2822, %v2895
          %v2903 = vmul.f32 %v2827, %v2895
          %v2904 = vmul.f32 %v2832, %v2895
          %v2905 = vmul.f32 %v2837, %v2895
          %v2906 = vmul.f32 %v2842, %v2895
          %v2907 = vmul.f32 %v2847, %v2895
          %v2908 = vmul.f32 %v2852, %v2895
          %v2909 = vmul.f32 %v2857, %v2895
          %v2910 = vmul.f32 %v2862, %v2895
          %v2911 = vmul.f32 %v2867, %v2895
          %v2912 = vmul.f32 %v2872, %v2895
          %v2913 = vmul.f32 %v2877, %v2895
          %v2914 = vmul.f32 %v2882, %v2895
          %v2915 = vmul.f32 %v2887, %v2895
          %v2916 = vmul.f32 %v2892, %v2895
          %v2917 = vld [vmem:[%s2] sm:$0x1]
          %v2919 = vperm.slane %v2917, 0
          %v2921 = vadd.f32 %v2897, %v2919
          %v2922 = vadd.f32 %v2898, %v2919
          %v2923 = vadd.f32 %v2899, %v2919
          %v2924 = vadd.f32 %v2900, %v2919
          %v2925 = vadd.f32 %v2901, %v2919
          %v2926 = vadd.f32 %v2902, %v2919
          %v2927 = vadd.f32 %v2903, %v2919
          %v2928 = vadd.f32 %v2904, %v2919
          %v2929 = vadd.f32 %v2905, %v2919
          %v2930 = vadd.f32 %v2906, %v2919
          %v2931 = vadd.f32 %v2907, %v2919
          %v2932 = vadd.f32 %v2908, %v2919
          %v2933 = vadd.f32 %v2909, %v2919
          %v2934 = vadd.f32 %v2910, %v2919
          %v2935 = vadd.f32 %v2911, %v2919
          %v2936 = vadd.f32 %v2912, %v2919
          %v2937 = vadd.f32 %v2913, %v2919
          %v2938 = vadd.f32 %v2914, %v2919
          %v2939 = vadd.f32 %v2915, %v2919
          %v2940 = vadd.f32 %v2916, %v2919
          %v2941 = vmax.f32 %v2921, 0.0
          %v2942 = vmax.f32 %v2922, 0.0
          %v2943 = vmax.f32 %v2923, 0.0
          %v2944 = vmax.f32 %v2924, 0.0
          %v2945 = vmax.f32 %v2925, 0.0
          %v2946 = vmax.f32 %v2926, 0.0
          %v2947 = vmax.f32 %v2927, 0.0
          %v2948 = vmax.f32 %v2928, 0.0
          %v2949 = vmax.f32 %v2929, 0.0
          %v2950 = vmax.f32 %v2930, 0.0
          %v2951 = vmax.f32 %v2931, 0.0
          %v2952 = vmax.f32 %v2932, 0.0
          %v2953 = vmax.f32 %v2933, 0.0
          %v2954 = vmax.f32 %v2934, 0.0
          %v2955 = vmax.f32 %v2935, 0.0
          %v2956 = vmax.f32 %v2936, 0.0
          %v2957 = vmax.f32 %v2937, 0.0
          %v2958 = vmax.f32 %v2938, 0.0
          %v2959 = vmax.f32 %v2939, 0.0
          %v2960 = vmax.f32 %v2940, 0.0
          %v2961 = vpack.c.bf16 %v2942, %v2941
          %v2962 = vpack.c.bf16 %v2944, %v2943
          %v2963 = vpack.c.bf16 %v2946, %v2945
          %v2964 = vpack.c.bf16 %v2948, %v2947
          %v2965 = vpack.c.bf16 %v2950, %v2949
          %v2966 = vpack.c.bf16 %v2952, %v2951
          %v2967 = vpack.c.bf16 %v2954, %v2953
          %v2968 = vpack.c.bf16 %v2956, %v2955
          %v2969 = vpack.c.bf16 %v2958, %v2957
          %v2970 = vpack.c.bf16 %v2960, %v2959
          %v2971 = vld [vmem:[%s3] sm:$0xf]
          %v2972 = vld [vmem:[%s3 + $0x4] sm:$0xf]
          %v2973 = vld [vmem:[%s3 + $0x8] sm:$0xf]
          %v2974 = vld [vmem:[%s3 + $0xc] sm:$0xf]
          %v2975 = vld [vmem:[%s3 + $0x10] sm:$0xf]
          %v2976 = vld [vmem:[%s3 + $0x14] sm:$0xf]
          %v2977 = vld [vmem:[%s4] sm:$0x1]
          %v2979 = vperm.slane %v2977, 0
          %v2987 = vunpack.c.l.b16 %v2971
          %v2988 = vunpack.c.l.b16 %v2972
          %v2989 = vunpack.c.l.b16 %v2973
          %v2990 = vunpack.c.l.b16 %v2974
          %v2991 = vunpack.c.l.b16 %v2975
          %v2992 = vunpack.c.l.b16 %v2976
          %v2993 = vpack.c.b16 %v2988, %v2987
          %v2994 = vpack.c.b16 %v2990, %v2989
          %v2995 = vpack.c.b16 %v2992, %v2991
          %v3000 = vsel %vm795, %v2961, 0
          %v3003 = vsel %vm795, %v2962, 0
          %v3006 = vsel %vm795, %v2963, 0
          %v3009 = vsel %vm795, %v2964, 0
          %v3012 = vsel %vm795, %v2965, 0
          %v3015 = vsel %vm795, %v2966, 0
          %v3018 = vsel %vm795, %v2967, 0
          %v3021 = vsel %vm795, %v2968, 0
          %v3024 = vsel %vm795, %v2969, 0
          %v3027 = vsel %vm795, %v2970, 0
          %3029 = vmatpush.bf16.msra.mxu0 0
          %3030 = vmatpush.bf16.msra.mxu0 0
          %3031 = vmatpush.bf16.msra.mxu0 0
          %3032 = vmatpush.bf16.msra.mxu0 0
          %3033 = vmatpush.bf16.msra.mxu0 0
          %3034 = vmatpush.bf16.msra.mxu0 %v2995
          %3035 = vmatpush.bf16.msra.mxu0 %v2994
          %3036 = vmatpush.bf16.msra.mxu0 %v2993
          %3037 = vmatmul.bf16.gmra.mxu0 %v3000
          %v3038 = vpop.f32.mrf.mxu0
          %v3039 = vadd.f32 %v2979, %v3038
          %v3040 = vpop.f32.mrf.mxu0
          %v3041 = vadd.f32 %v2979, %v3040
          %3042 = vmatmul.bf16.gmra.mxu0 %v3003
          %v3043 = vpop.f32.mrf.mxu0
          %v3044 = vadd.f32 %v2979, %v3043
          %v3045 = vpop.f32.mrf.mxu0
          %v3046 = vadd.f32 %v2979, %v3045
          %3047 = vmatmul.bf16.gmra.mxu0 %v3006
          %v3048 = vpop.f32.mrf.mxu0
          %v3049 = vadd.f32 %v2979, %v3048
          %v3050 = vpop.f32.mrf.mxu0
          %v3051 = vadd.f32 %v2979, %v3050
          %3052 = vmatmul.bf16.gmra.mxu0 %v3009
          %v3053 = vpop.f32.mrf.mxu0
          %v3054 = vadd.f32 %v2979, %v3053
          %v3055 = vpop.f32.mrf.mxu0
          %v3056 = vadd.f32 %v2979, %v3055
          %3057 = vmatmul.bf16.gmra.mxu0 %v3012
          %v3058 = vpop.f32.mrf.mxu0
          %v3059 = vadd.f32 %v2979, %v3058
          %v3060 = vpop.f32.mrf.mxu0
          %v3061 = vadd.f32 %v2979, %v3060
          %3062 = vmatmul.bf16.gmra.mxu0 %v3015
          %v3063 = vpop.f32.mrf.mxu0
          %v3064 = vadd.f32 %v2979, %v3063
          %v3065 = vpop.f32.mrf.mxu0
          %v3066 = vadd.f32 %v2979, %v3065
          %3067 = vmatmul.bf16.gmra.mxu0 %v3018
          %v3068 = vpop.f32.mrf.mxu0
          %v3069 = vadd.f32 %v2979, %v3068
          %v3070 = vpop.f32.mrf.mxu0
          %v3071 = vadd.f32 %v2979, %v3070
          %3072 = vmatmul.bf16.gmra.mxu0 %v3021
          %v3073 = vpop.f32.mrf.mxu0
          %v3074 = vadd.f32 %v2979, %v3073
          %v3075 = vpop.f32.mrf.mxu0
          %v3076 = vadd.f32 %v2979, %v3075
          %3077 = vmatmul.bf16.gmra.mxu0 %v3024
          %v3078 = vpop.f32.mrf.mxu0
          %v3079 = vadd.f32 %v2979, %v3078
          %v3080 = vpop.f32.mrf.mxu0
          %v3081 = vadd.f32 %v2979, %v3080
          %3082 = vmatmul.bf16.gmra.mxu0 %v3027
          %v3083 = vpop.f32.mrf.mxu0
          %v3084 = vadd.f32 %v2979, %v3083
          %v3085 = vpop.f32.mrf.mxu0
          %v3086 = vadd.f32 %v2979, %v3085
          %3087 = vdwg.mxu0
          %v3088 = vmax.f32 %v3039, 0.0
          %v3089 = vmax.f32 %v3041, 0.0
          %v3090 = vmax.f32 %v3044, 0.0
          %v3091 = vmax.f32 %v3046, 0.0
          %v3092 = vmax.f32 %v3049, 0.0
          %v3093 = vmax.f32 %v3051, 0.0
          %v3094 = vmax.f32 %v3054, 0.0
          %v3095 = vmax.f32 %v3056, 0.0
          %v3096 = vmax.f32 %v3059, 0.0
          %v3097 = vmax.f32 %v3061, 0.0
          %v3098 = vmax.f32 %v3064, 0.0
          %v3099 = vmax.f32 %v3066, 0.0
          %v3100 = vmax.f32 %v3069, 0.0
          %v3101 = vmax.f32 %v3071, 0.0
          %v3102 = vmax.f32 %v3074, 0.0
          %v3103 = vmax.f32 %v3076, 0.0
          %v3104 = vmax.f32 %v3079, 0.0
          %v3105 = vmax.f32 %v3081, 0.0
          %v3106 = vmax.f32 %v3084, 0.0
          %v3107 = vmax.f32 %v3086, 0.0
          %v3108 = vpack.c.bf16 %v3089, %v3088
          %v3109 = vpack.c.bf16 %v3091, %v3090
          %v3110 = vpack.c.bf16 %v3093, %v3092
          %v3111 = vpack.c.bf16 %v3095, %v3094
          %v3112 = vpack.c.bf16 %v3097, %v3096
          %v3113 = vpack.c.bf16 %v3099, %v3098
          %v3114 = vpack.c.bf16 %v3101, %v3100
          %v3115 = vpack.c.bf16 %v3103, %v3102
          %v3116 = vpack.c.bf16 %v3105, %v3104
          %v3117 = vpack.c.bf16 %v3107, %v3106
          %v3118 = vld [vmem:[%s5] sm:$0xf]
          %v3119 = vld [vmem:[%s5 + $0x4] sm:$0xf]
          %v3120 = vld [vmem:[%s5 + $0x8] sm:$0xf]
          %v3121 = vld [vmem:[%s5 + $0xc] sm:$0xf]
          %v3122 = vld [vmem:[%s5 + $0x10] sm:$0xf]
          %v3123 = vld [vmem:[%s5 + $0x14] sm:$0xf]
          %v3124 = vld [vmem:[%s6] sm:$0x1]
          %v3126 = vperm.slane %v3124, 0
          %v3134 = vunpack.c.l.b16 %v3118
          %v3135 = vunpack.c.l.b16 %v3119
          %v3136 = vunpack.c.l.b16 %v3120
          %v3137 = vunpack.c.l.b16 %v3121
          %v3138 = vunpack.c.l.b16 %v3122
          %v3139 = vunpack.c.l.b16 %v3123
          %v3140 = vpack.c.b16 %v3135, %v3134
          %v3141 = vpack.c.b16 %v3137, %v3136
          %v3142 = vpack.c.b16 %v3139, %v3138
          %v3147 = vsel %vm795, %v3108, 0
          %v3150 = vsel %vm795, %v3109, 0
          %v3153 = vsel %vm795, %v3110, 0
          %v3156 = vsel %vm795, %v3111, 0
          %v3159 = vsel %vm795, %v3112, 0
          %v3162 = vsel %vm795, %v3113, 0
          %v3165 = vsel %vm795, %v3114, 0
          %v3168 = vsel %vm795, %v3115, 0
          %v3171 = vsel %vm795, %v3116, 0
          %v3174 = vsel %vm795, %v3117, 0
          %3176 = vmatpush.bf16.msra.mxu0 0
          %3177 = vmatpush.bf16.msra.mxu0 0
          %3178 = vmatpush.bf16.msra.mxu0 0
          %3179 = vmatpush.bf16.msra.mxu0 0
          %3180 = vmatpush.bf16.msra.mxu0 0
          %3181 = vmatpush.bf16.msra.mxu0 %v3142
          %3182 = vmatpush.bf16.msra.mxu0 %v3141
          %3183 = vmatpush.bf16.msra.mxu0 %v3140
          %3184 = vmatmul.bf16.gmra.mxu0 %v3147
          %v3185 = vpop.f32.mrf.mxu0
          %v3186 = vadd.f32 %v3126, %v3185
          %v3187 = vpop.f32.mrf.mxu0
          %v3188 = vadd.f32 %v3126, %v3187
          %3189 = vmatmul.bf16.gmra.mxu0 %v3150
          %v3190 = vpop.f32.mrf.mxu0
          %v3191 = vadd.f32 %v3126, %v3190
          %v3192 = vpop.f32.mrf.mxu0
          %v3193 = vadd.f32 %v3126, %v3192
          %3194 = vmatmul.bf16.gmra.mxu0 %v3153
          %v3195 = vpop.f32.mrf.mxu0
          %v3196 = vadd.f32 %v3126, %v3195
          %v3197 = vpop.f32.mrf.mxu0
          %v3198 = vadd.f32 %v3126, %v3197
          %3199 = vmatmul.bf16.gmra.mxu0 %v3156
          %v3200 = vpop.f32.mrf.mxu0
          %v3201 = vadd.f32 %v3126, %v3200
          %v3202 = vpop.f32.mrf.mxu0
          %v3203 = vadd.f32 %v3126, %v3202
          %3204 = vmatmul.bf16.gmra.mxu0 %v3159
          %v3205 = vpop.f32.mrf.mxu0
          %v3206 = vadd.f32 %v3126, %v3205
          %v3207 = vpop.f32.mrf.mxu0
          %v3208 = vadd.f32 %v3126, %v3207
          %3209 = vmatmul.bf16.gmra.mxu0 %v3162
          %v3210 = vpop.f32.mrf.mxu0
          %v3211 = vadd.f32 %v3126, %v3210
          %v3212 = vpop.f32.mrf.mxu0
          %v3213 = vadd.f32 %v3126, %v3212
          %3214 = vmatmul.bf16.gmra.mxu0 %v3165
          %v3215 = vpop.f32.mrf.mxu0
          %v3216 = vadd.f32 %v3126, %v3215
          %v3217 = vpop.f32.mrf.mxu0
          %v3218 = vadd.f32 %v3126, %v3217
          %3219 = vmatmul.bf16.gmra.mxu0 %v3168
          %v3220 = vpop.f32.mrf.mxu0
          %v3221 = vadd.f32 %v3126, %v3220
          %v3222 = vpop.f32.mrf.mxu0
          %v3223 = vadd.f32 %v3126, %v3222
          %3224 = vmatmul.bf16.gmra.mxu0 %v3171
          %v3225 = vpop.f32.mrf.mxu0
          %v3226 = vadd.f32 %v3126, %v3225
          %v3227 = vpop.f32.mrf.mxu0
          %v3228 = vadd.f32 %v3126, %v3227
          %3229 = vmatmul.bf16.gmra.mxu0 %v3174
          %v3230 = vpop.f32.mrf.mxu0
          %v3231 = vadd.f32 %v3126, %v3230
          %v3232 = vpop.f32.mrf.mxu0
          %v3233 = vadd.f32 %v3126, %v3232
          %3234 = vdwg.mxu0
          %v3235 = vmax.f32 %v3186, 0.0
          %v3236 = vmax.f32 %v3188, 0.0
          %v3237 = vmax.f32 %v3191, 0.0
          %v3238 = vmax.f32 %v3193, 0.0
          %v3239 = vmax.f32 %v3196, 0.0
          %v3240 = vmax.f32 %v3198, 0.0
          %v3241 = vmax.f32 %v3201, 0.0
          %v3242 = vmax.f32 %v3203, 0.0
          %v3243 = vmax.f32 %v3206, 0.0
          %v3244 = vmax.f32 %v3208, 0.0
          %v3245 = vmax.f32 %v3211, 0.0
          %v3246 = vmax.f32 %v3213, 0.0
          %v3247 = vmax.f32 %v3216, 0.0
          %v3248 = vmax.f32 %v3218, 0.0
          %v3249 = vmax.f32 %v3221, 0.0
          %v3250 = vmax.f32 %v3223, 0.0
          %v3251 = vmax.f32 %v3226, 0.0
          %v3252 = vmax.f32 %v3228, 0.0
          %v3253 = vmax.f32 %v3231, 0.0
          %v3254 = vmax.f32 %v3233, 0.0
          %s3255 = scalar_lea.vmem [#allocation2], %s2771
          %v3256 = vld [vmem:[%s3255] sm:$0xff]
          %v3257 = vld [vmem:[%s3255 + $0x8] sm:$0xff]
          %v3258 = vld [vmem:[%s3255 + $0x10] sm:$0xff]
          %v3259 = vld [vmem:[%s3255 + $0x18] sm:$0xff]
          %v3260 = vld [vmem:[%s3255 + $0x20] sm:$0xff]
          %v3261 = vld [vmem:[%s3255 + $0x28] sm:$0xff]
          %v3262 = vld [vmem:[%s3255 + $0x30] sm:$0xff]
          %v3263 = vld [vmem:[%s3255 + $0x38] sm:$0xff]
          %v3264 = vld [vmem:[%s3255 + $0x40] sm:$0xff]
          %v3265 = vld [vmem:[%s3255 + $0x48] sm:$0xff]
          %v3266 = vld [vmem:[%s3255 + $0x50] sm:$0xff]
          %v3267 = vld [vmem:[%s3255 + $0x58] sm:$0xff]
          %v3268 = vld [vmem:[%s3255 + $0x60] sm:$0xff]
          %v3269 = vld [vmem:[%s3255 + $0x68] sm:$0xff]
          %v3270 = vld [vmem:[%s3255 + $0x70] sm:$0xff]
          %v3271 = vld [vmem:[%s3255 + $0x78] sm:$0xff]
          %v3272 = vld [vmem:[%s3255 + $0x80] sm:$0xff]
          %v3273 = vld [vmem:[%s3255 + $0x88] sm:$0xff]
          %v3274 = vld [vmem:[%s3255 + $0x90] sm:$0xff]
          %v3275 = vld [vmem:[%s3255 + $0x98] sm:$0xff]
          %3277 = vset.pattern.permute.xlu0 0
          %3278 = vperm.xlu0 %3277, %v3256
          %v3279 = vpop.permute.xlu0 %3278
          %3282 = vset.pattern.permute.xlu0 0
          %3283 = vperm.xlu0 %3282, %v3257
          %v3284 = vpop.permute.xlu0 %3283
          %3287 = vset.pattern.permute.xlu0 0
          %3288 = vperm.xlu0 %3287, %v3258
          %v3289 = vpop.permute.xlu0 %3288
          %3292 = vset.pattern.permute.xlu0 0
          %3293 = vperm.xlu0 %3292, %v3259
          %v3294 = vpop.permute.xlu0 %3293
          %3297 = vset.pattern.permute.xlu0 0
          %3298 = vperm.xlu0 %3297, %v3260
          %v3299 = vpop.permute.xlu0 %3298
          %3302 = vset.pattern.permute.xlu0 0
          %3303 = vperm.xlu0 %3302, %v3261
          %v3304 = vpop.permute.xlu0 %3303
          %3307 = vset.pattern.permute.xlu0 0
          %3308 = vperm.xlu0 %3307, %v3262
          %v3309 = vpop.permute.xlu0 %3308
          %3312 = vset.pattern.permute.xlu0 0
          %3313 = vperm.xlu0 %3312, %v3263
          %v3314 = vpop.permute.xlu0 %3313
          %3317 = vset.pattern.permute.xlu0 0
          %3318 = vperm.xlu0 %3317, %v3264
          %v3319 = vpop.permute.xlu0 %3318
          %3322 = vset.pattern.permute.xlu0 0
          %3323 = vperm.xlu0 %3322, %v3265
          %v3324 = vpop.permute.xlu0 %3323
          %3327 = vset.pattern.permute.xlu0 0
          %3328 = vperm.xlu0 %3327, %v3266
          %v3329 = vpop.permute.xlu0 %3328
          %3332 = vset.pattern.permute.xlu0 0
          %3333 = vperm.xlu0 %3332, %v3267
          %v3334 = vpop.permute.xlu0 %3333
          %3337 = vset.pattern.permute.xlu0 0
          %3338 = vperm.xlu0 %3337, %v3268
          %v3339 = vpop.permute.xlu0 %3338
          %3342 = vset.pattern.permute.xlu0 0
          %3343 = vperm.xlu0 %3342, %v3269
          %v3344 = vpop.permute.xlu0 %3343
          %3347 = vset.pattern.permute.xlu0 0
          %3348 = vperm.xlu0 %3347, %v3270
          %v3349 = vpop.permute.xlu0 %3348
          %3352 = vset.pattern.permute.xlu0 0
          %3353 = vperm.xlu0 %3352, %v3271
          %v3354 = vpop.permute.xlu0 %3353
          %3357 = vset.pattern.permute.xlu0 0
          %3358 = vperm.xlu0 %3357, %v3272
          %v3359 = vpop.permute.xlu0 %3358
          %3362 = vset.pattern.permute.xlu0 0
          %3363 = vperm.xlu0 %3362, %v3273
          %v3364 = vpop.permute.xlu0 %3363
          %3367 = vset.pattern.permute.xlu0 0
          %3368 = vperm.xlu0 %3367, %v3274
          %v3369 = vpop.permute.xlu0 %3368
          %3372 = vset.pattern.permute.xlu0 0
          %3373 = vperm.xlu0 %3372, %v3275
          %v3374 = vpop.permute.xlu0 %3373
          %v3376 = vmul.f32 %v3235, %v3279
          %v3377 = vmul.f32 %v3236, %v3284
          %v3378 = vmul.f32 %v3237, %v3289
          %v3379 = vmul.f32 %v3238, %v3294
          %v3380 = vmul.f32 %v3239, %v3299
          %v3381 = vmul.f32 %v3240, %v3304
          %v3382 = vmul.f32 %v3241, %v3309
          %v3383 = vmul.f32 %v3242, %v3314
          %v3384 = vmul.f32 %v3243, %v3319
          %v3385 = vmul.f32 %v3244, %v3324
          %v3386 = vmul.f32 %v3245, %v3329
          %v3387 = vmul.f32 %v3246, %v3334
          %v3388 = vmul.f32 %v3247, %v3339
          %v3389 = vmul.f32 %v3248, %v3344
          %v3390 = vmul.f32 %v3249, %v3349
          %v3391 = vmul.f32 %v3250, %v3354
          %v3392 = vmul.f32 %v3251, %v3359
          %v3393 = vmul.f32 %v3252, %v3364
          %v3394 = vmul.f32 %v3253, %v3369
          %v3395 = vmul.f32 %v3254, %v3374
          %s3396 = sadd.s32 %s2771, 2440
          %s3397 = scalar_lea.vmem [#allocation3], %s3396
          %3398 = vst.msk [vmem:[%s3397] sm:$0xff] %vm795, %v3376
          %3399 = vst.msk [vmem:[%s3397 + $0x8] sm:$0xff] %vm795, %v3377
          %3400 = vst.msk [vmem:[%s3397 + $0x10] sm:$0xff] %vm795, %v3378
          %3401 = vst.msk [vmem:[%s3397 + $0x18] sm:$0xff] %vm795, %v3379
          %3402 = vst.msk [vmem:[%s3397 + $0x20] sm:$0xff] %vm795, %v3380
          %3403 = vst.msk [vmem:[%s3397 + $0x28] sm:$0xff] %vm795, %v3381
          %3404 = vst.msk [vmem:[%s3397 + $0x30] sm:$0xff] %vm795, %v3382
          %3405 = vst.msk [vmem:[%s3397 + $0x38] sm:$0xff] %vm795, %v3383
          %3406 = vst.msk [vmem:[%s3397 + $0x40] sm:$0xff] %vm795, %v3384
          %3407 = vst.msk [vmem:[%s3397 + $0x48] sm:$0xff] %vm795, %v3385
          %3408 = vst.msk [vmem:[%s3397 + $0x50] sm:$0xff] %vm795, %v3386
          %3409 = vst.msk [vmem:[%s3397 + $0x58] sm:$0xff] %vm795, %v3387
          %3410 = vst.msk [vmem:[%s3397 + $0x60] sm:$0xff] %vm795, %v3388
          %3411 = vst.msk [vmem:[%s3397 + $0x68] sm:$0xff] %vm795, %v3389
          %3412 = vst.msk [vmem:[%s3397 + $0x70] sm:$0xff] %vm795, %v3390
          %3413 = vst.msk [vmem:[%s3397 + $0x78] sm:$0xff] %vm795, %v3391
          %3414 = vst.msk [vmem:[%s3397 + $0x80] sm:$0xff] %vm795, %v3392
          %3415 = vst.msk [vmem:[%s3397 + $0x88] sm:$0xff] %vm795, %v3393
          %3416 = vst.msk [vmem:[%s3397 + $0x90] sm:$0xff] %vm795, %v3394
          %3417 = vst.msk [vmem:[%s3397 + $0x98] sm:$0xff] %vm795, %v3395
        $region129: #{danet_forward.1} parent=95 // loop_footer
          %s2770 = sadd.s32 1, %s2766
        $region130: #{danet_forward.1} parent=95 // loop_footer_branch
          %2765 = sbr.rel target = $region126
        $region131: #{danet_forward.1} parent=95 // loop_exit
          _
        loop: start=0, step=1, limit=5
        $region132: #{danet_forward.1} parent=95 // loop_pre_header
          _
        $region133: #{danet_forward.1} parent=95 // loop_header
          %s3419 = sphi 0, %s3423
          %p3420 = scmp.ge.s32.totalorder %s3419, 5
        $region134: #{danet_forward.1} parent=95 // loop_header_branch
          %3422 = sbr.rel (%p3420) target = $region138
        $region135: #{danet_forward.1} parent=95 // loop_body
          %s3424 = smul.u32 %s3419, 160
          %s3425 = scalar_lea.vmem %s601, %s3424
          %v3426 = vld [vmem:[%s3425] sm:$0xff]
          %v3427 = vld [vmem:[%s3425 + $0x8] sm:$0xff]
          %v3428 = vld [vmem:[%s3425 + $0x10] sm:$0xff]
          %v3429 = vld [vmem:[%s3425 + $0x18] sm:$0xff]
          %v3430 = vld [vmem:[%s3425 + $0x20] sm:$0xff]
          %v3431 = vld [vmem:[%s3425 + $0x28] sm:$0xff]
          %v3432 = vld [vmem:[%s3425 + $0x30] sm:$0xff]
          %v3433 = vld [vmem:[%s3425 + $0x38] sm:$0xff]
          %v3434 = vld [vmem:[%s3425 + $0x40] sm:$0xff]
          %v3435 = vld [vmem:[%s3425 + $0x48] sm:$0xff]
          %v3436 = vld [vmem:[%s3425 + $0x50] sm:$0xff]
          %v3437 = vld [vmem:[%s3425 + $0x58] sm:$0xff]
          %v3438 = vld [vmem:[%s3425 + $0x60] sm:$0xff]
          %v3439 = vld [vmem:[%s3425 + $0x68] sm:$0xff]
          %v3440 = vld [vmem:[%s3425 + $0x70] sm:$0xff]
          %v3441 = vld [vmem:[%s3425 + $0x78] sm:$0xff]
          %v3442 = vld [vmem:[%s3425 + $0x80] sm:$0xff]
          %v3443 = vld [vmem:[%s3425 + $0x88] sm:$0xff]
          %v3444 = vld [vmem:[%s3425 + $0x90] sm:$0xff]
          %v3445 = vld [vmem:[%s3425 + $0x98] sm:$0xff]
          %v3446 = vld [vmem:[%s1] sm:$0x1]
          %3448 = vset.pattern.permute.xlu0 4
          %3449 = vperm.xlu0 %3448, %v3426
          %v3450 = vpop.permute.xlu0 %3449
          %3453 = vset.pattern.permute.xlu0 4
          %3454 = vperm.xlu0 %3453, %v3427
          %v3455 = vpop.permute.xlu0 %3454
          %3458 = vset.pattern.permute.xlu0 4
          %3459 = vperm.xlu0 %3458, %v3428
          %v3460 = vpop.permute.xlu0 %3459
          %3463 = vset.pattern.permute.xlu0 4
          %3464 = vperm.xlu0 %3463, %v3429
          %v3465 = vpop.permute.xlu0 %3464
          %3468 = vset.pattern.permute.xlu0 4
          %3469 = vperm.xlu0 %3468, %v3430
          %v3470 = vpop.permute.xlu0 %3469
          %3473 = vset.pattern.permute.xlu0 4
          %3474 = vperm.xlu0 %3473, %v3431
          %v3475 = vpop.permute.xlu0 %3474
          %3478 = vset.pattern.permute.xlu0 4
          %3479 = vperm.xlu0 %3478, %v3432
          %v3480 = vpop.permute.xlu0 %3479
          %3483 = vset.pattern.permute.xlu0 4
          %3484 = vperm.xlu0 %3483, %v3433
          %v3485 = vpop.permute.xlu0 %3484
          %3488 = vset.pattern.permute.xlu0 4
          %3489 = vperm.xlu0 %3488, %v3434
          %v3490 = vpop.permute.xlu0 %3489
          %3493 = vset.pattern.permute.xlu0 4
          %3494 = vperm.xlu0 %3493, %v3435
          %v3495 = vpop.permute.xlu0 %3494
          %3498 = vset.pattern.permute.xlu0 4
          %3499 = vperm.xlu0 %3498, %v3436
          %v3500 = vpop.permute.xlu0 %3499
          %3503 = vset.pattern.permute.xlu0 4
          %3504 = vperm.xlu0 %3503, %v3437
          %v3505 = vpop.permute.xlu0 %3504
          %3508 = vset.pattern.permute.xlu0 4
          %3509 = vperm.xlu0 %3508, %v3438
          %v3510 = vpop.permute.xlu0 %3509
          %3513 = vset.pattern.permute.xlu0 4
          %3514 = vperm.xlu0 %3513, %v3439
          %v3515 = vpop.permute.xlu0 %3514
          %3518 = vset.pattern.permute.xlu0 4
          %3519 = vperm.xlu0 %3518, %v3440
          %v3520 = vpop.permute.xlu0 %3519
          %3523 = vset.pattern.permute.xlu0 4
          %3524 = vperm.xlu0 %3523, %v3441
          %v3525 = vpop.permute.xlu0 %3524
          %3528 = vset.pattern.permute.xlu0 4
          %3529 = vperm.xlu0 %3528, %v3442
          %v3530 = vpop.permute.xlu0 %3529
          %3533 = vset.pattern.permute.xlu0 4
          %3534 = vperm.xlu0 %3533, %v3443
          %v3535 = vpop.permute.xlu0 %3534
          %3538 = vset.pattern.permute.xlu0 4
          %3539 = vperm.xlu0 %3538, %v3444
          %v3540 = vpop.permute.xlu0 %3539
          %3543 = vset.pattern.permute.xlu0 4
          %3544 = vperm.xlu0 %3543, %v3445
          %v3545 = vpop.permute.xlu0 %3544
          %v3548 = vperm.slane %v3446, 0
          %v3550 = vmul.f32 %v3450, %v3548
          %v3551 = vmul.f32 %v3455, %v3548
          %v3552 = vmul.f32 %v3460, %v3548
          %v3553 = vmul.f32 %v3465, %v3548
          %v3554 = vmul.f32 %v3470, %v3548
          %v3555 = vmul.f32 %v3475, %v3548
          %v3556 = vmul.f32 %v3480, %v3548
          %v3557 = vmul.f32 %v3485, %v3548
          %v3558 = vmul.f32 %v3490, %v3548
          %v3559 = vmul.f32 %v3495, %v3548
          %v3560 = vmul.f32 %v3500, %v3548
          %v3561 = vmul.f32 %v3505, %v3548
          %v3562 = vmul.f32 %v3510, %v3548
          %v3563 = vmul.f32 %v3515, %v3548
          %v3564 = vmul.f32 %v3520, %v3548
          %v3565 = vmul.f32 %v3525, %v3548
          %v3566 = vmul.f32 %v3530, %v3548
          %v3567 = vmul.f32 %v3535, %v3548
          %v3568 = vmul.f32 %v3540, %v3548
          %v3569 = vmul.f32 %v3545, %v3548
          %v3570 = vld [vmem:[%s2] sm:$0x1]
          %v3572 = vperm.slane %v3570, 0
          %v3574 = vadd.f32 %v3550, %v3572
          %v3575 = vadd.f32 %v3551, %v3572
          %v3576 = vadd.f32 %v3552, %v3572
          %v3577 = vadd.f32 %v3553, %v3572
          %v3578 = vadd.f32 %v3554, %v3572
          %v3579 = vadd.f32 %v3555, %v3572
          %v3580 = vadd.f32 %v3556, %v3572
          %v3581 = vadd.f32 %v3557, %v3572
          %v3582 = vadd.f32 %v3558, %v3572
          %v3583 = vadd.f32 %v3559, %v3572
          %v3584 = vadd.f32 %v3560, %v3572
          %v3585 = vadd.f32 %v3561, %v3572
          %v3586 = vadd.f32 %v3562, %v3572
          %v3587 = vadd.f32 %v3563, %v3572
          %v3588 = vadd.f32 %v3564, %v3572
          %v3589 = vadd.f32 %v3565, %v3572
          %v3590 = vadd.f32 %v3566, %v3572
          %v3591 = vadd.f32 %v3567, %v3572
          %v3592 = vadd.f32 %v3568, %v3572
          %v3593 = vadd.f32 %v3569, %v3572
          %v3594 = vmax.f32 %v3574, 0.0
          %v3595 = vmax.f32 %v3575, 0.0
          %v3596 = vmax.f32 %v3576, 0.0
          %v3597 = vmax.f32 %v3577, 0.0
          %v3598 = vmax.f32 %v3578, 0.0
          %v3599 = vmax.f32 %v3579, 0.0
          %v3600 = vmax.f32 %v3580, 0.0
          %v3601 = vmax.f32 %v3581, 0.0
          %v3602 = vmax.f32 %v3582, 0.0
          %v3603 = vmax.f32 %v3583, 0.0
          %v3604 = vmax.f32 %v3584, 0.0
          %v3605 = vmax.f32 %v3585, 0.0
          %v3606 = vmax.f32 %v3586, 0.0
          %v3607 = vmax.f32 %v3587, 0.0
          %v3608 = vmax.f32 %v3588, 0.0
          %v3609 = vmax.f32 %v3589, 0.0
          %v3610 = vmax.f32 %v3590, 0.0
          %v3611 = vmax.f32 %v3591, 0.0
          %v3612 = vmax.f32 %v3592, 0.0
          %v3613 = vmax.f32 %v3593, 0.0
          %v3614 = vpack.c.bf16 %v3595, %v3594
          %v3615 = vpack.c.bf16 %v3597, %v3596
          %v3616 = vpack.c.bf16 %v3599, %v3598
          %v3617 = vpack.c.bf16 %v3601, %v3600
          %v3618 = vpack.c.bf16 %v3603, %v3602
          %v3619 = vpack.c.bf16 %v3605, %v3604
          %v3620 = vpack.c.bf16 %v3607, %v3606
          %v3621 = vpack.c.bf16 %v3609, %v3608
          %v3622 = vpack.c.bf16 %v3611, %v3610
          %v3623 = vpack.c.bf16 %v3613, %v3612
          %v3624 = vld [vmem:[%s3] sm:$0xf]
          %v3625 = vld [vmem:[%s3 + $0x4] sm:$0xf]
          %v3626 = vld [vmem:[%s3 + $0x8] sm:$0xf]
          %v3627 = vld [vmem:[%s3 + $0xc] sm:$0xf]
          %v3628 = vld [vmem:[%s3 + $0x10] sm:$0xf]
          %v3629 = vld [vmem:[%s3 + $0x14] sm:$0xf]
          %v3630 = vld [vmem:[%s4] sm:$0x1]
          %v3632 = vperm.slane %v3630, 0
          %v3640 = vunpack.c.l.b16 %v3624
          %v3641 = vunpack.c.l.b16 %v3625
          %v3642 = vunpack.c.l.b16 %v3626
          %v3643 = vunpack.c.l.b16 %v3627
          %v3644 = vunpack.c.l.b16 %v3628
          %v3645 = vunpack.c.l.b16 %v3629
          %v3646 = vpack.c.b16 %v3641, %v3640
          %v3647 = vpack.c.b16 %v3643, %v3642
          %v3648 = vpack.c.b16 %v3645, %v3644
          %v3653 = vsel %vm795, %v3614, 0
          %v3656 = vsel %vm795, %v3615, 0
          %v3659 = vsel %vm795, %v3616, 0
          %v3662 = vsel %vm795, %v3617, 0
          %v3665 = vsel %vm795, %v3618, 0
          %v3668 = vsel %vm795, %v3619, 0
          %v3671 = vsel %vm795, %v3620, 0
          %v3674 = vsel %vm795, %v3621, 0
          %v3677 = vsel %vm795, %v3622, 0
          %v3680 = vsel %vm795, %v3623, 0
          %3682 = vmatpush.bf16.msra.mxu0 0
          %3683 = vmatpush.bf16.msra.mxu0 0
          %3684 = vmatpush.bf16.msra.mxu0 0
          %3685 = vmatpush.bf16.msra.mxu0 0
          %3686 = vmatpush.bf16.msra.mxu0 0
          %3687 = vmatpush.bf16.msra.mxu0 %v3648
          %3688 = vmatpush.bf16.msra.mxu0 %v3647
          %3689 = vmatpush.bf16.msra.mxu0 %v3646
          %3690 = vmatmul.bf16.gmra.mxu0 %v3653
          %v3691 = vpop.f32.mrf.mxu0
          %v3692 = vadd.f32 %v3632, %v3691
          %v3693 = vpop.f32.mrf.mxu0
          %v3694 = vadd.f32 %v3632, %v3693
          %3695 = vmatmul.bf16.gmra.mxu0 %v3656
          %v3696 = vpop.f32.mrf.mxu0
          %v3697 = vadd.f32 %v3632, %v3696
          %v3698 = vpop.f32.mrf.mxu0
          %v3699 = vadd.f32 %v3632, %v3698
          %3700 = vmatmul.bf16.gmra.mxu0 %v3659
          %v3701 = vpop.f32.mrf.mxu0
          %v3702 = vadd.f32 %v3632, %v3701
          %v3703 = vpop.f32.mrf.mxu0
          %v3704 = vadd.f32 %v3632, %v3703
          %3705 = vmatmul.bf16.gmra.mxu0 %v3662
          %v3706 = vpop.f32.mrf.mxu0
          %v3707 = vadd.f32 %v3632, %v3706
          %v3708 = vpop.f32.mrf.mxu0
          %v3709 = vadd.f32 %v3632, %v3708
          %3710 = vmatmul.bf16.gmra.mxu0 %v3665
          %v3711 = vpop.f32.mrf.mxu0
          %v3712 = vadd.f32 %v3632, %v3711
          %v3713 = vpop.f32.mrf.mxu0
          %v3714 = vadd.f32 %v3632, %v3713
          %3715 = vmatmul.bf16.gmra.mxu0 %v3668
          %v3716 = vpop.f32.mrf.mxu0
          %v3717 = vadd.f32 %v3632, %v3716
          %v3718 = vpop.f32.mrf.mxu0
          %v3719 = vadd.f32 %v3632, %v3718
          %3720 = vmatmul.bf16.gmra.mxu0 %v3671
          %v3721 = vpop.f32.mrf.mxu0
          %v3722 = vadd.f32 %v3632, %v3721
          %v3723 = vpop.f32.mrf.mxu0
          %v3724 = vadd.f32 %v3632, %v3723
          %3725 = vmatmul.bf16.gmra.mxu0 %v3674
          %v3726 = vpop.f32.mrf.mxu0
          %v3727 = vadd.f32 %v3632, %v3726
          %v3728 = vpop.f32.mrf.mxu0
          %v3729 = vadd.f32 %v3632, %v3728
          %3730 = vmatmul.bf16.gmra.mxu0 %v3677
          %v3731 = vpop.f32.mrf.mxu0
          %v3732 = vadd.f32 %v3632, %v3731
          %v3733 = vpop.f32.mrf.mxu0
          %v3734 = vadd.f32 %v3632, %v3733
          %3735 = vmatmul.bf16.gmra.mxu0 %v3680
          %v3736 = vpop.f32.mrf.mxu0
          %v3737 = vadd.f32 %v3632, %v3736
          %v3738 = vpop.f32.mrf.mxu0
          %v3739 = vadd.f32 %v3632, %v3738
          %3740 = vdwg.mxu0
          %v3741 = vmax.f32 %v3692, 0.0
          %v3742 = vmax.f32 %v3694, 0.0
          %v3743 = vmax.f32 %v3697, 0.0
          %v3744 = vmax.f32 %v3699, 0.0
          %v3745 = vmax.f32 %v3702, 0.0
          %v3746 = vmax.f32 %v3704, 0.0
          %v3747 = vmax.f32 %v3707, 0.0
          %v3748 = vmax.f32 %v3709, 0.0
          %v3749 = vmax.f32 %v3712, 0.0
          %v3750 = vmax.f32 %v3714, 0.0
          %v3751 = vmax.f32 %v3717, 0.0
          %v3752 = vmax.f32 %v3719, 0.0
          %v3753 = vmax.f32 %v3722, 0.0
          %v3754 = vmax.f32 %v3724, 0.0
          %v3755 = vmax.f32 %v3727, 0.0
          %v3756 = vmax.f32 %v3729, 0.0
          %v3757 = vmax.f32 %v3732, 0.0
          %v3758 = vmax.f32 %v3734, 0.0
          %v3759 = vmax.f32 %v3737, 0.0
          %v3760 = vmax.f32 %v3739, 0.0
          %v3761 = vpack.c.bf16 %v3742, %v3741
          %v3762 = vpack.c.bf16 %v3744, %v3743
          %v3763 = vpack.c.bf16 %v3746, %v3745
          %v3764 = vpack.c.bf16 %v3748, %v3747
          %v3765 = vpack.c.bf16 %v3750, %v3749
          %v3766 = vpack.c.bf16 %v3752, %v3751
          %v3767 = vpack.c.bf16 %v3754, %v3753
          %v3768 = vpack.c.bf16 %v3756, %v3755
          %v3769 = vpack.c.bf16 %v3758, %v3757
          %v3770 = vpack.c.bf16 %v3760, %v3759
          %v3771 = vld [vmem:[%s5] sm:$0xf]
          %v3772 = vld [vmem:[%s5 + $0x4] sm:$0xf]
          %v3773 = vld [vmem:[%s5 + $0x8] sm:$0xf]
          %v3774 = vld [vmem:[%s5 + $0xc] sm:$0xf]
          %v3775 = vld [vmem:[%s5 + $0x10] sm:$0xf]
          %v3776 = vld [vmem:[%s5 + $0x14] sm:$0xf]
          %v3777 = vld [vmem:[%s6] sm:$0x1]
          %v3779 = vperm.slane %v3777, 0
          %v3787 = vunpack.c.l.b16 %v3771
          %v3788 = vunpack.c.l.b16 %v3772
          %v3789 = vunpack.c.l.b16 %v3773
          %v3790 = vunpack.c.l.b16 %v3774
          %v3791 = vunpack.c.l.b16 %v3775
          %v3792 = vunpack.c.l.b16 %v3776
          %v3793 = vpack.c.b16 %v3788, %v3787
          %v3794 = vpack.c.b16 %v3790, %v3789
          %v3795 = vpack.c.b16 %v3792, %v3791
          %v3800 = vsel %vm795, %v3761, 0
          %v3803 = vsel %vm795, %v3762, 0
          %v3806 = vsel %vm795, %v3763, 0
          %v3809 = vsel %vm795, %v3764, 0
          %v3812 = vsel %vm795, %v3765, 0
          %v3815 = vsel %vm795, %v3766, 0
          %v3818 = vsel %vm795, %v3767, 0
          %v3821 = vsel %vm795, %v3768, 0
          %v3824 = vsel %vm795, %v3769, 0
          %v3827 = vsel %vm795, %v3770, 0
          %3829 = vmatpush.bf16.msra.mxu0 0
          %3830 = vmatpush.bf16.msra.mxu0 0
          %3831 = vmatpush.bf16.msra.mxu0 0
          %3832 = vmatpush.bf16.msra.mxu0 0
          %3833 = vmatpush.bf16.msra.mxu0 0
          %3834 = vmatpush.bf16.msra.mxu0 %v3795
          %3835 = vmatpush.bf16.msra.mxu0 %v3794
          %3836 = vmatpush.bf16.msra.mxu0 %v3793
          %3837 = vmatmul.bf16.gmra.mxu0 %v3800
          %v3838 = vpop.f32.mrf.mxu0
          %v3839 = vadd.f32 %v3779, %v3838
          %v3840 = vpop.f32.mrf.mxu0
          %v3841 = vadd.f32 %v3779, %v3840
          %3842 = vmatmul.bf16.gmra.mxu0 %v3803
          %v3843 = vpop.f32.mrf.mxu0
          %v3844 = vadd.f32 %v3779, %v3843
          %v3845 = vpop.f32.mrf.mxu0
          %v3846 = vadd.f32 %v3779, %v3845
          %3847 = vmatmul.bf16.gmra.mxu0 %v3806
          %v3848 = vpop.f32.mrf.mxu0
          %v3849 = vadd.f32 %v3779, %v3848
          %v3850 = vpop.f32.mrf.mxu0
          %v3851 = vadd.f32 %v3779, %v3850
          %3852 = vmatmul.bf16.gmra.mxu0 %v3809
          %v3853 = vpop.f32.mrf.mxu0
          %v3854 = vadd.f32 %v3779, %v3853
          %v3855 = vpop.f32.mrf.mxu0
          %v3856 = vadd.f32 %v3779, %v3855
          %3857 = vmatmul.bf16.gmra.mxu0 %v3812
          %v3858 = vpop.f32.mrf.mxu0
          %v3859 = vadd.f32 %v3779, %v3858
          %v3860 = vpop.f32.mrf.mxu0
          %v3861 = vadd.f32 %v3779, %v3860
          %3862 = vmatmul.bf16.gmra.mxu0 %v3815
          %v3863 = vpop.f32.mrf.mxu0
          %v3864 = vadd.f32 %v3779, %v3863
          %v3865 = vpop.f32.mrf.mxu0
          %v3866 = vadd.f32 %v3779, %v3865
          %3867 = vmatmul.bf16.gmra.mxu0 %v3818
          %v3868 = vpop.f32.mrf.mxu0
          %v3869 = vadd.f32 %v3779, %v3868
          %v3870 = vpop.f32.mrf.mxu0
          %v3871 = vadd.f32 %v3779, %v3870
          %3872 = vmatmul.bf16.gmra.mxu0 %v3821
          %v3873 = vpop.f32.mrf.mxu0
          %v3874 = vadd.f32 %v3779, %v3873
          %v3875 = vpop.f32.mrf.mxu0
          %v3876 = vadd.f32 %v3779, %v3875
          %3877 = vmatmul.bf16.gmra.mxu0 %v3824
          %v3878 = vpop.f32.mrf.mxu0
          %v3879 = vadd.f32 %v3779, %v3878
          %v3880 = vpop.f32.mrf.mxu0
          %v3881 = vadd.f32 %v3779, %v3880
          %3882 = vmatmul.bf16.gmra.mxu0 %v3827
          %v3883 = vpop.f32.mrf.mxu0
          %v3884 = vadd.f32 %v3779, %v3883
          %v3885 = vpop.f32.mrf.mxu0
          %v3886 = vadd.f32 %v3779, %v3885
          %3887 = vdwg.mxu0
          %v3888 = vmax.f32 %v3839, 0.0
          %v3889 = vmax.f32 %v3841, 0.0
          %v3890 = vmax.f32 %v3844, 0.0
          %v3891 = vmax.f32 %v3846, 0.0
          %v3892 = vmax.f32 %v3849, 0.0
          %v3893 = vmax.f32 %v3851, 0.0
          %v3894 = vmax.f32 %v3854, 0.0
          %v3895 = vmax.f32 %v3856, 0.0
          %v3896 = vmax.f32 %v3859, 0.0
          %v3897 = vmax.f32 %v3861, 0.0
          %v3898 = vmax.f32 %v3864, 0.0
          %v3899 = vmax.f32 %v3866, 0.0
          %v3900 = vmax.f32 %v3869, 0.0
          %v3901 = vmax.f32 %v3871, 0.0
          %v3902 = vmax.f32 %v3874, 0.0
          %v3903 = vmax.f32 %v3876, 0.0
          %v3904 = vmax.f32 %v3879, 0.0
          %v3905 = vmax.f32 %v3881, 0.0
          %v3906 = vmax.f32 %v3884, 0.0
          %v3907 = vmax.f32 %v3886, 0.0
          %s3908 = scalar_lea.vmem [#allocation2], %s3424
          %v3909 = vld [vmem:[%s3908] sm:$0xff]
          %v3910 = vld [vmem:[%s3908 + $0x8] sm:$0xff]
          %v3911 = vld [vmem:[%s3908 + $0x10] sm:$0xff]
          %v3912 = vld [vmem:[%s3908 + $0x18] sm:$0xff]
          %v3913 = vld [vmem:[%s3908 + $0x20] sm:$0xff]
          %v3914 = vld [vmem:[%s3908 + $0x28] sm:$0xff]
          %v3915 = vld [vmem:[%s3908 + $0x30] sm:$0xff]
          %v3916 = vld [vmem:[%s3908 + $0x38] sm:$0xff]
          %v3917 = vld [vmem:[%s3908 + $0x40] sm:$0xff]
          %v3918 = vld [vmem:[%s3908 + $0x48] sm:$0xff]
          %v3919 = vld [vmem:[%s3908 + $0x50] sm:$0xff]
          %v3920 = vld [vmem:[%s3908 + $0x58] sm:$0xff]
          %v3921 = vld [vmem:[%s3908 + $0x60] sm:$0xff]
          %v3922 = vld [vmem:[%s3908 + $0x68] sm:$0xff]
          %v3923 = vld [vmem:[%s3908 + $0x70] sm:$0xff]
          %v3924 = vld [vmem:[%s3908 + $0x78] sm:$0xff]
          %v3925 = vld [vmem:[%s3908 + $0x80] sm:$0xff]
          %v3926 = vld [vmem:[%s3908 + $0x88] sm:$0xff]
          %v3927 = vld [vmem:[%s3908 + $0x90] sm:$0xff]
          %v3928 = vld [vmem:[%s3908 + $0x98] sm:$0xff]
          %3930 = vset.pattern.permute.xlu0 0
          %3931 = vperm.xlu0 %3930, %v3909
          %v3932 = vpop.permute.xlu0 %3931
          %3935 = vset.pattern.permute.xlu0 0
          %3936 = vperm.xlu0 %3935, %v3910
          %v3937 = vpop.permute.xlu0 %3936
          %3940 = vset.pattern.permute.xlu0 0
          %3941 = vperm.xlu0 %3940, %v3911
          %v3942 = vpop.permute.xlu0 %3941
          %3945 = vset.pattern.permute.xlu0 0
          %3946 = vperm.xlu0 %3945, %v3912
          %v3947 = vpop.permute.xlu0 %3946
          %3950 = vset.pattern.permute.xlu0 0
          %3951 = vperm.xlu0 %3950, %v3913
          %v3952 = vpop.permute.xlu0 %3951
          %3955 = vset.pattern.permute.xlu0 0
          %3956 = vperm.xlu0 %3955, %v3914
          %v3957 = vpop.permute.xlu0 %3956
          %3960 = vset.pattern.permute.xlu0 0
          %3961 = vperm.xlu0 %3960, %v3915
          %v3962 = vpop.permute.xlu0 %3961
          %3965 = vset.pattern.permute.xlu0 0
          %3966 = vperm.xlu0 %3965, %v3916
          %v3967 = vpop.permute.xlu0 %3966
          %3970 = vset.pattern.permute.xlu0 0
          %3971 = vperm.xlu0 %3970, %v3917
          %v3972 = vpop.permute.xlu0 %3971
          %3975 = vset.pattern.permute.xlu0 0
          %3976 = vperm.xlu0 %3975, %v3918
          %v3977 = vpop.permute.xlu0 %3976
          %3980 = vset.pattern.permute.xlu0 0
          %3981 = vperm.xlu0 %3980, %v3919
          %v3982 = vpop.permute.xlu0 %3981
          %3985 = vset.pattern.permute.xlu0 0
          %3986 = vperm.xlu0 %3985, %v3920
          %v3987 = vpop.permute.xlu0 %3986
          %3990 = vset.pattern.permute.xlu0 0
          %3991 = vperm.xlu0 %3990, %v3921
          %v3992 = vpop.permute.xlu0 %3991
          %3995 = vset.pattern.permute.xlu0 0
          %3996 = vperm.xlu0 %3995, %v3922
          %v3997 = vpop.permute.xlu0 %3996
          %4000 = vset.pattern.permute.xlu0 0
          %4001 = vperm.xlu0 %4000, %v3923
          %v4002 = vpop.permute.xlu0 %4001
          %4005 = vset.pattern.permute.xlu0 0
          %4006 = vperm.xlu0 %4005, %v3924
          %v4007 = vpop.permute.xlu0 %4006
          %4010 = vset.pattern.permute.xlu0 0
          %4011 = vperm.xlu0 %4010, %v3925
          %v4012 = vpop.permute.xlu0 %4011
          %4015 = vset.pattern.permute.xlu0 0
          %4016 = vperm.xlu0 %4015, %v3926
          %v4017 = vpop.permute.xlu0 %4016
          %4020 = vset.pattern.permute.xlu0 0
          %4021 = vperm.xlu0 %4020, %v3927
          %v4022 = vpop.permute.xlu0 %4021
          %4025 = vset.pattern.permute.xlu0 0
          %4026 = vperm.xlu0 %4025, %v3928
          %v4027 = vpop.permute.xlu0 %4026
          %v4029 = vmul.f32 %v3888, %v3932
          %v4030 = vmul.f32 %v3889, %v3937
          %v4031 = vmul.f32 %v3890, %v3942
          %v4032 = vmul.f32 %v3891, %v3947
          %v4033 = vmul.f32 %v3892, %v3952
          %v4034 = vmul.f32 %v3893, %v3957
          %v4035 = vmul.f32 %v3894, %v3962
          %v4036 = vmul.f32 %v3895, %v3967
          %v4037 = vmul.f32 %v3896, %v3972
          %v4038 = vmul.f32 %v3897, %v3977
          %v4039 = vmul.f32 %v3898, %v3982
          %v4040 = vmul.f32 %v3899, %v3987
          %v4041 = vmul.f32 %v3900, %v3992
          %v4042 = vmul.f32 %v3901, %v3997
          %v4043 = vmul.f32 %v3902, %v4002
          %v4044 = vmul.f32 %v3903, %v4007
          %v4045 = vmul.f32 %v3904, %v4012
          %v4046 = vmul.f32 %v3905, %v4017
          %v4047 = vmul.f32 %v3906, %v4022
          %v4048 = vmul.f32 %v3907, %v4027
          %s4049 = sadd.s32 %s3424, 3240
          %s4050 = scalar_lea.vmem [#allocation3], %s4049
          %4051 = vst.msk [vmem:[%s4050] sm:$0xff] %vm795, %v4029
          %4052 = vst.msk [vmem:[%s4050 + $0x8] sm:$0xff] %vm795, %v4030
          %4053 = vst.msk [vmem:[%s4050 + $0x10] sm:$0xff] %vm795, %v4031
          %4054 = vst.msk [vmem:[%s4050 + $0x18] sm:$0xff] %vm795, %v4032
          %4055 = vst.msk [vmem:[%s4050 + $0x20] sm:$0xff] %vm795, %v4033
          %4056 = vst.msk [vmem:[%s4050 + $0x28] sm:$0xff] %vm795, %v4034
          %4057 = vst.msk [vmem:[%s4050 + $0x30] sm:$0xff] %vm795, %v4035
          %4058 = vst.msk [vmem:[%s4050 + $0x38] sm:$0xff] %vm795, %v4036
          %4059 = vst.msk [vmem:[%s4050 + $0x40] sm:$0xff] %vm795, %v4037
          %4060 = vst.msk [vmem:[%s4050 + $0x48] sm:$0xff] %vm795, %v4038
          %4061 = vst.msk [vmem:[%s4050 + $0x50] sm:$0xff] %vm795, %v4039
          %4062 = vst.msk [vmem:[%s4050 + $0x58] sm:$0xff] %vm795, %v4040
          %4063 = vst.msk [vmem:[%s4050 + $0x60] sm:$0xff] %vm795, %v4041
          %4064 = vst.msk [vmem:[%s4050 + $0x68] sm:$0xff] %vm795, %v4042
          %4065 = vst.msk [vmem:[%s4050 + $0x70] sm:$0xff] %vm795, %v4043
          %4066 = vst.msk [vmem:[%s4050 + $0x78] sm:$0xff] %vm795, %v4044
          %4067 = vst.msk [vmem:[%s4050 + $0x80] sm:$0xff] %vm795, %v4045
          %4068 = vst.msk [vmem:[%s4050 + $0x88] sm:$0xff] %vm795, %v4046
          %4069 = vst.msk [vmem:[%s4050 + $0x90] sm:$0xff] %vm795, %v4047
          %4070 = vst.msk [vmem:[%s4050 + $0x98] sm:$0xff] %vm795, %v4048
        $region136: #{danet_forward.1} parent=95 // loop_footer
          %s3423 = sadd.s32 1, %s3419
        $region137: #{danet_forward.1} parent=95 // loop_footer_branch
          %3418 = sbr.rel target = $region133
        $region138: #{danet_forward.1} parent=95 // loop_exit
          _
        loop: start=0, step=1, limit=5
        $region139: #{danet_forward.1} parent=95 // loop_pre_header
          _
        $region140: #{danet_forward.1} parent=95 // loop_header
          %s4072 = sphi 0, %s4076
          %p4073 = scmp.ge.s32.totalorder %s4072, 5
        $region141: #{danet_forward.1} parent=95 // loop_header_branch
          %4075 = sbr.rel (%p4073) target = $region145
        $region142: #{danet_forward.1} parent=95 // loop_body
          %s4077 = smul.u32 %s4072, 160
          %s4078 = scalar_lea.vmem %s601, %s4077
          %v4079 = vld [vmem:[%s4078] sm:$0xff]
          %v4080 = vld [vmem:[%s4078 + $0x8] sm:$0xff]
          %v4081 = vld [vmem:[%s4078 + $0x10] sm:$0xff]
          %v4082 = vld [vmem:[%s4078 + $0x18] sm:$0xff]
          %v4083 = vld [vmem:[%s4078 + $0x20] sm:$0xff]
          %v4084 = vld [vmem:[%s4078 + $0x28] sm:$0xff]
          %v4085 = vld [vmem:[%s4078 + $0x30] sm:$0xff]
          %v4086 = vld [vmem:[%s4078 + $0x38] sm:$0xff]
          %v4087 = vld [vmem:[%s4078 + $0x40] sm:$0xff]
          %v4088 = vld [vmem:[%s4078 + $0x48] sm:$0xff]
          %v4089 = vld [vmem:[%s4078 + $0x50] sm:$0xff]
          %v4090 = vld [vmem:[%s4078 + $0x58] sm:$0xff]
          %v4091 = vld [vmem:[%s4078 + $0x60] sm:$0xff]
          %v4092 = vld [vmem:[%s4078 + $0x68] sm:$0xff]
          %v4093 = vld [vmem:[%s4078 + $0x70] sm:$0xff]
          %v4094 = vld [vmem:[%s4078 + $0x78] sm:$0xff]
          %v4095 = vld [vmem:[%s4078 + $0x80] sm:$0xff]
          %v4096 = vld [vmem:[%s4078 + $0x88] sm:$0xff]
          %v4097 = vld [vmem:[%s4078 + $0x90] sm:$0xff]
          %v4098 = vld [vmem:[%s4078 + $0x98] sm:$0xff]
          %v4099 = vld [vmem:[%s1] sm:$0x1]
          %4101 = vset.pattern.permute.xlu0 5
          %4102 = vperm.xlu0 %4101, %v4079
          %v4103 = vpop.permute.xlu0 %4102
          %4106 = vset.pattern.permute.xlu0 5
          %4107 = vperm.xlu0 %4106, %v4080
          %v4108 = vpop.permute.xlu0 %4107
          %4111 = vset.pattern.permute.xlu0 5
          %4112 = vperm.xlu0 %4111, %v4081
          %v4113 = vpop.permute.xlu0 %4112
          %4116 = vset.pattern.permute.xlu0 5
          %4117 = vperm.xlu0 %4116, %v4082
          %v4118 = vpop.permute.xlu0 %4117
          %4121 = vset.pattern.permute.xlu0 5
          %4122 = vperm.xlu0 %4121, %v4083
          %v4123 = vpop.permute.xlu0 %4122
          %4126 = vset.pattern.permute.xlu0 5
          %4127 = vperm.xlu0 %4126, %v4084
          %v4128 = vpop.permute.xlu0 %4127
          %4131 = vset.pattern.permute.xlu0 5
          %4132 = vperm.xlu0 %4131, %v4085
          %v4133 = vpop.permute.xlu0 %4132
          %4136 = vset.pattern.permute.xlu0 5
          %4137 = vperm.xlu0 %4136, %v4086
          %v4138 = vpop.permute.xlu0 %4137
          %4141 = vset.pattern.permute.xlu0 5
          %4142 = vperm.xlu0 %4141, %v4087
          %v4143 = vpop.permute.xlu0 %4142
          %4146 = vset.pattern.permute.xlu0 5
          %4147 = vperm.xlu0 %4146, %v4088
          %v4148 = vpop.permute.xlu0 %4147
          %4151 = vset.pattern.permute.xlu0 5
          %4152 = vperm.xlu0 %4151, %v4089
          %v4153 = vpop.permute.xlu0 %4152
          %4156 = vset.pattern.permute.xlu0 5
          %4157 = vperm.xlu0 %4156, %v4090
          %v4158 = vpop.permute.xlu0 %4157
          %4161 = vset.pattern.permute.xlu0 5
          %4162 = vperm.xlu0 %4161, %v4091
          %v4163 = vpop.permute.xlu0 %4162
          %4166 = vset.pattern.permute.xlu0 5
          %4167 = vperm.xlu0 %4166, %v4092
          %v4168 = vpop.permute.xlu0 %4167
          %4171 = vset.pattern.permute.xlu0 5
          %4172 = vperm.xlu0 %4171, %v4093
          %v4173 = vpop.permute.xlu0 %4172
          %4176 = vset.pattern.permute.xlu0 5
          %4177 = vperm.xlu0 %4176, %v4094
          %v4178 = vpop.permute.xlu0 %4177
          %4181 = vset.pattern.permute.xlu0 5
          %4182 = vperm.xlu0 %4181, %v4095
          %v4183 = vpop.permute.xlu0 %4182
          %4186 = vset.pattern.permute.xlu0 5
          %4187 = vperm.xlu0 %4186, %v4096
          %v4188 = vpop.permute.xlu0 %4187
          %4191 = vset.pattern.permute.xlu0 5
          %4192 = vperm.xlu0 %4191, %v4097
          %v4193 = vpop.permute.xlu0 %4192
          %4196 = vset.pattern.permute.xlu0 5
          %4197 = vperm.xlu0 %4196, %v4098
          %v4198 = vpop.permute.xlu0 %4197
          %v4201 = vperm.slane %v4099, 0
          %v4203 = vmul.f32 %v4103, %v4201
          %v4204 = vmul.f32 %v4108, %v4201
          %v4205 = vmul.f32 %v4113, %v4201
          %v4206 = vmul.f32 %v4118, %v4201
          %v4207 = vmul.f32 %v4123, %v4201
          %v4208 = vmul.f32 %v4128, %v4201
          %v4209 = vmul.f32 %v4133, %v4201
          %v4210 = vmul.f32 %v4138, %v4201
          %v4211 = vmul.f32 %v4143, %v4201
          %v4212 = vmul.f32 %v4148, %v4201
          %v4213 = vmul.f32 %v4153, %v4201
          %v4214 = vmul.f32 %v4158, %v4201
          %v4215 = vmul.f32 %v4163, %v4201
          %v4216 = vmul.f32 %v4168, %v4201
          %v4217 = vmul.f32 %v4173, %v4201
          %v4218 = vmul.f32 %v4178, %v4201
          %v4219 = vmul.f32 %v4183, %v4201
          %v4220 = vmul.f32 %v4188, %v4201
          %v4221 = vmul.f32 %v4193, %v4201
          %v4222 = vmul.f32 %v4198, %v4201
          %v4223 = vld [vmem:[%s2] sm:$0x1]
          %v4225 = vperm.slane %v4223, 0
          %v4227 = vadd.f32 %v4203, %v4225
          %v4228 = vadd.f32 %v4204, %v4225
          %v4229 = vadd.f32 %v4205, %v4225
          %v4230 = vadd.f32 %v4206, %v4225
          %v4231 = vadd.f32 %v4207, %v4225
          %v4232 = vadd.f32 %v4208, %v4225
          %v4233 = vadd.f32 %v4209, %v4225
          %v4234 = vadd.f32 %v4210, %v4225
          %v4235 = vadd.f32 %v4211, %v4225
          %v4236 = vadd.f32 %v4212, %v4225
          %v4237 = vadd.f32 %v4213, %v4225
          %v4238 = vadd.f32 %v4214, %v4225
          %v4239 = vadd.f32 %v4215, %v4225
          %v4240 = vadd.f32 %v4216, %v4225
          %v4241 = vadd.f32 %v4217, %v4225
          %v4242 = vadd.f32 %v4218, %v4225
          %v4243 = vadd.f32 %v4219, %v4225
          %v4244 = vadd.f32 %v4220, %v4225
          %v4245 = vadd.f32 %v4221, %v4225
          %v4246 = vadd.f32 %v4222, %v4225
          %v4247 = vmax.f32 %v4227, 0.0
          %v4248 = vmax.f32 %v4228, 0.0
          %v4249 = vmax.f32 %v4229, 0.0
          %v4250 = vmax.f32 %v4230, 0.0
          %v4251 = vmax.f32 %v4231, 0.0
          %v4252 = vmax.f32 %v4232, 0.0
          %v4253 = vmax.f32 %v4233, 0.0
          %v4254 = vmax.f32 %v4234, 0.0
          %v4255 = vmax.f32 %v4235, 0.0
          %v4256 = vmax.f32 %v4236, 0.0
          %v4257 = vmax.f32 %v4237, 0.0
          %v4258 = vmax.f32 %v4238, 0.0
          %v4259 = vmax.f32 %v4239, 0.0
          %v4260 = vmax.f32 %v4240, 0.0
          %v4261 = vmax.f32 %v4241, 0.0
          %v4262 = vmax.f32 %v4242, 0.0
          %v4263 = vmax.f32 %v4243, 0.0
          %v4264 = vmax.f32 %v4244, 0.0
          %v4265 = vmax.f32 %v4245, 0.0
          %v4266 = vmax.f32 %v4246, 0.0
          %v4267 = vpack.c.bf16 %v4248, %v4247
          %v4268 = vpack.c.bf16 %v4250, %v4249
          %v4269 = vpack.c.bf16 %v4252, %v4251
          %v4270 = vpack.c.bf16 %v4254, %v4253
          %v4271 = vpack.c.bf16 %v4256, %v4255
          %v4272 = vpack.c.bf16 %v4258, %v4257
          %v4273 = vpack.c.bf16 %v4260, %v4259
          %v4274 = vpack.c.bf16 %v4262, %v4261
          %v4275 = vpack.c.bf16 %v4264, %v4263
          %v4276 = vpack.c.bf16 %v4266, %v4265
          %v4277 = vld [vmem:[%s3] sm:$0xf]
          %v4278 = vld [vmem:[%s3 + $0x4] sm:$0xf]
          %v4279 = vld [vmem:[%s3 + $0x8] sm:$0xf]
          %v4280 = vld [vmem:[%s3 + $0xc] sm:$0xf]
          %v4281 = vld [vmem:[%s3 + $0x10] sm:$0xf]
          %v4282 = vld [vmem:[%s3 + $0x14] sm:$0xf]
          %v4283 = vld [vmem:[%s4] sm:$0x1]
          %v4285 = vperm.slane %v4283, 0
          %v4293 = vunpack.c.l.b16 %v4277
          %v4294 = vunpack.c.l.b16 %v4278
          %v4295 = vunpack.c.l.b16 %v4279
          %v4296 = vunpack.c.l.b16 %v4280
          %v4297 = vunpack.c.l.b16 %v4281
          %v4298 = vunpack.c.l.b16 %v4282
          %v4299 = vpack.c.b16 %v4294, %v4293
          %v4300 = vpack.c.b16 %v4296, %v4295
          %v4301 = vpack.c.b16 %v4298, %v4297
          %v4306 = vsel %vm795, %v4267, 0
          %v4309 = vsel %vm795, %v4268, 0
          %v4312 = vsel %vm795, %v4269, 0
          %v4315 = vsel %vm795, %v4270, 0
          %v4318 = vsel %vm795, %v4271, 0
          %v4321 = vsel %vm795, %v4272, 0
          %v4324 = vsel %vm795, %v4273, 0
          %v4327 = vsel %vm795, %v4274, 0
          %v4330 = vsel %vm795, %v4275, 0
          %v4333 = vsel %vm795, %v4276, 0
          %4335 = vmatpush.bf16.msra.mxu0 0
          %4336 = vmatpush.bf16.msra.mxu0 0
          %4337 = vmatpush.bf16.msra.mxu0 0
          %4338 = vmatpush.bf16.msra.mxu0 0
          %4339 = vmatpush.bf16.msra.mxu0 0
          %4340 = vmatpush.bf16.msra.mxu0 %v4301
          %4341 = vmatpush.bf16.msra.mxu0 %v4300
          %4342 = vmatpush.bf16.msra.mxu0 %v4299
          %4343 = vmatmul.bf16.gmra.mxu0 %v4306
          %v4344 = vpop.f32.mrf.mxu0
          %v4345 = vadd.f32 %v4285, %v4344
          %v4346 = vpop.f32.mrf.mxu0
          %v4347 = vadd.f32 %v4285, %v4346
          %4348 = vmatmul.bf16.gmra.mxu0 %v4309
          %v4349 = vpop.f32.mrf.mxu0
          %v4350 = vadd.f32 %v4285, %v4349
          %v4351 = vpop.f32.mrf.mxu0
          %v4352 = vadd.f32 %v4285, %v4351
          %4353 = vmatmul.bf16.gmra.mxu0 %v4312
          %v4354 = vpop.f32.mrf.mxu0
          %v4355 = vadd.f32 %v4285, %v4354
          %v4356 = vpop.f32.mrf.mxu0
          %v4357 = vadd.f32 %v4285, %v4356
          %4358 = vmatmul.bf16.gmra.mxu0 %v4315
          %v4359 = vpop.f32.mrf.mxu0
          %v4360 = vadd.f32 %v4285, %v4359
          %v4361 = vpop.f32.mrf.mxu0
          %v4362 = vadd.f32 %v4285, %v4361
          %4363 = vmatmul.bf16.gmra.mxu0 %v4318
          %v4364 = vpop.f32.mrf.mxu0
          %v4365 = vadd.f32 %v4285, %v4364
          %v4366 = vpop.f32.mrf.mxu0
          %v4367 = vadd.f32 %v4285, %v4366
          %4368 = vmatmul.bf16.gmra.mxu0 %v4321
          %v4369 = vpop.f32.mrf.mxu0
          %v4370 = vadd.f32 %v4285, %v4369
          %v4371 = vpop.f32.mrf.mxu0
          %v4372 = vadd.f32 %v4285, %v4371
          %4373 = vmatmul.bf16.gmra.mxu0 %v4324
          %v4374 = vpop.f32.mrf.mxu0
          %v4375 = vadd.f32 %v4285, %v4374
          %v4376 = vpop.f32.mrf.mxu0
          %v4377 = vadd.f32 %v4285, %v4376
          %4378 = vmatmul.bf16.gmra.mxu0 %v4327
          %v4379 = vpop.f32.mrf.mxu0
          %v4380 = vadd.f32 %v4285, %v4379
          %v4381 = vpop.f32.mrf.mxu0
          %v4382 = vadd.f32 %v4285, %v4381
          %4383 = vmatmul.bf16.gmra.mxu0 %v4330
          %v4384 = vpop.f32.mrf.mxu0
          %v4385 = vadd.f32 %v4285, %v4384
          %v4386 = vpop.f32.mrf.mxu0
          %v4387 = vadd.f32 %v4285, %v4386
          %4388 = vmatmul.bf16.gmra.mxu0 %v4333
          %v4389 = vpop.f32.mrf.mxu0
          %v4390 = vadd.f32 %v4285, %v4389
          %v4391 = vpop.f32.mrf.mxu0
          %v4392 = vadd.f32 %v4285, %v4391
          %4393 = vdwg.mxu0
          %v4394 = vmax.f32 %v4345, 0.0
          %v4395 = vmax.f32 %v4347, 0.0
          %v4396 = vmax.f32 %v4350, 0.0
          %v4397 = vmax.f32 %v4352, 0.0
          %v4398 = vmax.f32 %v4355, 0.0
          %v4399 = vmax.f32 %v4357, 0.0
          %v4400 = vmax.f32 %v4360, 0.0
          %v4401 = vmax.f32 %v4362, 0.0
          %v4402 = vmax.f32 %v4365, 0.0
          %v4403 = vmax.f32 %v4367, 0.0
          %v4404 = vmax.f32 %v4370, 0.0
          %v4405 = vmax.f32 %v4372, 0.0
          %v4406 = vmax.f32 %v4375, 0.0
          %v4407 = vmax.f32 %v4377, 0.0
          %v4408 = vmax.f32 %v4380, 0.0
          %v4409 = vmax.f32 %v4382, 0.0
          %v4410 = vmax.f32 %v4385, 0.0
          %v4411 = vmax.f32 %v4387, 0.0
          %v4412 = vmax.f32 %v4390, 0.0
          %v4413 = vmax.f32 %v4392, 0.0
          %v4414 = vpack.c.bf16 %v4395, %v4394
          %v4415 = vpack.c.bf16 %v4397, %v4396
          %v4416 = vpack.c.bf16 %v4399, %v4398
          %v4417 = vpack.c.bf16 %v4401, %v4400
          %v4418 = vpack.c.bf16 %v4403, %v4402
          %v4419 = vpack.c.bf16 %v4405, %v4404
          %v4420 = vpack.c.bf16 %v4407, %v4406
          %v4421 = vpack.c.bf16 %v4409, %v4408
          %v4422 = vpack.c.bf16 %v4411, %v4410
          %v4423 = vpack.c.bf16 %v4413, %v4412
          %v4424 = vld [vmem:[%s5] sm:$0xf]
          %v4425 = vld [vmem:[%s5 + $0x4] sm:$0xf]
          %v4426 = vld [vmem:[%s5 + $0x8] sm:$0xf]
          %v4427 = vld [vmem:[%s5 + $0xc] sm:$0xf]
          %v4428 = vld [vmem:[%s5 + $0x10] sm:$0xf]
          %v4429 = vld [vmem:[%s5 + $0x14] sm:$0xf]
          %v4430 = vld [vmem:[%s6] sm:$0x1]
          %v4432 = vperm.slane %v4430, 0
          %v4440 = vunpack.c.l.b16 %v4424
          %v4441 = vunpack.c.l.b16 %v4425
          %v4442 = vunpack.c.l.b16 %v4426
          %v4443 = vunpack.c.l.b16 %v4427
          %v4444 = vunpack.c.l.b16 %v4428
          %v4445 = vunpack.c.l.b16 %v4429
          %v4446 = vpack.c.b16 %v4441, %v4440
          %v4447 = vpack.c.b16 %v4443, %v4442
          %v4448 = vpack.c.b16 %v4445, %v4444
          %v4453 = vsel %vm795, %v4414, 0
          %v4456 = vsel %vm795, %v4415, 0
          %v4459 = vsel %vm795, %v4416, 0
          %v4462 = vsel %vm795, %v4417, 0
          %v4465 = vsel %vm795, %v4418, 0
          %v4468 = vsel %vm795, %v4419, 0
          %v4471 = vsel %vm795, %v4420, 0
          %v4474 = vsel %vm795, %v4421, 0
          %v4477 = vsel %vm795, %v4422, 0
          %v4480 = vsel %vm795, %v4423, 0
          %4482 = vmatpush.bf16.msra.mxu0 0
          %4483 = vmatpush.bf16.msra.mxu0 0
          %4484 = vmatpush.bf16.msra.mxu0 0
          %4485 = vmatpush.bf16.msra.mxu0 0
          %4486 = vmatpush.bf16.msra.mxu0 0
          %4487 = vmatpush.bf16.msra.mxu0 %v4448
          %4488 = vmatpush.bf16.msra.mxu0 %v4447
          %4489 = vmatpush.bf16.msra.mxu0 %v4446
          %4490 = vmatmul.bf16.gmra.mxu0 %v4453
          %v4491 = vpop.f32.mrf.mxu0
          %v4492 = vadd.f32 %v4432, %v4491
          %v4493 = vpop.f32.mrf.mxu0
          %v4494 = vadd.f32 %v4432, %v4493
          %4495 = vmatmul.bf16.gmra.mxu0 %v4456
          %v4496 = vpop.f32.mrf.mxu0
          %v4497 = vadd.f32 %v4432, %v4496
          %v4498 = vpop.f32.mrf.mxu0
          %v4499 = vadd.f32 %v4432, %v4498
          %4500 = vmatmul.bf16.gmra.mxu0 %v4459
          %v4501 = vpop.f32.mrf.mxu0
          %v4502 = vadd.f32 %v4432, %v4501
          %v4503 = vpop.f32.mrf.mxu0
          %v4504 = vadd.f32 %v4432, %v4503
          %4505 = vmatmul.bf16.gmra.mxu0 %v4462
          %v4506 = vpop.f32.mrf.mxu0
          %v4507 = vadd.f32 %v4432, %v4506
          %v4508 = vpop.f32.mrf.mxu0
          %v4509 = vadd.f32 %v4432, %v4508
          %4510 = vmatmul.bf16.gmra.mxu0 %v4465
          %v4511 = vpop.f32.mrf.mxu0
          %v4512 = vadd.f32 %v4432, %v4511
          %v4513 = vpop.f32.mrf.mxu0
          %v4514 = vadd.f32 %v4432, %v4513
          %4515 = vmatmul.bf16.gmra.mxu0 %v4468
          %v4516 = vpop.f32.mrf.mxu0
          %v4517 = vadd.f32 %v4432, %v4516
          %v4518 = vpop.f32.mrf.mxu0
          %v4519 = vadd.f32 %v4432, %v4518
          %4520 = vmatmul.bf16.gmra.mxu0 %v4471
          %v4521 = vpop.f32.mrf.mxu0
          %v4522 = vadd.f32 %v4432, %v4521
          %v4523 = vpop.f32.mrf.mxu0
          %v4524 = vadd.f32 %v4432, %v4523
          %4525 = vmatmul.bf16.gmra.mxu0 %v4474
          %v4526 = vpop.f32.mrf.mxu0
          %v4527 = vadd.f32 %v4432, %v4526
          %v4528 = vpop.f32.mrf.mxu0
          %v4529 = vadd.f32 %v4432, %v4528
          %4530 = vmatmul.bf16.gmra.mxu0 %v4477
          %v4531 = vpop.f32.mrf.mxu0
          %v4532 = vadd.f32 %v4432, %v4531
          %v4533 = vpop.f32.mrf.mxu0
          %v4534 = vadd.f32 %v4432, %v4533
          %4535 = vmatmul.bf16.gmra.mxu0 %v4480
          %v4536 = vpop.f32.mrf.mxu0
          %v4537 = vadd.f32 %v4432, %v4536
          %v4538 = vpop.f32.mrf.mxu0
          %v4539 = vadd.f32 %v4432, %v4538
          %4540 = vdwg.mxu0
          %v4541 = vmax.f32 %v4492, 0.0
          %v4542 = vmax.f32 %v4494, 0.0
          %v4543 = vmax.f32 %v4497, 0.0
          %v4544 = vmax.f32 %v4499, 0.0
          %v4545 = vmax.f32 %v4502, 0.0
          %v4546 = vmax.f32 %v4504, 0.0
          %v4547 = vmax.f32 %v4507, 0.0
          %v4548 = vmax.f32 %v4509, 0.0
          %v4549 = vmax.f32 %v4512, 0.0
          %v4550 = vmax.f32 %v4514, 0.0
          %v4551 = vmax.f32 %v4517, 0.0
          %v4552 = vmax.f32 %v4519, 0.0
          %v4553 = vmax.f32 %v4522, 0.0
          %v4554 = vmax.f32 %v4524, 0.0
          %v4555 = vmax.f32 %v4527, 0.0
          %v4556 = vmax.f32 %v4529, 0.0
          %v4557 = vmax.f32 %v4532, 0.0
          %v4558 = vmax.f32 %v4534, 0.0
          %v4559 = vmax.f32 %v4537, 0.0
          %v4560 = vmax.f32 %v4539, 0.0
          %s4561 = scalar_lea.vmem [#allocation2], %s4077
          %v4562 = vld [vmem:[%s4561] sm:$0xff]
          %v4563 = vld [vmem:[%s4561 + $0x8] sm:$0xff]
          %v4564 = vld [vmem:[%s4561 + $0x10] sm:$0xff]
          %v4565 = vld [vmem:[%s4561 + $0x18] sm:$0xff]
          %v4566 = vld [vmem:[%s4561 + $0x20] sm:$0xff]
          %v4567 = vld [vmem:[%s4561 + $0x28] sm:$0xff]
          %v4568 = vld [vmem:[%s4561 + $0x30] sm:$0xff]
          %v4569 = vld [vmem:[%s4561 + $0x38] sm:$0xff]
          %v4570 = vld [vmem:[%s4561 + $0x40] sm:$0xff]
          %v4571 = vld [vmem:[%s4561 + $0x48] sm:$0xff]
          %v4572 = vld [vmem:[%s4561 + $0x50] sm:$0xff]
          %v4573 = vld [vmem:[%s4561 + $0x58] sm:$0xff]
          %v4574 = vld [vmem:[%s4561 + $0x60] sm:$0xff]
          %v4575 = vld [vmem:[%s4561 + $0x68] sm:$0xff]
          %v4576 = vld [vmem:[%s4561 + $0x70] sm:$0xff]
          %v4577 = vld [vmem:[%s4561 + $0x78] sm:$0xff]
          %v4578 = vld [vmem:[%s4561 + $0x80] sm:$0xff]
          %v4579 = vld [vmem:[%s4561 + $0x88] sm:$0xff]
          %v4580 = vld [vmem:[%s4561 + $0x90] sm:$0xff]
          %v4581 = vld [vmem:[%s4561 + $0x98] sm:$0xff]
          %4583 = vset.pattern.permute.xlu0 0
          %4584 = vperm.xlu0 %4583, %v4562
          %v4585 = vpop.permute.xlu0 %4584
          %4588 = vset.pattern.permute.xlu0 0
          %4589 = vperm.xlu0 %4588, %v4563
          %v4590 = vpop.permute.xlu0 %4589
          %4593 = vset.pattern.permute.xlu0 0
          %4594 = vperm.xlu0 %4593, %v4564
          %v4595 = vpop.permute.xlu0 %4594
          %4598 = vset.pattern.permute.xlu0 0
          %4599 = vperm.xlu0 %4598, %v4565
          %v4600 = vpop.permute.xlu0 %4599
          %4603 = vset.pattern.permute.xlu0 0
          %4604 = vperm.xlu0 %4603, %v4566
          %v4605 = vpop.permute.xlu0 %4604
          %4608 = vset.pattern.permute.xlu0 0
          %4609 = vperm.xlu0 %4608, %v4567
          %v4610 = vpop.permute.xlu0 %4609
          %4613 = vset.pattern.permute.xlu0 0
          %4614 = vperm.xlu0 %4613, %v4568
          %v4615 = vpop.permute.xlu0 %4614
          %4618 = vset.pattern.permute.xlu0 0
          %4619 = vperm.xlu0 %4618, %v4569
          %v4620 = vpop.permute.xlu0 %4619
          %4623 = vset.pattern.permute.xlu0 0
          %4624 = vperm.xlu0 %4623, %v4570
          %v4625 = vpop.permute.xlu0 %4624
          %4628 = vset.pattern.permute.xlu0 0
          %4629 = vperm.xlu0 %4628, %v4571
          %v4630 = vpop.permute.xlu0 %4629
          %4633 = vset.pattern.permute.xlu0 0
          %4634 = vperm.xlu0 %4633, %v4572
          %v4635 = vpop.permute.xlu0 %4634
          %4638 = vset.pattern.permute.xlu0 0
          %4639 = vperm.xlu0 %4638, %v4573
          %v4640 = vpop.permute.xlu0 %4639
          %4643 = vset.pattern.permute.xlu0 0
          %4644 = vperm.xlu0 %4643, %v4574
          %v4645 = vpop.permute.xlu0 %4644
          %4648 = vset.pattern.permute.xlu0 0
          %4649 = vperm.xlu0 %4648, %v4575
          %v4650 = vpop.permute.xlu0 %4649
          %4653 = vset.pattern.permute.xlu0 0
          %4654 = vperm.xlu0 %4653, %v4576
          %v4655 = vpop.permute.xlu0 %4654
          %4658 = vset.pattern.permute.xlu0 0
          %4659 = vperm.xlu0 %4658, %v4577
          %v4660 = vpop.permute.xlu0 %4659
          %4663 = vset.pattern.permute.xlu0 0
          %4664 = vperm.xlu0 %4663, %v4578
          %v4665 = vpop.permute.xlu0 %4664
          %4668 = vset.pattern.permute.xlu0 0
          %4669 = vperm.xlu0 %4668, %v4579
          %v4670 = vpop.permute.xlu0 %4669
          %4673 = vset.pattern.permute.xlu0 0
          %4674 = vperm.xlu0 %4673, %v4580
          %v4675 = vpop.permute.xlu0 %4674
          %4678 = vset.pattern.permute.xlu0 0
          %4679 = vperm.xlu0 %4678, %v4581
          %v4680 = vpop.permute.xlu0 %4679
          %v4682 = vmul.f32 %v4541, %v4585
          %v4683 = vmul.f32 %v4542, %v4590
          %v4684 = vmul.f32 %v4543, %v4595
          %v4685 = vmul.f32 %v4544, %v4600
          %v4686 = vmul.f32 %v4545, %v4605
          %v4687 = vmul.f32 %v4546, %v4610
          %v4688 = vmul.f32 %v4547, %v4615
          %v4689 = vmul.f32 %v4548, %v4620
          %v4690 = vmul.f32 %v4549, %v4625
          %v4691 = vmul.f32 %v4550, %v4630
          %v4692 = vmul.f32 %v4551, %v4635
          %v4693 = vmul.f32 %v4552, %v4640
          %v4694 = vmul.f32 %v4553, %v4645
          %v4695 = vmul.f32 %v4554, %v4650
          %v4696 = vmul.f32 %v4555, %v4655
          %v4697 = vmul.f32 %v4556, %v4660
          %v4698 = vmul.f32 %v4557, %v4665
          %v4699 = vmul.f32 %v4558, %v4670
          %v4700 = vmul.f32 %v4559, %v4675
          %v4701 = vmul.f32 %v4560, %v4680
          %s4702 = sadd.s32 %s4077, 4040
          %s4703 = scalar_lea.vmem [#allocation3], %s4702
          %4704 = vst.msk [vmem:[%s4703] sm:$0xff] %vm795, %v4682
          %4705 = vst.msk [vmem:[%s4703 + $0x8] sm:$0xff] %vm795, %v4683
          %4706 = vst.msk [vmem:[%s4703 + $0x10] sm:$0xff] %vm795, %v4684
          %4707 = vst.msk [vmem:[%s4703 + $0x18] sm:$0xff] %vm795, %v4685
          %4708 = vst.msk [vmem:[%s4703 + $0x20] sm:$0xff] %vm795, %v4686
          %4709 = vst.msk [vmem:[%s4703 + $0x28] sm:$0xff] %vm795, %v4687
          %4710 = vst.msk [vmem:[%s4703 + $0x30] sm:$0xff] %vm795, %v4688
          %4711 = vst.msk [vmem:[%s4703 + $0x38] sm:$0xff] %vm795, %v4689
          %4712 = vst.msk [vmem:[%s4703 + $0x40] sm:$0xff] %vm795, %v4690
          %4713 = vst.msk [vmem:[%s4703 + $0x48] sm:$0xff] %vm795, %v4691
          %4714 = vst.msk [vmem:[%s4703 + $0x50] sm:$0xff] %vm795, %v4692
          %4715 = vst.msk [vmem:[%s4703 + $0x58] sm:$0xff] %vm795, %v4693
          %4716 = vst.msk [vmem:[%s4703 + $0x60] sm:$0xff] %vm795, %v4694
          %4717 = vst.msk [vmem:[%s4703 + $0x68] sm:$0xff] %vm795, %v4695
          %4718 = vst.msk [vmem:[%s4703 + $0x70] sm:$0xff] %vm795, %v4696
          %4719 = vst.msk [vmem:[%s4703 + $0x78] sm:$0xff] %vm795, %v4697
          %4720 = vst.msk [vmem:[%s4703 + $0x80] sm:$0xff] %vm795, %v4698
          %4721 = vst.msk [vmem:[%s4703 + $0x88] sm:$0xff] %vm795, %v4699
          %4722 = vst.msk [vmem:[%s4703 + $0x90] sm:$0xff] %vm795, %v4700
          %4723 = vst.msk [vmem:[%s4703 + $0x98] sm:$0xff] %vm795, %v4701
        $region143: #{danet_forward.1} parent=95 // loop_footer
          %s4076 = sadd.s32 1, %s4072
        $region144: #{danet_forward.1} parent=95 // loop_footer_branch
          %4071 = sbr.rel target = $region140
        $region145: #{danet_forward.1} parent=95 // loop_exit
          _
        loop: start=0, step=1, limit=5
        $region146: #{danet_forward.1} parent=95 // loop_pre_header
          _
        $region147: #{danet_forward.1} parent=95 // loop_header
          %s4725 = sphi 0, %s4729
          %p4726 = scmp.ge.s32.totalorder %s4725, 5
        $region148: #{danet_forward.1} parent=95 // loop_header_branch
          %4728 = sbr.rel (%p4726) target = $region152
        $region149: #{danet_forward.1} parent=95 // loop_body
          %s4730 = smul.u32 %s4725, 160
          %s4731 = scalar_lea.vmem %s601, %s4730
          %v4732 = vld [vmem:[%s4731] sm:$0xff]
          %v4733 = vld [vmem:[%s4731 + $0x8] sm:$0xff]
          %v4734 = vld [vmem:[%s4731 + $0x10] sm:$0xff]
          %v4735 = vld [vmem:[%s4731 + $0x18] sm:$0xff]
          %v4736 = vld [vmem:[%s4731 + $0x20] sm:$0xff]
          %v4737 = vld [vmem:[%s4731 + $0x28] sm:$0xff]
          %v4738 = vld [vmem:[%s4731 + $0x30] sm:$0xff]
          %v4739 = vld [vmem:[%s4731 + $0x38] sm:$0xff]
          %v4740 = vld [vmem:[%s4731 + $0x40] sm:$0xff]
          %v4741 = vld [vmem:[%s4731 + $0x48] sm:$0xff]
          %v4742 = vld [vmem:[%s4731 + $0x50] sm:$0xff]
          %v4743 = vld [vmem:[%s4731 + $0x58] sm:$0xff]
          %v4744 = vld [vmem:[%s4731 + $0x60] sm:$0xff]
          %v4745 = vld [vmem:[%s4731 + $0x68] sm:$0xff]
          %v4746 = vld [vmem:[%s4731 + $0x70] sm:$0xff]
          %v4747 = vld [vmem:[%s4731 + $0x78] sm:$0xff]
          %v4748 = vld [vmem:[%s4731 + $0x80] sm:$0xff]
          %v4749 = vld [vmem:[%s4731 + $0x88] sm:$0xff]
          %v4750 = vld [vmem:[%s4731 + $0x90] sm:$0xff]
          %v4751 = vld [vmem:[%s4731 + $0x98] sm:$0xff]
          %v4752 = vld [vmem:[%s1] sm:$0x1]
          %4754 = vset.pattern.permute.xlu0 6
          %4755 = vperm.xlu0 %4754, %v4732
          %v4756 = vpop.permute.xlu0 %4755
          %4759 = vset.pattern.permute.xlu0 6
          %4760 = vperm.xlu0 %4759, %v4733
          %v4761 = vpop.permute.xlu0 %4760
          %4764 = vset.pattern.permute.xlu0 6
          %4765 = vperm.xlu0 %4764, %v4734
          %v4766 = vpop.permute.xlu0 %4765
          %4769 = vset.pattern.permute.xlu0 6
          %4770 = vperm.xlu0 %4769, %v4735
          %v4771 = vpop.permute.xlu0 %4770
          %4774 = vset.pattern.permute.xlu0 6
          %4775 = vperm.xlu0 %4774, %v4736
          %v4776 = vpop.permute.xlu0 %4775
          %4779 = vset.pattern.permute.xlu0 6
          %4780 = vperm.xlu0 %4779, %v4737
          %v4781 = vpop.permute.xlu0 %4780
          %4784 = vset.pattern.permute.xlu0 6
          %4785 = vperm.xlu0 %4784, %v4738
          %v4786 = vpop.permute.xlu0 %4785
          %4789 = vset.pattern.permute.xlu0 6
          %4790 = vperm.xlu0 %4789, %v4739
          %v4791 = vpop.permute.xlu0 %4790
          %4794 = vset.pattern.permute.xlu0 6
          %4795 = vperm.xlu0 %4794, %v4740
          %v4796 = vpop.permute.xlu0 %4795
          %4799 = vset.pattern.permute.xlu0 6
          %4800 = vperm.xlu0 %4799, %v4741
          %v4801 = vpop.permute.xlu0 %4800
          %4804 = vset.pattern.permute.xlu0 6
          %4805 = vperm.xlu0 %4804, %v4742
          %v4806 = vpop.permute.xlu0 %4805
          %4809 = vset.pattern.permute.xlu0 6
          %4810 = vperm.xlu0 %4809, %v4743
          %v4811 = vpop.permute.xlu0 %4810
          %4814 = vset.pattern.permute.xlu0 6
          %4815 = vperm.xlu0 %4814, %v4744
          %v4816 = vpop.permute.xlu0 %4815
          %4819 = vset.pattern.permute.xlu0 6
          %4820 = vperm.xlu0 %4819, %v4745
          %v4821 = vpop.permute.xlu0 %4820
          %4824 = vset.pattern.permute.xlu0 6
          %4825 = vperm.xlu0 %4824, %v4746
          %v4826 = vpop.permute.xlu0 %4825
          %4829 = vset.pattern.permute.xlu0 6
          %4830 = vperm.xlu0 %4829, %v4747
          %v4831 = vpop.permute.xlu0 %4830
          %4834 = vset.pattern.permute.xlu0 6
          %4835 = vperm.xlu0 %4834, %v4748
          %v4836 = vpop.permute.xlu0 %4835
          %4839 = vset.pattern.permute.xlu0 6
          %4840 = vperm.xlu0 %4839, %v4749
          %v4841 = vpop.permute.xlu0 %4840
          %4844 = vset.pattern.permute.xlu0 6
          %4845 = vperm.xlu0 %4844, %v4750
          %v4846 = vpop.permute.xlu0 %4845
          %4849 = vset.pattern.permute.xlu0 6
          %4850 = vperm.xlu0 %4849, %v4751
          %v4851 = vpop.permute.xlu0 %4850
          %v4854 = vperm.slane %v4752, 0
          %v4856 = vmul.f32 %v4756, %v4854
          %v4857 = vmul.f32 %v4761, %v4854
          %v4858 = vmul.f32 %v4766, %v4854
          %v4859 = vmul.f32 %v4771, %v4854
          %v4860 = vmul.f32 %v4776, %v4854
          %v4861 = vmul.f32 %v4781, %v4854
          %v4862 = vmul.f32 %v4786, %v4854
          %v4863 = vmul.f32 %v4791, %v4854
          %v4864 = vmul.f32 %v4796, %v4854
          %v4865 = vmul.f32 %v4801, %v4854
          %v4866 = vmul.f32 %v4806, %v4854
          %v4867 = vmul.f32 %v4811, %v4854
          %v4868 = vmul.f32 %v4816, %v4854
          %v4869 = vmul.f32 %v4821, %v4854
          %v4870 = vmul.f32 %v4826, %v4854
          %v4871 = vmul.f32 %v4831, %v4854
          %v4872 = vmul.f32 %v4836, %v4854
          %v4873 = vmul.f32 %v4841, %v4854
          %v4874 = vmul.f32 %v4846, %v4854
          %v4875 = vmul.f32 %v4851, %v4854
          %v4876 = vld [vmem:[%s2] sm:$0x1]
          %v4878 = vperm.slane %v4876, 0
          %v4880 = vadd.f32 %v4856, %v4878
          %v4881 = vadd.f32 %v4857, %v4878
          %v4882 = vadd.f32 %v4858, %v4878
          %v4883 = vadd.f32 %v4859, %v4878
          %v4884 = vadd.f32 %v4860, %v4878
          %v4885 = vadd.f32 %v4861, %v4878
          %v4886 = vadd.f32 %v4862, %v4878
          %v4887 = vadd.f32 %v4863, %v4878
          %v4888 = vadd.f32 %v4864, %v4878
          %v4889 = vadd.f32 %v4865, %v4878
          %v4890 = vadd.f32 %v4866, %v4878
          %v4891 = vadd.f32 %v4867, %v4878
          %v4892 = vadd.f32 %v4868, %v4878
          %v4893 = vadd.f32 %v4869, %v4878
          %v4894 = vadd.f32 %v4870, %v4878
          %v4895 = vadd.f32 %v4871, %v4878
          %v4896 = vadd.f32 %v4872, %v4878
          %v4897 = vadd.f32 %v4873, %v4878
          %v4898 = vadd.f32 %v4874, %v4878
          %v4899 = vadd.f32 %v4875, %v4878
          %v4900 = vmax.f32 %v4880, 0.0
          %v4901 = vmax.f32 %v4881, 0.0
          %v4902 = vmax.f32 %v4882, 0.0
          %v4903 = vmax.f32 %v4883, 0.0
          %v4904 = vmax.f32 %v4884, 0.0
          %v4905 = vmax.f32 %v4885, 0.0
          %v4906 = vmax.f32 %v4886, 0.0
          %v4907 = vmax.f32 %v4887, 0.0
          %v4908 = vmax.f32 %v4888, 0.0
          %v4909 = vmax.f32 %v4889, 0.0
          %v4910 = vmax.f32 %v4890, 0.0
          %v4911 = vmax.f32 %v4891, 0.0
          %v4912 = vmax.f32 %v4892, 0.0
          %v4913 = vmax.f32 %v4893, 0.0
          %v4914 = vmax.f32 %v4894, 0.0
          %v4915 = vmax.f32 %v4895, 0.0
          %v4916 = vmax.f32 %v4896, 0.0
          %v4917 = vmax.f32 %v4897, 0.0
          %v4918 = vmax.f32 %v4898, 0.0
          %v4919 = vmax.f32 %v4899, 0.0
          %v4920 = vpack.c.bf16 %v4901, %v4900
          %v4921 = vpack.c.bf16 %v4903, %v4902
          %v4922 = vpack.c.bf16 %v4905, %v4904
          %v4923 = vpack.c.bf16 %v4907, %v4906
          %v4924 = vpack.c.bf16 %v4909, %v4908
          %v4925 = vpack.c.bf16 %v4911, %v4910
          %v4926 = vpack.c.bf16 %v4913, %v4912
          %v4927 = vpack.c.bf16 %v4915, %v4914
          %v4928 = vpack.c.bf16 %v4917, %v4916
          %v4929 = vpack.c.bf16 %v4919, %v4918
          %v4930 = vld [vmem:[%s3] sm:$0xf]
          %v4931 = vld [vmem:[%s3 + $0x4] sm:$0xf]
          %v4932 = vld [vmem:[%s3 + $0x8] sm:$0xf]
          %v4933 = vld [vmem:[%s3 + $0xc] sm:$0xf]
          %v4934 = vld [vmem:[%s3 + $0x10] sm:$0xf]
          %v4935 = vld [vmem:[%s3 + $0x14] sm:$0xf]
          %v4936 = vld [vmem:[%s4] sm:$0x1]
          %v4938 = vperm.slane %v4936, 0
          %v4946 = vunpack.c.l.b16 %v4930
          %v4947 = vunpack.c.l.b16 %v4931
          %v4948 = vunpack.c.l.b16 %v4932
          %v4949 = vunpack.c.l.b16 %v4933
          %v4950 = vunpack.c.l.b16 %v4934
          %v4951 = vunpack.c.l.b16 %v4935
          %v4952 = vpack.c.b16 %v4947, %v4946
          %v4953 = vpack.c.b16 %v4949, %v4948
          %v4954 = vpack.c.b16 %v4951, %v4950
          %v4959 = vsel %vm795, %v4920, 0
          %v4962 = vsel %vm795, %v4921, 0
          %v4965 = vsel %vm795, %v4922, 0
          %v4968 = vsel %vm795, %v4923, 0
          %v4971 = vsel %vm795, %v4924, 0
          %v4974 = vsel %vm795, %v4925, 0
          %v4977 = vsel %vm795, %v4926, 0
          %v4980 = vsel %vm795, %v4927, 0
          %v4983 = vsel %vm795, %v4928, 0
          %v4986 = vsel %vm795, %v4929, 0
          %4988 = vmatpush.bf16.msra.mxu0 0
          %4989 = vmatpush.bf16.msra.mxu0 0
          %4990 = vmatpush.bf16.msra.mxu0 0
          %4991 = vmatpush.bf16.msra.mxu0 0
          %4992 = vmatpush.bf16.msra.mxu0 0
          %4993 = vmatpush.bf16.msra.mxu0 %v4954
          %4994 = vmatpush.bf16.msra.mxu0 %v4953
          %4995 = vmatpush.bf16.msra.mxu0 %v4952
          %4996 = vmatmul.bf16.gmra.mxu0 %v4959
          %v4997 = vpop.f32.mrf.mxu0
          %v4998 = vadd.f32 %v4938, %v4997
          %v4999 = vpop.f32.mrf.mxu0
          %v5000 = vadd.f32 %v4938, %v4999
          %5001 = vmatmul.bf16.gmra.mxu0 %v4962
          %v5002 = vpop.f32.mrf.mxu0
          %v5003 = vadd.f32 %v4938, %v5002
          %v5004 = vpop.f32.mrf.mxu0
          %v5005 = vadd.f32 %v4938, %v5004
          %5006 = vmatmul.bf16.gmra.mxu0 %v4965
          %v5007 = vpop.f32.mrf.mxu0
          %v5008 = vadd.f32 %v4938, %v5007
          %v5009 = vpop.f32.mrf.mxu0
          %v5010 = vadd.f32 %v4938, %v5009
          %5011 = vmatmul.bf16.gmra.mxu0 %v4968
          %v5012 = vpop.f32.mrf.mxu0
          %v5013 = vadd.f32 %v4938, %v5012
          %v5014 = vpop.f32.mrf.mxu0
          %v5015 = vadd.f32 %v4938, %v5014
          %5016 = vmatmul.bf16.gmra.mxu0 %v4971
          %v5017 = vpop.f32.mrf.mxu0
          %v5018 = vadd.f32 %v4938, %v5017
          %v5019 = vpop.f32.mrf.mxu0
          %v5020 = vadd.f32 %v4938, %v5019
          %5021 = vmatmul.bf16.gmra.mxu0 %v4974
          %v5022 = vpop.f32.mrf.mxu0
          %v5023 = vadd.f32 %v4938, %v5022
          %v5024 = vpop.f32.mrf.mxu0
          %v5025 = vadd.f32 %v4938, %v5024
          %5026 = vmatmul.bf16.gmra.mxu0 %v4977
          %v5027 = vpop.f32.mrf.mxu0
          %v5028 = vadd.f32 %v4938, %v5027
          %v5029 = vpop.f32.mrf.mxu0
          %v5030 = vadd.f32 %v4938, %v5029
          %5031 = vmatmul.bf16.gmra.mxu0 %v4980
          %v5032 = vpop.f32.mrf.mxu0
          %v5033 = vadd.f32 %v4938, %v5032
          %v5034 = vpop.f32.mrf.mxu0
          %v5035 = vadd.f32 %v4938, %v5034
          %5036 = vmatmul.bf16.gmra.mxu0 %v4983
          %v5037 = vpop.f32.mrf.mxu0
          %v5038 = vadd.f32 %v4938, %v5037
          %v5039 = vpop.f32.mrf.mxu0
          %v5040 = vadd.f32 %v4938, %v5039
          %5041 = vmatmul.bf16.gmra.mxu0 %v4986
          %v5042 = vpop.f32.mrf.mxu0
          %v5043 = vadd.f32 %v4938, %v5042
          %v5044 = vpop.f32.mrf.mxu0
          %v5045 = vadd.f32 %v4938, %v5044
          %5046 = vdwg.mxu0
          %v5047 = vmax.f32 %v4998, 0.0
          %v5048 = vmax.f32 %v5000, 0.0
          %v5049 = vmax.f32 %v5003, 0.0
          %v5050 = vmax.f32 %v5005, 0.0
          %v5051 = vmax.f32 %v5008, 0.0
          %v5052 = vmax.f32 %v5010, 0.0
          %v5053 = vmax.f32 %v5013, 0.0
          %v5054 = vmax.f32 %v5015, 0.0
          %v5055 = vmax.f32 %v5018, 0.0
          %v5056 = vmax.f32 %v5020, 0.0
          %v5057 = vmax.f32 %v5023, 0.0
          %v5058 = vmax.f32 %v5025, 0.0
          %v5059 = vmax.f32 %v5028, 0.0
          %v5060 = vmax.f32 %v5030, 0.0
          %v5061 = vmax.f32 %v5033, 0.0
          %v5062 = vmax.f32 %v5035, 0.0
          %v5063 = vmax.f32 %v5038, 0.0
          %v5064 = vmax.f32 %v5040, 0.0
          %v5065 = vmax.f32 %v5043, 0.0
          %v5066 = vmax.f32 %v5045, 0.0
          %v5067 = vpack.c.bf16 %v5048, %v5047
          %v5068 = vpack.c.bf16 %v5050, %v5049
          %v5069 = vpack.c.bf16 %v5052, %v5051
          %v5070 = vpack.c.bf16 %v5054, %v5053
          %v5071 = vpack.c.bf16 %v5056, %v5055
          %v5072 = vpack.c.bf16 %v5058, %v5057
          %v5073 = vpack.c.bf16 %v5060, %v5059
          %v5074 = vpack.c.bf16 %v5062, %v5061
          %v5075 = vpack.c.bf16 %v5064, %v5063
          %v5076 = vpack.c.bf16 %v5066, %v5065
          %v5077 = vld [vmem:[%s5] sm:$0xf]
          %v5078 = vld [vmem:[%s5 + $0x4] sm:$0xf]
          %v5079 = vld [vmem:[%s5 + $0x8] sm:$0xf]
          %v5080 = vld [vmem:[%s5 + $0xc] sm:$0xf]
          %v5081 = vld [vmem:[%s5 + $0x10] sm:$0xf]
          %v5082 = vld [vmem:[%s5 + $0x14] sm:$0xf]
          %v5083 = vld [vmem:[%s6] sm:$0x1]
          %v5085 = vperm.slane %v5083, 0
          %v5093 = vunpack.c.l.b16 %v5077
          %v5094 = vunpack.c.l.b16 %v5078
          %v5095 = vunpack.c.l.b16 %v5079
          %v5096 = vunpack.c.l.b16 %v5080
          %v5097 = vunpack.c.l.b16 %v5081
          %v5098 = vunpack.c.l.b16 %v5082
          %v5099 = vpack.c.b16 %v5094, %v5093
          %v5100 = vpack.c.b16 %v5096, %v5095
          %v5101 = vpack.c.b16 %v5098, %v5097
          %v5106 = vsel %vm795, %v5067, 0
          %v5109 = vsel %vm795, %v5068, 0
          %v5112 = vsel %vm795, %v5069, 0
          %v5115 = vsel %vm795, %v5070, 0
          %v5118 = vsel %vm795, %v5071, 0
          %v5121 = vsel %vm795, %v5072, 0
          %v5124 = vsel %vm795, %v5073, 0
          %v5127 = vsel %vm795, %v5074, 0
          %v5130 = vsel %vm795, %v5075, 0
          %v5133 = vsel %vm795, %v5076, 0
          %5135 = vmatpush.bf16.msra.mxu0 0
          %5136 = vmatpush.bf16.msra.mxu0 0
          %5137 = vmatpush.bf16.msra.mxu0 0
          %5138 = vmatpush.bf16.msra.mxu0 0
          %5139 = vmatpush.bf16.msra.mxu0 0
          %5140 = vmatpush.bf16.msra.mxu0 %v5101
          %5141 = vmatpush.bf16.msra.mxu0 %v5100
          %5142 = vmatpush.bf16.msra.mxu0 %v5099
          %5143 = vmatmul.bf16.gmra.mxu0 %v5106
          %v5144 = vpop.f32.mrf.mxu0
          %v5145 = vadd.f32 %v5085, %v5144
          %v5146 = vpop.f32.mrf.mxu0
          %v5147 = vadd.f32 %v5085, %v5146
          %5148 = vmatmul.bf16.gmra.mxu0 %v5109
          %v5149 = vpop.f32.mrf.mxu0
          %v5150 = vadd.f32 %v5085, %v5149
          %v5151 = vpop.f32.mrf.mxu0
          %v5152 = vadd.f32 %v5085, %v5151
          %5153 = vmatmul.bf16.gmra.mxu0 %v5112
          %v5154 = vpop.f32.mrf.mxu0
          %v5155 = vadd.f32 %v5085, %v5154
          %v5156 = vpop.f32.mrf.mxu0
          %v5157 = vadd.f32 %v5085, %v5156
          %5158 = vmatmul.bf16.gmra.mxu0 %v5115
          %v5159 = vpop.f32.mrf.mxu0
          %v5160 = vadd.f32 %v5085, %v5159
          %v5161 = vpop.f32.mrf.mxu0
          %v5162 = vadd.f32 %v5085, %v5161
          %5163 = vmatmul.bf16.gmra.mxu0 %v5118
          %v5164 = vpop.f32.mrf.mxu0
          %v5165 = vadd.f32 %v5085, %v5164
          %v5166 = vpop.f32.mrf.mxu0
          %v5167 = vadd.f32 %v5085, %v5166
          %5168 = vmatmul.bf16.gmra.mxu0 %v5121
          %v5169 = vpop.f32.mrf.mxu0
          %v5170 = vadd.f32 %v5085, %v5169
          %v5171 = vpop.f32.mrf.mxu0
          %v5172 = vadd.f32 %v5085, %v5171
          %5173 = vmatmul.bf16.gmra.mxu0 %v5124
          %v5174 = vpop.f32.mrf.mxu0
          %v5175 = vadd.f32 %v5085, %v5174
          %v5176 = vpop.f32.mrf.mxu0
          %v5177 = vadd.f32 %v5085, %v5176
          %5178 = vmatmul.bf16.gmra.mxu0 %v5127
          %v5179 = vpop.f32.mrf.mxu0
          %v5180 = vadd.f32 %v5085, %v5179
          %v5181 = vpop.f32.mrf.mxu0
          %v5182 = vadd.f32 %v5085, %v5181
          %5183 = vmatmul.bf16.gmra.mxu0 %v5130
          %v5184 = vpop.f32.mrf.mxu0
          %v5185 = vadd.f32 %v5085, %v5184
          %v5186 = vpop.f32.mrf.mxu0
          %v5187 = vadd.f32 %v5085, %v5186
          %5188 = vmatmul.bf16.gmra.mxu0 %v5133
          %v5189 = vpop.f32.mrf.mxu0
          %v5190 = vadd.f32 %v5085, %v5189
          %v5191 = vpop.f32.mrf.mxu0
          %v5192 = vadd.f32 %v5085, %v5191
          %5193 = vdwg.mxu0
          %v5194 = vmax.f32 %v5145, 0.0
          %v5195 = vmax.f32 %v5147, 0.0
          %v5196 = vmax.f32 %v5150, 0.0
          %v5197 = vmax.f32 %v5152, 0.0
          %v5198 = vmax.f32 %v5155, 0.0
          %v5199 = vmax.f32 %v5157, 0.0
          %v5200 = vmax.f32 %v5160, 0.0
          %v5201 = vmax.f32 %v5162, 0.0
          %v5202 = vmax.f32 %v5165, 0.0
          %v5203 = vmax.f32 %v5167, 0.0
          %v5204 = vmax.f32 %v5170, 0.0
          %v5205 = vmax.f32 %v5172, 0.0
          %v5206 = vmax.f32 %v5175, 0.0
          %v5207 = vmax.f32 %v5177, 0.0
          %v5208 = vmax.f32 %v5180, 0.0
          %v5209 = vmax.f32 %v5182, 0.0
          %v5210 = vmax.f32 %v5185, 0.0
          %v5211 = vmax.f32 %v5187, 0.0
          %v5212 = vmax.f32 %v5190, 0.0
          %v5213 = vmax.f32 %v5192, 0.0
          %s5214 = scalar_lea.vmem [#allocation2], %s4730
          %v5215 = vld [vmem:[%s5214] sm:$0xff]
          %v5216 = vld [vmem:[%s5214 + $0x8] sm:$0xff]
          %v5217 = vld [vmem:[%s5214 + $0x10] sm:$0xff]
          %v5218 = vld [vmem:[%s5214 + $0x18] sm:$0xff]
          %v5219 = vld [vmem:[%s5214 + $0x20] sm:$0xff]
          %v5220 = vld [vmem:[%s5214 + $0x28] sm:$0xff]
          %v5221 = vld [vmem:[%s5214 + $0x30] sm:$0xff]
          %v5222 = vld [vmem:[%s5214 + $0x38] sm:$0xff]
          %v5223 = vld [vmem:[%s5214 + $0x40] sm:$0xff]
          %v5224 = vld [vmem:[%s5214 + $0x48] sm:$0xff]
          %v5225 = vld [vmem:[%s5214 + $0x50] sm:$0xff]
          %v5226 = vld [vmem:[%s5214 + $0x58] sm:$0xff]
          %v5227 = vld [vmem:[%s5214 + $0x60] sm:$0xff]
          %v5228 = vld [vmem:[%s5214 + $0x68] sm:$0xff]
          %v5229 = vld [vmem:[%s5214 + $0x70] sm:$0xff]
          %v5230 = vld [vmem:[%s5214 + $0x78] sm:$0xff]
          %v5231 = vld [vmem:[%s5214 + $0x80] sm:$0xff]
          %v5232 = vld [vmem:[%s5214 + $0x88] sm:$0xff]
          %v5233 = vld [vmem:[%s5214 + $0x90] sm:$0xff]
          %v5234 = vld [vmem:[%s5214 + $0x98] sm:$0xff]
          %5236 = vset.pattern.permute.xlu0 0
          %5237 = vperm.xlu0 %5236, %v5215
          %v5238 = vpop.permute.xlu0 %5237
          %5241 = vset.pattern.permute.xlu0 0
          %5242 = vperm.xlu0 %5241, %v5216
          %v5243 = vpop.permute.xlu0 %5242
          %5246 = vset.pattern.permute.xlu0 0
          %5247 = vperm.xlu0 %5246, %v5217
          %v5248 = vpop.permute.xlu0 %5247
          %5251 = vset.pattern.permute.xlu0 0
          %5252 = vperm.xlu0 %5251, %v5218
          %v5253 = vpop.permute.xlu0 %5252
          %5256 = vset.pattern.permute.xlu0 0
          %5257 = vperm.xlu0 %5256, %v5219
          %v5258 = vpop.permute.xlu0 %5257
          %5261 = vset.pattern.permute.xlu0 0
          %5262 = vperm.xlu0 %5261, %v5220
          %v5263 = vpop.permute.xlu0 %5262
          %5266 = vset.pattern.permute.xlu0 0
          %5267 = vperm.xlu0 %5266, %v5221
          %v5268 = vpop.permute.xlu0 %5267
          %5271 = vset.pattern.permute.xlu0 0
          %5272 = vperm.xlu0 %5271, %v5222
          %v5273 = vpop.permute.xlu0 %5272
          %5276 = vset.pattern.permute.xlu0 0
          %5277 = vperm.xlu0 %5276, %v5223
          %v5278 = vpop.permute.xlu0 %5277
          %5281 = vset.pattern.permute.xlu0 0
          %5282 = vperm.xlu0 %5281, %v5224
          %v5283 = vpop.permute.xlu0 %5282
          %5286 = vset.pattern.permute.xlu0 0
          %5287 = vperm.xlu0 %5286, %v5225
          %v5288 = vpop.permute.xlu0 %5287
          %5291 = vset.pattern.permute.xlu0 0
          %5292 = vperm.xlu0 %5291, %v5226
          %v5293 = vpop.permute.xlu0 %5292
          %5296 = vset.pattern.permute.xlu0 0
          %5297 = vperm.xlu0 %5296, %v5227
          %v5298 = vpop.permute.xlu0 %5297
          %5301 = vset.pattern.permute.xlu0 0
          %5302 = vperm.xlu0 %5301, %v5228
          %v5303 = vpop.permute.xlu0 %5302
          %5306 = vset.pattern.permute.xlu0 0
          %5307 = vperm.xlu0 %5306, %v5229
          %v5308 = vpop.permute.xlu0 %5307
          %5311 = vset.pattern.permute.xlu0 0
          %5312 = vperm.xlu0 %5311, %v5230
          %v5313 = vpop.permute.xlu0 %5312
          %5316 = vset.pattern.permute.xlu0 0
          %5317 = vperm.xlu0 %5316, %v5231
          %v5318 = vpop.permute.xlu0 %5317
          %5321 = vset.pattern.permute.xlu0 0
          %5322 = vperm.xlu0 %5321, %v5232
          %v5323 = vpop.permute.xlu0 %5322
          %5326 = vset.pattern.permute.xlu0 0
          %5327 = vperm.xlu0 %5326, %v5233
          %v5328 = vpop.permute.xlu0 %5327
          %5331 = vset.pattern.permute.xlu0 0
          %5332 = vperm.xlu0 %5331, %v5234
          %v5333 = vpop.permute.xlu0 %5332
          %v5335 = vmul.f32 %v5194, %v5238
          %v5336 = vmul.f32 %v5195, %v5243
          %v5337 = vmul.f32 %v5196, %v5248
          %v5338 = vmul.f32 %v5197, %v5253
          %v5339 = vmul.f32 %v5198, %v5258
          %v5340 = vmul.f32 %v5199, %v5263
          %v5341 = vmul.f32 %v5200, %v5268
          %v5342 = vmul.f32 %v5201, %v5273
          %v5343 = vmul.f32 %v5202, %v5278
          %v5344 = vmul.f32 %v5203, %v5283
          %v5345 = vmul.f32 %v5204, %v5288
          %v5346 = vmul.f32 %v5205, %v5293
          %v5347 = vmul.f32 %v5206, %v5298
          %v5348 = vmul.f32 %v5207, %v5303
          %v5349 = vmul.f32 %v5208, %v5308
          %v5350 = vmul.f32 %v5209, %v5313
          %v5351 = vmul.f32 %v5210, %v5318
          %v5352 = vmul.f32 %v5211, %v5323
          %v5353 = vmul.f32 %v5212, %v5328
          %v5354 = vmul.f32 %v5213, %v5333
          %s5355 = sadd.s32 %s4730, 4840
          %s5356 = scalar_lea.vmem [#allocation3], %s5355
          %5357 = vst.msk [vmem:[%s5356] sm:$0xff] %vm795, %v5335
          %5358 = vst.msk [vmem:[%s5356 + $0x8] sm:$0xff] %vm795, %v5336
          %5359 = vst.msk [vmem:[%s5356 + $0x10] sm:$0xff] %vm795, %v5337
          %5360 = vst.msk [vmem:[%s5356 + $0x18] sm:$0xff] %vm795, %v5338
          %5361 = vst.msk [vmem:[%s5356 + $0x20] sm:$0xff] %vm795, %v5339
          %5362 = vst.msk [vmem:[%s5356 + $0x28] sm:$0xff] %vm795, %v5340
          %5363 = vst.msk [vmem:[%s5356 + $0x30] sm:$0xff] %vm795, %v5341
          %5364 = vst.msk [vmem:[%s5356 + $0x38] sm:$0xff] %vm795, %v5342
          %5365 = vst.msk [vmem:[%s5356 + $0x40] sm:$0xff] %vm795, %v5343
          %5366 = vst.msk [vmem:[%s5356 + $0x48] sm:$0xff] %vm795, %v5344
          %5367 = vst.msk [vmem:[%s5356 + $0x50] sm:$0xff] %vm795, %v5345
          %5368 = vst.msk [vmem:[%s5356 + $0x58] sm:$0xff] %vm795, %v5346
          %5369 = vst.msk [vmem:[%s5356 + $0x60] sm:$0xff] %vm795, %v5347
          %5370 = vst.msk [vmem:[%s5356 + $0x68] sm:$0xff] %vm795, %v5348
          %5371 = vst.msk [vmem:[%s5356 + $0x70] sm:$0xff] %vm795, %v5349
          %5372 = vst.msk [vmem:[%s5356 + $0x78] sm:$0xff] %vm795, %v5350
          %5373 = vst.msk [vmem:[%s5356 + $0x80] sm:$0xff] %vm795, %v5351
          %5374 = vst.msk [vmem:[%s5356 + $0x88] sm:$0xff] %vm795, %v5352
          %5375 = vst.msk [vmem:[%s5356 + $0x90] sm:$0xff] %vm795, %v5353
          %5376 = vst.msk [vmem:[%s5356 + $0x98] sm:$0xff] %vm795, %v5354
        $region150: #{danet_forward.1} parent=95 // loop_footer
          %s4729 = sadd.s32 1, %s4725
        $region151: #{danet_forward.1} parent=95 // loop_footer_branch
          %4724 = sbr.rel target = $region147
        $region152: #{danet_forward.1} parent=95 // loop_exit
          _
        loop: start=0, step=1, limit=5
        $region153: #{danet_forward.1} parent=95 // loop_pre_header
          _
        $region154: #{danet_forward.1} parent=95 // loop_header
          %s5378 = sphi 0, %s5382
          %p5379 = scmp.ge.s32.totalorder %s5378, 5
        $region155: #{danet_forward.1} parent=95 // loop_header_branch
          %5381 = sbr.rel (%p5379) target = $region159
        $region156: #{danet_forward.1} parent=95 // loop_body
          %s5383 = smul.u32 %s5378, 160
          %s5384 = scalar_lea.vmem %s601, %s5383
          %v5385 = vld [vmem:[%s5384] sm:$0xff]
          %v5386 = vld [vmem:[%s5384 + $0x8] sm:$0xff]
          %v5387 = vld [vmem:[%s5384 + $0x10] sm:$0xff]
          %v5388 = vld [vmem:[%s5384 + $0x18] sm:$0xff]
          %v5389 = vld [vmem:[%s5384 + $0x20] sm:$0xff]
          %v5390 = vld [vmem:[%s5384 + $0x28] sm:$0xff]
          %v5391 = vld [vmem:[%s5384 + $0x30] sm:$0xff]
          %v5392 = vld [vmem:[%s5384 + $0x38] sm:$0xff]
          %v5393 = vld [vmem:[%s5384 + $0x40] sm:$0xff]
          %v5394 = vld [vmem:[%s5384 + $0x48] sm:$0xff]
          %v5395 = vld [vmem:[%s5384 + $0x50] sm:$0xff]
          %v5396 = vld [vmem:[%s5384 + $0x58] sm:$0xff]
          %v5397 = vld [vmem:[%s5384 + $0x60] sm:$0xff]
          %v5398 = vld [vmem:[%s5384 + $0x68] sm:$0xff]
          %v5399 = vld [vmem:[%s5384 + $0x70] sm:$0xff]
          %v5400 = vld [vmem:[%s5384 + $0x78] sm:$0xff]
          %v5401 = vld [vmem:[%s5384 + $0x80] sm:$0xff]
          %v5402 = vld [vmem:[%s5384 + $0x88] sm:$0xff]
          %v5403 = vld [vmem:[%s5384 + $0x90] sm:$0xff]
          %v5404 = vld [vmem:[%s5384 + $0x98] sm:$0xff]
          %v5405 = vld [vmem:[%s1] sm:$0x1]
          %5407 = vset.pattern.permute.xlu0 7
          %5408 = vperm.xlu0 %5407, %v5385
          %v5409 = vpop.permute.xlu0 %5408
          %5412 = vset.pattern.permute.xlu0 7
          %5413 = vperm.xlu0 %5412, %v5386
          %v5414 = vpop.permute.xlu0 %5413
          %5417 = vset.pattern.permute.xlu0 7
          %5418 = vperm.xlu0 %5417, %v5387
          %v5419 = vpop.permute.xlu0 %5418
          %5422 = vset.pattern.permute.xlu0 7
          %5423 = vperm.xlu0 %5422, %v5388
          %v5424 = vpop.permute.xlu0 %5423
          %5427 = vset.pattern.permute.xlu0 7
          %5428 = vperm.xlu0 %5427, %v5389
          %v5429 = vpop.permute.xlu0 %5428
          %5432 = vset.pattern.permute.xlu0 7
          %5433 = vperm.xlu0 %5432, %v5390
          %v5434 = vpop.permute.xlu0 %5433
          %5437 = vset.pattern.permute.xlu0 7
          %5438 = vperm.xlu0 %5437, %v5391
          %v5439 = vpop.permute.xlu0 %5438
          %5442 = vset.pattern.permute.xlu0 7
          %5443 = vperm.xlu0 %5442, %v5392
          %v5444 = vpop.permute.xlu0 %5443
          %5447 = vset.pattern.permute.xlu0 7
          %5448 = vperm.xlu0 %5447, %v5393
          %v5449 = vpop.permute.xlu0 %5448
          %5452 = vset.pattern.permute.xlu0 7
          %5453 = vperm.xlu0 %5452, %v5394
          %v5454 = vpop.permute.xlu0 %5453
          %5457 = vset.pattern.permute.xlu0 7
          %5458 = vperm.xlu0 %5457, %v5395
          %v5459 = vpop.permute.xlu0 %5458
          %5462 = vset.pattern.permute.xlu0 7
          %5463 = vperm.xlu0 %5462, %v5396
          %v5464 = vpop.permute.xlu0 %5463
          %5467 = vset.pattern.permute.xlu0 7
          %5468 = vperm.xlu0 %5467, %v5397
          %v5469 = vpop.permute.xlu0 %5468
          %5472 = vset.pattern.permute.xlu0 7
          %5473 = vperm.xlu0 %5472, %v5398
          %v5474 = vpop.permute.xlu0 %5473
          %5477 = vset.pattern.permute.xlu0 7
          %5478 = vperm.xlu0 %5477, %v5399
          %v5479 = vpop.permute.xlu0 %5478
          %5482 = vset.pattern.permute.xlu0 7
          %5483 = vperm.xlu0 %5482, %v5400
          %v5484 = vpop.permute.xlu0 %5483
          %5487 = vset.pattern.permute.xlu0 7
          %5488 = vperm.xlu0 %5487, %v5401
          %v5489 = vpop.permute.xlu0 %5488
          %5492 = vset.pattern.permute.xlu0 7
          %5493 = vperm.xlu0 %5492, %v5402
          %v5494 = vpop.permute.xlu0 %5493
          %5497 = vset.pattern.permute.xlu0 7
          %5498 = vperm.xlu0 %5497, %v5403
          %v5499 = vpop.permute.xlu0 %5498
          %5502 = vset.pattern.permute.xlu0 7
          %5503 = vperm.xlu0 %5502, %v5404
          %v5504 = vpop.permute.xlu0 %5503
          %v5507 = vperm.slane %v5405, 0
          %v5509 = vmul.f32 %v5409, %v5507
          %v5510 = vmul.f32 %v5414, %v5507
          %v5511 = vmul.f32 %v5419, %v5507
          %v5512 = vmul.f32 %v5424, %v5507
          %v5513 = vmul.f32 %v5429, %v5507
          %v5514 = vmul.f32 %v5434, %v5507
          %v5515 = vmul.f32 %v5439, %v5507
          %v5516 = vmul.f32 %v5444, %v5507
          %v5517 = vmul.f32 %v5449, %v5507
          %v5518 = vmul.f32 %v5454, %v5507
          %v5519 = vmul.f32 %v5459, %v5507
          %v5520 = vmul.f32 %v5464, %v5507
          %v5521 = vmul.f32 %v5469, %v5507
          %v5522 = vmul.f32 %v5474, %v5507
          %v5523 = vmul.f32 %v5479, %v5507
          %v5524 = vmul.f32 %v5484, %v5507
          %v5525 = vmul.f32 %v5489, %v5507
          %v5526 = vmul.f32 %v5494, %v5507
          %v5527 = vmul.f32 %v5499, %v5507
          %v5528 = vmul.f32 %v5504, %v5507
          %v5529 = vld [vmem:[%s2] sm:$0x1]
          %v5531 = vperm.slane %v5529, 0
          %v5533 = vadd.f32 %v5509, %v5531
          %v5534 = vadd.f32 %v5510, %v5531
          %v5535 = vadd.f32 %v5511, %v5531
          %v5536 = vadd.f32 %v5512, %v5531
          %v5537 = vadd.f32 %v5513, %v5531
          %v5538 = vadd.f32 %v5514, %v5531
          %v5539 = vadd.f32 %v5515, %v5531
          %v5540 = vadd.f32 %v5516, %v5531
          %v5541 = vadd.f32 %v5517, %v5531
          %v5542 = vadd.f32 %v5518, %v5531
          %v5543 = vadd.f32 %v5519, %v5531
          %v5544 = vadd.f32 %v5520, %v5531
          %v5545 = vadd.f32 %v5521, %v5531
          %v5546 = vadd.f32 %v5522, %v5531
          %v5547 = vadd.f32 %v5523, %v5531
          %v5548 = vadd.f32 %v5524, %v5531
          %v5549 = vadd.f32 %v5525, %v5531
          %v5550 = vadd.f32 %v5526, %v5531
          %v5551 = vadd.f32 %v5527, %v5531
          %v5552 = vadd.f32 %v5528, %v5531
          %v5553 = vmax.f32 %v5533, 0.0
          %v5554 = vmax.f32 %v5534, 0.0
          %v5555 = vmax.f32 %v5535, 0.0
          %v5556 = vmax.f32 %v5536, 0.0
          %v5557 = vmax.f32 %v5537, 0.0
          %v5558 = vmax.f32 %v5538, 0.0
          %v5559 = vmax.f32 %v5539, 0.0
          %v5560 = vmax.f32 %v5540, 0.0
          %v5561 = vmax.f32 %v5541, 0.0
          %v5562 = vmax.f32 %v5542, 0.0
          %v5563 = vmax.f32 %v5543, 0.0
          %v5564 = vmax.f32 %v5544, 0.0
          %v5565 = vmax.f32 %v5545, 0.0
          %v5566 = vmax.f32 %v5546, 0.0
          %v5567 = vmax.f32 %v5547, 0.0
          %v5568 = vmax.f32 %v5548, 0.0
          %v5569 = vmax.f32 %v5549, 0.0
          %v5570 = vmax.f32 %v5550, 0.0
          %v5571 = vmax.f32 %v5551, 0.0
          %v5572 = vmax.f32 %v5552, 0.0
          %v5573 = vpack.c.bf16 %v5554, %v5553
          %v5574 = vpack.c.bf16 %v5556, %v5555
          %v5575 = vpack.c.bf16 %v5558, %v5557
          %v5576 = vpack.c.bf16 %v5560, %v5559
          %v5577 = vpack.c.bf16 %v5562, %v5561
          %v5578 = vpack.c.bf16 %v5564, %v5563
          %v5579 = vpack.c.bf16 %v5566, %v5565
          %v5580 = vpack.c.bf16 %v5568, %v5567
          %v5581 = vpack.c.bf16 %v5570, %v5569
          %v5582 = vpack.c.bf16 %v5572, %v5571
          %v5583 = vld [vmem:[%s3] sm:$0xf]
          %v5584 = vld [vmem:[%s3 + $0x4] sm:$0xf]
          %v5585 = vld [vmem:[%s3 + $0x8] sm:$0xf]
          %v5586 = vld [vmem:[%s3 + $0xc] sm:$0xf]
          %v5587 = vld [vmem:[%s3 + $0x10] sm:$0xf]
          %v5588 = vld [vmem:[%s3 + $0x14] sm:$0xf]
          %v5589 = vld [vmem:[%s4] sm:$0x1]
          %v5591 = vperm.slane %v5589, 0
          %v5599 = vunpack.c.l.b16 %v5583
          %v5600 = vunpack.c.l.b16 %v5584
          %v5601 = vunpack.c.l.b16 %v5585
          %v5602 = vunpack.c.l.b16 %v5586
          %v5603 = vunpack.c.l.b16 %v5587
          %v5604 = vunpack.c.l.b16 %v5588
          %v5605 = vpack.c.b16 %v5600, %v5599
          %v5606 = vpack.c.b16 %v5602, %v5601
          %v5607 = vpack.c.b16 %v5604, %v5603
          %v5612 = vsel %vm795, %v5573, 0
          %v5615 = vsel %vm795, %v5574, 0
          %v5618 = vsel %vm795, %v5575, 0
          %v5621 = vsel %vm795, %v5576, 0
          %v5624 = vsel %vm795, %v5577, 0
          %v5627 = vsel %vm795, %v5578, 0
          %v5630 = vsel %vm795, %v5579, 0
          %v5633 = vsel %vm795, %v5580, 0
          %v5636 = vsel %vm795, %v5581, 0
          %v5639 = vsel %vm795, %v5582, 0
          %5641 = vmatpush.bf16.msra.mxu0 0
          %5642 = vmatpush.bf16.msra.mxu0 0
          %5643 = vmatpush.bf16.msra.mxu0 0
          %5644 = vmatpush.bf16.msra.mxu0 0
          %5645 = vmatpush.bf16.msra.mxu0 0
          %5646 = vmatpush.bf16.msra.mxu0 %v5607
          %5647 = vmatpush.bf16.msra.mxu0 %v5606
          %5648 = vmatpush.bf16.msra.mxu0 %v5605
          %5649 = vmatmul.bf16.gmra.mxu0 %v5612
          %v5650 = vpop.f32.mrf.mxu0
          %v5651 = vadd.f32 %v5591, %v5650
          %v5652 = vpop.f32.mrf.mxu0
          %v5653 = vadd.f32 %v5591, %v5652
          %5654 = vmatmul.bf16.gmra.mxu0 %v5615
          %v5655 = vpop.f32.mrf.mxu0
          %v5656 = vadd.f32 %v5591, %v5655
          %v5657 = vpop.f32.mrf.mxu0
          %v5658 = vadd.f32 %v5591, %v5657
          %5659 = vmatmul.bf16.gmra.mxu0 %v5618
          %v5660 = vpop.f32.mrf.mxu0
          %v5661 = vadd.f32 %v5591, %v5660
          %v5662 = vpop.f32.mrf.mxu0
          %v5663 = vadd.f32 %v5591, %v5662
          %5664 = vmatmul.bf16.gmra.mxu0 %v5621
          %v5665 = vpop.f32.mrf.mxu0
          %v5666 = vadd.f32 %v5591, %v5665
          %v5667 = vpop.f32.mrf.mxu0
          %v5668 = vadd.f32 %v5591, %v5667
          %5669 = vmatmul.bf16.gmra.mxu0 %v5624
          %v5670 = vpop.f32.mrf.mxu0
          %v5671 = vadd.f32 %v5591, %v5670
          %v5672 = vpop.f32.mrf.mxu0
          %v5673 = vadd.f32 %v5591, %v5672
          %5674 = vmatmul.bf16.gmra.mxu0 %v5627
          %v5675 = vpop.f32.mrf.mxu0
          %v5676 = vadd.f32 %v5591, %v5675
          %v5677 = vpop.f32.mrf.mxu0
          %v5678 = vadd.f32 %v5591, %v5677
          %5679 = vmatmul.bf16.gmra.mxu0 %v5630
          %v5680 = vpop.f32.mrf.mxu0
          %v5681 = vadd.f32 %v5591, %v5680
          %v5682 = vpop.f32.mrf.mxu0
          %v5683 = vadd.f32 %v5591, %v5682
          %5684 = vmatmul.bf16.gmra.mxu0 %v5633
          %v5685 = vpop.f32.mrf.mxu0
          %v5686 = vadd.f32 %v5591, %v5685
          %v5687 = vpop.f32.mrf.mxu0
          %v5688 = vadd.f32 %v5591, %v5687
          %5689 = vmatmul.bf16.gmra.mxu0 %v5636
          %v5690 = vpop.f32.mrf.mxu0
          %v5691 = vadd.f32 %v5591, %v5690
          %v5692 = vpop.f32.mrf.mxu0
          %v5693 = vadd.f32 %v5591, %v5692
          %5694 = vmatmul.bf16.gmra.mxu0 %v5639
          %v5695 = vpop.f32.mrf.mxu0
          %v5696 = vadd.f32 %v5591, %v5695
          %v5697 = vpop.f32.mrf.mxu0
          %v5698 = vadd.f32 %v5591, %v5697
          %5699 = vdwg.mxu0
          %v5700 = vmax.f32 %v5651, 0.0
          %v5701 = vmax.f32 %v5653, 0.0
          %v5702 = vmax.f32 %v5656, 0.0
          %v5703 = vmax.f32 %v5658, 0.0
          %v5704 = vmax.f32 %v5661, 0.0
          %v5705 = vmax.f32 %v5663, 0.0
          %v5706 = vmax.f32 %v5666, 0.0
          %v5707 = vmax.f32 %v5668, 0.0
          %v5708 = vmax.f32 %v5671, 0.0
          %v5709 = vmax.f32 %v5673, 0.0
          %v5710 = vmax.f32 %v5676, 0.0
          %v5711 = vmax.f32 %v5678, 0.0
          %v5712 = vmax.f32 %v5681, 0.0
          %v5713 = vmax.f32 %v5683, 0.0
          %v5714 = vmax.f32 %v5686, 0.0
          %v5715 = vmax.f32 %v5688, 0.0
          %v5716 = vmax.f32 %v5691, 0.0
          %v5717 = vmax.f32 %v5693, 0.0
          %v5718 = vmax.f32 %v5696, 0.0
          %v5719 = vmax.f32 %v5698, 0.0
          %v5720 = vpack.c.bf16 %v5701, %v5700
          %v5721 = vpack.c.bf16 %v5703, %v5702
          %v5722 = vpack.c.bf16 %v5705, %v5704
          %v5723 = vpack.c.bf16 %v5707, %v5706
          %v5724 = vpack.c.bf16 %v5709, %v5708
          %v5725 = vpack.c.bf16 %v5711, %v5710
          %v5726 = vpack.c.bf16 %v5713, %v5712
          %v5727 = vpack.c.bf16 %v5715, %v5714
          %v5728 = vpack.c.bf16 %v5717, %v5716
          %v5729 = vpack.c.bf16 %v5719, %v5718
          %v5730 = vld [vmem:[%s5] sm:$0xf]
          %v5731 = vld [vmem:[%s5 + $0x4] sm:$0xf]
          %v5732 = vld [vmem:[%s5 + $0x8] sm:$0xf]
          %v5733 = vld [vmem:[%s5 + $0xc] sm:$0xf]
          %v5734 = vld [vmem:[%s5 + $0x10] sm:$0xf]
          %v5735 = vld [vmem:[%s5 + $0x14] sm:$0xf]
          %v5736 = vld [vmem:[%s6] sm:$0x1]
          %v5738 = vperm.slane %v5736, 0
          %v5746 = vunpack.c.l.b16 %v5730
          %v5747 = vunpack.c.l.b16 %v5731
          %v5748 = vunpack.c.l.b16 %v5732
          %v5749 = vunpack.c.l.b16 %v5733
          %v5750 = vunpack.c.l.b16 %v5734
          %v5751 = vunpack.c.l.b16 %v5735
          %v5752 = vpack.c.b16 %v5747, %v5746
          %v5753 = vpack.c.b16 %v5749, %v5748
          %v5754 = vpack.c.b16 %v5751, %v5750
          %v5759 = vsel %vm795, %v5720, 0
          %v5762 = vsel %vm795, %v5721, 0
          %v5765 = vsel %vm795, %v5722, 0
          %v5768 = vsel %vm795, %v5723, 0
          %v5771 = vsel %vm795, %v5724, 0
          %v5774 = vsel %vm795, %v5725, 0
          %v5777 = vsel %vm795, %v5726, 0
          %v5780 = vsel %vm795, %v5727, 0
          %v5783 = vsel %vm795, %v5728, 0
          %v5786 = vsel %vm795, %v5729, 0
          %5788 = vmatpush.bf16.msra.mxu0 0
          %5789 = vmatpush.bf16.msra.mxu0 0
          %5790 = vmatpush.bf16.msra.mxu0 0
          %5791 = vmatpush.bf16.msra.mxu0 0
          %5792 = vmatpush.bf16.msra.mxu0 0
          %5793 = vmatpush.bf16.msra.mxu0 %v5754
          %5794 = vmatpush.bf16.msra.mxu0 %v5753
          %5795 = vmatpush.bf16.msra.mxu0 %v5752
          %5796 = vmatmul.bf16.gmra.mxu0 %v5759
          %v5797 = vpop.f32.mrf.mxu0
          %v5798 = vadd.f32 %v5738, %v5797
          %v5799 = vpop.f32.mrf.mxu0
          %v5800 = vadd.f32 %v5738, %v5799
          %5801 = vmatmul.bf16.gmra.mxu0 %v5762
          %v5802 = vpop.f32.mrf.mxu0
          %v5803 = vadd.f32 %v5738, %v5802
          %v5804 = vpop.f32.mrf.mxu0
          %v5805 = vadd.f32 %v5738, %v5804
          %5806 = vmatmul.bf16.gmra.mxu0 %v5765
          %v5807 = vpop.f32.mrf.mxu0
          %v5808 = vadd.f32 %v5738, %v5807
          %v5809 = vpop.f32.mrf.mxu0
          %v5810 = vadd.f32 %v5738, %v5809
          %5811 = vmatmul.bf16.gmra.mxu0 %v5768
          %v5812 = vpop.f32.mrf.mxu0
          %v5813 = vadd.f32 %v5738, %v5812
          %v5814 = vpop.f32.mrf.mxu0
          %v5815 = vadd.f32 %v5738, %v5814
          %5816 = vmatmul.bf16.gmra.mxu0 %v5771
          %v5817 = vpop.f32.mrf.mxu0
          %v5818 = vadd.f32 %v5738, %v5817
          %v5819 = vpop.f32.mrf.mxu0
          %v5820 = vadd.f32 %v5738, %v5819
          %5821 = vmatmul.bf16.gmra.mxu0 %v5774
          %v5822 = vpop.f32.mrf.mxu0
          %v5823 = vadd.f32 %v5738, %v5822
          %v5824 = vpop.f32.mrf.mxu0
          %v5825 = vadd.f32 %v5738, %v5824
          %5826 = vmatmul.bf16.gmra.mxu0 %v5777
          %v5827 = vpop.f32.mrf.mxu0
          %v5828 = vadd.f32 %v5738, %v5827
          %v5829 = vpop.f32.mrf.mxu0
          %v5830 = vadd.f32 %v5738, %v5829
          %5831 = vmatmul.bf16.gmra.mxu0 %v5780
          %v5832 = vpop.f32.mrf.mxu0
          %v5833 = vadd.f32 %v5738, %v5832
          %v5834 = vpop.f32.mrf.mxu0
          %v5835 = vadd.f32 %v5738, %v5834
          %5836 = vmatmul.bf16.gmra.mxu0 %v5783
          %v5837 = vpop.f32.mrf.mxu0
          %v5838 = vadd.f32 %v5738, %v5837
          %v5839 = vpop.f32.mrf.mxu0
          %v5840 = vadd.f32 %v5738, %v5839
          %5841 = vmatmul.bf16.gmra.mxu0 %v5786
          %v5842 = vpop.f32.mrf.mxu0
          %v5843 = vadd.f32 %v5738, %v5842
          %v5844 = vpop.f32.mrf.mxu0
          %v5845 = vadd.f32 %v5738, %v5844
          %5846 = vdwg.mxu0
          %v5847 = vmax.f32 %v5798, 0.0
          %v5848 = vmax.f32 %v5800, 0.0
          %v5849 = vmax.f32 %v5803, 0.0
          %v5850 = vmax.f32 %v5805, 0.0
          %v5851 = vmax.f32 %v5808, 0.0
          %v5852 = vmax.f32 %v5810, 0.0
          %v5853 = vmax.f32 %v5813, 0.0
          %v5854 = vmax.f32 %v5815, 0.0
          %v5855 = vmax.f32 %v5818, 0.0
          %v5856 = vmax.f32 %v5820, 0.0
          %v5857 = vmax.f32 %v5823, 0.0
          %v5858 = vmax.f32 %v5825, 0.0
          %v5859 = vmax.f32 %v5828, 0.0
          %v5860 = vmax.f32 %v5830, 0.0
          %v5861 = vmax.f32 %v5833, 0.0
          %v5862 = vmax.f32 %v5835, 0.0
          %v5863 = vmax.f32 %v5838, 0.0
          %v5864 = vmax.f32 %v5840, 0.0
          %v5865 = vmax.f32 %v5843, 0.0
          %v5866 = vmax.f32 %v5845, 0.0
          %s5867 = scalar_lea.vmem [#allocation2], %s5383
          %v5868 = vld [vmem:[%s5867] sm:$0xff]
          %v5869 = vld [vmem:[%s5867 + $0x8] sm:$0xff]
          %v5870 = vld [vmem:[%s5867 + $0x10] sm:$0xff]
          %v5871 = vld [vmem:[%s5867 + $0x18] sm:$0xff]
          %v5872 = vld [vmem:[%s5867 + $0x20] sm:$0xff]
          %v5873 = vld [vmem:[%s5867 + $0x28] sm:$0xff]
          %v5874 = vld [vmem:[%s5867 + $0x30] sm:$0xff]
          %v5875 = vld [vmem:[%s5867 + $0x38] sm:$0xff]
          %v5876 = vld [vmem:[%s5867 + $0x40] sm:$0xff]
          %v5877 = vld [vmem:[%s5867 + $0x48] sm:$0xff]
          %v5878 = vld [vmem:[%s5867 + $0x50] sm:$0xff]
          %v5879 = vld [vmem:[%s5867 + $0x58] sm:$0xff]
          %v5880 = vld [vmem:[%s5867 + $0x60] sm:$0xff]
          %v5881 = vld [vmem:[%s5867 + $0x68] sm:$0xff]
          %v5882 = vld [vmem:[%s5867 + $0x70] sm:$0xff]
          %v5883 = vld [vmem:[%s5867 + $0x78] sm:$0xff]
          %v5884 = vld [vmem:[%s5867 + $0x80] sm:$0xff]
          %v5885 = vld [vmem:[%s5867 + $0x88] sm:$0xff]
          %v5886 = vld [vmem:[%s5867 + $0x90] sm:$0xff]
          %v5887 = vld [vmem:[%s5867 + $0x98] sm:$0xff]
          %5889 = vset.pattern.permute.xlu0 0
          %5890 = vperm.xlu0 %5889, %v5868
          %v5891 = vpop.permute.xlu0 %5890
          %5894 = vset.pattern.permute.xlu0 0
          %5895 = vperm.xlu0 %5894, %v5869
          %v5896 = vpop.permute.xlu0 %5895
          %5899 = vset.pattern.permute.xlu0 0
          %5900 = vperm.xlu0 %5899, %v5870
          %v5901 = vpop.permute.xlu0 %5900
          %5904 = vset.pattern.permute.xlu0 0
          %5905 = vperm.xlu0 %5904, %v5871
          %v5906 = vpop.permute.xlu0 %5905
          %5909 = vset.pattern.permute.xlu0 0
          %5910 = vperm.xlu0 %5909, %v5872
          %v5911 = vpop.permute.xlu0 %5910
          %5914 = vset.pattern.permute.xlu0 0
          %5915 = vperm.xlu0 %5914, %v5873
          %v5916 = vpop.permute.xlu0 %5915
          %5919 = vset.pattern.permute.xlu0 0
          %5920 = vperm.xlu0 %5919, %v5874
          %v5921 = vpop.permute.xlu0 %5920
          %5924 = vset.pattern.permute.xlu0 0
          %5925 = vperm.xlu0 %5924, %v5875
          %v5926 = vpop.permute.xlu0 %5925
          %5929 = vset.pattern.permute.xlu0 0
          %5930 = vperm.xlu0 %5929, %v5876
          %v5931 = vpop.permute.xlu0 %5930
          %5934 = vset.pattern.permute.xlu0 0
          %5935 = vperm.xlu0 %5934, %v5877
          %v5936 = vpop.permute.xlu0 %5935
          %5939 = vset.pattern.permute.xlu0 0
          %5940 = vperm.xlu0 %5939, %v5878
          %v5941 = vpop.permute.xlu0 %5940
          %5944 = vset.pattern.permute.xlu0 0
          %5945 = vperm.xlu0 %5944, %v5879
          %v5946 = vpop.permute.xlu0 %5945
          %5949 = vset.pattern.permute.xlu0 0
          %5950 = vperm.xlu0 %5949, %v5880
          %v5951 = vpop.permute.xlu0 %5950
          %5954 = vset.pattern.permute.xlu0 0
          %5955 = vperm.xlu0 %5954, %v5881
          %v5956 = vpop.permute.xlu0 %5955
          %5959 = vset.pattern.permute.xlu0 0
          %5960 = vperm.xlu0 %5959, %v5882
          %v5961 = vpop.permute.xlu0 %5960
          %5964 = vset.pattern.permute.xlu0 0
          %5965 = vperm.xlu0 %5964, %v5883
          %v5966 = vpop.permute.xlu0 %5965
          %5969 = vset.pattern.permute.xlu0 0
          %5970 = vperm.xlu0 %5969, %v5884
          %v5971 = vpop.permute.xlu0 %5970
          %5974 = vset.pattern.permute.xlu0 0
          %5975 = vperm.xlu0 %5974, %v5885
          %v5976 = vpop.permute.xlu0 %5975
          %5979 = vset.pattern.permute.xlu0 0
          %5980 = vperm.xlu0 %5979, %v5886
          %v5981 = vpop.permute.xlu0 %5980
          %5984 = vset.pattern.permute.xlu0 0
          %5985 = vperm.xlu0 %5984, %v5887
          %v5986 = vpop.permute.xlu0 %5985
          %v5988 = vmul.f32 %v5847, %v5891
          %v5989 = vmul.f32 %v5848, %v5896
          %v5990 = vmul.f32 %v5849, %v5901
          %v5991 = vmul.f32 %v5850, %v5906
          %v5992 = vmul.f32 %v5851, %v5911
          %v5993 = vmul.f32 %v5852, %v5916
          %v5994 = vmul.f32 %v5853, %v5921
          %v5995 = vmul.f32 %v5854, %v5926
          %v5996 = vmul.f32 %v5855, %v5931
          %v5997 = vmul.f32 %v5856, %v5936
          %v5998 = vmul.f32 %v5857, %v5941
          %v5999 = vmul.f32 %v5858, %v5946
          %v6000 = vmul.f32 %v5859, %v5951
          %v6001 = vmul.f32 %v5860, %v5956
          %v6002 = vmul.f32 %v5861, %v5961
          %v6003 = vmul.f32 %v5862, %v5966
          %v6004 = vmul.f32 %v5863, %v5971
          %v6005 = vmul.f32 %v5864, %v5976
          %v6006 = vmul.f32 %v5865, %v5981
          %v6007 = vmul.f32 %v5866, %v5986
          %s6008 = sadd.s32 %s5383, 5640
          %s6009 = scalar_lea.vmem [#allocation3], %s6008
          %6010 = vst.msk [vmem:[%s6009] sm:$0xff] %vm795, %v5988
          %6011 = vst.msk [vmem:[%s6009 + $0x8] sm:$0xff] %vm795, %v5989
          %6012 = vst.msk [vmem:[%s6009 + $0x10] sm:$0xff] %vm795, %v5990
          %6013 = vst.msk [vmem:[%s6009 + $0x18] sm:$0xff] %vm795, %v5991
          %6014 = vst.msk [vmem:[%s6009 + $0x20] sm:$0xff] %vm795, %v5992
          %6015 = vst.msk [vmem:[%s6009 + $0x28] sm:$0xff] %vm795, %v5993
          %6016 = vst.msk [vmem:[%s6009 + $0x30] sm:$0xff] %vm795, %v5994
          %6017 = vst.msk [vmem:[%s6009 + $0x38] sm:$0xff] %vm795, %v5995
          %6018 = vst.msk [vmem:[%s6009 + $0x40] sm:$0xff] %vm795, %v5996
          %6019 = vst.msk [vmem:[%s6009 + $0x48] sm:$0xff] %vm795, %v5997
          %6020 = vst.msk [vmem:[%s6009 + $0x50] sm:$0xff] %vm795, %v5998
          %6021 = vst.msk [vmem:[%s6009 + $0x58] sm:$0xff] %vm795, %v5999
          %6022 = vst.msk [vmem:[%s6009 + $0x60] sm:$0xff] %vm795, %v6000
          %6023 = vst.msk [vmem:[%s6009 + $0x68] sm:$0xff] %vm795, %v6001
          %6024 = vst.msk [vmem:[%s6009 + $0x70] sm:$0xff] %vm795, %v6002
          %6025 = vst.msk [vmem:[%s6009 + $0x78] sm:$0xff] %vm795, %v6003
          %6026 = vst.msk [vmem:[%s6009 + $0x80] sm:$0xff] %vm795, %v6004
          %6027 = vst.msk [vmem:[%s6009 + $0x88] sm:$0xff] %vm795, %v6005
          %6028 = vst.msk [vmem:[%s6009 + $0x90] sm:$0xff] %vm795, %v6006
          %6029 = vst.msk [vmem:[%s6009 + $0x98] sm:$0xff] %vm795, %v6007
        $region157: #{danet_forward.1} parent=95 // loop_footer
          %s5382 = sadd.s32 1, %s5378
        $region158: #{danet_forward.1} parent=95 // loop_footer_branch
          %5377 = sbr.rel target = $region154
        $region159: #{danet_forward.1} parent=95 // loop_exit
          _
        loop: start=0, step=1, limit=40
        $region160: #{danet_forward.1} parent=95 // loop_pre_header
          _
        $region161: #{danet_forward.1} parent=95 // loop_header
          %s6031 = sphi 0, %s6035
          %p6032 = scmp.ge.s32.totalorder %s6031, 40
        $region162: #{danet_forward.1} parent=95 // loop_header_branch
          %6034 = sbr.rel (%p6032) target = $region166
        $region163: #{danet_forward.1} parent=95 // loop_body
          %s6036 = smul.u32 %s6031, 160
          %s6037 = sadd.s32 %s6036, 7
          %s6038 = scalar_lea.vmem [#allocation3], %s6037
          %v6039 = vld [vmem:[%s6038] sm:$0xff]
          %v6040 = vld [vmem:[%s6038 + $0x8] sm:$0xff]
          %v6041 = vld [vmem:[%s6038 + $0x10] sm:$0xff]
          %v6042 = vld [vmem:[%s6038 + $0x18] sm:$0xff]
          %v6043 = vld [vmem:[%s6038 + $0x20] sm:$0xff]
          %v6044 = vld [vmem:[%s6038 + $0x28] sm:$0xff]
          %v6045 = vld [vmem:[%s6038 + $0x30] sm:$0xff]
          %v6046 = vld [vmem:[%s6038 + $0x38] sm:$0xff]
          %v6047 = vld [vmem:[%s6038 + $0x40] sm:$0xff]
          %v6048 = vld [vmem:[%s6038 + $0x48] sm:$0xff]
          %v6049 = vld [vmem:[%s6038 + $0x50] sm:$0xff]
          %v6050 = vld [vmem:[%s6038 + $0x58] sm:$0xff]
          %v6051 = vld [vmem:[%s6038 + $0x60] sm:$0xff]
          %v6052 = vld [vmem:[%s6038 + $0x68] sm:$0xff]
          %v6053 = vld [vmem:[%s6038 + $0x70] sm:$0xff]
          %v6054 = vld [vmem:[%s6038 + $0x78] sm:$0xff]
          %v6055 = vld [vmem:[%s6038 + $0x80] sm:$0xff]
          %v6056 = vld [vmem:[%s6038 + $0x88] sm:$0xff]
          %v6057 = vld [vmem:[%s6038 + $0x90] sm:$0xff]
          %v6058 = vld [vmem:[%s6038 + $0x98] sm:$0xff]
          %v6059 = vpack.c.bf16 %v6040, %v6039
          %v6060 = vpack.c.bf16 %v6042, %v6041
          %v6061 = vpack.c.bf16 %v6044, %v6043
          %v6062 = vpack.c.bf16 %v6046, %v6045
          %v6063 = vpack.c.bf16 %v6048, %v6047
          %v6064 = vpack.c.bf16 %v6050, %v6049
          %v6065 = vpack.c.bf16 %v6052, %v6051
          %v6066 = vpack.c.bf16 %v6054, %v6053
          %v6067 = vpack.c.bf16 %v6056, %v6055
          %v6068 = vpack.c.bf16 %v6058, %v6057
          %v6069 = vld [vmem:[%s7] sm:$0xf]
          %v6070 = vld [vmem:[%s7 + $0x4] sm:$0xf]
          %v6071 = vld [vmem:[%s7 + $0x8] sm:$0xf]
          %v6072 = vld [vmem:[%s7 + $0xc] sm:$0xf]
          %v6073 = vld [vmem:[%s7 + $0x10] sm:$0xf]
          %v6074 = vld [vmem:[%s7 + $0x14] sm:$0xf]
          %s6075 = sadd.s32 %s6036, 8
          %s6076 = scalar_lea.vmem [#allocation3], %s6075
          %v6077 = vld [vmem:[%s6076] sm:$0xff]
          %v6078 = vld [vmem:[%s6076 + $0x8] sm:$0xff]
          %v6079 = vld [vmem:[%s6076 + $0x10] sm:$0xff]
          %v6080 = vld [vmem:[%s6076 + $0x18] sm:$0xff]
          %v6081 = vld [vmem:[%s6076 + $0x20] sm:$0xff]
          %v6082 = vld [vmem:[%s6076 + $0x28] sm:$0xff]
          %v6083 = vld [vmem:[%s6076 + $0x30] sm:$0xff]
          %v6084 = vld [vmem:[%s6076 + $0x38] sm:$0xff]
          %v6085 = vld [vmem:[%s6076 + $0x40] sm:$0xff]
          %v6086 = vld [vmem:[%s6076 + $0x48] sm:$0xff]
          %v6087 = vld [vmem:[%s6076 + $0x50] sm:$0xff]
          %v6088 = vld [vmem:[%s6076 + $0x58] sm:$0xff]
          %v6089 = vld [vmem:[%s6076 + $0x60] sm:$0xff]
          %v6090 = vld [vmem:[%s6076 + $0x68] sm:$0xff]
          %v6091 = vld [vmem:[%s6076 + $0x70] sm:$0xff]
          %v6092 = vld [vmem:[%s6076 + $0x78] sm:$0xff]
          %v6093 = vld [vmem:[%s6076 + $0x80] sm:$0xff]
          %v6094 = vld [vmem:[%s6076 + $0x88] sm:$0xff]
          %v6095 = vld [vmem:[%s6076 + $0x90] sm:$0xff]
          %v6096 = vld [vmem:[%s6076 + $0x98] sm:$0xff]
          %v6097 = vpack.c.bf16 %v6078, %v6077
          %v6098 = vpack.c.bf16 %v6080, %v6079
          %v6099 = vpack.c.bf16 %v6082, %v6081
          %v6100 = vpack.c.bf16 %v6084, %v6083
          %v6101 = vpack.c.bf16 %v6086, %v6085
          %v6102 = vpack.c.bf16 %v6088, %v6087
          %v6103 = vpack.c.bf16 %v6090, %v6089
          %v6104 = vpack.c.bf16 %v6092, %v6091
          %v6105 = vpack.c.bf16 %v6094, %v6093
          %v6106 = vpack.c.bf16 %v6096, %v6095
          %v6107 = vld [vmem:[%s7 + $0x18] sm:$0xf]
          %v6108 = vld [vmem:[%s7 + $0x1c] sm:$0xf]
          %v6109 = vld [vmem:[%s7 + $0x20] sm:$0xf]
          %v6110 = vld [vmem:[%s7 + $0x24] sm:$0xf]
          %v6111 = vld [vmem:[%s7 + $0x28] sm:$0xf]
          %v6112 = vld [vmem:[%s7 + $0x2c] sm:$0xf]
          %v6119 = vunpack.c.l.b16 %v6107
          %v6120 = vunpack.c.l.b16 %v6108
          %v6121 = vunpack.c.l.b16 %v6109
          %v6122 = vunpack.c.l.b16 %v6110
          %v6123 = vunpack.c.l.b16 %v6111
          %v6124 = vunpack.c.l.b16 %v6112
          %v6125 = vpack.c.b16 %v6120, %v6119
          %v6126 = vpack.c.b16 %v6122, %v6121
          %v6127 = vpack.c.b16 %v6124, %v6123
          %v6132 = vsel %vm795, %v6097, 0
          %v6135 = vsel %vm795, %v6098, 0
          %v6138 = vsel %vm795, %v6099, 0
          %v6141 = vsel %vm795, %v6100, 0
          %v6144 = vsel %vm795, %v6101, 0
          %v6147 = vsel %vm795, %v6102, 0
          %v6150 = vsel %vm795, %v6103, 0
          %v6153 = vsel %vm795, %v6104, 0
          %v6156 = vsel %vm795, %v6105, 0
          %v6159 = vsel %vm795, %v6106, 0
          %6161 = vmatpush.bf16.msra.mxu0 0
          %6162 = vmatpush.bf16.msra.mxu0 0
          %6163 = vmatpush.bf16.msra.mxu0 0
          %6164 = vmatpush.bf16.msra.mxu0 0
          %6165 = vmatpush.bf16.msra.mxu0 0
          %6166 = vmatpush.bf16.msra.mxu0 %v6127
          %6167 = vmatpush.bf16.msra.mxu0 %v6126
          %6168 = vmatpush.bf16.msra.mxu0 %v6125
          %6169 = vmatmul.bf16.gmra.mxu0 %v6132
          %v6170 = vpop.f32.mrf.mxu0
          %v6171 = vadd.f32 0.0, %v6170
          %v6172 = vpop.f32.mrf.mxu0
          %v6173 = vadd.f32 0.0, %v6172
          %6174 = vmatmul.bf16.gmra.mxu0 %v6135
          %v6175 = vpop.f32.mrf.mxu0
          %v6176 = vadd.f32 0.0, %v6175
          %v6177 = vpop.f32.mrf.mxu0
          %v6178 = vadd.f32 0.0, %v6177
          %6179 = vmatmul.bf16.gmra.mxu0 %v6138
          %v6180 = vpop.f32.mrf.mxu0
          %v6181 = vadd.f32 0.0, %v6180
          %v6182 = vpop.f32.mrf.mxu0
          %v6183 = vadd.f32 0.0, %v6182
          %6184 = vmatmul.bf16.gmra.mxu0 %v6141
          %v6185 = vpop.f32.mrf.mxu0
          %v6186 = vadd.f32 0.0, %v6185
          %v6187 = vpop.f32.mrf.mxu0
          %v6188 = vadd.f32 0.0, %v6187
          %6189 = vmatmul.bf16.gmra.mxu0 %v6144
          %v6190 = vpop.f32.mrf.mxu0
          %v6191 = vadd.f32 0.0, %v6190
          %v6192 = vpop.f32.mrf.mxu0
          %v6193 = vadd.f32 0.0, %v6192
          %6194 = vmatmul.bf16.gmra.mxu0 %v6147
          %v6195 = vpop.f32.mrf.mxu0
          %v6196 = vadd.f32 0.0, %v6195
          %v6197 = vpop.f32.mrf.mxu0
          %v6198 = vadd.f32 0.0, %v6197
          %6199 = vmatmul.bf16.gmra.mxu0 %v6150
          %v6200 = vpop.f32.mrf.mxu0
          %v6201 = vadd.f32 0.0, %v6200
          %v6202 = vpop.f32.mrf.mxu0
          %v6203 = vadd.f32 0.0, %v6202
          %6204 = vmatmul.bf16.gmra.mxu0 %v6153
          %v6205 = vpop.f32.mrf.mxu0
          %v6206 = vadd.f32 0.0, %v6205
          %v6207 = vpop.f32.mrf.mxu0
          %v6208 = vadd.f32 0.0, %v6207
          %6209 = vmatmul.bf16.gmra.mxu0 %v6156
          %v6210 = vpop.f32.mrf.mxu0
          %v6211 = vadd.f32 0.0, %v6210
          %v6212 = vpop.f32.mrf.mxu0
          %v6213 = vadd.f32 0.0, %v6212
          %6214 = vmatmul.bf16.gmra.mxu0 %v6159
          %v6215 = vpop.f32.mrf.mxu0
          %v6216 = vadd.f32 0.0, %v6215
          %v6217 = vpop.f32.mrf.mxu0
          %v6218 = vadd.f32 0.0, %v6217
          %6219 = vdwg.mxu0
          %v6226 = vunpack.c.l.b16 %v6069
          %v6227 = vunpack.c.l.b16 %v6070
          %v6228 = vunpack.c.l.b16 %v6071
          %v6229 = vunpack.c.l.b16 %v6072
          %v6230 = vunpack.c.l.b16 %v6073
          %v6231 = vunpack.c.l.b16 %v6074
          %v6232 = vpack.c.b16 %v6227, %v6226
          %v6233 = vpack.c.b16 %v6229, %v6228
          %v6234 = vpack.c.b16 %v6231, %v6230
          %v6239 = vsel %vm795, %v6059, 0
          %v6242 = vsel %vm795, %v6060, 0
          %v6245 = vsel %vm795, %v6061, 0
          %v6248 = vsel %vm795, %v6062, 0
          %v6251 = vsel %vm795, %v6063, 0
          %v6254 = vsel %vm795, %v6064, 0
          %v6257 = vsel %vm795, %v6065, 0
          %v6260 = vsel %vm795, %v6066, 0
          %v6263 = vsel %vm795, %v6067, 0
          %v6266 = vsel %vm795, %v6068, 0
          %6268 = vmatpush.bf16.msra.mxu0 0
          %6269 = vmatpush.bf16.msra.mxu0 0
          %6270 = vmatpush.bf16.msra.mxu0 0
          %6271 = vmatpush.bf16.msra.mxu0 0
          %6272 = vmatpush.bf16.msra.mxu0 0
          %6273 = vmatpush.bf16.msra.mxu0 %v6234
          %6274 = vmatpush.bf16.msra.mxu0 %v6233
          %6275 = vmatpush.bf16.msra.mxu0 %v6232
          %6276 = vmatmul.bf16.gmra.mxu0 %v6239
          %v6277 = vpop.f32.mrf.mxu0
          %v6278 = vadd.f32 %v6171, %v6277
          %v6279 = vpop.f32.mrf.mxu0
          %v6280 = vadd.f32 %v6173, %v6279
          %6281 = vmatmul.bf16.gmra.mxu0 %v6242
          %v6282 = vpop.f32.mrf.mxu0
          %v6283 = vadd.f32 %v6176, %v6282
          %v6284 = vpop.f32.mrf.mxu0
          %v6285 = vadd.f32 %v6178, %v6284
          %6286 = vmatmul.bf16.gmra.mxu0 %v6245
          %v6287 = vpop.f32.mrf.mxu0
          %v6288 = vadd.f32 %v6181, %v6287
          %v6289 = vpop.f32.mrf.mxu0
          %v6290 = vadd.f32 %v6183, %v6289
          %6291 = vmatmul.bf16.gmra.mxu0 %v6248
          %v6292 = vpop.f32.mrf.mxu0
          %v6293 = vadd.f32 %v6186, %v6292
          %v6294 = vpop.f32.mrf.mxu0
          %v6295 = vadd.f32 %v6188, %v6294
          %6296 = vmatmul.bf16.gmra.mxu0 %v6251
          %v6297 = vpop.f32.mrf.mxu0
          %v6298 = vadd.f32 %v6191, %v6297
          %v6299 = vpop.f32.mrf.mxu0
          %v6300 = vadd.f32 %v6193, %v6299
          %6301 = vmatmul.bf16.gmra.mxu0 %v6254
          %v6302 = vpop.f32.mrf.mxu0
          %v6303 = vadd.f32 %v6196, %v6302
          %v6304 = vpop.f32.mrf.mxu0
          %v6305 = vadd.f32 %v6198, %v6304
          %6306 = vmatmul.bf16.gmra.mxu0 %v6257
          %v6307 = vpop.f32.mrf.mxu0
          %v6308 = vadd.f32 %v6201, %v6307
          %v6309 = vpop.f32.mrf.mxu0
          %v6310 = vadd.f32 %v6203, %v6309
          %6311 = vmatmul.bf16.gmra.mxu0 %v6260
          %v6312 = vpop.f32.mrf.mxu0
          %v6313 = vadd.f32 %v6206, %v6312
          %v6314 = vpop.f32.mrf.mxu0
          %v6315 = vadd.f32 %v6208, %v6314
          %6316 = vmatmul.bf16.gmra.mxu0 %v6263
          %v6317 = vpop.f32.mrf.mxu0
          %v6318 = vadd.f32 %v6211, %v6317
          %v6319 = vpop.f32.mrf.mxu0
          %v6320 = vadd.f32 %v6213, %v6319
          %6321 = vmatmul.bf16.gmra.mxu0 %v6266
          %v6322 = vpop.f32.mrf.mxu0
          %v6323 = vadd.f32 %v6216, %v6322
          %v6324 = vpop.f32.mrf.mxu0
          %v6325 = vadd.f32 %v6218, %v6324
          %6326 = vdwg.mxu0
          %s6327 = sadd.s32 %s6036, 9
          %s6328 = scalar_lea.vmem [#allocation3], %s6327
          %v6329 = vld [vmem:[%s6328] sm:$0xff]
          %v6330 = vld [vmem:[%s6328 + $0x8] sm:$0xff]
          %v6331 = vld [vmem:[%s6328 + $0x10] sm:$0xff]
          %v6332 = vld [vmem:[%s6328 + $0x18] sm:$0xff]
          %v6333 = vld [vmem:[%s6328 + $0x20] sm:$0xff]
          %v6334 = vld [vmem:[%s6328 + $0x28] sm:$0xff]
          %v6335 = vld [vmem:[%s6328 + $0x30] sm:$0xff]
          %v6336 = vld [vmem:[%s6328 + $0x38] sm:$0xff]
          %v6337 = vld [vmem:[%s6328 + $0x40] sm:$0xff]
          %v6338 = vld [vmem:[%s6328 + $0x48] sm:$0xff]
          %v6339 = vld [vmem:[%s6328 + $0x50] sm:$0xff]
          %v6340 = vld [vmem:[%s6328 + $0x58] sm:$0xff]
          %v6341 = vld [vmem:[%s6328 + $0x60] sm:$0xff]
          %v6342 = vld [vmem:[%s6328 + $0x68] sm:$0xff]
          %v6343 = vld [vmem:[%s6328 + $0x70] sm:$0xff]
          %v6344 = vld [vmem:[%s6328 + $0x78] sm:$0xff]
          %v6345 = vld [vmem:[%s6328 + $0x80] sm:$0xff]
          %v6346 = vld [vmem:[%s6328 + $0x88] sm:$0xff]
          %v6347 = vld [vmem:[%s6328 + $0x90] sm:$0xff]
          %v6348 = vld [vmem:[%s6328 + $0x98] sm:$0xff]
          %v6349 = vpack.c.bf16 %v6330, %v6329
          %v6350 = vpack.c.bf16 %v6332, %v6331
          %v6351 = vpack.c.bf16 %v6334, %v6333
          %v6352 = vpack.c.bf16 %v6336, %v6335
          %v6353 = vpack.c.bf16 %v6338, %v6337
          %v6354 = vpack.c.bf16 %v6340, %v6339
          %v6355 = vpack.c.bf16 %v6342, %v6341
          %v6356 = vpack.c.bf16 %v6344, %v6343
          %v6357 = vpack.c.bf16 %v6346, %v6345
          %v6358 = vpack.c.bf16 %v6348, %v6347
          %v6359 = vld [vmem:[%s7 + $0x30] sm:$0xf]
          %v6360 = vld [vmem:[%s7 + $0x34] sm:$0xf]
          %v6361 = vld [vmem:[%s7 + $0x38] sm:$0xf]
          %v6362 = vld [vmem:[%s7 + $0x3c] sm:$0xf]
          %v6363 = vld [vmem:[%s7 + $0x40] sm:$0xf]
          %v6364 = vld [vmem:[%s7 + $0x44] sm:$0xf]
          %v6371 = vunpack.c.l.b16 %v6359
          %v6372 = vunpack.c.l.b16 %v6360
          %v6373 = vunpack.c.l.b16 %v6361
          %v6374 = vunpack.c.l.b16 %v6362
          %v6375 = vunpack.c.l.b16 %v6363
          %v6376 = vunpack.c.l.b16 %v6364
          %v6377 = vpack.c.b16 %v6372, %v6371
          %v6378 = vpack.c.b16 %v6374, %v6373
          %v6379 = vpack.c.b16 %v6376, %v6375
          %v6384 = vsel %vm795, %v6349, 0
          %v6387 = vsel %vm795, %v6350, 0
          %v6390 = vsel %vm795, %v6351, 0
          %v6393 = vsel %vm795, %v6352, 0
          %v6396 = vsel %vm795, %v6353, 0
          %v6399 = vsel %vm795, %v6354, 0
          %v6402 = vsel %vm795, %v6355, 0
          %v6405 = vsel %vm795, %v6356, 0
          %v6408 = vsel %vm795, %v6357, 0
          %v6411 = vsel %vm795, %v6358, 0
          %6413 = vmatpush.bf16.msra.mxu0 0
          %6414 = vmatpush.bf16.msra.mxu0 0
          %6415 = vmatpush.bf16.msra.mxu0 0
          %6416 = vmatpush.bf16.msra.mxu0 0
          %6417 = vmatpush.bf16.msra.mxu0 0
          %6418 = vmatpush.bf16.msra.mxu0 %v6379
          %6419 = vmatpush.bf16.msra.mxu0 %v6378
          %6420 = vmatpush.bf16.msra.mxu0 %v6377
          %6421 = vmatmul.bf16.gmra.mxu0 %v6384
          %v6422 = vpop.f32.mrf.mxu0
          %v6423 = vadd.f32 0.0, %v6422
          %v6424 = vpop.f32.mrf.mxu0
          %v6425 = vadd.f32 0.0, %v6424
          %6426 = vmatmul.bf16.gmra.mxu0 %v6387
          %v6427 = vpop.f32.mrf.mxu0
          %v6428 = vadd.f32 0.0, %v6427
          %v6429 = vpop.f32.mrf.mxu0
          %v6430 = vadd.f32 0.0, %v6429
          %6431 = vmatmul.bf16.gmra.mxu0 %v6390
          %v6432 = vpop.f32.mrf.mxu0
          %v6433 = vadd.f32 0.0, %v6432
          %v6434 = vpop.f32.mrf.mxu0
          %v6435 = vadd.f32 0.0, %v6434
          %6436 = vmatmul.bf16.gmra.mxu0 %v6393
          %v6437 = vpop.f32.mrf.mxu0
          %v6438 = vadd.f32 0.0, %v6437
          %v6439 = vpop.f32.mrf.mxu0
          %v6440 = vadd.f32 0.0, %v6439
          %6441 = vmatmul.bf16.gmra.mxu0 %v6396
          %v6442 = vpop.f32.mrf.mxu0
          %v6443 = vadd.f32 0.0, %v6442
          %v6444 = vpop.f32.mrf.mxu0
          %v6445 = vadd.f32 0.0, %v6444
          %6446 = vmatmul.bf16.gmra.mxu0 %v6399
          %v6447 = vpop.f32.mrf.mxu0
          %v6448 = vadd.f32 0.0, %v6447
          %v6449 = vpop.f32.mrf.mxu0
          %v6450 = vadd.f32 0.0, %v6449
          %6451 = vmatmul.bf16.gmra.mxu0 %v6402
          %v6452 = vpop.f32.mrf.mxu0
          %v6453 = vadd.f32 0.0, %v6452
          %v6454 = vpop.f32.mrf.mxu0
          %v6455 = vadd.f32 0.0, %v6454
          %6456 = vmatmul.bf16.gmra.mxu0 %v6405
          %v6457 = vpop.f32.mrf.mxu0
          %v6458 = vadd.f32 0.0, %v6457
          %v6459 = vpop.f32.mrf.mxu0
          %v6460 = vadd.f32 0.0, %v6459
          %6461 = vmatmul.bf16.gmra.mxu0 %v6408
          %v6462 = vpop.f32.mrf.mxu0
          %v6463 = vadd.f32 0.0, %v6462
          %v6464 = vpop.f32.mrf.mxu0
          %v6465 = vadd.f32 0.0, %v6464
          %6466 = vmatmul.bf16.gmra.mxu0 %v6411
          %v6467 = vpop.f32.mrf.mxu0
          %v6468 = vadd.f32 0.0, %v6467
          %v6469 = vpop.f32.mrf.mxu0
          %v6470 = vadd.f32 0.0, %v6469
          %6471 = vdwg.mxu0
          %v6472 = vadd.f32 %v6278, %v6423
          %v6473 = vadd.f32 %v6280, %v6425
          %v6474 = vadd.f32 %v6283, %v6428
          %v6475 = vadd.f32 %v6285, %v6430
          %v6476 = vadd.f32 %v6288, %v6433
          %v6477 = vadd.f32 %v6290, %v6435
          %v6478 = vadd.f32 %v6293, %v6438
          %v6479 = vadd.f32 %v6295, %v6440
          %v6480 = vadd.f32 %v6298, %v6443
          %v6481 = vadd.f32 %v6300, %v6445
          %v6482 = vadd.f32 %v6303, %v6448
          %v6483 = vadd.f32 %v6305, %v6450
          %v6484 = vadd.f32 %v6308, %v6453
          %v6485 = vadd.f32 %v6310, %v6455
          %v6486 = vadd.f32 %v6313, %v6458
          %v6487 = vadd.f32 %v6315, %v6460
          %v6488 = vadd.f32 %v6318, %v6463
          %v6489 = vadd.f32 %v6320, %v6465
          %v6490 = vadd.f32 %v6323, %v6468
          %v6491 = vadd.f32 %v6325, %v6470
          %s6492 = sadd.s32 %s6036, 39
          %s6493 = scalar_lea.vmem [#allocation3], %s6492
          %v6494 = vld [vmem:[%s6493] sm:$0xff]
          %v6495 = vld [vmem:[%s6493 + $0x8] sm:$0xff]
          %v6496 = vld [vmem:[%s6493 + $0x10] sm:$0xff]
          %v6497 = vld [vmem:[%s6493 + $0x18] sm:$0xff]
          %v6498 = vld [vmem:[%s6493 + $0x20] sm:$0xff]
          %v6499 = vld [vmem:[%s6493 + $0x28] sm:$0xff]
          %v6500 = vld [vmem:[%s6493 + $0x30] sm:$0xff]
          %v6501 = vld [vmem:[%s6493 + $0x38] sm:$0xff]
          %v6502 = vld [vmem:[%s6493 + $0x40] sm:$0xff]
          %v6503 = vld [vmem:[%s6493 + $0x48] sm:$0xff]
          %v6504 = vld [vmem:[%s6493 + $0x50] sm:$0xff]
          %v6505 = vld [vmem:[%s6493 + $0x58] sm:$0xff]
          %v6506 = vld [vmem:[%s6493 + $0x60] sm:$0xff]
          %v6507 = vld [vmem:[%s6493 + $0x68] sm:$0xff]
          %v6508 = vld [vmem:[%s6493 + $0x70] sm:$0xff]
          %v6509 = vld [vmem:[%s6493 + $0x78] sm:$0xff]
          %v6510 = vld [vmem:[%s6493 + $0x80] sm:$0xff]
          %v6511 = vld [vmem:[%s6493 + $0x88] sm:$0xff]
          %v6512 = vld [vmem:[%s6493 + $0x90] sm:$0xff]
          %v6513 = vld [vmem:[%s6493 + $0x98] sm:$0xff]
          %v6514 = vpack.c.bf16 %v6495, %v6494
          %v6515 = vpack.c.bf16 %v6497, %v6496
          %v6516 = vpack.c.bf16 %v6499, %v6498
          %v6517 = vpack.c.bf16 %v6501, %v6500
          %v6518 = vpack.c.bf16 %v6503, %v6502
          %v6519 = vpack.c.bf16 %v6505, %v6504
          %v6520 = vpack.c.bf16 %v6507, %v6506
          %v6521 = vpack.c.bf16 %v6509, %v6508
          %v6522 = vpack.c.bf16 %v6511, %v6510
          %v6523 = vpack.c.bf16 %v6513, %v6512
          %v6524 = vld [vmem:[%s7 + $0x48] sm:$0xf]
          %v6525 = vld [vmem:[%s7 + $0x4c] sm:$0xf]
          %v6526 = vld [vmem:[%s7 + $0x50] sm:$0xf]
          %v6527 = vld [vmem:[%s7 + $0x54] sm:$0xf]
          %v6528 = vld [vmem:[%s7 + $0x58] sm:$0xf]
          %v6529 = vld [vmem:[%s7 + $0x5c] sm:$0xf]
          %v6536 = vunpack.c.l.b16 %v6524
          %v6537 = vunpack.c.l.b16 %v6525
          %v6538 = vunpack.c.l.b16 %v6526
          %v6539 = vunpack.c.l.b16 %v6527
          %v6540 = vunpack.c.l.b16 %v6528
          %v6541 = vunpack.c.l.b16 %v6529
          %v6542 = vpack.c.b16 %v6537, %v6536
          %v6543 = vpack.c.b16 %v6539, %v6538
          %v6544 = vpack.c.b16 %v6541, %v6540
          %v6549 = vsel %vm795, %v6514, 0
          %v6552 = vsel %vm795, %v6515, 0
          %v6555 = vsel %vm795, %v6516, 0
          %v6558 = vsel %vm795, %v6517, 0
          %v6561 = vsel %vm795, %v6518, 0
          %v6564 = vsel %vm795, %v6519, 0
          %v6567 = vsel %vm795, %v6520, 0
          %v6570 = vsel %vm795, %v6521, 0
          %v6573 = vsel %vm795, %v6522, 0
          %v6576 = vsel %vm795, %v6523, 0
          %6578 = vmatpush.bf16.msra.mxu0 0
          %6579 = vmatpush.bf16.msra.mxu0 0
          %6580 = vmatpush.bf16.msra.mxu0 0
          %6581 = vmatpush.bf16.msra.mxu0 0
          %6582 = vmatpush.bf16.msra.mxu0 0
          %6583 = vmatpush.bf16.msra.mxu0 %v6544
          %6584 = vmatpush.bf16.msra.mxu0 %v6543
          %6585 = vmatpush.bf16.msra.mxu0 %v6542
          %6586 = vmatmul.bf16.gmra.mxu0 %v6549
          %v6587 = vpop.f32.mrf.mxu0
          %v6588 = vadd.f32 0.0, %v6587
          %v6589 = vpop.f32.mrf.mxu0
          %v6590 = vadd.f32 0.0, %v6589
          %6591 = vmatmul.bf16.gmra.mxu0 %v6552
          %v6592 = vpop.f32.mrf.mxu0
          %v6593 = vadd.f32 0.0, %v6592
          %v6594 = vpop.f32.mrf.mxu0
          %v6595 = vadd.f32 0.0, %v6594
          %6596 = vmatmul.bf16.gmra.mxu0 %v6555
          %v6597 = vpop.f32.mrf.mxu0
          %v6598 = vadd.f32 0.0, %v6597
          %v6599 = vpop.f32.mrf.mxu0
          %v6600 = vadd.f32 0.0, %v6599
          %6601 = vmatmul.bf16.gmra.mxu0 %v6558
          %v6602 = vpop.f32.mrf.mxu0
          %v6603 = vadd.f32 0.0, %v6602
          %v6604 = vpop.f32.mrf.mxu0
          %v6605 = vadd.f32 0.0, %v6604
          %6606 = vmatmul.bf16.gmra.mxu0 %v6561
          %v6607 = vpop.f32.mrf.mxu0
          %v6608 = vadd.f32 0.0, %v6607
          %v6609 = vpop.f32.mrf.mxu0
          %v6610 = vadd.f32 0.0, %v6609
          %6611 = vmatmul.bf16.gmra.mxu0 %v6564
          %v6612 = vpop.f32.mrf.mxu0
          %v6613 = vadd.f32 0.0, %v6612
          %v6614 = vpop.f32.mrf.mxu0
          %v6615 = vadd.f32 0.0, %v6614
          %6616 = vmatmul.bf16.gmra.mxu0 %v6567
          %v6617 = vpop.f32.mrf.mxu0
          %v6618 = vadd.f32 0.0, %v6617
          %v6619 = vpop.f32.mrf.mxu0
          %v6620 = vadd.f32 0.0, %v6619
          %6621 = vmatmul.bf16.gmra.mxu0 %v6570
          %v6622 = vpop.f32.mrf.mxu0
          %v6623 = vadd.f32 0.0, %v6622
          %v6624 = vpop.f32.mrf.mxu0
          %v6625 = vadd.f32 0.0, %v6624
          %6626 = vmatmul.bf16.gmra.mxu0 %v6573
          %v6627 = vpop.f32.mrf.mxu0
          %v6628 = vadd.f32 0.0, %v6627
          %v6629 = vpop.f32.mrf.mxu0
          %v6630 = vadd.f32 0.0, %v6629
          %6631 = vmatmul.bf16.gmra.mxu0 %v6576
          %v6632 = vpop.f32.mrf.mxu0
          %v6633 = vadd.f32 0.0, %v6632
          %v6634 = vpop.f32.mrf.mxu0
          %v6635 = vadd.f32 0.0, %v6634
          %6636 = vdwg.mxu0
          %v6637 = vadd.f32 %v6472, %v6588
          %v6638 = vadd.f32 %v6473, %v6590
          %v6639 = vadd.f32 %v6474, %v6593
          %v6640 = vadd.f32 %v6475, %v6595
          %v6641 = vadd.f32 %v6476, %v6598
          %v6642 = vadd.f32 %v6477, %v6600
          %v6643 = vadd.f32 %v6478, %v6603
          %v6644 = vadd.f32 %v6479, %v6605
          %v6645 = vadd.f32 %v6480, %v6608
          %v6646 = vadd.f32 %v6481, %v6610
          %v6647 = vadd.f32 %v6482, %v6613
          %v6648 = vadd.f32 %v6483, %v6615
          %v6649 = vadd.f32 %v6484, %v6618
          %v6650 = vadd.f32 %v6485, %v6620
          %v6651 = vadd.f32 %v6486, %v6623
          %v6652 = vadd.f32 %v6487, %v6625
          %v6653 = vadd.f32 %v6488, %v6628
          %v6654 = vadd.f32 %v6489, %v6630
          %v6655 = vadd.f32 %v6490, %v6633
          %v6656 = vadd.f32 %v6491, %v6635
          %s6657 = sadd.s32 %s6036, 40
          %s6658 = scalar_lea.vmem [#allocation3], %s6657
          %v6659 = vld [vmem:[%s6658] sm:$0xff]
          %v6660 = vld [vmem:[%s6658 + $0x8] sm:$0xff]
          %v6661 = vld [vmem:[%s6658 + $0x10] sm:$0xff]
          %v6662 = vld [vmem:[%s6658 + $0x18] sm:$0xff]
          %v6663 = vld [vmem:[%s6658 + $0x20] sm:$0xff]
          %v6664 = vld [vmem:[%s6658 + $0x28] sm:$0xff]
          %v6665 = vld [vmem:[%s6658 + $0x30] sm:$0xff]
          %v6666 = vld [vmem:[%s6658 + $0x38] sm:$0xff]
          %v6667 = vld [vmem:[%s6658 + $0x40] sm:$0xff]
          %v6668 = vld [vmem:[%s6658 + $0x48] sm:$0xff]
          %v6669 = vld [vmem:[%s6658 + $0x50] sm:$0xff]
          %v6670 = vld [vmem:[%s6658 + $0x58] sm:$0xff]
          %v6671 = vld [vmem:[%s6658 + $0x60] sm:$0xff]
          %v6672 = vld [vmem:[%s6658 + $0x68] sm:$0xff]
          %v6673 = vld [vmem:[%s6658 + $0x70] sm:$0xff]
          %v6674 = vld [vmem:[%s6658 + $0x78] sm:$0xff]
          %v6675 = vld [vmem:[%s6658 + $0x80] sm:$0xff]
          %v6676 = vld [vmem:[%s6658 + $0x88] sm:$0xff]
          %v6677 = vld [vmem:[%s6658 + $0x90] sm:$0xff]
          %v6678 = vld [vmem:[%s6658 + $0x98] sm:$0xff]
          %v6679 = vpack.c.bf16 %v6660, %v6659
          %v6680 = vpack.c.bf16 %v6662, %v6661
          %v6681 = vpack.c.bf16 %v6664, %v6663
          %v6682 = vpack.c.bf16 %v6666, %v6665
          %v6683 = vpack.c.bf16 %v6668, %v6667
          %v6684 = vpack.c.bf16 %v6670, %v6669
          %v6685 = vpack.c.bf16 %v6672, %v6671
          %v6686 = vpack.c.bf16 %v6674, %v6673
          %v6687 = vpack.c.bf16 %v6676, %v6675
          %v6688 = vpack.c.bf16 %v6678, %v6677
          %v6689 = vld [vmem:[%s7 + $0x60] sm:$0xf]
          %v6690 = vld [vmem:[%s7 + $0x64] sm:$0xf]
          %v6691 = vld [vmem:[%s7 + $0x68] sm:$0xf]
          %v6692 = vld [vmem:[%s7 + $0x6c] sm:$0xf]
          %v6693 = vld [vmem:[%s7 + $0x70] sm:$0xf]
          %v6694 = vld [vmem:[%s7 + $0x74] sm:$0xf]
          %v6701 = vunpack.c.l.b16 %v6689
          %v6702 = vunpack.c.l.b16 %v6690
          %v6703 = vunpack.c.l.b16 %v6691
          %v6704 = vunpack.c.l.b16 %v6692
          %v6705 = vunpack.c.l.b16 %v6693
          %v6706 = vunpack.c.l.b16 %v6694
          %v6707 = vpack.c.b16 %v6702, %v6701
          %v6708 = vpack.c.b16 %v6704, %v6703
          %v6709 = vpack.c.b16 %v6706, %v6705
          %v6714 = vsel %vm795, %v6679, 0
          %v6717 = vsel %vm795, %v6680, 0
          %v6720 = vsel %vm795, %v6681, 0
          %v6723 = vsel %vm795, %v6682, 0
          %v6726 = vsel %vm795, %v6683, 0
          %v6729 = vsel %vm795, %v6684, 0
          %v6732 = vsel %vm795, %v6685, 0
          %v6735 = vsel %vm795, %v6686, 0
          %v6738 = vsel %vm795, %v6687, 0
          %v6741 = vsel %vm795, %v6688, 0
          %6743 = vmatpush.bf16.msra.mxu0 0
          %6744 = vmatpush.bf16.msra.mxu0 0
          %6745 = vmatpush.bf16.msra.mxu0 0
          %6746 = vmatpush.bf16.msra.mxu0 0
          %6747 = vmatpush.bf16.msra.mxu0 0
          %6748 = vmatpush.bf16.msra.mxu0 %v6709
          %6749 = vmatpush.bf16.msra.mxu0 %v6708
          %6750 = vmatpush.bf16.msra.mxu0 %v6707
          %6751 = vmatmul.bf16.gmra.mxu0 %v6714
          %v6752 = vpop.f32.mrf.mxu0
          %v6753 = vadd.f32 0.0, %v6752
          %v6754 = vpop.f32.mrf.mxu0
          %v6755 = vadd.f32 0.0, %v6754
          %6756 = vmatmul.bf16.gmra.mxu0 %v6717
          %v6757 = vpop.f32.mrf.mxu0
          %v6758 = vadd.f32 0.0, %v6757
          %v6759 = vpop.f32.mrf.mxu0
          %v6760 = vadd.f32 0.0, %v6759
          %6761 = vmatmul.bf16.gmra.mxu0 %v6720
          %v6762 = vpop.f32.mrf.mxu0
          %v6763 = vadd.f32 0.0, %v6762
          %v6764 = vpop.f32.mrf.mxu0
          %v6765 = vadd.f32 0.0, %v6764
          %6766 = vmatmul.bf16.gmra.mxu0 %v6723
          %v6767 = vpop.f32.mrf.mxu0
          %v6768 = vadd.f32 0.0, %v6767
          %v6769 = vpop.f32.mrf.mxu0
          %v6770 = vadd.f32 0.0, %v6769
          %6771 = vmatmul.bf16.gmra.mxu0 %v6726
          %v6772 = vpop.f32.mrf.mxu0
          %v6773 = vadd.f32 0.0, %v6772
          %v6774 = vpop.f32.mrf.mxu0
          %v6775 = vadd.f32 0.0, %v6774
          %6776 = vmatmul.bf16.gmra.mxu0 %v6729
          %v6777 = vpop.f32.mrf.mxu0
          %v6778 = vadd.f32 0.0, %v6777
          %v6779 = vpop.f32.mrf.mxu0
          %v6780 = vadd.f32 0.0, %v6779
          %6781 = vmatmul.bf16.gmra.mxu0 %v6732
          %v6782 = vpop.f32.mrf.mxu0
          %v6783 = vadd.f32 0.0, %v6782
          %v6784 = vpop.f32.mrf.mxu0
          %v6785 = vadd.f32 0.0, %v6784
          %6786 = vmatmul.bf16.gmra.mxu0 %v6735
          %v6787 = vpop.f32.mrf.mxu0
          %v6788 = vadd.f32 0.0, %v6787
          %v6789 = vpop.f32.mrf.mxu0
          %v6790 = vadd.f32 0.0, %v6789
          %6791 = vmatmul.bf16.gmra.mxu0 %v6738
          %v6792 = vpop.f32.mrf.mxu0
          %v6793 = vadd.f32 0.0, %v6792
          %v6794 = vpop.f32.mrf.mxu0
          %v6795 = vadd.f32 0.0, %v6794
          %6796 = vmatmul.bf16.gmra.mxu0 %v6741
          %v6797 = vpop.f32.mrf.mxu0
          %v6798 = vadd.f32 0.0, %v6797
          %v6799 = vpop.f32.mrf.mxu0
          %v6800 = vadd.f32 0.0, %v6799
          %6801 = vdwg.mxu0
          %v6802 = vadd.f32 %v6637, %v6753
          %v6803 = vadd.f32 %v6638, %v6755
          %v6804 = vadd.f32 %v6639, %v6758
          %v6805 = vadd.f32 %v6640, %v6760
          %v6806 = vadd.f32 %v6641, %v6763
          %v6807 = vadd.f32 %v6642, %v6765
          %v6808 = vadd.f32 %v6643, %v6768
          %v6809 = vadd.f32 %v6644, %v6770
          %v6810 = vadd.f32 %v6645, %v6773
          %v6811 = vadd.f32 %v6646, %v6775
          %v6812 = vadd.f32 %v6647, %v6778
          %v6813 = vadd.f32 %v6648, %v6780
          %v6814 = vadd.f32 %v6649, %v6783
          %v6815 = vadd.f32 %v6650, %v6785
          %v6816 = vadd.f32 %v6651, %v6788
          %v6817 = vadd.f32 %v6652, %v6790
          %v6818 = vadd.f32 %v6653, %v6793
          %v6819 = vadd.f32 %v6654, %v6795
          %v6820 = vadd.f32 %v6655, %v6798
          %v6821 = vadd.f32 %v6656, %v6800
          %s6822 = sadd.s32 %s6036, 41
          %s6823 = scalar_lea.vmem [#allocation3], %s6822
          %v6824 = vld [vmem:[%s6823] sm:$0xff]
          %v6825 = vld [vmem:[%s6823 + $0x8] sm:$0xff]
          %v6826 = vld [vmem:[%s6823 + $0x10] sm:$0xff]
          %v6827 = vld [vmem:[%s6823 + $0x18] sm:$0xff]
          %v6828 = vld [vmem:[%s6823 + $0x20] sm:$0xff]
          %v6829 = vld [vmem:[%s6823 + $0x28] sm:$0xff]
          %v6830 = vld [vmem:[%s6823 + $0x30] sm:$0xff]
          %v6831 = vld [vmem:[%s6823 + $0x38] sm:$0xff]
          %v6832 = vld [vmem:[%s6823 + $0x40] sm:$0xff]
          %v6833 = vld [vmem:[%s6823 + $0x48] sm:$0xff]
          %v6834 = vld [vmem:[%s6823 + $0x50] sm:$0xff]
          %v6835 = vld [vmem:[%s6823 + $0x58] sm:$0xff]
          %v6836 = vld [vmem:[%s6823 + $0x60] sm:$0xff]
          %v6837 = vld [vmem:[%s6823 + $0x68] sm:$0xff]
          %v6838 = vld [vmem:[%s6823 + $0x70] sm:$0xff]
          %v6839 = vld [vmem:[%s6823 + $0x78] sm:$0xff]
          %v6840 = vld [vmem:[%s6823 + $0x80] sm:$0xff]
          %v6841 = vld [vmem:[%s6823 + $0x88] sm:$0xff]
          %v6842 = vld [vmem:[%s6823 + $0x90] sm:$0xff]
          %v6843 = vld [vmem:[%s6823 + $0x98] sm:$0xff]
          %v6844 = vpack.c.bf16 %v6825, %v6824
          %v6845 = vpack.c.bf16 %v6827, %v6826
          %v6846 = vpack.c.bf16 %v6829, %v6828
          %v6847 = vpack.c.bf16 %v6831, %v6830
          %v6848 = vpack.c.bf16 %v6833, %v6832
          %v6849 = vpack.c.bf16 %v6835, %v6834
          %v6850 = vpack.c.bf16 %v6837, %v6836
          %v6851 = vpack.c.bf16 %v6839, %v6838
          %v6852 = vpack.c.bf16 %v6841, %v6840
          %v6853 = vpack.c.bf16 %v6843, %v6842
          %v6854 = vld [vmem:[%s7 + $0x78] sm:$0xf]
          %v6855 = vld [vmem:[%s7 + $0x7c] sm:$0xf]
          %v6856 = vld [vmem:[%s7 + $0x80] sm:$0xf]
          %v6857 = vld [vmem:[%s7 + $0x84] sm:$0xf]
          %v6858 = vld [vmem:[%s7 + $0x88] sm:$0xf]
          %v6859 = vld [vmem:[%s7 + $0x8c] sm:$0xf]
          %v6866 = vunpack.c.l.b16 %v6854
          %v6867 = vunpack.c.l.b16 %v6855
          %v6868 = vunpack.c.l.b16 %v6856
          %v6869 = vunpack.c.l.b16 %v6857
          %v6870 = vunpack.c.l.b16 %v6858
          %v6871 = vunpack.c.l.b16 %v6859
          %v6872 = vpack.c.b16 %v6867, %v6866
          %v6873 = vpack.c.b16 %v6869, %v6868
          %v6874 = vpack.c.b16 %v6871, %v6870
          %v6879 = vsel %vm795, %v6844, 0
          %v6882 = vsel %vm795, %v6845, 0
          %v6885 = vsel %vm795, %v6846, 0
          %v6888 = vsel %vm795, %v6847, 0
          %v6891 = vsel %vm795, %v6848, 0
          %v6894 = vsel %vm795, %v6849, 0
          %v6897 = vsel %vm795, %v6850, 0
          %v6900 = vsel %vm795, %v6851, 0
          %v6903 = vsel %vm795, %v6852, 0
          %v6906 = vsel %vm795, %v6853, 0
          %6908 = vmatpush.bf16.msra.mxu0 0
          %6909 = vmatpush.bf16.msra.mxu0 0
          %6910 = vmatpush.bf16.msra.mxu0 0
          %6911 = vmatpush.bf16.msra.mxu0 0
          %6912 = vmatpush.bf16.msra.mxu0 0
          %6913 = vmatpush.bf16.msra.mxu0 %v6874
          %6914 = vmatpush.bf16.msra.mxu0 %v6873
          %6915 = vmatpush.bf16.msra.mxu0 %v6872
          %6916 = vmatmul.bf16.gmra.mxu0 %v6879
          %v6917 = vpop.f32.mrf.mxu0
          %v6918 = vadd.f32 0.0, %v6917
          %v6919 = vpop.f32.mrf.mxu0
          %v6920 = vadd.f32 0.0, %v6919
          %6921 = vmatmul.bf16.gmra.mxu0 %v6882
          %v6922 = vpop.f32.mrf.mxu0
          %v6923 = vadd.f32 0.0, %v6922
          %v6924 = vpop.f32.mrf.mxu0
          %v6925 = vadd.f32 0.0, %v6924
          %6926 = vmatmul.bf16.gmra.mxu0 %v6885
          %v6927 = vpop.f32.mrf.mxu0
          %v6928 = vadd.f32 0.0, %v6927
          %v6929 = vpop.f32.mrf.mxu0
          %v6930 = vadd.f32 0.0, %v6929
          %6931 = vmatmul.bf16.gmra.mxu0 %v6888
          %v6932 = vpop.f32.mrf.mxu0
          %v6933 = vadd.f32 0.0, %v6932
          %v6934 = vpop.f32.mrf.mxu0
          %v6935 = vadd.f32 0.0, %v6934
          %6936 = vmatmul.bf16.gmra.mxu0 %v6891
          %v6937 = vpop.f32.mrf.mxu0
          %v6938 = vadd.f32 0.0, %v6937
          %v6939 = vpop.f32.mrf.mxu0
          %v6940 = vadd.f32 0.0, %v6939
          %6941 = vmatmul.bf16.gmra.mxu0 %v6894
          %v6942 = vpop.f32.mrf.mxu0
          %v6943 = vadd.f32 0.0, %v6942
          %v6944 = vpop.f32.mrf.mxu0
          %v6945 = vadd.f32 0.0, %v6944
          %6946 = vmatmul.bf16.gmra.mxu0 %v6897
          %v6947 = vpop.f32.mrf.mxu0
          %v6948 = vadd.f32 0.0, %v6947
          %v6949 = vpop.f32.mrf.mxu0
          %v6950 = vadd.f32 0.0, %v6949
          %6951 = vmatmul.bf16.gmra.mxu0 %v6900
          %v6952 = vpop.f32.mrf.mxu0
          %v6953 = vadd.f32 0.0, %v6952
          %v6954 = vpop.f32.mrf.mxu0
          %v6955 = vadd.f32 0.0, %v6954
          %6956 = vmatmul.bf16.gmra.mxu0 %v6903
          %v6957 = vpop.f32.mrf.mxu0
          %v6958 = vadd.f32 0.0, %v6957
          %v6959 = vpop.f32.mrf.mxu0
          %v6960 = vadd.f32 0.0, %v6959
          %6961 = vmatmul.bf16.gmra.mxu0 %v6906
          %v6962 = vpop.f32.mrf.mxu0
          %v6963 = vadd.f32 0.0, %v6962
          %v6964 = vpop.f32.mrf.mxu0
          %v6965 = vadd.f32 0.0, %v6964
          %6966 = vdwg.mxu0
          %v6967 = vadd.f32 %v6802, %v6918
          %v6968 = vadd.f32 %v6803, %v6920
          %v6969 = vadd.f32 %v6804, %v6923
          %v6970 = vadd.f32 %v6805, %v6925
          %v6971 = vadd.f32 %v6806, %v6928
          %v6972 = vadd.f32 %v6807, %v6930
          %v6973 = vadd.f32 %v6808, %v6933
          %v6974 = vadd.f32 %v6809, %v6935
          %v6975 = vadd.f32 %v6810, %v6938
          %v6976 = vadd.f32 %v6811, %v6940
          %v6977 = vadd.f32 %v6812, %v6943
          %v6978 = vadd.f32 %v6813, %v6945
          %v6979 = vadd.f32 %v6814, %v6948
          %v6980 = vadd.f32 %v6815, %v6950
          %v6981 = vadd.f32 %v6816, %v6953
          %v6982 = vadd.f32 %v6817, %v6955
          %v6983 = vadd.f32 %v6818, %v6958
          %v6984 = vadd.f32 %v6819, %v6960
          %v6985 = vadd.f32 %v6820, %v6963
          %v6986 = vadd.f32 %v6821, %v6965
          %s6987 = sadd.s32 %s6036, 71
          %s6988 = scalar_lea.vmem [#allocation3], %s6987
          %v6989 = vld [vmem:[%s6988] sm:$0xff]
          %v6990 = vld [vmem:[%s6988 + $0x8] sm:$0xff]
          %v6991 = vld [vmem:[%s6988 + $0x10] sm:$0xff]
          %v6992 = vld [vmem:[%s6988 + $0x18] sm:$0xff]
          %v6993 = vld [vmem:[%s6988 + $0x20] sm:$0xff]
          %v6994 = vld [vmem:[%s6988 + $0x28] sm:$0xff]
          %v6995 = vld [vmem:[%s6988 + $0x30] sm:$0xff]
          %v6996 = vld [vmem:[%s6988 + $0x38] sm:$0xff]
          %v6997 = vld [vmem:[%s6988 + $0x40] sm:$0xff]
          %v6998 = vld [vmem:[%s6988 + $0x48] sm:$0xff]
          %v6999 = vld [vmem:[%s6988 + $0x50] sm:$0xff]
          %v7000 = vld [vmem:[%s6988 + $0x58] sm:$0xff]
          %v7001 = vld [vmem:[%s6988 + $0x60] sm:$0xff]
          %v7002 = vld [vmem:[%s6988 + $0x68] sm:$0xff]
          %v7003 = vld [vmem:[%s6988 + $0x70] sm:$0xff]
          %v7004 = vld [vmem:[%s6988 + $0x78] sm:$0xff]
          %v7005 = vld [vmem:[%s6988 + $0x80] sm:$0xff]
          %v7006 = vld [vmem:[%s6988 + $0x88] sm:$0xff]
          %v7007 = vld [vmem:[%s6988 + $0x90] sm:$0xff]
          %v7008 = vld [vmem:[%s6988 + $0x98] sm:$0xff]
          %v7009 = vpack.c.bf16 %v6990, %v6989
          %v7010 = vpack.c.bf16 %v6992, %v6991
          %v7011 = vpack.c.bf16 %v6994, %v6993
          %v7012 = vpack.c.bf16 %v6996, %v6995
          %v7013 = vpack.c.bf16 %v6998, %v6997
          %v7014 = vpack.c.bf16 %v7000, %v6999
          %v7015 = vpack.c.bf16 %v7002, %v7001
          %v7016 = vpack.c.bf16 %v7004, %v7003
          %v7017 = vpack.c.bf16 %v7006, %v7005
          %v7018 = vpack.c.bf16 %v7008, %v7007
          %v7019 = vld [vmem:[%s7 + $0x90] sm:$0xf]
          %v7020 = vld [vmem:[%s7 + $0x94] sm:$0xf]
          %v7021 = vld [vmem:[%s7 + $0x98] sm:$0xf]
          %v7022 = vld [vmem:[%s7 + $0x9c] sm:$0xf]
          %v7023 = vld [vmem:[%s7 + $0xa0] sm:$0xf]
          %v7024 = vld [vmem:[%s7 + $0xa4] sm:$0xf]
          %v7031 = vunpack.c.l.b16 %v7019
          %v7032 = vunpack.c.l.b16 %v7020
          %v7033 = vunpack.c.l.b16 %v7021
          %v7034 = vunpack.c.l.b16 %v7022
          %v7035 = vunpack.c.l.b16 %v7023
          %v7036 = vunpack.c.l.b16 %v7024
          %v7037 = vpack.c.b16 %v7032, %v7031
          %v7038 = vpack.c.b16 %v7034, %v7033
          %v7039 = vpack.c.b16 %v7036, %v7035
          %v7044 = vsel %vm795, %v7009, 0
          %v7047 = vsel %vm795, %v7010, 0
          %v7050 = vsel %vm795, %v7011, 0
          %v7053 = vsel %vm795, %v7012, 0
          %v7056 = vsel %vm795, %v7013, 0
          %v7059 = vsel %vm795, %v7014, 0
          %v7062 = vsel %vm795, %v7015, 0
          %v7065 = vsel %vm795, %v7016, 0
          %v7068 = vsel %vm795, %v7017, 0
          %v7071 = vsel %vm795, %v7018, 0
          %7073 = vmatpush.bf16.msra.mxu0 0
          %7074 = vmatpush.bf16.msra.mxu0 0
          %7075 = vmatpush.bf16.msra.mxu0 0
          %7076 = vmatpush.bf16.msra.mxu0 0
          %7077 = vmatpush.bf16.msra.mxu0 0
          %7078 = vmatpush.bf16.msra.mxu0 %v7039
          %7079 = vmatpush.bf16.msra.mxu0 %v7038
          %7080 = vmatpush.bf16.msra.mxu0 %v7037
          %7081 = vmatmul.bf16.gmra.mxu0 %v7044
          %v7082 = vpop.f32.mrf.mxu0
          %v7083 = vadd.f32 0.0, %v7082
          %v7084 = vpop.f32.mrf.mxu0
          %v7085 = vadd.f32 0.0, %v7084
          %7086 = vmatmul.bf16.gmra.mxu0 %v7047
          %v7087 = vpop.f32.mrf.mxu0
          %v7088 = vadd.f32 0.0, %v7087
          %v7089 = vpop.f32.mrf.mxu0
          %v7090 = vadd.f32 0.0, %v7089
          %7091 = vmatmul.bf16.gmra.mxu0 %v7050
          %v7092 = vpop.f32.mrf.mxu0
          %v7093 = vadd.f32 0.0, %v7092
          %v7094 = vpop.f32.mrf.mxu0
          %v7095 = vadd.f32 0.0, %v7094
          %7096 = vmatmul.bf16.gmra.mxu0 %v7053
          %v7097 = vpop.f32.mrf.mxu0
          %v7098 = vadd.f32 0.0, %v7097
          %v7099 = vpop.f32.mrf.mxu0
          %v7100 = vadd.f32 0.0, %v7099
          %7101 = vmatmul.bf16.gmra.mxu0 %v7056
          %v7102 = vpop.f32.mrf.mxu0
          %v7103 = vadd.f32 0.0, %v7102
          %v7104 = vpop.f32.mrf.mxu0
          %v7105 = vadd.f32 0.0, %v7104
          %7106 = vmatmul.bf16.gmra.mxu0 %v7059
          %v7107 = vpop.f32.mrf.mxu0
          %v7108 = vadd.f32 0.0, %v7107
          %v7109 = vpop.f32.mrf.mxu0
          %v7110 = vadd.f32 0.0, %v7109
          %7111 = vmatmul.bf16.gmra.mxu0 %v7062
          %v7112 = vpop.f32.mrf.mxu0
          %v7113 = vadd.f32 0.0, %v7112
          %v7114 = vpop.f32.mrf.mxu0
          %v7115 = vadd.f32 0.0, %v7114
          %7116 = vmatmul.bf16.gmra.mxu0 %v7065
          %v7117 = vpop.f32.mrf.mxu0
          %v7118 = vadd.f32 0.0, %v7117
          %v7119 = vpop.f32.mrf.mxu0
          %v7120 = vadd.f32 0.0, %v7119
          %7121 = vmatmul.bf16.gmra.mxu0 %v7068
          %v7122 = vpop.f32.mrf.mxu0
          %v7123 = vadd.f32 0.0, %v7122
          %v7124 = vpop.f32.mrf.mxu0
          %v7125 = vadd.f32 0.0, %v7124
          %7126 = vmatmul.bf16.gmra.mxu0 %v7071
          %v7127 = vpop.f32.mrf.mxu0
          %v7128 = vadd.f32 0.0, %v7127
          %v7129 = vpop.f32.mrf.mxu0
          %v7130 = vadd.f32 0.0, %v7129
          %7131 = vdwg.mxu0
          %v7132 = vadd.f32 %v6967, %v7083
          %v7133 = vadd.f32 %v6968, %v7085
          %v7134 = vadd.f32 %v6969, %v7088
          %v7135 = vadd.f32 %v6970, %v7090
          %v7136 = vadd.f32 %v6971, %v7093
          %v7137 = vadd.f32 %v6972, %v7095
          %v7138 = vadd.f32 %v6973, %v7098
          %v7139 = vadd.f32 %v6974, %v7100
          %v7140 = vadd.f32 %v6975, %v7103
          %v7141 = vadd.f32 %v6976, %v7105
          %v7142 = vadd.f32 %v6977, %v7108
          %v7143 = vadd.f32 %v6978, %v7110
          %v7144 = vadd.f32 %v6979, %v7113
          %v7145 = vadd.f32 %v6980, %v7115
          %v7146 = vadd.f32 %v6981, %v7118
          %v7147 = vadd.f32 %v6982, %v7120
          %v7148 = vadd.f32 %v6983, %v7123
          %v7149 = vadd.f32 %v6984, %v7125
          %v7150 = vadd.f32 %v6985, %v7128
          %v7151 = vadd.f32 %v6986, %v7130
          %s7152 = sadd.s32 %s6036, 72
          %s7153 = scalar_lea.vmem [#allocation3], %s7152
          %v7154 = vld [vmem:[%s7153] sm:$0xff]
          %v7155 = vld [vmem:[%s7153 + $0x8] sm:$0xff]
          %v7156 = vld [vmem:[%s7153 + $0x10] sm:$0xff]
          %v7157 = vld [vmem:[%s7153 + $0x18] sm:$0xff]
          %v7158 = vld [vmem:[%s7153 + $0x20] sm:$0xff]
          %v7159 = vld [vmem:[%s7153 + $0x28] sm:$0xff]
          %v7160 = vld [vmem:[%s7153 + $0x30] sm:$0xff]
          %v7161 = vld [vmem:[%s7153 + $0x38] sm:$0xff]
          %v7162 = vld [vmem:[%s7153 + $0x40] sm:$0xff]
          %v7163 = vld [vmem:[%s7153 + $0x48] sm:$0xff]
          %v7164 = vld [vmem:[%s7153 + $0x50] sm:$0xff]
          %v7165 = vld [vmem:[%s7153 + $0x58] sm:$0xff]
          %v7166 = vld [vmem:[%s7153 + $0x60] sm:$0xff]
          %v7167 = vld [vmem:[%s7153 + $0x68] sm:$0xff]
          %v7168 = vld [vmem:[%s7153 + $0x70] sm:$0xff]
          %v7169 = vld [vmem:[%s7153 + $0x78] sm:$0xff]
          %v7170 = vld [vmem:[%s7153 + $0x80] sm:$0xff]
          %v7171 = vld [vmem:[%s7153 + $0x88] sm:$0xff]
          %v7172 = vld [vmem:[%s7153 + $0x90] sm:$0xff]
          %v7173 = vld [vmem:[%s7153 + $0x98] sm:$0xff]
          %v7174 = vpack.c.bf16 %v7155, %v7154
          %v7175 = vpack.c.bf16 %v7157, %v7156
          %v7176 = vpack.c.bf16 %v7159, %v7158
          %v7177 = vpack.c.bf16 %v7161, %v7160
          %v7178 = vpack.c.bf16 %v7163, %v7162
          %v7179 = vpack.c.bf16 %v7165, %v7164
          %v7180 = vpack.c.bf16 %v7167, %v7166
          %v7181 = vpack.c.bf16 %v7169, %v7168
          %v7182 = vpack.c.bf16 %v7171, %v7170
          %v7183 = vpack.c.bf16 %v7173, %v7172
          %v7184 = vld [vmem:[%s7 + $0xa8] sm:$0xf]
          %v7185 = vld [vmem:[%s7 + $0xac] sm:$0xf]
          %v7186 = vld [vmem:[%s7 + $0xb0] sm:$0xf]
          %v7187 = vld [vmem:[%s7 + $0xb4] sm:$0xf]
          %v7188 = vld [vmem:[%s7 + $0xb8] sm:$0xf]
          %v7189 = vld [vmem:[%s7 + $0xbc] sm:$0xf]
          %v7196 = vunpack.c.l.b16 %v7184
          %v7197 = vunpack.c.l.b16 %v7185
          %v7198 = vunpack.c.l.b16 %v7186
          %v7199 = vunpack.c.l.b16 %v7187
          %v7200 = vunpack.c.l.b16 %v7188
          %v7201 = vunpack.c.l.b16 %v7189
          %v7202 = vpack.c.b16 %v7197, %v7196
          %v7203 = vpack.c.b16 %v7199, %v7198
          %v7204 = vpack.c.b16 %v7201, %v7200
          %v7209 = vsel %vm795, %v7174, 0
          %v7212 = vsel %vm795, %v7175, 0
          %v7215 = vsel %vm795, %v7176, 0
          %v7218 = vsel %vm795, %v7177, 0
          %v7221 = vsel %vm795, %v7178, 0
          %v7224 = vsel %vm795, %v7179, 0
          %v7227 = vsel %vm795, %v7180, 0
          %v7230 = vsel %vm795, %v7181, 0
          %v7233 = vsel %vm795, %v7182, 0
          %v7236 = vsel %vm795, %v7183, 0
          %7238 = vmatpush.bf16.msra.mxu0 0
          %7239 = vmatpush.bf16.msra.mxu0 0
          %7240 = vmatpush.bf16.msra.mxu0 0
          %7241 = vmatpush.bf16.msra.mxu0 0
          %7242 = vmatpush.bf16.msra.mxu0 0
          %7243 = vmatpush.bf16.msra.mxu0 %v7204
          %7244 = vmatpush.bf16.msra.mxu0 %v7203
          %7245 = vmatpush.bf16.msra.mxu0 %v7202
          %7246 = vmatmul.bf16.gmra.mxu0 %v7209
          %v7247 = vpop.f32.mrf.mxu0
          %v7248 = vadd.f32 0.0, %v7247
          %v7249 = vpop.f32.mrf.mxu0
          %v7250 = vadd.f32 0.0, %v7249
          %7251 = vmatmul.bf16.gmra.mxu0 %v7212
          %v7252 = vpop.f32.mrf.mxu0
          %v7253 = vadd.f32 0.0, %v7252
          %v7254 = vpop.f32.mrf.mxu0
          %v7255 = vadd.f32 0.0, %v7254
          %7256 = vmatmul.bf16.gmra.mxu0 %v7215
          %v7257 = vpop.f32.mrf.mxu0
          %v7258 = vadd.f32 0.0, %v7257
          %v7259 = vpop.f32.mrf.mxu0
          %v7260 = vadd.f32 0.0, %v7259
          %7261 = vmatmul.bf16.gmra.mxu0 %v7218
          %v7262 = vpop.f32.mrf.mxu0
          %v7263 = vadd.f32 0.0, %v7262
          %v7264 = vpop.f32.mrf.mxu0
          %v7265 = vadd.f32 0.0, %v7264
          %7266 = vmatmul.bf16.gmra.mxu0 %v7221
          %v7267 = vpop.f32.mrf.mxu0
          %v7268 = vadd.f32 0.0, %v7267
          %v7269 = vpop.f32.mrf.mxu0
          %v7270 = vadd.f32 0.0, %v7269
          %7271 = vmatmul.bf16.gmra.mxu0 %v7224
          %v7272 = vpop.f32.mrf.mxu0
          %v7273 = vadd.f32 0.0, %v7272
          %v7274 = vpop.f32.mrf.mxu0
          %v7275 = vadd.f32 0.0, %v7274
          %7276 = vmatmul.bf16.gmra.mxu0 %v7227
          %v7277 = vpop.f32.mrf.mxu0
          %v7278 = vadd.f32 0.0, %v7277
          %v7279 = vpop.f32.mrf.mxu0
          %v7280 = vadd.f32 0.0, %v7279
          %7281 = vmatmul.bf16.gmra.mxu0 %v7230
          %v7282 = vpop.f32.mrf.mxu0
          %v7283 = vadd.f32 0.0, %v7282
          %v7284 = vpop.f32.mrf.mxu0
          %v7285 = vadd.f32 0.0, %v7284
          %7286 = vmatmul.bf16.gmra.mxu0 %v7233
          %v7287 = vpop.f32.mrf.mxu0
          %v7288 = vadd.f32 0.0, %v7287
          %v7289 = vpop.f32.mrf.mxu0
          %v7290 = vadd.f32 0.0, %v7289
          %7291 = vmatmul.bf16.gmra.mxu0 %v7236
          %v7292 = vpop.f32.mrf.mxu0
          %v7293 = vadd.f32 0.0, %v7292
          %v7294 = vpop.f32.mrf.mxu0
          %v7295 = vadd.f32 0.0, %v7294
          %7296 = vdwg.mxu0
          %v7297 = vadd.f32 %v7132, %v7248
          %v7298 = vadd.f32 %v7133, %v7250
          %v7299 = vadd.f32 %v7134, %v7253
          %v7300 = vadd.f32 %v7135, %v7255
          %v7301 = vadd.f32 %v7136, %v7258
          %v7302 = vadd.f32 %v7137, %v7260
          %v7303 = vadd.f32 %v7138, %v7263
          %v7304 = vadd.f32 %v7139, %v7265
          %v7305 = vadd.f32 %v7140, %v7268
          %v7306 = vadd.f32 %v7141, %v7270
          %v7307 = vadd.f32 %v7142, %v7273
          %v7308 = vadd.f32 %v7143, %v7275
          %v7309 = vadd.f32 %v7144, %v7278
          %v7310 = vadd.f32 %v7145, %v7280
          %v7311 = vadd.f32 %v7146, %v7283
          %v7312 = vadd.f32 %v7147, %v7285
          %v7313 = vadd.f32 %v7148, %v7288
          %v7314 = vadd.f32 %v7149, %v7290
          %v7315 = vadd.f32 %v7150, %v7293
          %v7316 = vadd.f32 %v7151, %v7295
          %s7317 = sadd.s32 %s6036, 73
          %s7318 = scalar_lea.vmem [#allocation3], %s7317
          %v7319 = vld [vmem:[%s7318] sm:$0xff]
          %v7320 = vld [vmem:[%s7318 + $0x8] sm:$0xff]
          %v7321 = vld [vmem:[%s7318 + $0x10] sm:$0xff]
          %v7322 = vld [vmem:[%s7318 + $0x18] sm:$0xff]
          %v7323 = vld [vmem:[%s7318 + $0x20] sm:$0xff]
          %v7324 = vld [vmem:[%s7318 + $0x28] sm:$0xff]
          %v7325 = vld [vmem:[%s7318 + $0x30] sm:$0xff]
          %v7326 = vld [vmem:[%s7318 + $0x38] sm:$0xff]
          %v7327 = vld [vmem:[%s7318 + $0x40] sm:$0xff]
          %v7328 = vld [vmem:[%s7318 + $0x48] sm:$0xff]
          %v7329 = vld [vmem:[%s7318 + $0x50] sm:$0xff]
          %v7330 = vld [vmem:[%s7318 + $0x58] sm:$0xff]
          %v7331 = vld [vmem:[%s7318 + $0x60] sm:$0xff]
          %v7332 = vld [vmem:[%s7318 + $0x68] sm:$0xff]
          %v7333 = vld [vmem:[%s7318 + $0x70] sm:$0xff]
          %v7334 = vld [vmem:[%s7318 + $0x78] sm:$0xff]
          %v7335 = vld [vmem:[%s7318 + $0x80] sm:$0xff]
          %v7336 = vld [vmem:[%s7318 + $0x88] sm:$0xff]
          %v7337 = vld [vmem:[%s7318 + $0x90] sm:$0xff]
          %v7338 = vld [vmem:[%s7318 + $0x98] sm:$0xff]
          %v7339 = vpack.c.bf16 %v7320, %v7319
          %v7340 = vpack.c.bf16 %v7322, %v7321
          %v7341 = vpack.c.bf16 %v7324, %v7323
          %v7342 = vpack.c.bf16 %v7326, %v7325
          %v7343 = vpack.c.bf16 %v7328, %v7327
          %v7344 = vpack.c.bf16 %v7330, %v7329
          %v7345 = vpack.c.bf16 %v7332, %v7331
          %v7346 = vpack.c.bf16 %v7334, %v7333
          %v7347 = vpack.c.bf16 %v7336, %v7335
          %v7348 = vpack.c.bf16 %v7338, %v7337
          %v7349 = vld [vmem:[%s7 + $0xc0] sm:$0xf]
          %v7350 = vld [vmem:[%s7 + $0xc4] sm:$0xf]
          %v7351 = vld [vmem:[%s7 + $0xc8] sm:$0xf]
          %v7352 = vld [vmem:[%s7 + $0xcc] sm:$0xf]
          %v7353 = vld [vmem:[%s7 + $0xd0] sm:$0xf]
          %v7354 = vld [vmem:[%s7 + $0xd4] sm:$0xf]
          %v7361 = vunpack.c.l.b16 %v7349
          %v7362 = vunpack.c.l.b16 %v7350
          %v7363 = vunpack.c.l.b16 %v7351
          %v7364 = vunpack.c.l.b16 %v7352
          %v7365 = vunpack.c.l.b16 %v7353
          %v7366 = vunpack.c.l.b16 %v7354
          %v7367 = vpack.c.b16 %v7362, %v7361
          %v7368 = vpack.c.b16 %v7364, %v7363
          %v7369 = vpack.c.b16 %v7366, %v7365
          %v7374 = vsel %vm795, %v7339, 0
          %v7377 = vsel %vm795, %v7340, 0
          %v7380 = vsel %vm795, %v7341, 0
          %v7383 = vsel %vm795, %v7342, 0
          %v7386 = vsel %vm795, %v7343, 0
          %v7389 = vsel %vm795, %v7344, 0
          %v7392 = vsel %vm795, %v7345, 0
          %v7395 = vsel %vm795, %v7346, 0
          %v7398 = vsel %vm795, %v7347, 0
          %v7401 = vsel %vm795, %v7348, 0
          %7403 = vmatpush.bf16.msra.mxu0 0
          %7404 = vmatpush.bf16.msra.mxu0 0
          %7405 = vmatpush.bf16.msra.mxu0 0
          %7406 = vmatpush.bf16.msra.mxu0 0
          %7407 = vmatpush.bf16.msra.mxu0 0
          %7408 = vmatpush.bf16.msra.mxu0 %v7369
          %7409 = vmatpush.bf16.msra.mxu0 %v7368
          %7410 = vmatpush.bf16.msra.mxu0 %v7367
          %7411 = vmatmul.bf16.gmra.mxu0 %v7374
          %v7412 = vpop.f32.mrf.mxu0
          %v7413 = vadd.f32 0.0, %v7412
          %v7414 = vpop.f32.mrf.mxu0
          %v7415 = vadd.f32 0.0, %v7414
          %7416 = vmatmul.bf16.gmra.mxu0 %v7377
          %v7417 = vpop.f32.mrf.mxu0
          %v7418 = vadd.f32 0.0, %v7417
          %v7419 = vpop.f32.mrf.mxu0
          %v7420 = vadd.f32 0.0, %v7419
          %7421 = vmatmul.bf16.gmra.mxu0 %v7380
          %v7422 = vpop.f32.mrf.mxu0
          %v7423 = vadd.f32 0.0, %v7422
          %v7424 = vpop.f32.mrf.mxu0
          %v7425 = vadd.f32 0.0, %v7424
          %7426 = vmatmul.bf16.gmra.mxu0 %v7383
          %v7427 = vpop.f32.mrf.mxu0
          %v7428 = vadd.f32 0.0, %v7427
          %v7429 = vpop.f32.mrf.mxu0
          %v7430 = vadd.f32 0.0, %v7429
          %7431 = vmatmul.bf16.gmra.mxu0 %v7386
          %v7432 = vpop.f32.mrf.mxu0
          %v7433 = vadd.f32 0.0, %v7432
          %v7434 = vpop.f32.mrf.mxu0
          %v7435 = vadd.f32 0.0, %v7434
          %7436 = vmatmul.bf16.gmra.mxu0 %v7389
          %v7437 = vpop.f32.mrf.mxu0
          %v7438 = vadd.f32 0.0, %v7437
          %v7439 = vpop.f32.mrf.mxu0
          %v7440 = vadd.f32 0.0, %v7439
          %7441 = vmatmul.bf16.gmra.mxu0 %v7392
          %v7442 = vpop.f32.mrf.mxu0
          %v7443 = vadd.f32 0.0, %v7442
          %v7444 = vpop.f32.mrf.mxu0
          %v7445 = vadd.f32 0.0, %v7444
          %7446 = vmatmul.bf16.gmra.mxu0 %v7395
          %v7447 = vpop.f32.mrf.mxu0
          %v7448 = vadd.f32 0.0, %v7447
          %v7449 = vpop.f32.mrf.mxu0
          %v7450 = vadd.f32 0.0, %v7449
          %7451 = vmatmul.bf16.gmra.mxu0 %v7398
          %v7452 = vpop.f32.mrf.mxu0
          %v7453 = vadd.f32 0.0, %v7452
          %v7454 = vpop.f32.mrf.mxu0
          %v7455 = vadd.f32 0.0, %v7454
          %7456 = vmatmul.bf16.gmra.mxu0 %v7401
          %v7457 = vpop.f32.mrf.mxu0
          %v7458 = vadd.f32 0.0, %v7457
          %v7459 = vpop.f32.mrf.mxu0
          %v7460 = vadd.f32 0.0, %v7459
          %7461 = vdwg.mxu0
          %v7462 = vadd.f32 %v7297, %v7413
          %v7463 = vadd.f32 %v7298, %v7415
          %v7464 = vadd.f32 %v7299, %v7418
          %v7465 = vadd.f32 %v7300, %v7420
          %v7466 = vadd.f32 %v7301, %v7423
          %v7467 = vadd.f32 %v7302, %v7425
          %v7468 = vadd.f32 %v7303, %v7428
          %v7469 = vadd.f32 %v7304, %v7430
          %v7470 = vadd.f32 %v7305, %v7433
          %v7471 = vadd.f32 %v7306, %v7435
          %v7472 = vadd.f32 %v7307, %v7438
          %v7473 = vadd.f32 %v7308, %v7440
          %v7474 = vadd.f32 %v7309, %v7443
          %v7475 = vadd.f32 %v7310, %v7445
          %v7476 = vadd.f32 %v7311, %v7448
          %v7477 = vadd.f32 %v7312, %v7450
          %v7478 = vadd.f32 %v7313, %v7453
          %v7479 = vadd.f32 %v7314, %v7455
          %v7480 = vadd.f32 %v7315, %v7458
          %v7481 = vadd.f32 %v7316, %v7460
          %v7482 = vld [vmem:[%s8] sm:$0x1]
          %v7484 = vperm.slane %v7482, 0
          %v7486 = vadd.f32 %v7462, %v7484
          %v7487 = vadd.f32 %v7463, %v7484
          %v7488 = vadd.f32 %v7464, %v7484
          %v7489 = vadd.f32 %v7465, %v7484
          %v7490 = vadd.f32 %v7466, %v7484
          %v7491 = vadd.f32 %v7467, %v7484
          %v7492 = vadd.f32 %v7468, %v7484
          %v7493 = vadd.f32 %v7469, %v7484
          %v7494 = vadd.f32 %v7470, %v7484
          %v7495 = vadd.f32 %v7471, %v7484
          %v7496 = vadd.f32 %v7472, %v7484
          %v7497 = vadd.f32 %v7473, %v7484
          %v7498 = vadd.f32 %v7474, %v7484
          %v7499 = vadd.f32 %v7475, %v7484
          %v7500 = vadd.f32 %v7476, %v7484
          %v7501 = vadd.f32 %v7477, %v7484
          %v7502 = vadd.f32 %v7478, %v7484
          %v7503 = vadd.f32 %v7479, %v7484
          %v7504 = vadd.f32 %v7480, %v7484
          %v7505 = vadd.f32 %v7481, %v7484
          %v7506 = vmax.f32 %v7486, 0.0
          %v7507 = vmax.f32 %v7487, 0.0
          %v7508 = vmax.f32 %v7488, 0.0
          %v7509 = vmax.f32 %v7489, 0.0
          %v7510 = vmax.f32 %v7490, 0.0
          %v7511 = vmax.f32 %v7491, 0.0
          %v7512 = vmax.f32 %v7492, 0.0
          %v7513 = vmax.f32 %v7493, 0.0
          %v7514 = vmax.f32 %v7494, 0.0
          %v7515 = vmax.f32 %v7495, 0.0
          %v7516 = vmax.f32 %v7496, 0.0
          %v7517 = vmax.f32 %v7497, 0.0
          %v7518 = vmax.f32 %v7498, 0.0
          %v7519 = vmax.f32 %v7499, 0.0
          %v7520 = vmax.f32 %v7500, 0.0
          %v7521 = vmax.f32 %v7501, 0.0
          %v7522 = vmax.f32 %v7502, 0.0
          %v7523 = vmax.f32 %v7503, 0.0
          %v7524 = vmax.f32 %v7504, 0.0
          %v7525 = vmax.f32 %v7505, 0.0
          %s7526 = scalar_lea.vmem [#allocation4], %s6036
          %vm7527 = vcmask 588800
          %7528 = vst.msk [vmem:[%s7526] sm:$0xff] %vm7527, %v7506
          %7529 = vst.msk [vmem:[%s7526 + $0x8] sm:$0xff] %vm7527, %v7507
          %7530 = vst.msk [vmem:[%s7526 + $0x10] sm:$0xff] %vm7527, %v7508
          %7531 = vst.msk [vmem:[%s7526 + $0x18] sm:$0xff] %vm7527, %v7509
          %7532 = vst.msk [vmem:[%s7526 + $0x20] sm:$0xff] %vm7527, %v7510
          %7533 = vst.msk [vmem:[%s7526 + $0x28] sm:$0xff] %vm7527, %v7511
          %7534 = vst.msk [vmem:[%s7526 + $0x30] sm:$0xff] %vm7527, %v7512
          %7535 = vst.msk [vmem:[%s7526 + $0x38] sm:$0xff] %vm7527, %v7513
          %7536 = vst.msk [vmem:[%s7526 + $0x40] sm:$0xff] %vm7527, %v7514
          %7537 = vst.msk [vmem:[%s7526 + $0x48] sm:$0xff] %vm7527, %v7515
          %7538 = vst.msk [vmem:[%s7526 + $0x50] sm:$0xff] %vm7527, %v7516
          %7539 = vst.msk [vmem:[%s7526 + $0x58] sm:$0xff] %vm7527, %v7517
          %7540 = vst.msk [vmem:[%s7526 + $0x60] sm:$0xff] %vm7527, %v7518
          %7541 = vst.msk [vmem:[%s7526 + $0x68] sm:$0xff] %vm7527, %v7519
          %7542 = vst.msk [vmem:[%s7526 + $0x70] sm:$0xff] %vm7527, %v7520
          %7543 = vst.msk [vmem:[%s7526 + $0x78] sm:$0xff] %vm7527, %v7521
          %7544 = vst.msk [vmem:[%s7526 + $0x80] sm:$0xff] %vm7527, %v7522
          %7545 = vst.msk [vmem:[%s7526 + $0x88] sm:$0xff] %vm7527, %v7523
          %7546 = vst.msk [vmem:[%s7526 + $0x90] sm:$0xff] %vm7527, %v7524
          %7547 = vst.msk [vmem:[%s7526 + $0x98] sm:$0xff] %vm7527, %v7525
        $region164: #{danet_forward.1} parent=95 // loop_footer
          %s6035 = sadd.s32 1, %s6031
        $region165: #{danet_forward.1} parent=95 // loop_footer_branch
          %6030 = sbr.rel target = $region161
        $region166: #{danet_forward.1} parent=95 // loop_exit
          _
        loop: start=0, step=1, limit=8
        $region167: #{danet_forward.1} parent=95 // loop_pre_header
          _
        $region168: #{danet_forward.1} parent=95 // loop_header
          %s7549 = sphi 0, %s7553
          %p7550 = scmp.ge.s32.totalorder %s7549, 8
        $region169: #{danet_forward.1} parent=95 // loop_header_branch
          %7552 = sbr.rel (%p7550) target = $region173
        $region170: #{danet_forward.1} parent=95 // loop_body
          %s7554 = smul.u32 %s7549, 800
          loop: start=0, step=1, limit=12
          $region174: #{danet_forward.1} parent=170 // loop_pre_header
            _
          $region175: #{danet_forward.1} parent=170 // loop_header
            %s7556 = sphi 0, %s7560
            %p7557 = scmp.ge.s32.totalorder %s7556, 12
          $region176: #{danet_forward.1} parent=170 // loop_header_branch
            %7559 = sbr.rel (%p7557) target = $region180
          $region177: #{danet_forward.1} parent=170 // loop_body
            %s7561 = smul.u32 %s7556, 2
            %s7562 = sadd.s32 %s7561, 1
            %s7563 = smul.u32 %s7562, 32
            %s7564 = sadd.s32 %s7554, %s7563
            %s7565 = scalar_lea.vmem [#allocation4], %s7564
            %v7566 = vld [vmem:[%s7565] sm:$0xff]
            %v7567 = vld [vmem:[%s7565 + $0x8] sm:$0xff]
            %v7568 = vld [vmem:[%s7565 + $0x10] sm:$0xff]
            %s7569 = sadd.s32 %s7564, 32
            %s7570 = scalar_lea.vmem [#allocation4], %s7569
            %v7571 = vld [vmem:[%s7570] sm:$0xff]
            %v7572 = vld [vmem:[%s7570 + $0x8] sm:$0xff]
            %v7573 = vld [vmem:[%s7570 + $0x10] sm:$0xff]
            %v7574 = vmax.f32 %v7566, %v7571
            %v7575 = vmax.f32 %v7567, %v7572
            %v7576 = vmax.f32 %v7568, %v7573
            %s7577 = smul.u32 %s7556, 24
            %s7578 = scalar_lea.vmem [#allocation5], %s7577
            %vm7579 = vcmask 588800
            %7580 = vst.msk [vmem:[%s7578] sm:$0xff] %vm7579, %v7574
            %7581 = vst.msk [vmem:[%s7578 + $0x8] sm:$0xff] %vm7579, %v7575
            %7582 = vst.msk [vmem:[%s7578 + $0x10] sm:$0xff] %vm7579, %v7576
          $region178: #{danet_forward.1} parent=170 // loop_footer
            %s7560 = sadd.s32 1, %s7556
          $region179: #{danet_forward.1} parent=170 // loop_footer_branch
            %7555 = sbr.rel target = $region175
          $region180: #{danet_forward.1} parent=170 // loop_exit
            _
          %v7583 = vld [vmem:[#allocation5] ss:$2 sm:$0xff]
          %s7584 = scalar_lea.vmem [#allocation5], 16
          %v7585 = vld [vmem:[%s7584] ss:$2 sm:$0xff]
          %s7586 = scalar_lea.vmem [#allocation5], 32
          %v7587 = vld [vmem:[%s7586] ss:$2 sm:$0xff]
          %s7588 = scalar_lea.vmem [#allocation5], 48
          %v7589 = vld [vmem:[%s7588] ss:$2 sm:$0xff]
          %s7590 = scalar_lea.vmem [#allocation5], 64
          %v7591 = vld [vmem:[%s7590] ss:$2 sm:$0xff]
          %s7592 = scalar_lea.vmem [#allocation5], 80
          %v7593 = vld [vmem:[%s7592] ss:$2 sm:$0xff]
          %s7594 = scalar_lea.vmem [#allocation5], 96
          %v7595 = vld [vmem:[%s7594] ss:$2 sm:$0xff]
          %s7596 = scalar_lea.vmem [#allocation5], 112
          %v7597 = vld [vmem:[%s7596] ss:$2 sm:$0xff]
          %s7598 = scalar_lea.vmem [#allocation5], 128
          %v7599 = vld [vmem:[%s7598] ss:$2 sm:$0xff]
          %s7600 = scalar_lea.vmem [#allocation5], 144
          %v7601 = vld [vmem:[%s7600] ss:$2 sm:$0xff]
          %s7602 = scalar_lea.vmem [#allocation5], 160
          %v7603 = vld [vmem:[%s7602] ss:$2 sm:$0xff]
          %s7604 = scalar_lea.vmem [#allocation5], 176
          %v7605 = vld [vmem:[%s7604] ss:$2 sm:$0xff]
          %s7606 = scalar_lea.vmem [#allocation5], 192
          %v7607 = vld [vmem:[%s7606] ss:$2 sm:$0xff]
          %s7608 = scalar_lea.vmem [#allocation5], 208
          %v7609 = vld [vmem:[%s7608] ss:$2 sm:$0xff]
          %s7610 = scalar_lea.vmem [#allocation5], 224
          %v7611 = vld [vmem:[%s7610] ss:$2 sm:$0xff]
          %s7612 = scalar_lea.vmem [#allocation5], 240
          %v7613 = vld [vmem:[%s7612] ss:$2 sm:$0xff]
          %s7614 = scalar_lea.vmem [#allocation5], 256
          %v7615 = vld [vmem:[%s7614] ss:$2 sm:$0xff]
          %s7616 = scalar_lea.vmem [#allocation5], 272
          %v7617 = vld [vmem:[%s7616] ss:$2 sm:$0xff]
          %s7618 = scalar_lea.vmem [#allocation5], 1
          %v7619 = vld [vmem:[%s7618] ss:$2 sm:$0xff]
          %s7620 = scalar_lea.vmem [#allocation5], 17
          %v7621 = vld [vmem:[%s7620] ss:$2 sm:$0xff]
          %s7622 = scalar_lea.vmem [#allocation5], 33
          %v7623 = vld [vmem:[%s7622] ss:$2 sm:$0xff]
          %s7624 = scalar_lea.vmem [#allocation5], 49
          %v7625 = vld [vmem:[%s7624] ss:$2 sm:$0xff]
          %s7626 = scalar_lea.vmem [#allocation5], 65
          %v7627 = vld [vmem:[%s7626] ss:$2 sm:$0xff]
          %s7628 = scalar_lea.vmem [#allocation5], 81
          %v7629 = vld [vmem:[%s7628] ss:$2 sm:$0xff]
          %s7630 = scalar_lea.vmem [#allocation5], 97
          %v7631 = vld [vmem:[%s7630] ss:$2 sm:$0xff]
          %s7632 = scalar_lea.vmem [#allocation5], 113
          %v7633 = vld [vmem:[%s7632] ss:$2 sm:$0xff]
          %s7634 = scalar_lea.vmem [#allocation5], 129
          %v7635 = vld [vmem:[%s7634] ss:$2 sm:$0xff]
          %s7636 = scalar_lea.vmem [#allocation5], 145
          %v7637 = vld [vmem:[%s7636] ss:$2 sm:$0xff]
          %s7638 = scalar_lea.vmem [#allocation5], 161
          %v7639 = vld [vmem:[%s7638] ss:$2 sm:$0xff]
          %s7640 = scalar_lea.vmem [#allocation5], 177
          %v7641 = vld [vmem:[%s7640] ss:$2 sm:$0xff]
          %s7642 = scalar_lea.vmem [#allocation5], 193
          %v7643 = vld [vmem:[%s7642] ss:$2 sm:$0xff]
          %s7644 = scalar_lea.vmem [#allocation5], 209
          %v7645 = vld [vmem:[%s7644] ss:$2 sm:$0xff]
          %s7646 = scalar_lea.vmem [#allocation5], 225
          %v7647 = vld [vmem:[%s7646] ss:$2 sm:$0xff]
          %s7648 = scalar_lea.vmem [#allocation5], 241
          %v7649 = vld [vmem:[%s7648] ss:$2 sm:$0xff]
          %s7650 = scalar_lea.vmem [#allocation5], 257
          %v7651 = vld [vmem:[%s7650] ss:$2 sm:$0xff]
          %s7652 = scalar_lea.vmem [#allocation5], 273
          %v7653 = vld [vmem:[%s7652] ss:$2 sm:$0xff]
          %v7654 = vmax.f32 %v7583, %v7619
          %v7655 = vmax.f32 %v7585, %v7621
          %v7656 = vmax.f32 %v7587, %v7623
          %v7657 = vmax.f32 %v7589, %v7625
          %v7658 = vmax.f32 %v7591, %v7627
          %v7659 = vmax.f32 %v7593, %v7629
          %v7660 = vmax.f32 %v7595, %v7631
          %v7661 = vmax.f32 %v7597, %v7633
          %v7662 = vmax.f32 %v7599, %v7635
          %v7663 = vmax.f32 %v7601, %v7637
          %v7664 = vmax.f32 %v7603, %v7639
          %v7665 = vmax.f32 %v7605, %v7641
          %v7666 = vmax.f32 %v7607, %v7643
          %v7667 = vmax.f32 %v7609, %v7645
          %v7668 = vmax.f32 %v7611, %v7647
          %v7669 = vmax.f32 %v7613, %v7649
          %v7670 = vmax.f32 %v7615, %v7651
          %v7671 = vmax.f32 %v7617, %v7653
          %s7672 = smul.u32 %s7549, 144
          %s7673 = scalar_lea.vmem [#allocation6], %s7672
          %vm7674 = vcmask 588800
          %7675 = vst.msk [vmem:[%s7673] sm:$0xff] %vm7674, %v7654
          %7676 = vst.msk [vmem:[%s7673 + $0x8] sm:$0xff] %vm7674, %v7655
          %7677 = vst.msk [vmem:[%s7673 + $0x10] sm:$0xff] %vm7674, %v7656
          %7678 = vst.msk [vmem:[%s7673 + $0x18] sm:$0xff] %vm7674, %v7657
          %7679 = vst.msk [vmem:[%s7673 + $0x20] sm:$0xff] %vm7674, %v7658
          %7680 = vst.msk [vmem:[%s7673 + $0x28] sm:$0xff] %vm7674, %v7659
          %7681 = vst.msk [vmem:[%s7673 + $0x30] sm:$0xff] %vm7674, %v7660
          %7682 = vst.msk [vmem:[%s7673 + $0x38] sm:$0xff] %vm7674, %v7661
          %7683 = vst.msk [vmem:[%s7673 + $0x40] sm:$0xff] %vm7674, %v7662
          %7684 = vst.msk [vmem:[%s7673 + $0x48] sm:$0xff] %vm7674, %v7663
          %7685 = vst.msk [vmem:[%s7673 + $0x50] sm:$0xff] %vm7674, %v7664
          %7686 = vst.msk [vmem:[%s7673 + $0x58] sm:$0xff] %vm7674, %v7665
          %7687 = vst.msk [vmem:[%s7673 + $0x60] sm:$0xff] %vm7674, %v7666
          %7688 = vst.msk [vmem:[%s7673 + $0x68] sm:$0xff] %vm7674, %v7667
          %7689 = vst.msk [vmem:[%s7673 + $0x70] sm:$0xff] %vm7674, %v7668
          %7690 = vst.msk [vmem:[%s7673 + $0x78] sm:$0xff] %vm7674, %v7669
          %7691 = vst.msk [vmem:[%s7673 + $0x80] sm:$0xff] %vm7674, %v7670
          %7692 = vst.msk [vmem:[%s7673 + $0x88] sm:$0xff] %vm7674, %v7671
        $region171: #{danet_forward.1} parent=95 // loop_footer
          %s7553 = sadd.s32 1, %s7549
        $region172: #{danet_forward.1} parent=95 // loop_footer_branch
          %7548 = sbr.rel target = $region168
        $region173: #{danet_forward.1} parent=95 // loop_exit
          _
        loop: start=0, step=1, limit=8
        $region181: #{danet_forward.1} parent=95 // loop_pre_header
          _
        $region182: #{danet_forward.1} parent=95 // loop_header
          %s7694 = sphi 0, %s7698
          %p7695 = scmp.ge.s32.totalorder %s7694, 8
        $region183: #{danet_forward.1} parent=95 // loop_header_branch
          %7697 = sbr.rel (%p7695) target = $region187
        $region184: #{danet_forward.1} parent=95 // loop_body
          %s7699 = smul.u32 %s7694, 144
          %s7700 = scalar_lea.vmem [#allocation6], %s7699
          %v7701 = vld [vmem:[%s7700] sm:$0xff]
          %v7702 = vld [vmem:[%s7700 + $0x8] sm:$0xff]
          %v7703 = vld [vmem:[%s7700 + $0x10] sm:$0xff]
          %v7704 = vld [vmem:[%s7700 + $0x18] sm:$0xff]
          %v7705 = vld [vmem:[%s7700 + $0x20] sm:$0xff]
          %v7706 = vld [vmem:[%s7700 + $0x28] sm:$0xff]
          %v7707 = vld [vmem:[%s7700 + $0x30] sm:$0xff]
          %v7708 = vld [vmem:[%s7700 + $0x38] sm:$0xff]
          %v7709 = vld [vmem:[%s7700 + $0x40] sm:$0xff]
          %v7710 = vld [vmem:[%s7700 + $0x48] sm:$0xff]
          %v7711 = vld [vmem:[%s7700 + $0x50] sm:$0xff]
          %v7712 = vld [vmem:[%s7700 + $0x58] sm:$0xff]
          %v7713 = vld [vmem:[%s7700 + $0x60] sm:$0xff]
          %v7714 = vld [vmem:[%s7700 + $0x68] sm:$0xff]
          %v7715 = vld [vmem:[%s7700 + $0x70] sm:$0xff]
          %v7716 = vld [vmem:[%s7700 + $0x78] sm:$0xff]
          %v7717 = vld [vmem:[%s7700 + $0x80] sm:$0xff]
          %v7718 = vld [vmem:[%s7700 + $0x88] sm:$0xff]
          %v7719 = vpack.c.bf16 %v7702, %v7701
          %v7720 = vpack.c.bf16 %v7704, %v7703
          %v7721 = vpack.c.bf16 %v7706, %v7705
          %v7722 = vpack.c.bf16 %v7708, %v7707
          %v7723 = vpack.c.bf16 %v7710, %v7709
          %v7724 = vpack.c.bf16 %v7712, %v7711
          %v7725 = vpack.c.bf16 %v7714, %v7713
          %v7726 = vpack.c.bf16 %v7716, %v7715
          %v7727 = vpack.c.bf16 %v7718, %v7717
          %v7728 = vld [vmem:[%s9] sm:$0xf]
          %v7729 = vld [vmem:[%s9 + $0x4] sm:$0xf]
          %v7730 = vld [vmem:[%s9 + $0x8] sm:$0xf]
          %v7731 = vld [vmem:[%s9 + $0xc] sm:$0xf]
          %v7732 = vld [vmem:[%s9 + $0x10] sm:$0xf]
          %v7733 = vld [vmem:[%s9 + $0x14] sm:$0xf]
          %v7734 = vld [vmem:[%s9 + $0x18] sm:$0xf]
          %v7735 = vld [vmem:[%s9 + $0x1c] sm:$0xf]
          %v7736 = vld [vmem:[%s9 + $0x20] sm:$0xf]
          %v7737 = vld [vmem:[%s10] sm:$0x1]
          %v7739 = vperm.slane %v7737, 0
          %v7750 = vunpack.c.l.b16 %v7728
          %v7751 = vunpack.c.l.b16 %v7729
          %v7752 = vunpack.c.l.b16 %v7730
          %v7753 = vunpack.c.l.b16 %v7731
          %v7754 = vunpack.c.l.b16 %v7732
          %v7755 = vunpack.c.l.b16 %v7733
          %v7756 = vunpack.c.l.b16 %v7734
          %v7757 = vunpack.c.l.b16 %v7735
          %v7758 = vunpack.c.l.b16 %v7736
          %v7759 = vpack.c.b16 %v7751, %v7750
          %v7760 = vpack.c.b16 %v7753, %v7752
          %v7761 = vpack.c.b16 %v7755, %v7754
          %v7762 = vpack.c.b16 %v7757, %v7756
          %v7763 = vpack.c.b16 %v7758, %v7758
          %vm7768 = vcmask 588800
          %v7770 = vsel %vm7768, %v7719, 0
          %v7773 = vsel %vm7768, %v7720, 0
          %v7776 = vsel %vm7768, %v7721, 0
          %v7779 = vsel %vm7768, %v7722, 0
          %v7782 = vsel %vm7768, %v7723, 0
          %v7785 = vsel %vm7768, %v7724, 0
          %v7788 = vsel %vm7768, %v7725, 0
          %v7791 = vsel %vm7768, %v7726, 0
          %v7794 = vsel %vm7768, %v7727, 0
          %vm7796 = vcmask 1043456
          %v7798 = vsel %vm7796, %v7763, 0
          %7800 = vmatpush.bf16.msra.mxu0 0
          %7801 = vmatpush.bf16.msra.mxu0 0
          %7802 = vmatpush.bf16.msra.mxu0 0
          %7803 = vmatpush.bf16.msra.mxu0 %v7798
          %7804 = vmatpush.bf16.msra.mxu0 %v7762
          %7805 = vmatpush.bf16.msra.mxu0 %v7761
          %7806 = vmatpush.bf16.msra.mxu0 %v7760
          %7807 = vmatpush.bf16.msra.mxu0 %v7759
          %7808 = vmatmul.bf16.gmra.mxu0 %v7770
          %v7809 = vpop.f32.mrf.mxu0
          %v7810 = vadd.f32 %v7739, %v7809
          %v7811 = vpop.f32.mrf.mxu0
          %v7812 = vadd.f32 %v7739, %v7811
          %7813 = vmatmul.bf16.gmra.mxu0 %v7773
          %v7814 = vpop.f32.mrf.mxu0
          %v7815 = vadd.f32 %v7739, %v7814
          %v7816 = vpop.f32.mrf.mxu0
          %v7817 = vadd.f32 %v7739, %v7816
          %7818 = vmatmul.bf16.gmra.mxu0 %v7776
          %v7819 = vpop.f32.mrf.mxu0
          %v7820 = vadd.f32 %v7739, %v7819
          %v7821 = vpop.f32.mrf.mxu0
          %v7822 = vadd.f32 %v7739, %v7821
          %7823 = vmatmul.bf16.gmra.mxu0 %v7779
          %v7824 = vpop.f32.mrf.mxu0
          %v7825 = vadd.f32 %v7739, %v7824
          %v7826 = vpop.f32.mrf.mxu0
          %v7827 = vadd.f32 %v7739, %v7826
          %7828 = vmatmul.bf16.gmra.mxu0 %v7782
          %v7829 = vpop.f32.mrf.mxu0
          %v7830 = vadd.f32 %v7739, %v7829
          %v7831 = vpop.f32.mrf.mxu0
          %v7832 = vadd.f32 %v7739, %v7831
          %7833 = vmatmul.bf16.gmra.mxu0 %v7785
          %v7834 = vpop.f32.mrf.mxu0
          %v7835 = vadd.f32 %v7739, %v7834
          %v7836 = vpop.f32.mrf.mxu0
          %v7837 = vadd.f32 %v7739, %v7836
          %7838 = vmatmul.bf16.gmra.mxu0 %v7788
          %v7839 = vpop.f32.mrf.mxu0
          %v7840 = vadd.f32 %v7739, %v7839
          %v7841 = vpop.f32.mrf.mxu0
          %v7842 = vadd.f32 %v7739, %v7841
          %7843 = vmatmul.bf16.gmra.mxu0 %v7791
          %v7844 = vpop.f32.mrf.mxu0
          %v7845 = vadd.f32 %v7739, %v7844
          %v7846 = vpop.f32.mrf.mxu0
          %v7847 = vadd.f32 %v7739, %v7846
          %7848 = vmatmul.bf16.gmra.mxu0 %v7794
          %v7849 = vpop.f32.mrf.mxu0
          %v7850 = vadd.f32 %v7739, %v7849
          %v7851 = vpop.f32.mrf.mxu0
          %v7852 = vadd.f32 %v7739, %v7851
          %7853 = vdwg.mxu0
          %v7854 = vmax.f32 %v7810, 0.0
          %v7855 = vmax.f32 %v7812, 0.0
          %v7856 = vmax.f32 %v7815, 0.0
          %v7857 = vmax.f32 %v7817, 0.0
          %v7858 = vmax.f32 %v7820, 0.0
          %v7859 = vmax.f32 %v7822, 0.0
          %v7860 = vmax.f32 %v7825, 0.0
          %v7861 = vmax.f32 %v7827, 0.0
          %v7862 = vmax.f32 %v7830, 0.0
          %v7863 = vmax.f32 %v7832, 0.0
          %v7864 = vmax.f32 %v7835, 0.0
          %v7865 = vmax.f32 %v7837, 0.0
          %v7866 = vmax.f32 %v7840, 0.0
          %v7867 = vmax.f32 %v7842, 0.0
          %v7868 = vmax.f32 %v7845, 0.0
          %v7869 = vmax.f32 %v7847, 0.0
          %v7870 = vmax.f32 %v7850, 0.0
          %v7871 = vmax.f32 %v7852, 0.0
          %v7872 = vpack.c.bf16 %v7855, %v7854
          %v7873 = vpack.c.bf16 %v7857, %v7856
          %v7874 = vpack.c.bf16 %v7859, %v7858
          %v7875 = vpack.c.bf16 %v7861, %v7860
          %v7876 = vpack.c.bf16 %v7863, %v7862
          %v7877 = vpack.c.bf16 %v7865, %v7864
          %v7878 = vpack.c.bf16 %v7867, %v7866
          %v7879 = vpack.c.bf16 %v7869, %v7868
          %v7880 = vpack.c.bf16 %v7871, %v7870
          %v7881 = vld [vmem:[%s11] sm:$0xf]
          %v7882 = vld [vmem:[%s11 + $0x4] sm:$0xf]
          %v7883 = vld [vmem:[%s11 + $0x8] sm:$0xf]
          %v7884 = vld [vmem:[%s11 + $0xc] sm:$0xf]
          %v7885 = vld [vmem:[%s11 + $0x10] sm:$0xf]
          %v7886 = vld [vmem:[%s11 + $0x14] sm:$0xf]
          %v7887 = vld [vmem:[%s11 + $0x18] sm:$0xf]
          %v7888 = vld [vmem:[%s11 + $0x1c] sm:$0xf]
          %v7889 = vld [vmem:[%s11 + $0x20] sm:$0xf]
          %v7890 = vld [vmem:[%s12] sm:$0x1]
          %v7892 = vperm.slane %v7890, 0
          %v7903 = vunpack.c.l.b16 %v7881
          %v7904 = vunpack.c.l.b16 %v7882
          %v7905 = vunpack.c.l.b16 %v7883
          %v7906 = vunpack.c.l.b16 %v7884
          %v7907 = vunpack.c.l.b16 %v7885
          %v7908 = vunpack.c.l.b16 %v7886
          %v7909 = vunpack.c.l.b16 %v7887
          %v7910 = vunpack.c.l.b16 %v7888
          %v7911 = vunpack.c.l.b16 %v7889
          %v7912 = vpack.c.b16 %v7904, %v7903
          %v7913 = vpack.c.b16 %v7906, %v7905
          %v7914 = vpack.c.b16 %v7908, %v7907
          %v7915 = vpack.c.b16 %v7910, %v7909
          %v7916 = vpack.c.b16 %v7911, %v7911
          %v7922 = vsel %vm7768, %v7872, 0
          %v7925 = vsel %vm7768, %v7873, 0
          %v7928 = vsel %vm7768, %v7874, 0
          %v7931 = vsel %vm7768, %v7875, 0
          %v7934 = vsel %vm7768, %v7876, 0
          %v7937 = vsel %vm7768, %v7877, 0
          %v7940 = vsel %vm7768, %v7878, 0
          %v7943 = vsel %vm7768, %v7879, 0
          %v7946 = vsel %vm7768, %v7880, 0
          %v7949 = vsel %vm7796, %v7916, 0
          %7951 = vmatpush.bf16.msra.mxu0 0
          %7952 = vmatpush.bf16.msra.mxu0 0
          %7953 = vmatpush.bf16.msra.mxu0 0
          %7954 = vmatpush.bf16.msra.mxu0 %v7949
          %7955 = vmatpush.bf16.msra.mxu0 %v7915
          %7956 = vmatpush.bf16.msra.mxu0 %v7914
          %7957 = vmatpush.bf16.msra.mxu0 %v7913
          %7958 = vmatpush.bf16.msra.mxu0 %v7912
          %7959 = vmatmul.bf16.gmra.mxu0 %v7922
          %v7960 = vpop.f32.mrf.mxu0
          %v7961 = vadd.f32 %v7892, %v7960
          %v7962 = vpop.f32.mrf.mxu0
          %v7963 = vadd.f32 %v7892, %v7962
          %7964 = vmatmul.bf16.gmra.mxu0 %v7925
          %v7965 = vpop.f32.mrf.mxu0
          %v7966 = vadd.f32 %v7892, %v7965
          %v7967 = vpop.f32.mrf.mxu0
          %v7968 = vadd.f32 %v7892, %v7967
          %7969 = vmatmul.bf16.gmra.mxu0 %v7928
          %v7970 = vpop.f32.mrf.mxu0
          %v7971 = vadd.f32 %v7892, %v7970
          %v7972 = vpop.f32.mrf.mxu0
          %v7973 = vadd.f32 %v7892, %v7972
          %7974 = vmatmul.bf16.gmra.mxu0 %v7931
          %v7975 = vpop.f32.mrf.mxu0
          %v7976 = vadd.f32 %v7892, %v7975
          %v7977 = vpop.f32.mrf.mxu0
          %v7978 = vadd.f32 %v7892, %v7977
          %7979 = vmatmul.bf16.gmra.mxu0 %v7934
          %v7980 = vpop.f32.mrf.mxu0
          %v7981 = vadd.f32 %v7892, %v7980
          %v7982 = vpop.f32.mrf.mxu0
          %v7983 = vadd.f32 %v7892, %v7982
          %7984 = vmatmul.bf16.gmra.mxu0 %v7937
          %v7985 = vpop.f32.mrf.mxu0
          %v7986 = vadd.f32 %v7892, %v7985
          %v7987 = vpop.f32.mrf.mxu0
          %v7988 = vadd.f32 %v7892, %v7987
          %7989 = vmatmul.bf16.gmra.mxu0 %v7940
          %v7990 = vpop.f32.mrf.mxu0
          %v7991 = vadd.f32 %v7892, %v7990
          %v7992 = vpop.f32.mrf.mxu0
          %v7993 = vadd.f32 %v7892, %v7992
          %7994 = vmatmul.bf16.gmra.mxu0 %v7943
          %v7995 = vpop.f32.mrf.mxu0
          %v7996 = vadd.f32 %v7892, %v7995
          %v7997 = vpop.f32.mrf.mxu0
          %v7998 = vadd.f32 %v7892, %v7997
          %7999 = vmatmul.bf16.gmra.mxu0 %v7946
          %v8000 = vpop.f32.mrf.mxu0
          %v8001 = vadd.f32 %v7892, %v8000
          %v8002 = vpop.f32.mrf.mxu0
          %v8003 = vadd.f32 %v7892, %v8002
          %8004 = vdwg.mxu0
          %v8005 = vmax.f32 %v7961, 0.0
          %v8006 = vmax.f32 %v7963, 0.0
          %v8007 = vmax.f32 %v7966, 0.0
          %v8008 = vmax.f32 %v7968, 0.0
          %v8009 = vmax.f32 %v7971, 0.0
          %v8010 = vmax.f32 %v7973, 0.0
          %v8011 = vmax.f32 %v7976, 0.0
          %v8012 = vmax.f32 %v7978, 0.0
          %v8013 = vmax.f32 %v7981, 0.0
          %v8014 = vmax.f32 %v7983, 0.0
          %v8015 = vmax.f32 %v7986, 0.0
          %v8016 = vmax.f32 %v7988, 0.0
          %v8017 = vmax.f32 %v7991, 0.0
          %v8018 = vmax.f32 %v7993, 0.0
          %v8019 = vmax.f32 %v7996, 0.0
          %v8020 = vmax.f32 %v7998, 0.0
          %v8021 = vmax.f32 %v8001, 0.0
          %v8022 = vmax.f32 %v8003, 0.0
          %v8023 = vpack.c.bf16 %v8006, %v8005
          %v8024 = vpack.c.bf16 %v8008, %v8007
          %v8025 = vpack.c.bf16 %v8010, %v8009
          %v8026 = vpack.c.bf16 %v8012, %v8011
          %v8027 = vpack.c.bf16 %v8014, %v8013
          %v8028 = vpack.c.bf16 %v8016, %v8015
          %v8029 = vpack.c.bf16 %v8018, %v8017
          %v8030 = vpack.c.bf16 %v8020, %v8019
          %v8031 = vpack.c.bf16 %v8022, %v8021
          %v8032 = vld [vmem:[%s13] sm:$0xf]
          %v8033 = vld [vmem:[%s13 + $0x4] sm:$0xf]
          %v8034 = vld [vmem:[%s13 + $0x8] sm:$0xf]
          %v8035 = vld [vmem:[%s13 + $0xc] sm:$0xf]
          %v8036 = vld [vmem:[%s13 + $0x10] sm:$0xf]
          %v8037 = vld [vmem:[%s13 + $0x14] sm:$0xf]
          %v8038 = vld [vmem:[%s13 + $0x18] sm:$0xf]
          %v8039 = vld [vmem:[%s13 + $0x1c] sm:$0xf]
          %v8040 = vld [vmem:[%s13 + $0x20] sm:$0xf]
          %v8041 = vld [vmem:[%s14] sm:$0x1]
          %v8043 = vperm.slane %v8041, 0
          %v8054 = vunpack.c.l.b16 %v8032
          %v8055 = vunpack.c.l.b16 %v8033
          %v8056 = vunpack.c.l.b16 %v8034
          %v8057 = vunpack.c.l.b16 %v8035
          %v8058 = vunpack.c.l.b16 %v8036
          %v8059 = vunpack.c.l.b16 %v8037
          %v8060 = vunpack.c.l.b16 %v8038
          %v8061 = vunpack.c.l.b16 %v8039
          %v8062 = vunpack.c.l.b16 %v8040
          %v8063 = vpack.c.b16 %v8055, %v8054
          %v8064 = vpack.c.b16 %v8057, %v8056
          %v8065 = vpack.c.b16 %v8059, %v8058
          %v8066 = vpack.c.b16 %v8061, %v8060
          %v8067 = vpack.c.b16 %v8062, %v8062
          %v8073 = vsel %vm7768, %v8023, 0
          %v8076 = vsel %vm7768, %v8024, 0
          %v8079 = vsel %vm7768, %v8025, 0
          %v8082 = vsel %vm7768, %v8026, 0
          %v8085 = vsel %vm7768, %v8027, 0
          %v8088 = vsel %vm7768, %v8028, 0
          %v8091 = vsel %vm7768, %v8029, 0
          %v8094 = vsel %vm7768, %v8030, 0
          %v8097 = vsel %vm7768, %v8031, 0
          %v8100 = vsel %vm7796, %v8067, 0
          %8102 = vmatpush.bf16.msra.mxu0 0
          %8103 = vmatpush.bf16.msra.mxu0 0
          %8104 = vmatpush.bf16.msra.mxu0 0
          %8105 = vmatpush.bf16.msra.mxu0 %v8100
          %8106 = vmatpush.bf16.msra.mxu0 %v8066
          %8107 = vmatpush.bf16.msra.mxu0 %v8065
          %8108 = vmatpush.bf16.msra.mxu0 %v8064
          %8109 = vmatpush.bf16.msra.mxu0 %v8063
          %8110 = vmatmul.bf16.gmra.mxu0 %v8073
          %v8111 = vpop.f32.mrf.mxu0
          %v8112 = vadd.f32 %v8043, %v8111
          %v8113 = vpop.f32.mrf.mxu0
          %v8114 = vadd.f32 %v8043, %v8113
          %8115 = vmatmul.bf16.gmra.mxu0 %v8076
          %v8116 = vpop.f32.mrf.mxu0
          %v8117 = vadd.f32 %v8043, %v8116
          %v8118 = vpop.f32.mrf.mxu0
          %v8119 = vadd.f32 %v8043, %v8118
          %8120 = vmatmul.bf16.gmra.mxu0 %v8079
          %v8121 = vpop.f32.mrf.mxu0
          %v8122 = vadd.f32 %v8043, %v8121
          %v8123 = vpop.f32.mrf.mxu0
          %v8124 = vadd.f32 %v8043, %v8123
          %8125 = vmatmul.bf16.gmra.mxu0 %v8082
          %v8126 = vpop.f32.mrf.mxu0
          %v8127 = vadd.f32 %v8043, %v8126
          %v8128 = vpop.f32.mrf.mxu0
          %v8129 = vadd.f32 %v8043, %v8128
          %8130 = vmatmul.bf16.gmra.mxu0 %v8085
          %v8131 = vpop.f32.mrf.mxu0
          %v8132 = vadd.f32 %v8043, %v8131
          %v8133 = vpop.f32.mrf.mxu0
          %v8134 = vadd.f32 %v8043, %v8133
          %8135 = vmatmul.bf16.gmra.mxu0 %v8088
          %v8136 = vpop.f32.mrf.mxu0
          %v8137 = vadd.f32 %v8043, %v8136
          %v8138 = vpop.f32.mrf.mxu0
          %v8139 = vadd.f32 %v8043, %v8138
          %8140 = vmatmul.bf16.gmra.mxu0 %v8091
          %v8141 = vpop.f32.mrf.mxu0
          %v8142 = vadd.f32 %v8043, %v8141
          %v8143 = vpop.f32.mrf.mxu0
          %v8144 = vadd.f32 %v8043, %v8143
          %8145 = vmatmul.bf16.gmra.mxu0 %v8094
          %v8146 = vpop.f32.mrf.mxu0
          %v8147 = vadd.f32 %v8043, %v8146
          %v8148 = vpop.f32.mrf.mxu0
          %v8149 = vadd.f32 %v8043, %v8148
          %8150 = vmatmul.bf16.gmra.mxu0 %v8097
          %v8151 = vpop.f32.mrf.mxu0
          %v8152 = vadd.f32 %v8043, %v8151
          %v8153 = vpop.f32.mrf.mxu0
          %v8154 = vadd.f32 %v8043, %v8153
          %8155 = vdwg.mxu0
          %v8156 = vmax.f32 %v8112, 0.0
          %v8157 = vmax.f32 %v8114, 0.0
          %v8158 = vmax.f32 %v8117, 0.0
          %v8159 = vmax.f32 %v8119, 0.0
          %v8160 = vmax.f32 %v8122, 0.0
          %v8161 = vmax.f32 %v8124, 0.0
          %v8162 = vmax.f32 %v8127, 0.0
          %v8163 = vmax.f32 %v8129, 0.0
          %v8164 = vmax.f32 %v8132, 0.0
          %v8165 = vmax.f32 %v8134, 0.0
          %v8166 = vmax.f32 %v8137, 0.0
          %v8167 = vmax.f32 %v8139, 0.0
          %v8168 = vmax.f32 %v8142, 0.0
          %v8169 = vmax.f32 %v8144, 0.0
          %v8170 = vmax.f32 %v8147, 0.0
          %v8171 = vmax.f32 %v8149, 0.0
          %v8172 = vmax.f32 %v8152, 0.0
          %v8173 = vmax.f32 %v8154, 0.0
          %s8174 = scalar_lea.vmem [#allocation7], %s7699
          %vm8175 = vcmask 785408
          %8176 = vst.msk [vmem:[%s8174] sm:$0xff] %vm8175, %v8156
          %8177 = vst.msk [vmem:[%s8174 + $0x8] sm:$0xff] %vm8175, %v8157
          %8178 = vst.msk [vmem:[%s8174 + $0x10] sm:$0xff] %vm8175, %v8158
          %8179 = vst.msk [vmem:[%s8174 + $0x18] sm:$0xff] %vm8175, %v8159
          %8180 = vst.msk [vmem:[%s8174 + $0x20] sm:$0xff] %vm8175, %v8160
          %8181 = vst.msk [vmem:[%s8174 + $0x28] sm:$0xff] %vm8175, %v8161
          %8182 = vst.msk [vmem:[%s8174 + $0x30] sm:$0xff] %vm8175, %v8162
          %8183 = vst.msk [vmem:[%s8174 + $0x38] sm:$0xff] %vm8175, %v8163
          %8184 = vst.msk [vmem:[%s8174 + $0x40] sm:$0xff] %vm8175, %v8164
          %8185 = vst.msk [vmem:[%s8174 + $0x48] sm:$0xff] %vm8175, %v8165
          %8186 = vst.msk [vmem:[%s8174 + $0x50] sm:$0xff] %vm8175, %v8166
          %8187 = vst.msk [vmem:[%s8174 + $0x58] sm:$0xff] %vm8175, %v8167
          %8188 = vst.msk [vmem:[%s8174 + $0x60] sm:$0xff] %vm8175, %v8168
          %8189 = vst.msk [vmem:[%s8174 + $0x68] sm:$0xff] %vm8175, %v8169
          %8190 = vst.msk [vmem:[%s8174 + $0x70] sm:$0xff] %vm8175, %v8170
          %8191 = vst.msk [vmem:[%s8174 + $0x78] sm:$0xff] %vm8175, %v8171
          %8192 = vst.msk [vmem:[%s8174 + $0x80] sm:$0xff] %vm8175, %v8172
          %8193 = vst.msk [vmem:[%s8174 + $0x88] sm:$0xff] %vm8175, %v8173
        $region185: #{danet_forward.1} parent=95 // loop_footer
          %s7698 = sadd.s32 1, %s7694
        $region186: #{danet_forward.1} parent=95 // loop_footer_branch
          %7693 = sbr.rel target = $region182
        $region187: #{danet_forward.1} parent=95 // loop_exit
          _
        loop: start=0, step=1, limit=8
        $region188: #{danet_forward.1} parent=95 // loop_pre_header
          _
        $region189: #{danet_forward.1} parent=95 // loop_header
          %s8195 = sphi 0, %s8199
          %p8196 = scmp.ge.s32.totalorder %s8195, 8
        $region190: #{danet_forward.1} parent=95 // loop_header_branch
          %8198 = sbr.rel (%p8196) target = $region194
        $region191: #{danet_forward.1} parent=95 // loop_body
          %s8200 = smul.u32 %s8195, 144
          loop: start=0, step=1, limit=6
          $region195: #{danet_forward.1} parent=191 // loop_pre_header
            _
          $region196: #{danet_forward.1} parent=191 // loop_header
            %s8202 = sphi 0, %s8206
            %p8203 = scmp.ge.s32.totalorder %s8202, 6
          $region197: #{danet_forward.1} parent=191 // loop_header_branch
            %8205 = sbr.rel (%p8203) target = $region201
          $region198: #{danet_forward.1} parent=191 // loop_body
            %s8207 = smul.u32 %s8202, 24
            %s8208 = sadd.s32 %s8200, %s8207
            %s8209 = scalar_lea.vmem [#allocation7], %s8208
            %v8210 = vld [vmem:[%s8209] sm:$0xff]
            %v8211 = vld [vmem:[%s8209 + $0x8] sm:$0xf]
            %s8212 = sadd.s32 %s8208, 12
            %s8213 = scalar_lea.vmem [#allocation7], %s8212
            %v8214 = vld [vmem:[%s8213] sm:$0xff]
            %v8215 = vld [vmem:[%s8213 + $0x8] sm:$0xf]
            %v8216 = vmax.f32 %v8210, %v8214
            %v8217 = vmax.f32 %v8211, %v8215
            %s8218 = smul.u32 %s8202, 12
            %s8219 = scalar_lea.vmem [#allocation8], %s8218
            %vm8220 = vcmask 785408
            %8221 = vst.msk [vmem:[%s8219] sm:$0xff] %vm8220, %v8216
            %vm8222 = vcmask 781312
            %8223 = vst.msk [vmem:[%s8219 + $0x8] sm:$0xf] %vm8222, %v8217
          $region199: #{danet_forward.1} parent=191 // loop_footer
            %s8206 = sadd.s32 1, %s8202
          $region200: #{danet_forward.1} parent=191 // loop_footer_branch
            %8201 = sbr.rel target = $region196
          $region201: #{danet_forward.1} parent=191 // loop_exit
            _
          %v8224 = vld [vmem:[#allocation8] ss:$2 sm:$0xff]
          %s8225 = scalar_lea.vmem [#allocation8], 16
          %v8226 = vld [vmem:[%s8225] ss:$2 sm:$0xff]
          %s8227 = scalar_lea.vmem [#allocation8], 32
          %v8228 = vld [vmem:[%s8227] ss:$2 sm:$0xff]
          %s8229 = scalar_lea.vmem [#allocation8], 48
          %v8230 = vld [vmem:[%s8229] ss:$2 sm:$0xff]
          %s8231 = scalar_lea.vmem [#allocation8], 64
          %v8232 = vld [vmem:[%s8231] ss:$2 sm:$0xf]
          %s8233 = scalar_lea.vmem [#allocation8], 1
          %v8234 = vld [vmem:[%s8233] ss:$2 sm:$0xff]
          %s8235 = scalar_lea.vmem [#allocation8], 17
          %v8236 = vld [vmem:[%s8235] ss:$2 sm:$0xff]
          %s8237 = scalar_lea.vmem [#allocation8], 33
          %v8238 = vld [vmem:[%s8237] ss:$2 sm:$0xff]
          %s8239 = scalar_lea.vmem [#allocation8], 49
          %v8240 = vld [vmem:[%s8239] ss:$2 sm:$0xff]
          %s8241 = scalar_lea.vmem [#allocation8], 65
          %v8242 = vld [vmem:[%s8241] ss:$2 sm:$0xf]
          %v8243 = vmax.f32 %v8224, %v8234
          %v8244 = vmax.f32 %v8226, %v8236
          %v8245 = vmax.f32 %v8228, %v8238
          %v8246 = vmax.f32 %v8230, %v8240
          %v8247 = vmax.f32 %v8232, %v8242
          %s8248 = smul.u32 %s8195, 36
          %s8249 = scalar_lea.vmem [#allocation9], %s8248
          %vm8250 = vcmask 785408
          %8251 = vst.msk [vmem:[%s8249] sm:$0xff] %vm8250, %v8243
          %8252 = vst.msk [vmem:[%s8249 + $0x8] sm:$0xff] %vm8250, %v8244
          %8253 = vst.msk [vmem:[%s8249 + $0x10] sm:$0xff] %vm8250, %v8245
          %8254 = vst.msk [vmem:[%s8249 + $0x18] sm:$0xff] %vm8250, %v8246
          %vm8255 = vcmask 781312
          %8256 = vst.msk [vmem:[%s8249 + $0x20] sm:$0xf] %vm8255, %v8247
        $region192: #{danet_forward.1} parent=95 // loop_footer
          %s8199 = sadd.s32 1, %s8195
        $region193: #{danet_forward.1} parent=95 // loop_footer_branch
          %8194 = sbr.rel target = $region189
        $region194: #{danet_forward.1} parent=95 // loop_exit
          _
        loop: start=0, step=1, limit=2
        $region202: #{danet_forward.1} parent=95 // loop_pre_header
          _
        $region203: #{danet_forward.1} parent=95 // loop_header
          %s8258 = sphi 0, %s8262
          %p8259 = scmp.ge.s32.totalorder %s8258, 2
        $region204: #{danet_forward.1} parent=95 // loop_header_branch
          %8261 = sbr.rel (%p8259) target = $region208
        $region205: #{danet_forward.1} parent=95 // loop_body
          %s8263 = smul.u32 %s8258, 144
          %s8264 = scalar_lea.vmem [#allocation9], %s8263
          %v8265 = vld [vmem:[%s8264] sm:$0xff]
          %v8266 = vld [vmem:[%s8264 + $0x8] sm:$0xff]
          %v8267 = vld [vmem:[%s8264 + $0x10] sm:$0xff]
          %v8268 = vld [vmem:[%s8264 + $0x18] sm:$0xff]
          %v8269 = vld [vmem:[%s8264 + $0x20] sm:$0xff]
          %v8270 = vld [vmem:[%s8264 + $0x28] sm:$0xff]
          %v8271 = vld [vmem:[%s8264 + $0x30] sm:$0xff]
          %v8272 = vld [vmem:[%s8264 + $0x38] sm:$0xff]
          %v8273 = vld [vmem:[%s8264 + $0x40] sm:$0xff]
          %v8274 = vld [vmem:[%s8264 + $0x48] sm:$0xff]
          %v8275 = vld [vmem:[%s8264 + $0x50] sm:$0xff]
          %v8276 = vld [vmem:[%s8264 + $0x58] sm:$0xff]
          %v8277 = vld [vmem:[%s8264 + $0x60] sm:$0xff]
          %v8278 = vld [vmem:[%s8264 + $0x68] sm:$0xff]
          %v8279 = vld [vmem:[%s8264 + $0x70] sm:$0xff]
          %v8280 = vld [vmem:[%s8264 + $0x78] sm:$0xff]
          %v8281 = vld [vmem:[%s8264 + $0x80] sm:$0xff]
          %v8282 = vld [vmem:[%s8264 + $0x88] sm:$0xff]
          %v8283 = vpack.c.bf16 %v8266, %v8265
          %v8284 = vpack.c.bf16 %v8268, %v8267
          %v8285 = vpack.c.bf16 %v8270, %v8269
          %v8286 = vpack.c.bf16 %v8272, %v8271
          %v8287 = vpack.c.bf16 %v8274, %v8273
          %v8288 = vpack.c.bf16 %v8276, %v8275
          %v8289 = vpack.c.bf16 %v8278, %v8277
          %v8290 = vpack.c.bf16 %v8280, %v8279
          %v8291 = vpack.c.bf16 %v8282, %v8281
          %v8292 = vld [vmem:[%s15] sm:$0xf]
          %v8293 = vld [vmem:[%s15 + $0x4] sm:$0xf]
          %v8294 = vld [vmem:[%s15 + $0x8] sm:$0xf]
          %v8295 = vld [vmem:[%s15 + $0xc] sm:$0xf]
          %v8296 = vld [vmem:[%s15 + $0x10] sm:$0xf]
          %v8297 = vld [vmem:[%s15 + $0x14] sm:$0xf]
          %v8298 = vld [vmem:[%s15 + $0x18] sm:$0xf]
          %v8299 = vld [vmem:[%s15 + $0x1c] sm:$0xf]
          %v8300 = vld [vmem:[%s15 + $0x20] sm:$0xf]
          %v8301 = vld [vmem:[%s15 + $0x24] sm:$0xf]
          %v8302 = vld [vmem:[%s15 + $0x28] sm:$0xf]
          %v8303 = vld [vmem:[%s15 + $0x2c] sm:$0xf]
          %v8304 = vld [vmem:[%s16] sm:$0x1]
          %v8306 = vperm.slane %v8304, 0
          %v8320 = vunpack.c.l.b16 %v8292
          %v8321 = vunpack.c.l.b16 %v8293
          %v8322 = vunpack.c.l.b16 %v8294
          %v8323 = vunpack.c.l.b16 %v8295
          %v8324 = vunpack.c.l.b16 %v8296
          %v8325 = vunpack.c.l.b16 %v8297
          %v8326 = vunpack.c.l.b16 %v8298
          %v8327 = vunpack.c.l.b16 %v8299
          %v8328 = vunpack.c.l.b16 %v8300
          %v8329 = vunpack.c.l.b16 %v8301
          %v8330 = vunpack.c.l.b16 %v8302
          %v8331 = vunpack.c.l.b16 %v8303
          %v8332 = vpack.c.b16 %v8321, %v8320
          %v8333 = vpack.c.b16 %v8323, %v8322
          %v8334 = vpack.c.b16 %v8325, %v8324
          %v8335 = vpack.c.b16 %v8327, %v8326
          %v8336 = vpack.c.b16 %v8329, %v8328
          %v8337 = vpack.c.b16 %v8331, %v8330
          %vm8344 = vcmask 785408
          %v8346 = vsel %vm8344, %v8283, 0
          %v8349 = vsel %vm8344, %v8284, 0
          %v8352 = vsel %vm8344, %v8285, 0
          %v8355 = vsel %vm8344, %v8286, 0
          %v8358 = vsel %vm8344, %v8287, 0
          %v8361 = vsel %vm8344, %v8288, 0
          %v8364 = vsel %vm8344, %v8289, 0
          %v8367 = vsel %vm8344, %v8290, 0
          %v8370 = vsel %vm8344, %v8291, 0
          %8372 = vmatpush.bf16.msra.mxu0 0
          %8373 = vmatpush.bf16.msra.mxu0 0
          %8374 = vmatpush.bf16.msra.mxu0 %v8337
          %8375 = vmatpush.bf16.msra.mxu0 %v8336
          %8376 = vmatpush.bf16.msra.mxu0 %v8335
          %8377 = vmatpush.bf16.msra.mxu0 %v8334
          %8378 = vmatpush.bf16.msra.mxu0 %v8333
          %8379 = vmatpush.bf16.msra.mxu0 %v8332
          %8380 = vmatmul.bf16.gmra.mxu0 %v8346
          %v8381 = vpop.f32.mrf.mxu0
          %v8382 = vadd.f32 %v8306, %v8381
          %v8383 = vpop.f32.mrf.mxu0
          %v8384 = vadd.f32 %v8306, %v8383
          %8385 = vmatmul.bf16.gmra.mxu0 %v8349
          %v8386 = vpop.f32.mrf.mxu0
          %v8387 = vadd.f32 %v8306, %v8386
          %v8388 = vpop.f32.mrf.mxu0
          %v8389 = vadd.f32 %v8306, %v8388
          %8390 = vmatmul.bf16.gmra.mxu0 %v8352
          %v8391 = vpop.f32.mrf.mxu0
          %v8392 = vadd.f32 %v8306, %v8391
          %v8393 = vpop.f32.mrf.mxu0
          %v8394 = vadd.f32 %v8306, %v8393
          %8395 = vmatmul.bf16.gmra.mxu0 %v8355
          %v8396 = vpop.f32.mrf.mxu0
          %v8397 = vadd.f32 %v8306, %v8396
          %v8398 = vpop.f32.mrf.mxu0
          %v8399 = vadd.f32 %v8306, %v8398
          %8400 = vmatmul.bf16.gmra.mxu0 %v8358
          %v8401 = vpop.f32.mrf.mxu0
          %v8402 = vadd.f32 %v8306, %v8401
          %v8403 = vpop.f32.mrf.mxu0
          %v8404 = vadd.f32 %v8306, %v8403
          %8405 = vmatmul.bf16.gmra.mxu0 %v8361
          %v8406 = vpop.f32.mrf.mxu0
          %v8407 = vadd.f32 %v8306, %v8406
          %v8408 = vpop.f32.mrf.mxu0
          %v8409 = vadd.f32 %v8306, %v8408
          %8410 = vmatmul.bf16.gmra.mxu0 %v8364
          %v8411 = vpop.f32.mrf.mxu0
          %v8412 = vadd.f32 %v8306, %v8411
          %v8413 = vpop.f32.mrf.mxu0
          %v8414 = vadd.f32 %v8306, %v8413
          %8415 = vmatmul.bf16.gmra.mxu0 %v8367
          %v8416 = vpop.f32.mrf.mxu0
          %v8417 = vadd.f32 %v8306, %v8416
          %v8418 = vpop.f32.mrf.mxu0
          %v8419 = vadd.f32 %v8306, %v8418
          %8420 = vmatmul.bf16.gmra.mxu0 %v8370
          %v8421 = vpop.f32.mrf.mxu0
          %v8422 = vadd.f32 %v8306, %v8421
          %v8423 = vpop.f32.mrf.mxu0
          %v8424 = vadd.f32 %v8306, %v8423
          %8425 = vdwg.mxu0
          %v8426 = vmax.f32 %v8382, 0.0
          %v8427 = vmax.f32 %v8384, 0.0
          %v8428 = vmax.f32 %v8387, 0.0
          %v8429 = vmax.f32 %v8389, 0.0
          %v8430 = vmax.f32 %v8392, 0.0
          %v8431 = vmax.f32 %v8394, 0.0
          %v8432 = vmax.f32 %v8397, 0.0
          %v8433 = vmax.f32 %v8399, 0.0
          %v8434 = vmax.f32 %v8402, 0.0
          %v8435 = vmax.f32 %v8404, 0.0
          %v8436 = vmax.f32 %v8407, 0.0
          %v8437 = vmax.f32 %v8409, 0.0
          %v8438 = vmax.f32 %v8412, 0.0
          %v8439 = vmax.f32 %v8414, 0.0
          %v8440 = vmax.f32 %v8417, 0.0
          %v8441 = vmax.f32 %v8419, 0.0
          %v8442 = vmax.f32 %v8422, 0.0
          %v8443 = vmax.f32 %v8424, 0.0
          %s8444 = scalar_lea.vmem [#allocation10], %s8263
          %vm8445 = vcmask 523264
          %8446 = vst.msk [vmem:[%s8444] sm:$0xff] %vm8445, %v8426
          %8447 = vst.msk [vmem:[%s8444 + $0x8] sm:$0xff] %vm8445, %v8427
          %8448 = vst.msk [vmem:[%s8444 + $0x10] sm:$0xff] %vm8445, %v8428
          %8449 = vst.msk [vmem:[%s8444 + $0x18] sm:$0xff] %vm8445, %v8429
          %8450 = vst.msk [vmem:[%s8444 + $0x20] sm:$0xff] %vm8445, %v8430
          %8451 = vst.msk [vmem:[%s8444 + $0x28] sm:$0xff] %vm8445, %v8431
          %8452 = vst.msk [vmem:[%s8444 + $0x30] sm:$0xff] %vm8445, %v8432
          %8453 = vst.msk [vmem:[%s8444 + $0x38] sm:$0xff] %vm8445, %v8433
          %8454 = vst.msk [vmem:[%s8444 + $0x40] sm:$0xff] %vm8445, %v8434
          %8455 = vst.msk [vmem:[%s8444 + $0x48] sm:$0xff] %vm8445, %v8435
          %8456 = vst.msk [vmem:[%s8444 + $0x50] sm:$0xff] %vm8445, %v8436
          %8457 = vst.msk [vmem:[%s8444 + $0x58] sm:$0xff] %vm8445, %v8437
          %8458 = vst.msk [vmem:[%s8444 + $0x60] sm:$0xff] %vm8445, %v8438
          %8459 = vst.msk [vmem:[%s8444 + $0x68] sm:$0xff] %vm8445, %v8439
          %8460 = vst.msk [vmem:[%s8444 + $0x70] sm:$0xff] %vm8445, %v8440
          %8461 = vst.msk [vmem:[%s8444 + $0x78] sm:$0xff] %vm8445, %v8441
          %8462 = vst.msk [vmem:[%s8444 + $0x80] sm:$0xff] %vm8445, %v8442
          %8463 = vst.msk [vmem:[%s8444 + $0x88] sm:$0xff] %vm8445, %v8443
        $region206: #{danet_forward.1} parent=95 // loop_footer
          %s8262 = sadd.s32 1, %s8258
        $region207: #{danet_forward.1} parent=95 // loop_footer_branch
          %8257 = sbr.rel target = $region203
        $region208: #{danet_forward.1} parent=95 // loop_exit
          _
        loop: start=0, step=1, limit=8
        $region209: #{danet_forward.1} parent=95 // loop_pre_header
          _
        $region210: #{danet_forward.1} parent=95 // loop_header
          %s8465 = sphi 0, %s8469
          %p8466 = scmp.ge.s32.totalorder %s8465, 8
        $region211: #{danet_forward.1} parent=95 // loop_header_branch
          %8468 = sbr.rel (%p8466) target = $region215
        $region212: #{danet_forward.1} parent=95 // loop_body
          %s8470 = smul.u32 %s8465, 36
          loop: start=0, step=1, limit=3
          $region216: #{danet_forward.1} parent=212 // loop_pre_header
            _
          $region217: #{danet_forward.1} parent=212 // loop_header
            %s8472 = sphi 0, %s8476
            %p8473 = scmp.ge.s32.totalorder %s8472, 3
          $region218: #{danet_forward.1} parent=212 // loop_header_branch
            %8475 = sbr.rel (%p8473) target = $region222
          $region219: #{danet_forward.1} parent=212 // loop_body
            %s8477 = smul.u32 %s8472, 12
            %s8478 = sadd.s32 %s8470, %s8477
            %s8479 = scalar_lea.vmem [#allocation10], %s8478
            %v8480 = vld [vmem:[%s8479] sm:$0x3f]
            %s8481 = sadd.s32 %s8478, 6
            %s8482 = scalar_lea.vmem [#allocation10], %s8481
            %v8483 = vld [vmem:[%s8482] sm:$0x3f]
            %v8484 = vmax.f32 %v8480, %v8483
            %s8485 = smul.u32 %s8472, 6
            %s8486 = scalar_lea.vmem [#allocation11], %s8485
            %vm8487 = vcmask 521216
            %8488 = vst.msk [vmem:[%s8486] sm:$0x3f] %vm8487, %v8484
          $region220: #{danet_forward.1} parent=212 // loop_footer
            %s8476 = sadd.s32 1, %s8472
          $region221: #{danet_forward.1} parent=212 // loop_footer_branch
            %8471 = sbr.rel target = $region217
          $region222: #{danet_forward.1} parent=212 // loop_exit
            _
          %v8489 = vld [vmem:[#allocation11] ss:$2 sm:$0xff]
          %s8490 = scalar_lea.vmem [#allocation11], 16
          %v8491 = vld [vmem:[%s8490] ss:$2 sm:$0x1]
          %s8492 = scalar_lea.vmem [#allocation11], 1
          %v8493 = vld [vmem:[%s8492] ss:$2 sm:$0xff]
          %s8494 = scalar_lea.vmem [#allocation11], 17
          %v8495 = vld [vmem:[%s8494] ss:$2 sm:$0x1]
          %v8496 = vmax.f32 %v8489, %v8493
          %v8497 = vmax.f32 %v8491, %v8495
          %s8498 = smul.u32 %s8465, 9
          %s8499 = scalar_lea.vmem [#allocation12], %s8498
          %vm8500 = vcmask 523264
          %8501 = vst.msk [vmem:[%s8499] sm:$0xff] %vm8500, %v8496
          %vm8502 = vcmask 516096
          %8503 = vst.msk [vmem:[%s8499 + $0x8] sm:$0x1] %vm8502, %v8497
        $region213: #{danet_forward.1} parent=95 // loop_footer
          %s8469 = sadd.s32 1, %s8465
        $region214: #{danet_forward.1} parent=95 // loop_footer_branch
          %8464 = sbr.rel target = $region210
        $region215: #{danet_forward.1} parent=95 // loop_exit
          _
        %v8504 = vld [vmem:[#allocation12] ss:$9 sm:$0xff]
        %v8505 = vpack.c.bf16 %v8504, %v8504
        %v8506 = vld [vmem:[%s17] sm:$0xf]
        %v8507 = vld [vmem:[%s17 + $0x4] sm:$0xf]
        %v8508 = vld [vmem:[%s17 + $0x8] sm:$0xf]
        %v8509 = vld [vmem:[%s17 + $0xc] sm:$0xf]
        %v8510 = vld [vmem:[%s17 + $0x10] sm:$0xf]
        %v8511 = vld [vmem:[%s17 + $0x14] sm:$0xf]
        %v8512 = vld [vmem:[%s17 + $0x18] sm:$0xf]
        %v8513 = vld [vmem:[%s17 + $0x1c] sm:$0xf]
        %s8514 = scalar_lea.vmem [#allocation12], 1
        %v8515 = vld [vmem:[%s8514] ss:$9 sm:$0xff]
        %v8516 = vpack.c.bf16 %v8515, %v8515
        %v8517 = vld [vmem:[%s17 + $0x20] sm:$0xf]
        %v8518 = vld [vmem:[%s17 + $0x24] sm:$0xf]
        %v8519 = vld [vmem:[%s17 + $0x28] sm:$0xf]
        %v8520 = vld [vmem:[%s17 + $0x2c] sm:$0xf]
        %v8521 = vld [vmem:[%s17 + $0x30] sm:$0xf]
        %v8522 = vld [vmem:[%s17 + $0x34] sm:$0xf]
        %v8523 = vld [vmem:[%s17 + $0x38] sm:$0xf]
        %v8524 = vld [vmem:[%s17 + $0x3c] sm:$0xf]
        %v8533 = vunpack.c.l.b16 %v8517
        %v8534 = vunpack.c.l.b16 %v8518
        %v8535 = vunpack.c.l.b16 %v8519
        %v8536 = vunpack.c.l.b16 %v8520
        %v8537 = vunpack.c.l.b16 %v8521
        %v8538 = vunpack.c.l.b16 %v8522
        %v8539 = vunpack.c.l.b16 %v8523
        %v8540 = vunpack.c.l.b16 %v8524
        %v8541 = vpack.c.b16 %v8534, %v8533
        %v8542 = vpack.c.b16 %v8536, %v8535
        %v8543 = vpack.c.b16 %v8538, %v8537
        %v8544 = vpack.c.b16 %v8540, %v8539
        %vm8549 = vcmask 523264
        %v8551 = vsel %vm8549, %v8516, 0
        %8553 = vmatpush.bf16.msra.mxu0 0
        %8554 = vmatpush.bf16.msra.mxu0 0
        %8555 = vmatpush.bf16.msra.mxu0 0
        %8556 = vmatpush.bf16.msra.mxu0 0
        %8557 = vmatpush.bf16.msra.mxu0 %v8544
        %8558 = vmatpush.bf16.msra.mxu0 %v8543
        %8559 = vmatpush.bf16.msra.mxu0 %v8542
        %8560 = vmatpush.bf16.msra.mxu0 %v8541
        %8561 = vmatmul.bf16.gmra.mxu0 %v8551
        %v8562 = vpop.f32.mrf.mxu0
        %v8563 = vadd.f32 0.0, %v8562
        %v8564 = vpop.f32.mrf.mxu0
        %8565 = vdwg.mxu0
        %v8574 = vunpack.c.l.b16 %v8506
        %v8575 = vunpack.c.l.b16 %v8507
        %v8576 = vunpack.c.l.b16 %v8508
        %v8577 = vunpack.c.l.b16 %v8509
        %v8578 = vunpack.c.l.b16 %v8510
        %v8579 = vunpack.c.l.b16 %v8511
        %v8580 = vunpack.c.l.b16 %v8512
        %v8581 = vunpack.c.l.b16 %v8513
        %v8582 = vpack.c.b16 %v8575, %v8574
        %v8583 = vpack.c.b16 %v8577, %v8576
        %v8584 = vpack.c.b16 %v8579, %v8578
        %v8585 = vpack.c.b16 %v8581, %v8580
        %v8591 = vsel %vm8549, %v8505, 0
        %8593 = vmatpush.bf16.msra.mxu0 0
        %8594 = vmatpush.bf16.msra.mxu0 0
        %8595 = vmatpush.bf16.msra.mxu0 0
        %8596 = vmatpush.bf16.msra.mxu0 0
        %8597 = vmatpush.bf16.msra.mxu0 %v8585
        %8598 = vmatpush.bf16.msra.mxu0 %v8584
        %8599 = vmatpush.bf16.msra.mxu0 %v8583
        %8600 = vmatpush.bf16.msra.mxu0 %v8582
        %8601 = vmatmul.bf16.gmra.mxu0 %v8591
        %v8602 = vpop.f32.mrf.mxu0
        %v8603 = vadd.f32 %v8563, %v8602
        %v8604 = vpop.f32.mrf.mxu0
        %8605 = vdwg.mxu0
        %s8606 = scalar_lea.vmem [#allocation12], 2
        %v8607 = vld [vmem:[%s8606] ss:$9 sm:$0xff]
        %v8608 = vpack.c.bf16 %v8607, %v8607
        %v8609 = vld [vmem:[%s17 + $0x40] sm:$0xf]
        %v8610 = vld [vmem:[%s17 + $0x44] sm:$0xf]
        %v8611 = vld [vmem:[%s17 + $0x48] sm:$0xf]
        %v8612 = vld [vmem:[%s17 + $0x4c] sm:$0xf]
        %v8613 = vld [vmem:[%s17 + $0x50] sm:$0xf]
        %v8614 = vld [vmem:[%s17 + $0x54] sm:$0xf]
        %v8615 = vld [vmem:[%s17 + $0x58] sm:$0xf]
        %v8616 = vld [vmem:[%s17 + $0x5c] sm:$0xf]
        %v8625 = vunpack.c.l.b16 %v8609
        %v8626 = vunpack.c.l.b16 %v8610
        %v8627 = vunpack.c.l.b16 %v8611
        %v8628 = vunpack.c.l.b16 %v8612
        %v8629 = vunpack.c.l.b16 %v8613
        %v8630 = vunpack.c.l.b16 %v8614
        %v8631 = vunpack.c.l.b16 %v8615
        %v8632 = vunpack.c.l.b16 %v8616
        %v8633 = vpack.c.b16 %v8626, %v8625
        %v8634 = vpack.c.b16 %v8628, %v8627
        %v8635 = vpack.c.b16 %v8630, %v8629
        %v8636 = vpack.c.b16 %v8632, %v8631
        %v8642 = vsel %vm8549, %v8608, 0
        %8644 = vmatpush.bf16.msra.mxu0 0
        %8645 = vmatpush.bf16.msra.mxu0 0
        %8646 = vmatpush.bf16.msra.mxu0 0
        %8647 = vmatpush.bf16.msra.mxu0 0
        %8648 = vmatpush.bf16.msra.mxu0 %v8636
        %8649 = vmatpush.bf16.msra.mxu0 %v8635
        %8650 = vmatpush.bf16.msra.mxu0 %v8634
        %8651 = vmatpush.bf16.msra.mxu0 %v8633
        %8652 = vmatmul.bf16.gmra.mxu0 %v8642
        %v8653 = vpop.f32.mrf.mxu0
        %v8654 = vadd.f32 0.0, %v8653
        %v8655 = vpop.f32.mrf.mxu0
        %8656 = vdwg.mxu0
        %v8657 = vadd.f32 %v8603, %v8654
        %s8658 = scalar_lea.vmem [#allocation12], 3
        %v8659 = vld [vmem:[%s8658] ss:$9 sm:$0xff]
        %v8660 = vpack.c.bf16 %v8659, %v8659
        %v8661 = vld [vmem:[%s17 + $0x60] sm:$0xf]
        %v8662 = vld [vmem:[%s17 + $0x64] sm:$0xf]
        %v8663 = vld [vmem:[%s17 + $0x68] sm:$0xf]
        %v8664 = vld [vmem:[%s17 + $0x6c] sm:$0xf]
        %v8665 = vld [vmem:[%s17 + $0x70] sm:$0xf]
        %v8666 = vld [vmem:[%s17 + $0x74] sm:$0xf]
        %v8667 = vld [vmem:[%s17 + $0x78] sm:$0xf]
        %v8668 = vld [vmem:[%s17 + $0x7c] sm:$0xf]
        %v8677 = vunpack.c.l.b16 %v8661
        %v8678 = vunpack.c.l.b16 %v8662
        %v8679 = vunpack.c.l.b16 %v8663
        %v8680 = vunpack.c.l.b16 %v8664
        %v8681 = vunpack.c.l.b16 %v8665
        %v8682 = vunpack.c.l.b16 %v8666
        %v8683 = vunpack.c.l.b16 %v8667
        %v8684 = vunpack.c.l.b16 %v8668
        %v8685 = vpack.c.b16 %v8678, %v8677
        %v8686 = vpack.c.b16 %v8680, %v8679
        %v8687 = vpack.c.b16 %v8682, %v8681
        %v8688 = vpack.c.b16 %v8684, %v8683
        %v8694 = vsel %vm8549, %v8660, 0
        %8696 = vmatpush.bf16.msra.mxu0 0
        %8697 = vmatpush.bf16.msra.mxu0 0
        %8698 = vmatpush.bf16.msra.mxu0 0
        %8699 = vmatpush.bf16.msra.mxu0 0
        %8700 = vmatpush.bf16.msra.mxu0 %v8688
        %8701 = vmatpush.bf16.msra.mxu0 %v8687
        %8702 = vmatpush.bf16.msra.mxu0 %v8686
        %8703 = vmatpush.bf16.msra.mxu0 %v8685
        %8704 = vmatmul.bf16.gmra.mxu0 %v8694
        %v8705 = vpop.f32.mrf.mxu0
        %v8706 = vadd.f32 0.0, %v8705
        %v8707 = vpop.f32.mrf.mxu0
        %8708 = vdwg.mxu0
        %v8709 = vadd.f32 %v8657, %v8706
        %s8710 = scalar_lea.vmem [#allocation12], 4
        %v8711 = vld [vmem:[%s8710] ss:$9 sm:$0xff]
        %v8712 = vpack.c.bf16 %v8711, %v8711
        %v8713 = vld [vmem:[%s17 + $0x80] sm:$0xf]
        %v8714 = vld [vmem:[%s17 + $0x84] sm:$0xf]
        %v8715 = vld [vmem:[%s17 + $0x88] sm:$0xf]
        %v8716 = vld [vmem:[%s17 + $0x8c] sm:$0xf]
        %v8717 = vld [vmem:[%s17 + $0x90] sm:$0xf]
        %v8718 = vld [vmem:[%s17 + $0x94] sm:$0xf]
        %v8719 = vld [vmem:[%s17 + $0x98] sm:$0xf]
        %v8720 = vld [vmem:[%s17 + $0x9c] sm:$0xf]
        %v8729 = vunpack.c.l.b16 %v8713
        %v8730 = vunpack.c.l.b16 %v8714
        %v8731 = vunpack.c.l.b16 %v8715
        %v8732 = vunpack.c.l.b16 %v8716
        %v8733 = vunpack.c.l.b16 %v8717
        %v8734 = vunpack.c.l.b16 %v8718
        %v8735 = vunpack.c.l.b16 %v8719
        %v8736 = vunpack.c.l.b16 %v8720
        %v8737 = vpack.c.b16 %v8730, %v8729
        %v8738 = vpack.c.b16 %v8732, %v8731
        %v8739 = vpack.c.b16 %v8734, %v8733
        %v8740 = vpack.c.b16 %v8736, %v8735
        %v8746 = vsel %vm8549, %v8712, 0
        %8748 = vmatpush.bf16.msra.mxu0 0
        %8749 = vmatpush.bf16.msra.mxu0 0
        %8750 = vmatpush.bf16.msra.mxu0 0
        %8751 = vmatpush.bf16.msra.mxu0 0
        %8752 = vmatpush.bf16.msra.mxu0 %v8740
        %8753 = vmatpush.bf16.msra.mxu0 %v8739
        %8754 = vmatpush.bf16.msra.mxu0 %v8738
        %8755 = vmatpush.bf16.msra.mxu0 %v8737
        %8756 = vmatmul.bf16.gmra.mxu0 %v8746
        %v8757 = vpop.f32.mrf.mxu0
        %v8758 = vadd.f32 0.0, %v8757
        %v8759 = vpop.f32.mrf.mxu0
        %8760 = vdwg.mxu0
        %v8761 = vadd.f32 %v8709, %v8758
        %s8762 = scalar_lea.vmem [#allocation12], 5
        %v8763 = vld [vmem:[%s8762] ss:$9 sm:$0xff]
        %v8764 = vpack.c.bf16 %v8763, %v8763
        %v8765 = vld [vmem:[%s17 + $0xa0] sm:$0xf]
        %v8766 = vld [vmem:[%s17 + $0xa4] sm:$0xf]
        %v8767 = vld [vmem:[%s17 + $0xa8] sm:$0xf]
        %v8768 = vld [vmem:[%s17 + $0xac] sm:$0xf]
        %v8769 = vld [vmem:[%s17 + $0xb0] sm:$0xf]
        %v8770 = vld [vmem:[%s17 + $0xb4] sm:$0xf]
        %v8771 = vld [vmem:[%s17 + $0xb8] sm:$0xf]
        %v8772 = vld [vmem:[%s17 + $0xbc] sm:$0xf]
        %v8781 = vunpack.c.l.b16 %v8765
        %v8782 = vunpack.c.l.b16 %v8766
        %v8783 = vunpack.c.l.b16 %v8767
        %v8784 = vunpack.c.l.b16 %v8768
        %v8785 = vunpack.c.l.b16 %v8769
        %v8786 = vunpack.c.l.b16 %v8770
        %v8787 = vunpack.c.l.b16 %v8771
        %v8788 = vunpack.c.l.b16 %v8772
        %v8789 = vpack.c.b16 %v8782, %v8781
        %v8790 = vpack.c.b16 %v8784, %v8783
        %v8791 = vpack.c.b16 %v8786, %v8785
        %v8792 = vpack.c.b16 %v8788, %v8787
        %v8798 = vsel %vm8549, %v8764, 0
        %8800 = vmatpush.bf16.msra.mxu0 0
        %8801 = vmatpush.bf16.msra.mxu0 0
        %8802 = vmatpush.bf16.msra.mxu0 0
        %8803 = vmatpush.bf16.msra.mxu0 0
        %8804 = vmatpush.bf16.msra.mxu0 %v8792
        %8805 = vmatpush.bf16.msra.mxu0 %v8791
        %8806 = vmatpush.bf16.msra.mxu0 %v8790
        %8807 = vmatpush.bf16.msra.mxu0 %v8789
        %8808 = vmatmul.bf16.gmra.mxu0 %v8798
        %v8809 = vpop.f32.mrf.mxu0
        %v8810 = vadd.f32 0.0, %v8809
        %v8811 = vpop.f32.mrf.mxu0
        %8812 = vdwg.mxu0
        %v8813 = vadd.f32 %v8761, %v8810
        %s8814 = scalar_lea.vmem [#allocation12], 6
        %v8815 = vld [vmem:[%s8814] ss:$9 sm:$0xff]
        %v8816 = vpack.c.bf16 %v8815, %v8815
        %v8817 = vld [vmem:[%s17 + $0xc0] sm:$0xf]
        %v8818 = vld [vmem:[%s17 + $0xc4] sm:$0xf]
        %v8819 = vld [vmem:[%s17 + $0xc8] sm:$0xf]
        %v8820 = vld [vmem:[%s17 + $0xcc] sm:$0xf]
        %v8821 = vld [vmem:[%s17 + $0xd0] sm:$0xf]
        %v8822 = vld [vmem:[%s17 + $0xd4] sm:$0xf]
        %v8823 = vld [vmem:[%s17 + $0xd8] sm:$0xf]
        %v8824 = vld [vmem:[%s17 + $0xdc] sm:$0xf]
        %v8833 = vunpack.c.l.b16 %v8817
        %v8834 = vunpack.c.l.b16 %v8818
        %v8835 = vunpack.c.l.b16 %v8819
        %v8836 = vunpack.c.l.b16 %v8820
        %v8837 = vunpack.c.l.b16 %v8821
        %v8838 = vunpack.c.l.b16 %v8822
        %v8839 = vunpack.c.l.b16 %v8823
        %v8840 = vunpack.c.l.b16 %v8824
        %v8841 = vpack.c.b16 %v8834, %v8833
        %v8842 = vpack.c.b16 %v8836, %v8835
        %v8843 = vpack.c.b16 %v8838, %v8837
        %v8844 = vpack.c.b16 %v8840, %v8839
        %v8850 = vsel %vm8549, %v8816, 0
        %8852 = vmatpush.bf16.msra.mxu0 0
        %8853 = vmatpush.bf16.msra.mxu0 0
        %8854 = vmatpush.bf16.msra.mxu0 0
        %8855 = vmatpush.bf16.msra.mxu0 0
        %8856 = vmatpush.bf16.msra.mxu0 %v8844
        %8857 = vmatpush.bf16.msra.mxu0 %v8843
        %8858 = vmatpush.bf16.msra.mxu0 %v8842
        %8859 = vmatpush.bf16.msra.mxu0 %v8841
        %8860 = vmatmul.bf16.gmra.mxu0 %v8850
        %v8861 = vpop.f32.mrf.mxu0
        %v8862 = vadd.f32 0.0, %v8861
        %v8863 = vpop.f32.mrf.mxu0
        %8864 = vdwg.mxu0
        %v8865 = vadd.f32 %v8813, %v8862
        %s8866 = scalar_lea.vmem [#allocation12], 7
        %v8867 = vld [vmem:[%s8866] ss:$9 sm:$0xff]
        %v8868 = vpack.c.bf16 %v8867, %v8867
        %v8869 = vld [vmem:[%s17 + $0xe0] sm:$0xf]
        %v8870 = vld [vmem:[%s17 + $0xe4] sm:$0xf]
        %v8871 = vld [vmem:[%s17 + $0xe8] sm:$0xf]
        %v8872 = vld [vmem:[%s17 + $0xec] sm:$0xf]
        %v8873 = vld [vmem:[%s17 + $0xf0] sm:$0xf]
        %v8874 = vld [vmem:[%s17 + $0xf4] sm:$0xf]
        %v8875 = vld [vmem:[%s17 + $0xf8] sm:$0xf]
        %v8876 = vld [vmem:[%s17 + $0xfc] sm:$0xf]
        %v8885 = vunpack.c.l.b16 %v8869
        %v8886 = vunpack.c.l.b16 %v8870
        %v8887 = vunpack.c.l.b16 %v8871
        %v8888 = vunpack.c.l.b16 %v8872
        %v8889 = vunpack.c.l.b16 %v8873
        %v8890 = vunpack.c.l.b16 %v8874
        %v8891 = vunpack.c.l.b16 %v8875
        %v8892 = vunpack.c.l.b16 %v8876
        %v8893 = vpack.c.b16 %v8886, %v8885
        %v8894 = vpack.c.b16 %v8888, %v8887
        %v8895 = vpack.c.b16 %v8890, %v8889
        %v8896 = vpack.c.b16 %v8892, %v8891
        %v8902 = vsel %vm8549, %v8868, 0
        %8904 = vmatpush.bf16.msra.mxu0 0
        %8905 = vmatpush.bf16.msra.mxu0 0
        %8906 = vmatpush.bf16.msra.mxu0 0
        %8907 = vmatpush.bf16.msra.mxu0 0
        %8908 = vmatpush.bf16.msra.mxu0 %v8896
        %8909 = vmatpush.bf16.msra.mxu0 %v8895
        %8910 = vmatpush.bf16.msra.mxu0 %v8894
        %8911 = vmatpush.bf16.msra.mxu0 %v8893
        %8912 = vmatmul.bf16.gmra.mxu0 %v8902
        %v8913 = vpop.f32.mrf.mxu0
        %v8914 = vadd.f32 0.0, %v8913
        %v8915 = vpop.f32.mrf.mxu0
        %8916 = vdwg.mxu0
        %v8917 = vadd.f32 %v8865, %v8914
        %s8918 = scalar_lea.vmem [#allocation12], 8
        %v8919 = vld [vmem:[%s8918] ss:$9 sm:$0xff]
        %v8920 = vpack.c.bf16 %v8919, %v8919
        %v8921 = vld [vmem:[%s17 + $0x100] sm:$0xf]
        %v8922 = vld [vmem:[%s17 + $0x104] sm:$0xf]
        %v8923 = vld [vmem:[%s17 + $0x108] sm:$0xf]
        %v8924 = vld [vmem:[%s17 + $0x10c] sm:$0xf]
        %v8925 = vld [vmem:[%s17 + $0x110] sm:$0xf]
        %v8926 = vld [vmem:[%s17 + $0x114] sm:$0xf]
        %v8927 = vld [vmem:[%s17 + $0x118] sm:$0xf]
        %v8928 = vld [vmem:[%s17 + $0x11c] sm:$0xf]
        %v8937 = vunpack.c.l.b16 %v8921
        %v8938 = vunpack.c.l.b16 %v8922
        %v8939 = vunpack.c.l.b16 %v8923
        %v8940 = vunpack.c.l.b16 %v8924
        %v8941 = vunpack.c.l.b16 %v8925
        %v8942 = vunpack.c.l.b16 %v8926
        %v8943 = vunpack.c.l.b16 %v8927
        %v8944 = vunpack.c.l.b16 %v8928
        %v8945 = vpack.c.b16 %v8938, %v8937
        %v8946 = vpack.c.b16 %v8940, %v8939
        %v8947 = vpack.c.b16 %v8942, %v8941
        %v8948 = vpack.c.b16 %v8944, %v8943
        %v8954 = vsel %vm8549, %v8920, 0
        %8956 = vmatpush.bf16.msra.mxu0 0
        %8957 = vmatpush.bf16.msra.mxu0 0
        %8958 = vmatpush.bf16.msra.mxu0 0
        %8959 = vmatpush.bf16.msra.mxu0 0
        %8960 = vmatpush.bf16.msra.mxu0 %v8948
        %8961 = vmatpush.bf16.msra.mxu0 %v8947
        %8962 = vmatpush.bf16.msra.mxu0 %v8946
        %8963 = vmatpush.bf16.msra.mxu0 %v8945
        %8964 = vmatmul.bf16.gmra.mxu0 %v8954
        %v8965 = vpop.f32.mrf.mxu0
        %v8966 = vadd.f32 0.0, %v8965
        %v8967 = vpop.f32.mrf.mxu0
        %8968 = vdwg.mxu0
        %v8969 = vadd.f32 %v8917, %v8966
        %v8970 = vld [vmem:[%s18] sm:$0x1]
        %v8972 = vperm.slane %v8970, 0
        %v8974 = vadd.f32 %v8969, %v8972
        %8975 = vmax.xlane.f32.xlu0 %v8974
        %v8976 = vpop.xlane.xlu0 %8975
        %v8977 = vsub.f32 %v8974, %v8976
        %v8978 = vmul.f32 %v8977, 1.442695
        %v8979 = vpow.pop %v8978
        %8980 = vadd.xlane.f32.xlu0 %v8979
        %v8981 = vpop.xlane.xlu0 %8980
        %v8982 = vlog2.pop %v8981
        %v8983 = vmul.f32 %v8982, 0.6931472
        %v8984 = vsub.f32 %v8977, %v8983
        %8985 = vst [vmem:[%s596] sm:$0xff] %v8984
        %s8986 = sand.u32 %s445, 1
        %s8987 = scalar_lea.sflag [#allocation14], %s8986
        %s8988 = sand.u32 %s445, 1
        %s8989 = smul.addr %s8988, 8
        %s8990 = scalar_lea.vmem [#allocation13], %s8989
        // Predicated region
        $region223: #{danet_forward.1} parent=95 // pred_check
          %p8991 = pneg %p455
        $region224: #{danet_forward.1} parent=95 // pred_check_branch
          %8993 = sbr.rel (%p8991) target = $region226
        $region225: #{danet_forward.1} parent=95 // pred_region
          %8995 = vsyncadd %s8987, 0
          %s8996 = smul.addr %s33, 8
          %s8997 = scalar_lea.hbm %s19, %s8996
          %s8999 = sshll.u32 %s8990, 4
          %s9000 = int_to_ptr.vmem [resolvable:$true] %s8999
          %s9001 = sshll.u32 %s8997, 4
          %s9002 = int_to_ptr.hbm [resolvable:$true] %s9001
          %9004 = dma.vmem_to_hbm [thread:$0]  %s9000, 128, %s9002, %s8987
        $region226: #{danet_forward.1} parent=95 // pred_fallthru
          _
      $region96: #{danet_forward.1} parent=5 // pred_fallthru
        _
      %p9005 = scmp.le.s32.totalorder 2, %s28
      // Predicated region
      $region227: #{danet_forward.1} parent=5 // pred_check
        %p9006 = pneg %p9005
      $region228: #{danet_forward.1} parent=5 // pred_check_branch
        %9008 = sbr.rel (%p9006) target = $region230
      $region229: #{danet_forward.1} parent=5 // pred_region
        %s9009 = ssub.s32 %s28, 2
        // Predicated region
        $region231: #{danet_forward.1} parent=229 // pred_check
          %p9010 = pneg %p461
        $region232: #{danet_forward.1} parent=229 // pred_check_branch
          %9012 = sbr.rel (%p9010) target = $region234
        $region233: #{danet_forward.1} parent=229 // pred_region
          %s9013 = sand.u32 %s446, 1
          %s9014 = scalar_lea.sflag [#allocation14], %s9013
          %s9015 = sand.u32 %s446, 1
          %s9016 = smul.addr %s9015, 8
          %s9017 = scalar_lea.vmem [#allocation13], %s9016
          %9019 = dma.done %s9014, 128
        $region234: #{danet_forward.1} parent=229 // pred_fallthru
          _
      $region230: #{danet_forward.1} parent=5 // pred_fallthru
        _
    $region6: #{danet_forward.1} parent=1 // loop_footer
      %s32 = sadd.s32 1, %s28
    $region7: #{danet_forward.1} parent=1 // loop_footer_branch
      %27 = sbr.rel target = $region3
    $region8: #{danet_forward.1} parent=1 // loop_exit
      _
    %9020 = vsyncpa [#allocation14], 1
    %s9021 = scalar_lea.sflag [#allocation14], 1
    %9022 = vsyncpa %s9021, 1

</llo_original>
